<compile_context>
chip_gen: v6e
topology: v6e:2x2x1
jax: 0.10.0
libtpu: 0.0.40
codegen_flags: <defaults>
</compile_context>

<pallas_src>
import functools
import math
from types import SimpleNamespace

import jax
import jax.numpy as jnp
from jax.experimental import pallas as pl
from jax.experimental.pallas import tpu as pltpu


# ----------------------------------------------------------------------------
# In-kernel helpers (traced inside the Pallas kernels)
# ----------------------------------------------------------------------------
def _masked_softmax(logits):
    """Numerically-stable softmax with EUP reciprocal (divide off the VALU)."""
    logits = logits - jnp.max(logits, axis=-1, keepdims=True)
    p = jnp.exp(logits)
    return p * pl.reciprocal(jnp.sum(p, axis=-1, keepdims=True), approx=True)


def _attn_core(x, y, kmask, wqkv_ref, bqkv_ref, wo_ref, bo_ref, g_ref, b_ref,
               *, scale, eps):
    """QKV proj + masked attention + out proj + residual + LayerNorm."""
    q = jnp.dot(x, wqkv_ref[0], preferred_element_type=jnp.float32) + bqkv_ref[0]
    k = jnp.dot(y, wqkv_ref[1], preferred_element_type=jnp.float32) + bqkv_ref[1]
    v = jnp.dot(y, wqkv_ref[2], preferred_element_type=jnp.float32) + bqkv_ref[2]
    s = jax.lax.dot_general(q, k, (((1,), (1,)), ((), ())),
                            preferred_element_type=jnp.float32) * scale
    s = s + kmask * (-1e9)                               # kmask: (1, Ly), 1.0 == pad
    att = _masked_softmax(s)
    a = jnp.dot(att, v, preferred_element_type=jnp.float32)
    o = jnp.dot(a, wo_ref[...], preferred_element_type=jnp.float32) + bo_ref[...]
    z = x + o                                            # residual fused in
    mu = jnp.mean(z, axis=-1, keepdims=True)
    var = jnp.mean((z - mu) ** 2, axis=-1, keepdims=True)
    zn = (z - mu) * jax.lax.rsqrt(var + eps)
    return zn * g_ref[...] + b_ref[...]


def _attflat_core(x, xmask, w1_ref, b1_ref, w2_ref, b2_ref, wm_ref, bm_ref):
    """MLP attention pooling + merge linear (AttFlat)."""
    h = jnp.dot(x, w1_ref[...], preferred_element_type=jnp.float32) + b1_ref[...]
    h = jnp.maximum(h, 0.0)                                              # (N, mid)
    logits = jax.lax.dot_general(w2_ref[...], h, (((1,), (1,)), ((), ())),
                                 preferred_element_type=jnp.float32)     # (1, N)
    logits = logits + b2_ref[...] + xmask * (-1e9)
    att = _masked_softmax(logits)                                        # (1, N)
    pooled = jnp.dot(att, x, preferred_element_type=jnp.float32)         # (1, D)
    return jnp.dot(pooled, wm_ref[...], preferred_element_type=jnp.float32) + bm_ref[...]


# ----------------------------------------------------------------------------
# Pallas kernels
# ----------------------------------------------------------------------------
def _gat_kernel(x_ref, adj_ref, W_ref, a1_ref, a2_ref, Wo_ref, a1o_ref, a2o_ref,
                o_ref, *, alpha, heads):
    x = x_ref[0]          # (N, E)
    adj = adj_ref[0]      # (N, N)

    def head_attn(wh, a1, a2):
        e1 = jnp.dot(wh, a1, preferred_element_type=jnp.float32)             # (N, 1)
        e2 = jax.lax.dot_general(a2, wh, (((0,), (1,)), ((), ())),
                                 preferred_element_type=jnp.float32)         # (1, N)
        e = e1 + e2
        e = jnp.where(e > 0, e, alpha * e)                                   # LeakyReLU
        e = jnp.where(adj > 0, e, -9e15)
        att = _masked_softmax(e)
        out = jnp.dot(att, wh, preferred_element_type=jnp.float32)
        return jnp.where(out > 0, out, jnp.exp(jnp.minimum(out, 0.0)) - 1.0) # ELU

    # hidden heads; concat-then-W_out expressed as sum of per-head matmuls
    acc = None
    for h in range(heads):
        wh = jnp.dot(x, W_ref[h], preferred_element_type=jnp.float32)        # (N, H)
        oh = head_attn(wh, a1_ref[h], a2_ref[h])
        contrib = jnp.dot(oh, Wo_ref[h], preferred_element_type=jnp.float32) # (N, E)
        acc = contrib if acc is None else acc + contrib

    out = head_attn(acc, a1o_ref[...], a2o_ref[...])                         # (N, E)

    # fold the padded-node zeroing into the epilogue (mask recomputed from x)
    pad = (jnp.sum(jnp.abs(x), axis=-1, keepdims=True) == 0)                 # (N, 1)
    o_ref[0] = jnp.where(pad, 0.0, out).astype(o_ref.dtype)


def _sa_flat_kernel(x_ref, m_ref, wqkv_ref, bqkv_ref, wo_ref, bo_ref, g_ref, b_ref,
                    fw1_ref, fb1_ref, fw2_ref, fb2_ref, fwm_ref, fbm_ref,
                    enc_ref, flat_ref, *, scale, eps):
    x = x_ref[0]
    m = m_ref[0]
    enc = _attn_core(x, x, m, wqkv_ref, bqkv_ref, wo_ref, bo_ref, g_ref, b_ref,
                     scale=scale, eps=eps)
    enc_ref[0] = enc.astype(enc_ref.dtype)
    flat_ref[0] = _attflat_core(enc, m, fw1_ref, fb1_ref, fw2_ref, fb2_ref,
                                fwm_ref, fbm_ref).astype(flat_ref.dtype)


def _sa_block_kernel(x_ref, m_ref, wqkv_ref, bqkv_ref, wo_ref, bo_ref, g_ref, b_ref,
                     o_ref, *, scale, eps):
    x = x_ref[0]
    o_ref[0] = _attn_core(x, x, m_ref[0], wqkv_ref, bqkv_ref, wo_ref, bo_ref,
                          g_ref, b_ref, scale=scale, eps=eps).astype(o_ref.dtype)


def _ga_flat_kernel(x_ref, y_ref, km_ref, xm_ref, wqkv_ref, bqkv_ref, wo_ref, bo_ref,
                    g_ref, b_ref, fw1_ref, fb1_ref, fw2_ref, fb2_ref, fwm_ref, fbm_ref,
                    flat_ref, *, scale, eps):
    enc = _attn_core(x_ref[0], y_ref[0], km_ref[0], wqkv_ref, bqkv_ref,
                     wo_ref, bo_ref, g_ref, b_ref, scale=scale, eps=eps)
    # only the pooled diagram feature leaves the kernel (enc never hits HBM)
    flat_ref[0] = _attflat_core(enc, xm_ref[0], fw1_ref, fb1_ref, fw2_ref, fb2_ref,
                                fwm_ref, fbm_ref).astype(flat_ref.dtype)


def _fusion_cls_kernel(f_ref, g_ref, b_ref, w_ref, bc_ref, o_ref, *, eps):
    f = f_ref[...]                                        # (B*O, 3M)
    mu = jnp.mean(f, axis=-1, keepdims=True)
    var = jnp.mean((f - mu) ** 2, axis=-1, keepdims=True)
    z = (f - mu) * jax.lax.rsqrt(var + eps)
    z = z * g_ref[...] + b_ref[...]
    s = jnp.dot(z, w_ref[...], preferred_element_type=jnp.float32) + bc_ref[...]
    o_ref[...] = s.astype(o_ref.dtype)


# ----------------------------------------------------------------------------
# Pallas wrappers
# ----------------------------------------------------------------------------
_PARALLEL_B = pltpu.CompilerParams(dimension_semantics=("parallel",))


def _wspec(shape):
    n = len(shape)
    return pl.BlockSpec(shape, lambda b, n=n: (0,) * n)


def gat_forward(x, adj, p, cfg):
    B, N, E = x.shape
    heads = cfg.gat_heads
    return pl.pallas_call(
        functools.partial(_gat_kernel, alpha=cfg.gat_alpha, heads=heads),
        out_shape=jax.ShapeDtypeStruct((B, N, E), jnp.float32),
        grid=(B,),
        in_specs=[
            pl.BlockSpec((1, N, E), lambda b: (b, 0, 0)),
            pl.BlockSpec((1, N, N), lambda b: (b, 0, 0)),
            _wspec(p['W'].shape), _wspec(p['a1'].shape), _wspec(p['a2'].shape),
            _wspec(p['W_out'].shape), _wspec(p['a1_out'].shape), _wspec(p['a2_out'].shape),
        ],
        out_specs=pl.BlockSpec((1, N, E), lambda b: (b, 0, 0)),
        compiler_params=_PARALLEL_B,
    )(x, adj, p['W'], p['a1'], p['a2'], p['W_out'], p['a1_out'], p['a2_out'])


def sa_flat_block(x, mask, p_blk, p_flat):
    """Fused self-attention encoder + AttFlat pooling (question branch)."""
    B, L, E = x.shape
    mid = p_flat['w1'].shape[1]
    M = p_flat['wm'].shape[1]
    scale = 1.0 / math.sqrt(E)
    m3 = mask[:, None, :]                                 # (B, 1, L)
    enc, flat = pl.pallas_call(
        functools.partial(_sa_flat_kernel, scale=scale, eps=1e-6),
        out_shape=(jax.ShapeDtypeStruct((B, L, E), jnp.float32),
                   jax.ShapeDtypeStruct((B, 1, M), jnp.float32)),
        grid=(B,),
        in_specs=[
            pl.BlockSpec((1, L, E), lambda b: (b, 0, 0)),
            pl.BlockSpec((1, 1, L), lambda b: (b, 0, 0)),
            _wspec((3, E, E)), _wspec((3, 1, E)),
            _wspec((E, E)), _wspec((1, E)), _wspec((1, E)), _wspec((1, E)),
            _wspec((E, mid)), _wspec((1, mid)), _wspec((1, mid)), _wspec((1, 1)),
            _wspec((E, M)), _wspec((1, M)),
        ],
        out_specs=(pl.BlockSpec((1, L, E), lambda b: (b, 0, 0)),
                   pl.BlockSpec((1, 1, M), lambda b: (b, 0, 0))),
        compiler_params=_PARALLEL_B,
    )(x, m3, p_blk['wqkv'], p_blk['bqkv'], p_blk['wo'], p_blk['bo'],
      p_blk['ln_g'], p_blk['ln_b'],
      p_flat['w1'], p_flat['b1'], p_flat['w2'], p_flat['b2'],
      p_flat['wm'], p_flat['bm'])
    return enc, flat


def sa_block(x, mask, p_blk):
    """Fused self-attention encoder (diagram branch)."""
    B, L, E = x.shape
    scale = 1.0 / math.sqrt(E)
    m3 = mask[:, None, :]
    return pl.pallas_call(
        functools.partial(_sa_block_kernel, scale=scale, eps=1e-6),
        out_shape=jax.ShapeDtypeStruct((B, L, E), jnp.float32),
        grid=(B,),
        in_specs=[
            pl.BlockSpec((1, L, E), lambda b: (b, 0, 0)),
            pl.BlockSpec((1, 1, L), lambda b: (b, 0, 0)),
            _wspec((3, E, E)), _wspec((3, 1, E)),
            _wspec((E, E)), _wspec((1, E)), _wspec((1, E)), _wspec((1, E)),
        ],
        out_specs=pl.BlockSpec((1, L, E), lambda b: (b, 0, 0)),
        compiler_params=_PARALLEL_B,
    )(x, m3, p_blk['wqkv'], p_blk['bqkv'], p_blk['wo'], p_blk['bo'],
      p_blk['ln_g'], p_blk['ln_b'])


def ga_flat_block(x, y, kmask, xmask, p_blk, p_flat):
    """Fused guided attention (x attends y) + AttFlatDiagram pooling."""
    B, Lx, E = x.shape
    Ly = y.shape[1]
    mid = p_flat['w1'].shape[1]
    M = p_flat['wm'].shape[1]
    scale = 1.0 / math.sqrt(E)
    km3 = kmask[:, None, :]                               # (B, 1, Ly)
    xm3 = xmask[:, None, :]                               # (B, 1, Lx)
    return pl.pallas_call(
        functools.partial(_ga_flat_kernel, scale=scale, eps=1e-6),
        out_shape=jax.ShapeDtypeStruct((B, 1, M), jnp.float32),
        grid=(B,),
        in_specs=[
            pl.BlockSpec((1, Lx, E), lambda b: (b, 0, 0)),
            pl.BlockSpec((1, Ly, E), lambda b: (b, 0, 0)),
            pl.BlockSpec((1, 1, Ly), lambda b: (b, 0, 0)),
            pl.BlockSpec((1, 1, Lx), lambda b: (b, 0, 0)),
            _wspec((3, E, E)), _wspec((3, 1, E)),
            _wspec((E, E)), _wspec((1, E)), _wspec((1, E)), _wspec((1, E)),
            _wspec((E, mid)), _wspec((1, mid)), _wspec((1, mid)), _wspec((1, 1)),
            _wspec((E, M)), _wspec((1, M)),
        ],
        out_specs=pl.BlockSpec((1, 1, M), lambda b: (b, 0, 0)),
        compiler_params=_PARALLEL_B,
    )(x, y, km3, xm3, p_blk['wqkv'], p_blk['bqkv'], p_blk['wo'], p_blk['bo'],
      p_blk['ln_g'], p_blk['ln_b'],
      p_flat['w1'], p_flat['b1'], p_flat['w2'], p_flat['b2'],
      p_flat['wm'], p_flat['bm'])


def fusion_classify(fusion2d, g, b, w, bc):
    """Fused fusion-LayerNorm + per-option classifier."""
    R, D = fusion2d.shape
    return pl.pallas_call(
        functools.partial(_fusion_cls_kernel, eps=1e-6),
        out_shape=jax.ShapeDtypeStruct((R, 1), jnp.float32),
        grid=(1,),
        in_specs=[pl.BlockSpec((R, D), lambda i: (0, 0)),
                  pl.BlockSpec((1, D), lambda i: (0, 0)),
                  pl.BlockSpec((1, D), lambda i: (0, 0)),
                  pl.BlockSpec((D, 1), lambda i: (0, 0)),
                  pl.BlockSpec((1, 1), lambda i: (0, 0))],
        out_specs=pl.BlockSpec((R, 1), lambda i: (0, 0)),
    )(fusion2d, g, b, w, bc)


# ----------------------------------------------------------------------------
# Model
# ----------------------------------------------------------------------------
def make_mask(x):
    # True (1.0) where the whole feature row is zero (padding).
    return (jnp.sum(jnp.abs(x), axis=-1) == 0).astype(jnp.float32)


def net_forward(params, que_emb, dia_f, opt_emb, dia_matrix, dia_node_emb, cfg):
    del dia_f  # unused by the reference forward
    B, Lq, E = que_emb.shape
    O, M = cfg.opt_num, cfg.mlp_out

    que_mask = make_mask(que_emb)              # (B, Lq)
    dia_node_mask = make_mask(dia_node_emb)    # (B, N)

    # --- GAT over diagram nodes (mask zeroing fused into the kernel) ---
    dia_node_feat = gat_forward(dia_node_emb, dia_matrix, params['gat'], cfg)

    # --- INTRA_2_INTER + AttFlat (all fused) ---
    que_enc, que_feat = sa_flat_block(que_emb, que_mask,
                                      params['i2i']['que_sa'],
                                      params['i2i']['que_flat'])
    dia_enc = sa_block(dia_node_feat, dia_node_mask, params['i2i']['dia_sa'])
    dia_feat = ga_flat_block(dia_enc, que_enc, que_mask, dia_node_mask,
                             params['i2i']['dia_ga'], params['flat'])

    que_feat = que_feat[:, 0, :]               # (B, M)
    dia_feat = dia_feat[:, 0, :]               # (B, M)

    # --- fusion (mirrors torch repeat/reshape semantics) ---
    opt_feat = opt_emb[:, :, 0, :]                                     # squeeze(2)
    dia_rep = jnp.broadcast_to(dia_feat[:, None, :], (B, O, M))
    que_rep = jnp.broadcast_to(que_feat[:, None, :], (B, O, M))
    fusion = jnp.concatenate([dia_rep, que_rep, opt_feat], axis=-1)    # (B, O, 3M)
    scores = fusion_classify(fusion.reshape(B * O, 3 * M),
                             params['ln_g'], params['ln_b'],
                             params['cls_w'], params['cls_b'])
    return scores.reshape(B, O)


# ----------------------------------------------------------------------------
# Deterministic parameter init (stacked layouts for fused kernels)
# ----------------------------------------------------------------------------
def init_params(key, cfg):
    E, H, nh = cfg.init_word_emb, cfg.gat_hidden, cfg.gat_heads
    M, mid = cfg.mlp_out, cfg.flat_mlp
    keys = iter(jax.random.split(key, 64))

    def nrm(shape, scale=0.1):
        return jax.random.normal(next(keys), shape, jnp.float32) * scale

    gat = {
        'W': nrm((nh, E, H)),          # stacked per-head input projections
        'a1': nrm((nh, H, 1)),
        'a2': nrm((nh, H, 1)),
        'W_out': nrm((nh, H, E)),      # output layer weight, split by head rows
        'a1_out': nrm((E, 1)),
        'a2_out': nrm((E, 1)),
    }

    def sa_params():
        return {
            'wqkv': nrm((3, E, E)),                       # stacked [Wq, Wk, Wv]
            'bqkv': jnp.zeros((3, 1, E), jnp.float32),
            'wo': nrm((E, E)), 'bo': jnp.zeros((1, E), jnp.float32),
            'ln_g': jnp.ones((1, E), jnp.float32),
            'ln_b': jnp.zeros((1, E), jnp.float32),
        }

    def flat_params():
        return {
            'w1': nrm((E, mid)), 'b1': jnp.zeros((1, mid), jnp.float32),
            'w2': nrm((1, mid)), 'b2': jnp.zeros((1, 1), jnp.float32),
            'wm': nrm((E, M)), 'bm': jnp.zeros((1, M), jnp.float32),
        }

    return {
        'gat': gat,
        'i2i': {'que_sa': sa_params(), 'dia_sa': sa_params(),
                'dia_ga': sa_params(), 'que_flat': flat_params()},
        'flat': flat_params(),
        'ln_g': jnp.ones((1, 3 * M), jnp.float32),
        'ln_b': jnp.zeros((1, 3 * M), jnp.float32),
        'cls_w': nrm((3 * M, 1)),
        'cls_b': jnp.zeros((1, 1), jnp.float32),
    }


# ----------------------------------------------------------------------------
# Main
# ----------------------------------------------------------------------------
if __name__ == "__main__":
    cfg = SimpleNamespace(init_word_emb=32, gat_hidden=16, gat_dropout=0.0,
                          gat_alpha=0.2, gat_heads=2, mlp_out=32, opt_num=4,
                          flat_mlp=16)
    B, Lq, N, E = 2, 8, 8, cfg.init_word_emb

    key = jax.random.PRNGKey(0)
    k1, k2, k3, k4, k5, kp = jax.random.split(key, 6)

    que_emb = jax.random.normal(k1, (B, Lq, E), jnp.float32)
    que_emb = que_emb.at[:, -2:, :].set(0.0)            # padded question tokens
    dia_node_emb = jax.random.normal(k2, (B, N, E), jnp.float32)
    dia_node_emb = dia_node_emb.at[:, -1:, :].set(0.0)  # padded diagram node
    dia_f = jax.random.normal(k3, (B, N, E), jnp.float32)  # unused, kept for parity
    opt_emb = jax.random.normal(k4, (B, cfg.opt_num, 1, cfg.mlp_out), jnp.float32)
    adj = (jax.random.uniform(k5, (B, N, N)) > 0.5).astype(jnp.float32)
    adj = jnp.maximum(adj, jnp.eye(N, dtype=jnp.float32)[None])  # self-loops

    params = init_params(kp, cfg)

    fwd = jax.jit(lambda p, q, df, oe, dm, dn: net_forward(p, q, df, oe, dm, dn, cfg))
    scores = fwd(params, que_emb, dia_f, opt_emb, adj, dia_node_emb)
    scores = jax.block_until_ready(scores)

    assert scores.shape == (B, cfg.opt_num)
    assert bool(jnp.all(jnp.isfinite(scores)))
    print("KERNEL_OK")
</pallas_src>

<mosaic_0001>
module attributes {stable_mosaic.version = 11 : i64} {
  func.func @_sa_flat_kernel(%arg0: i32, %arg1: memref<1x8x32xf32, #tpu.memory_space<vmem>>, %arg2: memref<1x1x8xf32, #tpu.memory_space<vmem>>, %arg3: memref<3x32x32xf32, #tpu.memory_space<vmem>>, %arg4: memref<3x1x32xf32, #tpu.memory_space<vmem>>, %arg5: memref<32x32xf32, #tpu.memory_space<vmem>>, %arg6: memref<1x32xf32, #tpu.memory_space<vmem>>, %arg7: memref<1x32xf32, #tpu.memory_space<vmem>>, %arg8: memref<1x32xf32, #tpu.memory_space<vmem>>, %arg9: memref<32x16xf32, #tpu.memory_space<vmem>>, %arg10: memref<1x16xf32, #tpu.memory_space<vmem>>, %arg11: memref<1x16xf32, #tpu.memory_space<vmem>>, %arg12: memref<1x1xf32, #tpu.memory_space<vmem>>, %arg13: memref<32x32xf32, #tpu.memory_space<vmem>>, %arg14: memref<1x32xf32, #tpu.memory_space<vmem>>, %arg15: memref<1x8x32xf32, #tpu.memory_space<vmem>>, %arg16: memref<1x1x32xf32, #tpu.memory_space<vmem>>) attributes {dimension_semantics = [#tpu.dimension_semantics<parallel>], iteration_bounds = array<i64: 2>, scalar_prefetch = 0 : i64, scratch_operands = 0 : i64, tpu.core_type = #tpu.core_type<tc>, window_params = [{transform_indices = @transform_0, window_bounds = array<i64: 1, 8, 32>}, {transform_indices = @transform_1, window_bounds = array<i64: 1, 1, 8>}, {pipeline_mode = #tpu.pipeline_mode<synchronous>, transform_indices = @transform_2, window_bounds = array<i64: 3, 32, 32>}, {pipeline_mode = #tpu.pipeline_mode<synchronous>, transform_indices = @transform_3, window_bounds = array<i64: 3, 1, 32>}, {pipeline_mode = #tpu.pipeline_mode<synchronous>, transform_indices = @transform_4, window_bounds = array<i64: 32, 32>}, {pipeline_mode = #tpu.pipeline_mode<synchronous>, transform_indices = @transform_5, window_bounds = array<i64: 1, 32>}, {pipeline_mode = #tpu.pipeline_mode<synchronous>, transform_indices = @transform_6, window_bounds = array<i64: 1, 32>}, {pipeline_mode = #tpu.pipeline_mode<synchronous>, transform_indices = @transform_7, window_bounds = array<i64: 1, 32>}, {pipeline_mode = #tpu.pipeline_mode<synchronous>, transform_indices = @transform_8, window_bounds = array<i64: 32, 16>}, {pipeline_mode = #tpu.pipeline_mode<synchronous>, transform_indices = @transform_9, window_bounds = array<i64: 1, 16>}, {pipeline_mode = #tpu.pipeline_mode<synchronous>, transform_indices = @transform_10, window_bounds = array<i64: 1, 16>}, {pipeline_mode = #tpu.pipeline_mode<synchronous>, transform_indices = @transform_11, window_bounds = array<i64: 1, 1>}, {pipeline_mode = #tpu.pipeline_mode<synchronous>, transform_indices = @transform_12, window_bounds = array<i64: 32, 32>}, {pipeline_mode = #tpu.pipeline_mode<synchronous>, transform_indices = @transform_13, window_bounds = array<i64: 1, 32>}, {transform_indices = @transform_14, window_bounds = array<i64: 1, 8, 32>}, {transform_indices = @transform_15, window_bounds = array<i64: 1, 1, 32>}]} {
    %c0 = arith.constant 0 : index
    %c0_0 = arith.constant 0 : index
    %c0_1 = arith.constant 0 : index
    %0 = vector.load %arg1[%c0, %c0_0, %c0_1] : memref<1x8x32xf32, #tpu.memory_space<vmem>>, vector<1x8x32xf32>
    %1 = vector.shape_cast %0 : vector<1x8x32xf32> to vector<8x32xf32>
    %c0_2 = arith.constant 0 : index
    %c0_3 = arith.constant 0 : index
    %c0_4 = arith.constant 0 : index
    %2 = vector.load %arg2[%c0_2, %c0_3, %c0_4] : memref<1x1x8xf32, #tpu.memory_space<vmem>>, vector<1x1x8xf32>
    %3 = vector.shape_cast %2 : vector<1x1x8xf32> to vector<1x8xf32>
    %c0_5 = arith.constant 0 : index
    %c0_6 = arith.constant 0 : index
    %c0_7 = arith.constant 0 : index
    %4 = vector.load %arg3[%c0_5, %c0_6, %c0_7] : memref<3x32x32xf32, #tpu.memory_space<vmem>>, vector<1x32x32xf32>
    %5 = vector.shape_cast %4 : vector<1x32x32xf32> to vector<32x32xf32>
    %cst = arith.constant dense<0.000000e+00> : vector<8x32xf32>
    %6 = tpu.matmul %1, %5, %cst {dimension_numbers = #tpu.dot_dimension_numbers<[1], [0], [0], [1], [0, 0, 1, 1], [], []>} : vector<8x32xf32>, vector<32x32xf32>, vector<8x32xf32> -> vector<8x32xf32>
    %c0_8 = arith.constant 0 : index
    %c0_9 = arith.constant 0 : index
    %c0_10 = arith.constant 0 : index
    %7 = vector.load %arg4[%c0_8, %c0_9, %c0_10] : memref<3x1x32xf32, #tpu.memory_space<vmem>>, vector<1x1x32xf32>
    %8 = vector.shape_cast %7 : vector<1x1x32xf32> to vector<1x32xf32>
    %9 = vector.broadcast %8 : vector<1x32xf32> to vector<8x32xf32>
    %10 = arith.addf %6, %9 : vector<8x32xf32>
    %c1 = arith.constant 1 : index
    %c0_11 = arith.constant 0 : index
    %c0_12 = arith.constant 0 : index
    %11 = vector.load %arg3[%c1, %c0_11, %c0_12] : memref<3x32x32xf32, #tpu.memory_space<vmem>>, vector<1x32x32xf32>
    %12 = vector.shape_cast %11 : vector<1x32x32xf32> to vector<32x32xf32>
    %cst_13 = arith.constant dense<0.000000e+00> : vector<8x32xf32>
    %13 = tpu.matmul %1, %12, %cst_13 {dimension_numbers = #tpu.dot_dimension_numbers<[1], [0], [0], [1], [0, 0, 1, 1], [], []>} : vector<8x32xf32>, vector<32x32xf32>, vector<8x32xf32> -> vector<8x32xf32>
    %c1_14 = arith.constant 1 : index
    %c0_15 = arith.constant 0 : index
    %c0_16 = arith.constant 0 : index
    %14 = vector.load %arg4[%c1_14, %c0_15, %c0_16] : memref<3x1x32xf32, #tpu.memory_space<vmem>>, vector<1x1x32xf32>
    %15 = vector.shape_cast %14 : vector<1x1x32xf32> to vector<1x32xf32>
    %16 = vector.broadcast %15 : vector<1x32xf32> to vector<8x32xf32>
    %17 = arith.addf %13, %16 : vector<8x32xf32>
    %c2 = arith.constant 2 : index
    %c0_17 = arith.constant 0 : index
    %c0_18 = arith.constant 0 : index
    %18 = vector.load %arg3[%c2, %c0_17, %c0_18] : memref<3x32x32xf32, #tpu.memory_space<vmem>>, vector<1x32x32xf32>
    %19 = vector.shape_cast %18 : vector<1x32x32xf32> to vector<32x32xf32>
    %cst_19 = arith.constant dense<0.000000e+00> : vector<8x32xf32>
    %20 = tpu.matmul %1, %19, %cst_19 {dimension_numbers = #tpu.dot_dimension_numbers<[1], [0], [0], [1], [0, 0, 1, 1], [], []>} : vector<8x32xf32>, vector<32x32xf32>, vector<8x32xf32> -> vector<8x32xf32>
    %c2_20 = arith.constant 2 : index
    %c0_21 = arith.constant 0 : index
    %c0_22 = arith.constant 0 : index
    %21 = vector.load %arg4[%c2_20, %c0_21, %c0_22] : memref<3x1x32xf32, #tpu.memory_space<vmem>>, vector<1x1x32xf32>
    %22 = vector.shape_cast %21 : vector<1x1x32xf32> to vector<1x32xf32>
    %23 = vector.broadcast %22 : vector<1x32xf32> to vector<8x32xf32>
    %24 = arith.addf %20, %23 : vector<8x32xf32>
    %cst_23 = arith.constant dense<0.000000e+00> : vector<8x8xf32>
    %25 = tpu.matmul %10, %17, %cst_23 {dimension_numbers = #tpu.dot_dimension_numbers<[1], [1], [0], [0], [0, 0, 1, 0], [], []>} : vector<8x32xf32>, vector<8x32xf32>, vector<8x8xf32> -> vector<8x8xf32>
    %cst_24 = arith.constant 0.176776692 : f32
    %26 = vector.broadcast %cst_24 : f32 to vector<8x8xf32>
    %27 = arith.mulf %25, %26 : vector<8x8xf32>
    %cst_25 = arith.constant -1.000000e+09 : f32
    %28 = vector.broadcast %cst_25 : f32 to vector<1x8xf32>
    %29 = arith.mulf %3, %28 : vector<1x8xf32>
    %30 = vector.broadcast %29 : vector<1x8xf32> to vector<8x8xf32>
    %31 = arith.addf %27, %30 : vector<8x8xf32>
    %cst_26 = arith.constant dense<0xFF800000> : vector<8xf32>
    %32 = vector.multi_reduction <maximumf>, %31, %cst_26 [1] : vector<8x8xf32> to vector<8xf32>
    %33 = vector.shape_cast %32 : vector<8xf32> to vector<8x1xf32>
    %34 = vector.broadcast %33 : vector<8x1xf32> to vector<8x8xf32>
    %35 = arith.subf %31, %34 : vector<8x8xf32>
    %36 = math.exp %35 : vector<8x8xf32>
    %cst_27 = arith.constant dense<0.000000e+00> : vector<8xf32>
    %37 = vector.multi_reduction <add>, %36, %cst_27 [1] : vector<8x8xf32> to vector<8xf32>
    %38 = vector.shape_cast %37 : vector<8xf32> to vector<8x1xf32>
    %39 = tpu.reciprocal %38 {approx = true} : vector<8x1xf32> -> vector<8x1xf32>
    %40 = vector.broadcast %39 : vector<8x1xf32> to vector<8x8xf32>
    %41 = arith.mulf %36, %40 : vector<8x8xf32>
    %cst_28 = arith.constant dense<0.000000e+00> : vector<8x32xf32>
    %42 = tpu.matmul %41, %24, %cst_28 {dimension_numbers = #tpu.dot_dimension_numbers<[1], [0], [0], [1], [0, 0, 1, 1], [], []>} : vector<8x8xf32>, vector<8x32xf32>, vector<8x32xf32> -> vector<8x32xf32>
    %c0_29 = arith.constant 0 : index
    %c0_30 = arith.constant 0 : index
    %43 = vector.load %arg5[%c0_29, %c0_30] : memref<32x32xf32, #tpu.memory_space<vmem>>, vector<32x32xf32>
    %cst_31 = arith.constant dense<0.000000e+00> : vector<8x32xf32>
    %44 = tpu.matmul %42, %43, %cst_31 {dimension_numbers = #tpu.dot_dimension_numbers<[1], [0], [0], [1], [0, 0, 1, 1], [], []>} : vector<8x32xf32>, vector<32x32xf32>, vector<8x32xf32> -> vector<8x32xf32>
    %c0_32 = arith.constant 0 : index
    %c0_33 = arith.constant 0 : index
    %45 = vector.load %arg6[%c0_32, %c0_33] : memref<1x32xf32, #tpu.memory_space<vmem>>, vector<1x32xf32>
    %46 = vector.broadcast %45 : vector<1x32xf32> to vector<8x32xf32>
    %47 = arith.addf %44, %46 : vector<8x32xf32>
    %48 = arith.addf %1, %47 : vector<8x32xf32>
    %cst_34 = arith.constant dense<0.000000e+00> : vector<8xf32>
    %49 = vector.multi_reduction <add>, %48, %cst_34 [1] : vector<8x32xf32> to vector<8xf32>
    %50 = vector.shape_cast %49 : vector<8xf32> to vector<8x1xf32>
    %cst_35 = arith.constant 3.200000e+01 : f32
    %51 = vector.broadcast %cst_35 : f32 to vector<8x1xf32>
    %52 = arith.divf %50, %51 : vector<8x1xf32>
    %53 = vector.broadcast %52 : vector<8x1xf32> to vector<8x32xf32>
    %54 = arith.subf %48, %53 : vector<8x32xf32>
    %55 = arith.mulf %54, %54 : vector<8x32xf32>
    %cst_36 = arith.constant dense<0.000000e+00> : vector<8xf32>
    %56 = vector.multi_reduction <add>, %55, %cst_36 [1] : vector<8x32xf32> to vector<8xf32>
    %57 = vector.shape_cast %56 : vector<8xf32> to vector<8x1xf32>
    %cst_37 = arith.constant 3.200000e+01 : f32
    %58 = vector.broadcast %cst_37 : f32 to vector<8x1xf32>
    %59 = arith.divf %57, %58 : vector<8x1xf32>
    %60 = vector.broadcast %52 : vector<8x1xf32> to vector<8x32xf32>
    %61 = arith.subf %48, %60 : vector<8x32xf32>
    %cst_38 = arith.constant 9.99999997E-7 : f32
    %62 = vector.broadcast %cst_38 : f32 to vector<8x1xf32>
    %63 = arith.addf %59, %62 : vector<8x1xf32>
    %64 = math.rsqrt %63 : vector<8x1xf32>
    %65 = vector.broadcast %64 : vector<8x1xf32> to vector<8x32xf32>
    %66 = arith.mulf %61, %65 : vector<8x32xf32>
    %c0_39 = arith.constant 0 : index
    %c0_40 = arith.constant 0 : index
    %67 = vector.load %arg7[%c0_39, %c0_40] : memref<1x32xf32, #tpu.memory_space<vmem>>, vector<1x32xf32>
    %68 = vector.broadcast %67 : vector<1x32xf32> to vector<8x32xf32>
    %69 = arith.mulf %66, %68 : vector<8x32xf32>
    %c0_41 = arith.constant 0 : index
    %c0_42 = arith.constant 0 : index
    %70 = vector.load %arg8[%c0_41, %c0_42] : memref<1x32xf32, #tpu.memory_space<vmem>>, vector<1x32xf32>
    %71 = vector.broadcast %70 : vector<1x32xf32> to vector<8x32xf32>
    %72 = arith.addf %69, %71 : vector<8x32xf32>
    %c0_43 = arith.constant 0 : index
    %c0_44 = arith.constant 0 : index
    %c0_45 = arith.constant 0 : index
    %73 = vector.load %arg15[%c0_43, %c0_44, %c0_45] : memref<1x8x32xf32, #tpu.memory_space<vmem>>, vector<1x8x32xf32>
    %74 = vector.shape_cast %73 : vector<1x8x32xf32> to vector<8x32xf32>
    %75 = vector.shape_cast %72 : vector<8x32xf32> to vector<1x8x32xf32>
    tpu.vector_store %arg15[%c0_43, %c0_44, %c0_45], %75 {strides = array<i32>} : memref<1x8x32xf32, #tpu.memory_space<vmem>>, vector<1x8x32xf32>,
    %c0_46 = arith.constant 0 : index
    %c0_47 = arith.constant 0 : index
    %76 = vector.load %arg9[%c0_46, %c0_47] : memref<32x16xf32, #tpu.memory_space<vmem>>, vector<32x16xf32>
    %cst_48 = arith.constant dense<0.000000e+00> : vector<8x16xf32>
    %77 = tpu.matmul %72, %76, %cst_48 {dimension_numbers = #tpu.dot_dimension_numbers<[1], [0], [0], [1], [0, 0, 1, 1], [], []>} : vector<8x32xf32>, vector<32x16xf32>, vector<8x16xf32> -> vector<8x16xf32>
    %c0_49 = arith.constant 0 : index
    %c0_50 = arith.constant 0 : index
    %78 = vector.load %arg10[%c0_49, %c0_50] : memref<1x16xf32, #tpu.memory_space<vmem>>, vector<1x16xf32>
    %79 = vector.broadcast %78 : vector<1x16xf32> to vector<8x16xf32>
    %80 = arith.addf %77, %79 : vector<8x16xf32>
    %cst_51 = arith.constant 0.000000e+00 : f32
    %81 = vector.broadcast %cst_51 : f32 to vector<8x16xf32>
    %82 = arith.maximumf %80, %81 : vector<8x16xf32>
    %c0_52 = arith.constant 0 : index
    %c0_53 = arith.constant 0 : index
    %83 = vector.load %arg11[%c0_52, %c0_53] : memref<1x16xf32, #tpu.memory_space<vmem>>, vector<1x16xf32>
    %cst_54 = arith.constant dense<0.000000e+00> : vector<1x8xf32>
    %84 = tpu.matmul %83, %82, %cst_54 {dimension_numbers = #tpu.dot_dimension_numbers<[1], [1], [0], [0], [0, 0, 1, 0], [], []>} : vector<1x16xf32>, vector<8x16xf32>, vector<1x8xf32> -> vector<1x8xf32>
    %c0_55 = arith.constant 0 : index
    %c0_56 = arith.constant 0 : index
    %85 = vector.load %arg12[%c0_55, %c0_56] : memref<1x1xf32, #tpu.memory_space<vmem>>, vector<1x1xf32>
    %86 = vector.broadcast %85 : vector<1x1xf32> to vector<1x8xf32>
    %87 = arith.addf %84, %86 : vector<1x8xf32>
    %cst_57 = arith.constant -1.000000e+09 : f32
    %88 = vector.broadcast %cst_57 : f32 to vector<1x8xf32>
    %89 = arith.mulf %3, %88 : vector<1x8xf32>
    %90 = arith.addf %87, %89 : vector<1x8xf32>
    %cst_58 = arith.constant dense<0xFF800000> : vector<1xf32>
    %91 = vector.multi_reduction <maximumf>, %90, %cst_58 [1] : vector<1x8xf32> to vector<1xf32>
    %92 = vector.shape_cast %91 : vector<1xf32> to vector<1x1xf32>
    %93 = vector.broadcast %92 : vector<1x1xf32> to vector<1x8xf32>
    %94 = arith.subf %90, %93 : vector<1x8xf32>
    %95 = math.exp %94 : vector<1x8xf32>
    %cst_59 = arith.constant dense<0.000000e+00> : vector<1xf32>
    %96 = vector.multi_reduction <add>, %95, %cst_59 [1] : vector<1x8xf32> to vector<1xf32>
    %97 = vector.shape_cast %96 : vector<1xf32> to vector<1x1xf32>
    %98 = tpu.reciprocal %97 {approx = true} : vector<1x1xf32> -> vector<1x1xf32>
    %99 = vector.broadcast %98 : vector<1x1xf32> to vector<1x8xf32>
    %100 = arith.mulf %95, %99 : vector<1x8xf32>
    %cst_60 = arith.constant dense<0.000000e+00> : vector<1x32xf32>
    %101 = tpu.matmul %100, %72, %cst_60 {dimension_numbers = #tpu.dot_dimension_numbers<[1], [0], [0], [1], [0, 0, 1, 1], [], []>} : vector<1x8xf32>, vector<8x32xf32>, vector<1x32xf32> -> vector<1x32xf32>
    %c0_61 = arith.constant 0 : index
    %c0_62 = arith.constant 0 : index
    %102 = vector.load %arg13[%c0_61, %c0_62] : memref<32x32xf32, #tpu.memory_space<vmem>>, vector<32x32xf32>
    %cst_63 = arith.constant dense<0.000000e+00> : vector<1x32xf32>
    %103 = tpu.matmul %101, %102, %cst_63 {dimension_numbers = #tpu.dot_dimension_numbers<[1], [0], [0], [1], [0, 0, 1, 1], [], []>} : vector<1x32xf32>, vector<32x32xf32>, vector<1x32xf32> -> vector<1x32xf32>
    %c0_64 = arith.constant 0 : index
    %c0_65 = arith.constant 0 : index
    %104 = vector.load %arg14[%c0_64, %c0_65] : memref<1x32xf32, #tpu.memory_space<vmem>>, vector<1x32xf32>
    %105 = arith.addf %103, %104 : vector<1x32xf32>
    %c0_66 = arith.constant 0 : index
    %c0_67 = arith.constant 0 : index
    %c0_68 = arith.constant 0 : index
    %106 = vector.load %arg16[%c0_66, %c0_67, %c0_68] : memref<1x1x32xf32, #tpu.memory_space<vmem>>, vector<1x1x32xf32>
    %107 = vector.shape_cast %106 : vector<1x1x32xf32> to vector<1x32xf32>
    %108 = vector.shape_cast %105 : vector<1x32xf32> to vector<1x1x32xf32>
    tpu.vector_store %arg16[%c0_66, %c0_67, %c0_68], %108 {strides = array<i32>} : memref<1x1x32xf32, #tpu.memory_space<vmem>>, vector<1x1x32xf32>,
    return
  }
  func.func @transform_0(%arg0: i32) -> (i32, i32, i32) {
    %c0_i32 = arith.constant 0 : i32
    %c0_i32_0 = arith.constant 0 : i32
    %c0_i32_1 = arith.constant 0 : i32
    return %arg0, %c0_i32, %c0_i32_0 : i32, i32, i32
  }
  func.func @transform_1(%arg0: i32) -> (i32, i32, i32) {
    %c0_i32 = arith.constant 0 : i32
    %c0_i32_0 = arith.constant 0 : i32
    %c0_i32_1 = arith.constant 0 : i32
    return %arg0, %c0_i32, %c0_i32_0 : i32, i32, i32
  }
  func.func @transform_2(%arg0: i32) -> (i32, i32, i32) {
    %c0_i32 = arith.constant 0 : i32
    %c0_i32_0 = arith.constant 0 : i32
    %c0_i32_1 = arith.constant 0 : i32
    %c0_i32_2 = arith.constant 0 : i32
    return %c0_i32, %c0_i32_0, %c0_i32_1 : i32, i32, i32
  }
  func.func @transform_3(%arg0: i32) -> (i32, i32, i32) {
    %c0_i32 = arith.constant 0 : i32
    %c0_i32_0 = arith.constant 0 : i32
    %c0_i32_1 = arith.constant 0 : i32
    %c0_i32_2 = arith.constant 0 : i32
    return %c0_i32, %c0_i32_0, %c0_i32_1 : i32, i32, i32
  }
  func.func @transform_4(%arg0: i32) -> (i32, i32) {
    %c0_i32 = arith.constant 0 : i32
    %c0_i32_0 = arith.constant 0 : i32
    %c0_i32_1 = arith.constant 0 : i32
    return %c0_i32, %c0_i32_0 : i32, i32
  }
  func.func @transform_5(%arg0: i32) -> (i32, i32) {
    %c0_i32 = arith.constant 0 : i32
    %c0_i32_0 = arith.constant 0 : i32
    %c0_i32_1 = arith.constant 0 : i32
    return %c0_i32, %c0_i32_0 : i32, i32
  }
  func.func @transform_6(%arg0: i32) -> (i32, i32) {
    %c0_i32 = arith.constant 0 : i32
    %c0_i32_0 = arith.constant 0 : i32
    %c0_i32_1 = arith.constant 0 : i32
    return %c0_i32, %c0_i32_0 : i32, i32
  }
  func.func @transform_7(%arg0: i32) -> (i32, i32) {
    %c0_i32 = arith.constant 0 : i32
    %c0_i32_0 = arith.constant 0 : i32
    %c0_i32_1 = arith.constant 0 : i32
    return %c0_i32, %c0_i32_0 : i32, i32
  }
  func.func @transform_8(%arg0: i32) -> (i32, i32) {
    %c0_i32 = arith.constant 0 : i32
    %c0_i32_0 = arith.constant 0 : i32
    %c0_i32_1 = arith.constant 0 : i32
    return %c0_i32, %c0_i32_0 : i32, i32
  }
  func.func @transform_9(%arg0: i32) -> (i32, i32) {
    %c0_i32 = arith.constant 0 : i32
    %c0_i32_0 = arith.constant 0 : i32
    %c0_i32_1 = arith.constant 0 : i32
    return %c0_i32, %c0_i32_0 : i32, i32
  }
  func.func @transform_10(%arg0: i32) -> (i32, i32) {
    %c0_i32 = arith.constant 0 : i32
    %c0_i32_0 = arith.constant 0 : i32
    %c0_i32_1 = arith.constant 0 : i32
    return %c0_i32, %c0_i32_0 : i32, i32
  }
  func.func @transform_11(%arg0: i32) -> (i32, i32) {
    %c0_i32 = arith.constant 0 : i32
    %c0_i32_0 = arith.constant 0 : i32
    %c0_i32_1 = arith.constant 0 : i32
    return %c0_i32, %c0_i32_0 : i32, i32
  }
  func.func @transform_12(%arg0: i32) -> (i32, i32) {
    %c0_i32 = arith.constant 0 : i32
    %c0_i32_0 = arith.constant 0 : i32
    %c0_i32_1 = arith.constant 0 : i32
    return %c0_i32, %c0_i32_0 : i32, i32
  }
  func.func @transform_13(%arg0: i32) -> (i32, i32) {
    %c0_i32 = arith.constant 0 : i32
    %c0_i32_0 = arith.constant 0 : i32
    %c0_i32_1 = arith.constant 0 : i32
    return %c0_i32, %c0_i32_0 : i32, i32
  }
  func.func @transform_14(%arg0: i32) -> (i32, i32, i32) {
    %c0_i32 = arith.constant 0 : i32
    %c0_i32_0 = arith.constant 0 : i32
    %c0_i32_1 = arith.constant 0 : i32
    return %arg0, %c0_i32, %c0_i32_0 : i32, i32, i32
  }
  func.func @transform_15(%arg0: i32) -> (i32, i32, i32) {
    %c0_i32 = arith.constant 0 : i32
    %c0_i32_0 = arith.constant 0 : i32
    %c0_i32_1 = arith.constant 0 : i32
    return %arg0, %c0_i32, %c0_i32_0 : i32, i32, i32
  }
}

module attributes {stable_mosaic.version = 11 : i64} {
  func.func @_gat_kernel(%arg0: i32, %arg1: memref<1x8x32xf32, #tpu.memory_space<vmem>>, %arg2: memref<1x8x8xf32, #tpu.memory_space<vmem>>, %arg3: memref<2x32x16xf32, #tpu.memory_space<vmem>>, %arg4: memref<2x16x1xf32, #tpu.memory_space<vmem>>, %arg5: memref<2x16x1xf32, #tpu.memory_space<vmem>>, %arg6: memref<2x16x32xf32, #tpu.memory_space<vmem>>, %arg7: memref<32x1xf32, #tpu.memory_space<vmem>>, %arg8: memref<32x1xf32, #tpu.memory_space<vmem>>, %arg9: memref<1x8x32xf32, #tpu.memory_space<vmem>>) attributes {dimension_semantics = [#tpu.dimension_semantics<parallel>], iteration_bounds = array<i64: 2>, scalar_prefetch = 0 : i64, scratch_operands = 0 : i64, tpu.core_type = #tpu.core_type<tc>, window_params = [{transform_indices = @transform_0, window_bounds = array<i64: 1, 8, 32>}, {transform_indices = @transform_1, window_bounds = array<i64: 1, 8, 8>}, {pipeline_mode = #tpu.pipeline_mode<synchronous>, transform_indices = @transform_2, window_bounds = array<i64: 2, 32, 16>}, {pipeline_mode = #tpu.pipeline_mode<synchronous>, transform_indices = @transform_3, window_bounds = array<i64: 2, 16, 1>}, {pipeline_mode = #tpu.pipeline_mode<synchronous>, transform_indices = @transform_4, window_bounds = array<i64: 2, 16, 1>}, {pipeline_mode = #tpu.pipeline_mode<synchronous>, transform_indices = @transform_5, window_bounds = array<i64: 2, 16, 32>}, {pipeline_mode = #tpu.pipeline_mode<synchronous>, transform_indices = @transform_6, window_bounds = array<i64: 32, 1>}, {pipeline_mode = #tpu.pipeline_mode<synchronous>, transform_indices = @transform_7, window_bounds = array<i64: 32, 1>}, {transform_indices = @transform_8, window_bounds = array<i64: 1, 8, 32>}]} {
    %c0 = arith.constant 0 : index
    %c0_0 = arith.constant 0 : index
    %c0_1 = arith.constant 0 : index
    %0 = vector.load %arg1[%c0, %c0_0, %c0_1] : memref<1x8x32xf32, #tpu.memory_space<vmem>>, vector<1x8x32xf32>
    %1 = vector.shape_cast %0 : vector<1x8x32xf32> to vector<8x32xf32>
    %c0_2 = arith.constant 0 : index
    %c0_3 = arith.constant 0 : index
    %c0_4 = arith.constant 0 : index
    %2 = vector.load %arg2[%c0_2, %c0_3, %c0_4] : memref<1x8x8xf32, #tpu.memory_space<vmem>>, vector<1x8x8xf32>
    %3 = vector.shape_cast %2 : vector<1x8x8xf32> to vector<8x8xf32>
    %c0_5 = arith.constant 0 : index
    %c0_6 = arith.constant 0 : index
    %c0_7 = arith.constant 0 : index
    %4 = vector.load %arg3[%c0_5, %c0_6, %c0_7] : memref<2x32x16xf32, #tpu.memory_space<vmem>>, vector<1x32x16xf32>
    %5 = vector.shape_cast %4 : vector<1x32x16xf32> to vector<32x16xf32>
    %cst = arith.constant dense<0.000000e+00> : vector<8x16xf32>
    %6 = tpu.matmul %1, %5, %cst {dimension_numbers = #tpu.dot_dimension_numbers<[1], [0], [0], [1], [0, 0, 1, 1], [], []>} : vector<8x32xf32>, vector<32x16xf32>, vector<8x16xf32> -> vector<8x16xf32>
    %c0_8 = arith.constant 0 : index
    %c0_9 = arith.constant 0 : index
    %c0_10 = arith.constant 0 : index
    %7 = vector.load %arg4[%c0_8, %c0_9, %c0_10] : memref<2x16x1xf32, #tpu.memory_space<vmem>>, vector<1x16x1xf32>
    %8 = vector.shape_cast %7 : vector<1x16x1xf32> to vector<16x1xf32>
    %c0_11 = arith.constant 0 : index
    %c0_12 = arith.constant 0 : index
    %c0_13 = arith.constant 0 : index
    %9 = vector.load %arg5[%c0_11, %c0_12, %c0_13] : memref<2x16x1xf32, #tpu.memory_space<vmem>>, vector<1x16x1xf32>
    %10 = vector.shape_cast %9 : vector<1x16x1xf32> to vector<16x1xf32>
    %cst_14 = arith.constant dense<0.000000e+00> : vector<8x1xf32>
    %11 = tpu.matmul %6, %8, %cst_14 {dimension_numbers = #tpu.dot_dimension_numbers<[1], [0], [0], [1], [0, 0, 1, 1], [], []>} : vector<8x16xf32>, vector<16x1xf32>, vector<8x1xf32> -> vector<8x1xf32>
    %cst_15 = arith.constant dense<0.000000e+00> : vector<1x8xf32>
    %12 = tpu.matmul %10, %6, %cst_15 {dimension_numbers = #tpu.dot_dimension_numbers<[0], [1], [1], [0], [0, 1, 1, 0], [], []>} : vector<16x1xf32>, vector<8x16xf32>, vector<1x8xf32> -> vector<1x8xf32>
    %13 = vector.broadcast %11 : vector<8x1xf32> to vector<8x8xf32>
    %14 = vector.broadcast %12 : vector<1x8xf32> to vector<8x8xf32>
    %15 = arith.addf %13, %14 : vector<8x8xf32>
    %cst_16 = arith.constant 0.000000e+00 : f32
    %16 = vector.broadcast %cst_16 : f32 to vector<8x8xf32>
    %17 = arith.cmpf ogt, %15, %16 : vector<8x8xf32>
    %cst_17 = arith.constant 2.000000e-01 : f32
    %18 = vector.broadcast %cst_17 : f32 to vector<8x8xf32>
    %19 = arith.mulf %18, %15 : vector<8x8xf32>
    %20 = arith.select %17, %15, %19 : vector<8x8xi1>, vector<8x8xf32>
    %cst_18 = arith.constant 0.000000e+00 : f32
    %21 = vector.broadcast %cst_18 : f32 to vector<8x8xf32>
    %22 = arith.cmpf ogt, %3, %21 : vector<8x8xf32>
    %cst_19 = arith.constant -9.000000e+15 : f32
    %23 = vector.broadcast %cst_19 : f32 to vector<8x8xf32>
    %24 = arith.select %22, %20, %23 : vector<8x8xi1>, vector<8x8xf32>
    %cst_20 = arith.constant dense<0xFF800000> : vector<8xf32>
    %25 = vector.multi_reduction <maximumf>, %24, %cst_20 [1] : vector<8x8xf32> to vector<8xf32>
    %26 = vector.shape_cast %25 : vector<8xf32> to vector<8x1xf32>
    %27 = vector.broadcast %26 : vector<8x1xf32> to vector<8x8xf32>
    %28 = arith.subf %24, %27 : vector<8x8xf32>
    %29 = math.exp %28 : vector<8x8xf32>
    %cst_21 = arith.constant dense<0.000000e+00> : vector<8xf32>
    %30 = vector.multi_reduction <add>, %29, %cst_21 [1] : vector<8x8xf32> to vector<8xf32>
    %31 = vector.shape_cast %30 : vector<8xf32> to vector<8x1xf32>
    %32 = tpu.reciprocal %31 {approx = true} : vector<8x1xf32> -> vector<8x1xf32>
    %33 = vector.broadcast %32 : vector<8x1xf32> to vector<8x8xf32>
    %34 = arith.mulf %29, %33 : vector<8x8xf32>
    %cst_22 = arith.constant dense<0.000000e+00> : vector<8x16xf32>
    %35 = tpu.matmul %34, %6, %cst_22 {dimension_numbers = #tpu.dot_dimension_numbers<[1], [0], [0], [1], [0, 0, 1, 1], [], []>} : vector<8x8xf32>, vector<8x16xf32>, vector<8x16xf32> -> vector<8x16xf32>
    %cst_23 = arith.constant 0.000000e+00 : f32
    %36 = vector.broadcast %cst_23 : f32 to vector<8x16xf32>
    %37 = arith.cmpf ogt, %35, %36 : vector<8x16xf32>
    %cst_24 = arith.constant 0.000000e+00 : f32
    %38 = vector.broadcast %cst_24 : f32 to vector<8x16xf32>
    %39 = arith.minimumf %35, %38 : vector<8x16xf32>
    %40 = math.exp %39 : vector<8x16xf32>
    %cst_25 = arith.constant 1.000000e+00 : f32
    %41 = vector.broadcast %cst_25 : f32 to vector<8x16xf32>
    %42 = arith.subf %40, %41 : vector<8x16xf32>
    %43 = arith.select %37, %35, %42 : vector<8x16xi1>, vector<8x16xf32>
    %c0_26 = arith.constant 0 : index
    %c0_27 = arith.constant 0 : index
    %c0_28 = arith.constant 0 : index
    %44 = vector.load %arg6[%c0_26, %c0_27, %c0_28] : memref<2x16x32xf32, #tpu.memory_space<vmem>>, vector<1x16x32xf32>
    %45 = vector.shape_cast %44 : vector<1x16x32xf32> to vector<16x32xf32>
    %cst_29 = arith.constant dense<0.000000e+00> : vector<8x32xf32>
    %46 = tpu.matmul %43, %45, %cst_29 {dimension_numbers = #tpu.dot_dimension_numbers<[1], [0], [0], [1], [0, 0, 1, 1], [], []>} : vector<8x16xf32>, vector<16x32xf32>, vector<8x32xf32> -> vector<8x32xf32>
    %c1 = arith.constant 1 : index
    %c0_30 = arith.constant 0 : index
    %c0_31 = arith.constant 0 : index
    %47 = vector.load %arg3[%c1, %c0_30, %c0_31] : memref<2x32x16xf32, #tpu.memory_space<vmem>>, vector<1x32x16xf32>
    %48 = vector.shape_cast %47 : vector<1x32x16xf32> to vector<32x16xf32>
    %cst_32 = arith.constant dense<0.000000e+00> : vector<8x16xf32>
    %49 = tpu.matmul %1, %48, %cst_32 {dimension_numbers = #tpu.dot_dimension_numbers<[1], [0], [0], [1], [0, 0, 1, 1], [], []>} : vector<8x32xf32>, vector<32x16xf32>, vector<8x16xf32> -> vector<8x16xf32>
    %c1_33 = arith.constant 1 : index
    %c0_34 = arith.constant 0 : index
    %c0_35 = arith.constant 0 : index
    %50 = vector.load %arg4[%c1_33, %c0_34, %c0_35] : memref<2x16x1xf32, #tpu.memory_space<vmem>>, vector<1x16x1xf32>
    %51 = vector.shape_cast %50 : vector<1x16x1xf32> to vector<16x1xf32>
    %c1_36 = arith.constant 1 : index
    %c0_37 = arith.constant 0 : index
    %c0_38 = arith.constant 0 : index
    %52 = vector.load %arg5[%c1_36, %c0_37, %c0_38] : memref<2x16x1xf32, #tpu.memory_space<vmem>>, vector<1x16x1xf32>
    %53 = vector.shape_cast %52 : vector<1x16x1xf32> to vector<16x1xf32>
    %cst_39 = arith.constant dense<0.000000e+00> : vector<8x1xf32>
    %54 = tpu.matmul %49, %51, %cst_39 {dimension_numbers = #tpu.dot_dimension_numbers<[1], [0], [0], [1], [0, 0, 1, 1], [], []>} : vector<8x16xf32>, vector<16x1xf32>, vector<8x1xf32> -> vector<8x1xf32>
    %cst_40 = arith.constant dense<0.000000e+00> : vector<1x8xf32>
    %55 = tpu.matmul %53, %49, %cst_40 {dimension_numbers = #tpu.dot_dimension_numbers<[0], [1], [1], [0], [0, 1, 1, 0], [], []>} : vector<16x1xf32>, vector<8x16xf32>, vector<1x8xf32> -> vector<1x8xf32>
    %56 = vector.broadcast %54 : vector<8x1xf32> to vector<8x8xf32>
    %57 = vector.broadcast %55 : vector<1x8xf32> to vector<8x8xf32>
    %58 = arith.addf %56, %57 : vector<8x8xf32>
    %cst_41 = arith.constant 0.000000e+00 : f32
    %59 = vector.broadcast %cst_41 : f32 to vector<8x8xf32>
    %60 = arith.cmpf ogt, %58, %59 : vector<8x8xf32>
    %cst_42 = arith.constant 2.000000e-01 : f32
    %61 = vector.broadcast %cst_42 : f32 to vector<8x8xf32>
    %62 = arith.mulf %61, %58 : vector<8x8xf32>
    %63 = arith.select %60, %58, %62 : vector<8x8xi1>, vector<8x8xf32>
    %cst_43 = arith.constant 0.000000e+00 : f32
    %64 = vector.broadcast %cst_43 : f32 to vector<8x8xf32>
    %65 = arith.cmpf ogt, %3, %64 : vector<8x8xf32>
    %cst_44 = arith.constant -9.000000e+15 : f32
    %66 = vector.broadcast %cst_44 : f32 to vector<8x8xf32>
    %67 = arith.select %65, %63, %66 : vector<8x8xi1>, vector<8x8xf32>
    %cst_45 = arith.constant dense<0xFF800000> : vector<8xf32>
    %68 = vector.multi_reduction <maximumf>, %67, %cst_45 [1] : vector<8x8xf32> to vector<8xf32>
    %69 = vector.shape_cast %68 : vector<8xf32> to vector<8x1xf32>
    %70 = vector.broadcast %69 : vector<8x1xf32> to vector<8x8xf32>
    %71 = arith.subf %67, %70 : vector<8x8xf32>
    %72 = math.exp %71 : vector<8x8xf32>
    %cst_46 = arith.constant dense<0.000000e+00> : vector<8xf32>
    %73 = vector.multi_reduction <add>, %72, %cst_46 [1] : vector<8x8xf32> to vector<8xf32>
    %74 = vector.shape_cast %73 : vector<8xf32> to vector<8x1xf32>
    %75 = tpu.reciprocal %74 {approx = true} : vector<8x1xf32> -> vector<8x1xf32>
    %76 = vector.broadcast %75 : vector<8x1xf32> to vector<8x8xf32>
    %77 = arith.mulf %72, %76 : vector<8x8xf32>
    %cst_47 = arith.constant dense<0.000000e+00> : vector<8x16xf32>
    %78 = tpu.matmul %77, %49, %cst_47 {dimension_numbers = #tpu.dot_dimension_numbers<[1], [0], [0], [1], [0, 0, 1, 1], [], []>} : vector<8x8xf32>, vector<8x16xf32>, vector<8x16xf32> -> vector<8x16xf32>
    %cst_48 = arith.constant 0.000000e+00 : f32
    %79 = vector.broadcast %cst_48 : f32 to vector<8x16xf32>
    %80 = arith.cmpf ogt, %78, %79 : vector<8x16xf32>
    %cst_49 = arith.constant 0.000000e+00 : f32
    %81 = vector.broadcast %cst_49 : f32 to vector<8x16xf32>
    %82 = arith.minimumf %78, %81 : vector<8x16xf32>
    %83 = math.exp %82 : vector<8x16xf32>
    %cst_50 = arith.constant 1.000000e+00 : f32
    %84 = vector.broadcast %cst_50 : f32 to vector<8x16xf32>
    %85 = arith.subf %83, %84 : vector<8x16xf32>
    %86 = arith.select %80, %78, %85 : vector<8x16xi1>, vector<8x16xf32>
    %c1_51 = arith.constant 1 : index
    %c0_52 = arith.constant 0 : index
    %c0_53 = arith.constant 0 : index
    %87 = vector.load %arg6[%c1_51, %c0_52, %c0_53] : memref<2x16x32xf32, #tpu.memory_space<vmem>>, vector<1x16x32xf32>
    %88 = vector.shape_cast %87 : vector<1x16x32xf32> to vector<16x32xf32>
    %cst_54 = arith.constant dense<0.000000e+00> : vector<8x32xf32>
    %89 = tpu.matmul %86, %88, %cst_54 {dimension_numbers = #tpu.dot_dimension_numbers<[1], [0], [0], [1], [0, 0, 1, 1], [], []>} : vector<8x16xf32>, vector<16x32xf32>, vector<8x32xf32> -> vector<8x32xf32>
    %90 = arith.addf %46, %89 : vector<8x32xf32>
    %c0_55 = arith.constant 0 : index
    %c0_56 = arith.constant 0 : index
    %91 = vector.load %arg7[%c0_55, %c0_56] : memref<32x1xf32, #tpu.memory_space<vmem>>, vector<32x1xf32>
    %c0_57 = arith.constant 0 : index
    %c0_58 = arith.constant 0 : index
    %92 = vector.load %arg8[%c0_57, %c0_58] : memref<32x1xf32, #tpu.memory_space<vmem>>, vector<32x1xf32>
    %cst_59 = arith.constant dense<0.000000e+00> : vector<8x1xf32>
    %93 = tpu.matmul %90, %91, %cst_59 {dimension_numbers = #tpu.dot_dimension_numbers<[1], [0], [0], [1], [0, 0, 1, 1], [], []>} : vector<8x32xf32>, vector<32x1xf32>, vector<8x1xf32> -> vector<8x1xf32>
    %cst_60 = arith.constant dense<0.000000e+00> : vector<1x8xf32>
    %94 = tpu.matmul %92, %90, %cst_60 {dimension_numbers = #tpu.dot_dimension_numbers<[0], [1], [1], [0], [0, 1, 1, 0], [], []>} : vector<32x1xf32>, vector<8x32xf32>, vector<1x8xf32> -> vector<1x8xf32>
    %95 = vector.broadcast %93 : vector<8x1xf32> to vector<8x8xf32>
    %96 = vector.broadcast %94 : vector<1x8xf32> to vector<8x8xf32>
    %97 = arith.addf %95, %96 : vector<8x8xf32>
    %cst_61 = arith.constant 0.000000e+00 : f32
    %98 = vector.broadcast %cst_61 : f32 to vector<8x8xf32>
    %99 = arith.cmpf ogt, %97, %98 : vector<8x8xf32>
    %cst_62 = arith.constant 2.000000e-01 : f32
    %100 = vector.broadcast %cst_62 : f32 to vector<8x8xf32>
    %101 = arith.mulf %100, %97 : vector<8x8xf32>
    %102 = arith.select %99, %97, %101 : vector<8x8xi1>, vector<8x8xf32>
    %cst_63 = arith.constant 0.000000e+00 : f32
    %103 = vector.broadcast %cst_63 : f32 to vector<8x8xf32>
    %104 = arith.cmpf ogt, %3, %103 : vector<8x8xf32>
    %cst_64 = arith.constant -9.000000e+15 : f32
    %105 = vector.broadcast %cst_64 : f32 to vector<8x8xf32>
    %106 = arith.select %104, %102, %105 : vector<8x8xi1>, vector<8x8xf32>
    %cst_65 = arith.constant dense<0xFF800000> : vector<8xf32>
    %107 = vector.multi_reduction <maximumf>, %106, %cst_65 [1] : vector<8x8xf32> to vector<8xf32>
    %108 = vector.shape_cast %107 : vector<8xf32> to vector<8x1xf32>
    %109 = vector.broadcast %108 : vector<8x1xf32> to vector<8x8xf32>
    %110 = arith.subf %106, %109 : vector<8x8xf32>
    %111 = math.exp %110 : vector<8x8xf32>
    %cst_66 = arith.constant dense<0.000000e+00> : vector<8xf32>
    %112 = vector.multi_reduction <add>, %111, %cst_66 [1] : vector<8x8xf32> to vector<8xf32>
    %113 = vector.shape_cast %112 : vector<8xf32> to vector<8x1xf32>
    %114 = tpu.reciprocal %113 {approx = true} : vector<8x1xf32> -> vector<8x1xf32>
    %115 = vector.broadcast %114 : vector<8x1xf32> to vector<8x8xf32>
    %116 = arith.mulf %111, %115 : vector<8x8xf32>
    %cst_67 = arith.constant dense<0.000000e+00> : vector<8x32xf32>
    %117 = tpu.matmul %116, %90, %cst_67 {dimension_numbers = #tpu.dot_dimension_numbers<[1], [0], [0], [1], [0, 0, 1, 1], [], []>} : vector<8x8xf32>, vector<8x32xf32>, vector<8x32xf32> -> vector<8x32xf32>
    %cst_68 = arith.constant 0.000000e+00 : f32
    %118 = vector.broadcast %cst_68 : f32 to vector<8x32xf32>
    %119 = arith.cmpf ogt, %117, %118 : vector<8x32xf32>
    %cst_69 = arith.constant 0.000000e+00 : f32
    %120 = vector.broadcast %cst_69 : f32 to vector<8x32xf32>
    %121 = arith.minimumf %117, %120 : vector<8x32xf32>
    %122 = math.exp %121 : vector<8x32xf32>
    %cst_70 = arith.constant 1.000000e+00 : f32
    %123 = vector.broadcast %cst_70 : f32 to vector<8x32xf32>
    %124 = arith.subf %122, %123 : vector<8x32xf32>
    %125 = arith.select %119, %117, %124 : vector<8x32xi1>, vector<8x32xf32>
    %126 = math.absf %1 : vector<8x32xf32>
    %cst_71 = arith.constant dense<0.000000e+00> : vector<8xf32>
    %127 = vector.multi_reduction <add>, %126, %cst_71 [1] : vector<8x32xf32> to vector<8xf32>
    %128 = vector.shape_cast %127 : vector<8xf32> to vector<8x1xf32>
    %cst_72 = arith.constant 0.000000e+00 : f32
    %129 = vector.broadcast %cst_72 : f32 to vector<8x1xf32>
    %130 = arith.cmpf oeq, %128, %129 : vector<8x1xf32>
    %cst_73 = arith.constant 0.000000e+00 : f32
    %131 = vector.shape_cast %130 : vector<8x1xi1> to vector<8x1xi1>
    %132 = vector.broadcast %131 : vector<8x1xi1> to vector<8x32xi1>
    %133 = vector.broadcast %cst_73 : f32 to vector<8x32xf32>
    %134 = arith.select %132, %133, %125 : vector<8x32xi1>, vector<8x32xf32>
    %c0_74 = arith.constant 0 : index
    %c0_75 = arith.constant 0 : index
    %c0_76 = arith.constant 0 : index
    %135 = vector.load %arg9[%c0_74, %c0_75, %c0_76] : memref<1x8x32xf32, #tpu.memory_space<vmem>>, vector<1x8x32xf32>
    %136 = vector.shape_cast %135 : vector<1x8x32xf32> to vector<8x32xf32>
    %137 = vector.shape_cast %134 : vector<8x32xf32> to vector<1x8x32xf32>
    tpu.vector_store %arg9[%c0_74, %c0_75, %c0_76], %137 {strides = array<i32>} : memref<1x8x32xf32, #tpu.memory_space<vmem>>, vector<1x8x32xf32>,
    return
  }
  func.func @transform_0(%arg0: i32) -> (i32, i32, i32) {
    %c0_i32 = arith.constant 0 : i32
    %c0_i32_0 = arith.constant 0 : i32
    %c0_i32_1 = arith.constant 0 : i32
    return %arg0, %c0_i32, %c0_i32_0 : i32, i32, i32
  }
  func.func @transform_1(%arg0: i32) -> (i32, i32, i32) {
    %c0_i32 = arith.constant 0 : i32
    %c0_i32_0 = arith.constant 0 : i32
    %c0_i32_1 = arith.constant 0 : i32
    return %arg0, %c0_i32, %c0_i32_0 : i32, i32, i32
  }
  func.func @transform_2(%arg0: i32) -> (i32, i32, i32) {
    %c0_i32 = arith.constant 0 : i32
    %c0_i32_0 = arith.constant 0 : i32
    %c0_i32_1 = arith.constant 0 : i32
    %c0_i32_2 = arith.constant 0 : i32
    return %c0_i32, %c0_i32_0, %c0_i32_1 : i32, i32, i32
  }
  func.func @transform_3(%arg0: i32) -> (i32, i32, i32) {
    %c0_i32 = arith.constant 0 : i32
    %c0_i32_0 = arith.constant 0 : i32
    %c0_i32_1 = arith.constant 0 : i32
    %c0_i32_2 = arith.constant 0 : i32
    return %c0_i32, %c0_i32_0, %c0_i32_1 : i32, i32, i32
  }
  func.func @transform_4(%arg0: i32) -> (i32, i32, i32) {
    %c0_i32 = arith.constant 0 : i32
    %c0_i32_0 = arith.constant 0 : i32
    %c0_i32_1 = arith.constant 0 : i32
    %c0_i32_2 = arith.constant 0 : i32
    return %c0_i32, %c0_i32_0, %c0_i32_1 : i32, i32, i32
  }
  func.func @transform_5(%arg0: i32) -> (i32, i32, i32) {
    %c0_i32 = arith.constant 0 : i32
    %c0_i32_0 = arith.constant 0 : i32
    %c0_i32_1 = arith.constant 0 : i32
    %c0_i32_2 = arith.constant 0 : i32
    return %c0_i32, %c0_i32_0, %c0_i32_1 : i32, i32, i32
  }
  func.func @transform_6(%arg0: i32) -> (i32, i32) {
    %c0_i32 = arith.constant 0 : i32
    %c0_i32_0 = arith.constant 0 : i32
    %c0_i32_1 = arith.constant 0 : i32
    return %c0_i32, %c0_i32_0 : i32, i32
  }
  func.func @transform_7(%arg0: i32) -> (i32, i32) {
    %c0_i32 = arith.constant 0 : i32
    %c0_i32_0 = arith.constant 0 : i32
    %c0_i32_1 = arith.constant 0 : i32
    return %c0_i32, %c0_i32_0 : i32, i32
  }
  func.func @transform_8(%arg0: i32) -> (i32, i32, i32) {
    %c0_i32 = arith.constant 0 : i32
    %c0_i32_0 = arith.constant 0 : i32
    %c0_i32_1 = arith.constant 0 : i32
    return %arg0, %c0_i32, %c0_i32_0 : i32, i32, i32
  }
}

module attributes {stable_mosaic.version = 11 : i64} {
  func.func @_sa_block_kernel(%arg0: i32, %arg1: memref<1x8x32xf32, #tpu.memory_space<vmem>>, %arg2: memref<1x1x8xf32, #tpu.memory_space<vmem>>, %arg3: memref<3x32x32xf32, #tpu.memory_space<vmem>>, %arg4: memref<3x1x32xf32, #tpu.memory_space<vmem>>, %arg5: memref<32x32xf32, #tpu.memory_space<vmem>>, %arg6: memref<1x32xf32, #tpu.memory_space<vmem>>, %arg7: memref<1x32xf32, #tpu.memory_space<vmem>>, %arg8: memref<1x32xf32, #tpu.memory_space<vmem>>, %arg9: memref<1x8x32xf32, #tpu.memory_space<vmem>>) attributes {dimension_semantics = [#tpu.dimension_semantics<parallel>], iteration_bounds = array<i64: 2>, scalar_prefetch = 0 : i64, scratch_operands = 0 : i64, tpu.core_type = #tpu.core_type<tc>, window_params = [{transform_indices = @transform_0, window_bounds = array<i64: 1, 8, 32>}, {transform_indices = @transform_1, window_bounds = array<i64: 1, 1, 8>}, {pipeline_mode = #tpu.pipeline_mode<synchronous>, transform_indices = @transform_2, window_bounds = array<i64: 3, 32, 32>}, {pipeline_mode = #tpu.pipeline_mode<synchronous>, transform_indices = @transform_3, window_bounds = array<i64: 3, 1, 32>}, {pipeline_mode = #tpu.pipeline_mode<synchronous>, transform_indices = @transform_4, window_bounds = array<i64: 32, 32>}, {pipeline_mode = #tpu.pipeline_mode<synchronous>, transform_indices = @transform_5, window_bounds = array<i64: 1, 32>}, {pipeline_mode = #tpu.pipeline_mode<synchronous>, transform_indices = @transform_6, window_bounds = array<i64: 1, 32>}, {pipeline_mode = #tpu.pipeline_mode<synchronous>, transform_indices = @transform_7, window_bounds = array<i64: 1, 32>}, {transform_indices = @transform_8, window_bounds = array<i64: 1, 8, 32>}]} {
    %c0 = arith.constant 0 : index
    %c0_0 = arith.constant 0 : index
    %c0_1 = arith.constant 0 : index
    %0 = vector.load %arg1[%c0, %c0_0, %c0_1] : memref<1x8x32xf32, #tpu.memory_space<vmem>>, vector<1x8x32xf32>
    %1 = vector.shape_cast %0 : vector<1x8x32xf32> to vector<8x32xf32>
    %c0_2 = arith.constant 0 : index
    %c0_3 = arith.constant 0 : index
    %c0_4 = arith.constant 0 : index
    %2 = vector.load %arg2[%c0_2, %c0_3, %c0_4] : memref<1x1x8xf32, #tpu.memory_space<vmem>>, vector<1x1x8xf32>
    %3 = vector.shape_cast %2 : vector<1x1x8xf32> to vector<1x8xf32>
    %c0_5 = arith.constant 0 : index
    %c0_6 = arith.constant 0 : index
    %c0_7 = arith.constant 0 : index
    %4 = vector.load %arg3[%c0_5, %c0_6, %c0_7] : memref<3x32x32xf32, #tpu.memory_space<vmem>>, vector<1x32x32xf32>
    %5 = vector.shape_cast %4 : vector<1x32x32xf32> to vector<32x32xf32>
    %cst = arith.constant dense<0.000000e+00> : vector<8x32xf32>
    %6 = tpu.matmul %1, %5, %cst {dimension_numbers = #tpu.dot_dimension_numbers<[1], [0], [0], [1], [0, 0, 1, 1], [], []>} : vector<8x32xf32>, vector<32x32xf32>, vector<8x32xf32> -> vector<8x32xf32>
    %c0_8 = arith.constant 0 : index
    %c0_9 = arith.constant 0 : index
    %c0_10 = arith.constant 0 : index
    %7 = vector.load %arg4[%c0_8, %c0_9, %c0_10] : memref<3x1x32xf32, #tpu.memory_space<vmem>>, vector<1x1x32xf32>
    %8 = vector.shape_cast %7 : vector<1x1x32xf32> to vector<1x32xf32>
    %9 = vector.broadcast %8 : vector<1x32xf32> to vector<8x32xf32>
    %10 = arith.addf %6, %9 : vector<8x32xf32>
    %c1 = arith.constant 1 : index
    %c0_11 = arith.constant 0 : index
    %c0_12 = arith.constant 0 : index
    %11 = vector.load %arg3[%c1, %c0_11, %c0_12] : memref<3x32x32xf32, #tpu.memory_space<vmem>>, vector<1x32x32xf32>
    %12 = vector.shape_cast %11 : vector<1x32x32xf32> to vector<32x32xf32>
    %cst_13 = arith.constant dense<0.000000e+00> : vector<8x32xf32>
    %13 = tpu.matmul %1, %12, %cst_13 {dimension_numbers = #tpu.dot_dimension_numbers<[1], [0], [0], [1], [0, 0, 1, 1], [], []>} : vector<8x32xf32>, vector<32x32xf32>, vector<8x32xf32> -> vector<8x32xf32>
    %c1_14 = arith.constant 1 : index
    %c0_15 = arith.constant 0 : index
    %c0_16 = arith.constant 0 : index
    %14 = vector.load %arg4[%c1_14, %c0_15, %c0_16] : memref<3x1x32xf32, #tpu.memory_space<vmem>>, vector<1x1x32xf32>
    %15 = vector.shape_cast %14 : vector<1x1x32xf32> to vector<1x32xf32>
    %16 = vector.broadcast %15 : vector<1x32xf32> to vector<8x32xf32>
    %17 = arith.addf %13, %16 : vector<8x32xf32>
    %c2 = arith.constant 2 : index
    %c0_17 = arith.constant 0 : index
    %c0_18 = arith.constant 0 : index
    %18 = vector.load %arg3[%c2, %c0_17, %c0_18] : memref<3x32x32xf32, #tpu.memory_space<vmem>>, vector<1x32x32xf32>
    %19 = vector.shape_cast %18 : vector<1x32x32xf32> to vector<32x32xf32>
    %cst_19 = arith.constant dense<0.000000e+00> : vector<8x32xf32>
    %20 = tpu.matmul %1, %19, %cst_19 {dimension_numbers = #tpu.dot_dimension_numbers<[1], [0], [0], [1], [0, 0, 1, 1], [], []>} : vector<8x32xf32>, vector<32x32xf32>, vector<8x32xf32> -> vector<8x32xf32>
    %c2_20 = arith.constant 2 : index
    %c0_21 = arith.constant 0 : index
    %c0_22 = arith.constant 0 : index
    %21 = vector.load %arg4[%c2_20, %c0_21, %c0_22] : memref<3x1x32xf32, #tpu.memory_space<vmem>>, vector<1x1x32xf32>
    %22 = vector.shape_cast %21 : vector<1x1x32xf32> to vector<1x32xf32>
    %23 = vector.broadcast %22 : vector<1x32xf32> to vector<8x32xf32>
    %24 = arith.addf %20, %23 : vector<8x32xf32>
    %cst_23 = arith.constant dense<0.000000e+00> : vector<8x8xf32>
    %25 = tpu.matmul %10, %17, %cst_23 {dimension_numbers = #tpu.dot_dimension_numbers<[1], [1], [0], [0], [0, 0, 1, 0], [], []>} : vector<8x32xf32>, vector<8x32xf32>, vector<8x8xf32> -> vector<8x8xf32>
    %cst_24 = arith.constant 0.176776692 : f32
    %26 = vector.broadcast %cst_24 : f32 to vector<8x8xf32>
    %27 = arith.mulf %25, %26 : vector<8x8xf32>
    %cst_25 = arith.constant -1.000000e+09 : f32
    %28 = vector.broadcast %cst_25 : f32 to vector<1x8xf32>
    %29 = arith.mulf %3, %28 : vector<1x8xf32>
    %30 = vector.broadcast %29 : vector<1x8xf32> to vector<8x8xf32>
    %31 = arith.addf %27, %30 : vector<8x8xf32>
    %cst_26 = arith.constant dense<0xFF800000> : vector<8xf32>
    %32 = vector.multi_reduction <maximumf>, %31, %cst_26 [1] : vector<8x8xf32> to vector<8xf32>
    %33 = vector.shape_cast %32 : vector<8xf32> to vector<8x1xf32>
    %34 = vector.broadcast %33 : vector<8x1xf32> to vector<8x8xf32>
    %35 = arith.subf %31, %34 : vector<8x8xf32>
    %36 = math.exp %35 : vector<8x8xf32>
    %cst_27 = arith.constant dense<0.000000e+00> : vector<8xf32>
    %37 = vector.multi_reduction <add>, %36, %cst_27 [1] : vector<8x8xf32> to vector<8xf32>
    %38 = vector.shape_cast %37 : vector<8xf32> to vector<8x1xf32>
    %39 = tpu.reciprocal %38 {approx = true} : vector<8x1xf32> -> vector<8x1xf32>
    %40 = vector.broadcast %39 : vector<8x1xf32> to vector<8x8xf32>
    %41 = arith.mulf %36, %40 : vector<8x8xf32>
    %cst_28 = arith.constant dense<0.000000e+00> : vector<8x32xf32>
    %42 = tpu.matmul %41, %24, %cst_28 {dimension_numbers = #tpu.dot_dimension_numbers<[1], [0], [0], [1], [0, 0, 1, 1], [], []>} : vector<8x8xf32>, vector<8x32xf32>, vector<8x32xf32> -> vector<8x32xf32>
    %c0_29 = arith.constant 0 : index
    %c0_30 = arith.constant 0 : index
    %43 = vector.load %arg5[%c0_29, %c0_30] : memref<32x32xf32, #tpu.memory_space<vmem>>, vector<32x32xf32>
    %cst_31 = arith.constant dense<0.000000e+00> : vector<8x32xf32>
    %44 = tpu.matmul %42, %43, %cst_31 {dimension_numbers = #tpu.dot_dimension_numbers<[1], [0], [0], [1], [0, 0, 1, 1], [], []>} : vector<8x32xf32>, vector<32x32xf32>, vector<8x32xf32> -> vector<8x32xf32>
    %c0_32 = arith.constant 0 : index
    %c0_33 = arith.constant 0 : index
    %45 = vector.load %arg6[%c0_32, %c0_33] : memref<1x32xf32, #tpu.memory_space<vmem>>, vector<1x32xf32>
    %46 = vector.broadcast %45 : vector<1x32xf32> to vector<8x32xf32>
    %47 = arith.addf %44, %46 : vector<8x32xf32>
    %48 = arith.addf %1, %47 : vector<8x32xf32>
    %cst_34 = arith.constant dense<0.000000e+00> : vector<8xf32>
    %49 = vector.multi_reduction <add>, %48, %cst_34 [1] : vector<8x32xf32> to vector<8xf32>
    %50 = vector.shape_cast %49 : vector<8xf32> to vector<8x1xf32>
    %cst_35 = arith.constant 3.200000e+01 : f32
    %51 = vector.broadcast %cst_35 : f32 to vector<8x1xf32>
    %52 = arith.divf %50, %51 : vector<8x1xf32>
    %53 = vector.broadcast %52 : vector<8x1xf32> to vector<8x32xf32>
    %54 = arith.subf %48, %53 : vector<8x32xf32>
    %55 = arith.mulf %54, %54 : vector<8x32xf32>
    %cst_36 = arith.constant dense<0.000000e+00> : vector<8xf32>
    %56 = vector.multi_reduction <add>, %55, %cst_36 [1] : vector<8x32xf32> to vector<8xf32>
    %57 = vector.shape_cast %56 : vector<8xf32> to vector<8x1xf32>
    %cst_37 = arith.constant 3.200000e+01 : f32
    %58 = vector.broadcast %cst_37 : f32 to vector<8x1xf32>
    %59 = arith.divf %57, %58 : vector<8x1xf32>
    %60 = vector.broadcast %52 : vector<8x1xf32> to vector<8x32xf32>
    %61 = arith.subf %48, %60 : vector<8x32xf32>
    %cst_38 = arith.constant 9.99999997E-7 : f32
    %62 = vector.broadcast %cst_38 : f32 to vector<8x1xf32>
    %63 = arith.addf %59, %62 : vector<8x1xf32>
    %64 = math.rsqrt %63 : vector<8x1xf32>
    %65 = vector.broadcast %64 : vector<8x1xf32> to vector<8x32xf32>
    %66 = arith.mulf %61, %65 : vector<8x32xf32>
    %c0_39 = arith.constant 0 : index
    %c0_40 = arith.constant 0 : index
    %67 = vector.load %arg7[%c0_39, %c0_40] : memref<1x32xf32, #tpu.memory_space<vmem>>, vector<1x32xf32>
    %68 = vector.broadcast %67 : vector<1x32xf32> to vector<8x32xf32>
    %69 = arith.mulf %66, %68 : vector<8x32xf32>
    %c0_41 = arith.constant 0 : index
    %c0_42 = arith.constant 0 : index
    %70 = vector.load %arg8[%c0_41, %c0_42] : memref<1x32xf32, #tpu.memory_space<vmem>>, vector<1x32xf32>
    %71 = vector.broadcast %70 : vector<1x32xf32> to vector<8x32xf32>
    %72 = arith.addf %69, %71 : vector<8x32xf32>
    %c0_43 = arith.constant 0 : index
    %c0_44 = arith.constant 0 : index
    %c0_45 = arith.constant 0 : index
    %73 = vector.load %arg9[%c0_43, %c0_44, %c0_45] : memref<1x8x32xf32, #tpu.memory_space<vmem>>, vector<1x8x32xf32>
    %74 = vector.shape_cast %73 : vector<1x8x32xf32> to vector<8x32xf32>
    %75 = vector.shape_cast %72 : vector<8x32xf32> to vector<1x8x32xf32>
    tpu.vector_store %arg9[%c0_43, %c0_44, %c0_45], %75 {strides = array<i32>} : memref<1x8x32xf32, #tpu.memory_space<vmem>>, vector<1x8x32xf32>,
    return
  }
  func.func @transform_0(%arg0: i32) -> (i32, i32, i32) {
    %c0_i32 = arith.constant 0 : i32
    %c0_i32_0 = arith.constant 0 : i32
    %c0_i32_1 = arith.constant 0 : i32
    return %arg0, %c0_i32, %c0_i32_0 : i32, i32, i32
  }
  func.func @transform_1(%arg0: i32) -> (i32, i32, i32) {
    %c0_i32 = arith.constant 0 : i32
    %c0_i32_0 = arith.constant 0 : i32
    %c0_i32_1 = arith.constant 0 : i32
    return %arg0, %c0_i32, %c0_i32_0 : i32, i32, i32
  }
  func.func @transform_2(%arg0: i32) -> (i32, i32, i32) {
    %c0_i32 = arith.constant 0 : i32
    %c0_i32_0 = arith.constant 0 : i32
    %c0_i32_1 = arith.constant 0 : i32
    %c0_i32_2 = arith.constant 0 : i32
    return %c0_i32, %c0_i32_0, %c0_i32_1 : i32, i32, i32
  }
  func.func @transform_3(%arg0: i32) -> (i32, i32, i32) {
    %c0_i32 = arith.constant 0 : i32
    %c0_i32_0 = arith.constant 0 : i32
    %c0_i32_1 = arith.constant 0 : i32
    %c0_i32_2 = arith.constant 0 : i32
    return %c0_i32, %c0_i32_0, %c0_i32_1 : i32, i32, i32
  }
  func.func @transform_4(%arg0: i32) -> (i32, i32) {
    %c0_i32 = arith.constant 0 : i32
    %c0_i32_0 = arith.constant 0 : i32
    %c0_i32_1 = arith.constant 0 : i32
    return %c0_i32, %c0_i32_0 : i32, i32
  }
  func.func @transform_5(%arg0: i32) -> (i32, i32) {
    %c0_i32 = arith.constant 0 : i32
    %c0_i32_0 = arith.constant 0 : i32
    %c0_i32_1 = arith.constant 0 : i32
    return %c0_i32, %c0_i32_0 : i32, i32
  }
  func.func @transform_6(%arg0: i32) -> (i32, i32) {
    %c0_i32 = arith.constant 0 : i32
    %c0_i32_0 = arith.constant 0 : i32
    %c0_i32_1 = arith.constant 0 : i32
    return %c0_i32, %c0_i32_0 : i32, i32
  }
  func.func @transform_7(%arg0: i32) -> (i32, i32) {
    %c0_i32 = arith.constant 0 : i32
    %c0_i32_0 = arith.constant 0 : i32
    %c0_i32_1 = arith.constant 0 : i32
    return %c0_i32, %c0_i32_0 : i32, i32
  }
  func.func @transform_8(%arg0: i32) -> (i32, i32, i32) {
    %c0_i32 = arith.constant 0 : i32
    %c0_i32_0 = arith.constant 0 : i32
    %c0_i32_1 = arith.constant 0 : i32
    return %arg0, %c0_i32, %c0_i32_0 : i32, i32, i32
  }
}

module attributes {stable_mosaic.version = 11 : i64} {
  func.func @_ga_flat_kernel(%arg0: i32, %arg1: memref<1x8x32xf32, #tpu.memory_space<vmem>>, %arg2: memref<1x8x32xf32, #tpu.memory_space<vmem>>, %arg3: memref<1x1x8xf32, #tpu.memory_space<vmem>>, %arg4: memref<1x1x8xf32, #tpu.memory_space<vmem>>, %arg5: memref<3x32x32xf32, #tpu.memory_space<vmem>>, %arg6: memref<3x1x32xf32, #tpu.memory_space<vmem>>, %arg7: memref<32x32xf32, #tpu.memory_space<vmem>>, %arg8: memref<1x32xf32, #tpu.memory_space<vmem>>, %arg9: memref<1x32xf32, #tpu.memory_space<vmem>>, %arg10: memref<1x32xf32, #tpu.memory_space<vmem>>, %arg11: memref<32x16xf32, #tpu.memory_space<vmem>>, %arg12: memref<1x16xf32, #tpu.memory_space<vmem>>, %arg13: memref<1x16xf32, #tpu.memory_space<vmem>>, %arg14: memref<1x1xf32, #tpu.memory_space<vmem>>, %arg15: memref<32x32xf32, #tpu.memory_space<vmem>>, %arg16: memref<1x32xf32, #tpu.memory_space<vmem>>, %arg17: memref<1x1x32xf32, #tpu.memory_space<vmem>>) attributes {dimension_semantics = [#tpu.dimension_semantics<parallel>], iteration_bounds = array<i64: 2>, scalar_prefetch = 0 : i64, scratch_operands = 0 : i64, tpu.core_type = #tpu.core_type<tc>, window_params = [{transform_indices = @transform_0, window_bounds = array<i64: 1, 8, 32>}, {transform_indices = @transform_1, window_bounds = array<i64: 1, 8, 32>}, {transform_indices = @transform_2, window_bounds = array<i64: 1, 1, 8>}, {transform_indices = @transform_3, window_bounds = array<i64: 1, 1, 8>}, {pipeline_mode = #tpu.pipeline_mode<synchronous>, transform_indices = @transform_4, window_bounds = array<i64: 3, 32, 32>}, {pipeline_mode = #tpu.pipeline_mode<synchronous>, transform_indices = @transform_5, window_bounds = array<i64: 3, 1, 32>}, {pipeline_mode = #tpu.pipeline_mode<synchronous>, transform_indices = @transform_6, window_bounds = array<i64: 32, 32>}, {pipeline_mode = #tpu.pipeline_mode<synchronous>, transform_indices = @transform_7, window_bounds = array<i64: 1, 32>}, {pipeline_mode = #tpu.pipeline_mode<synchronous>, transform_indices = @transform_8, window_bounds = array<i64: 1, 32>}, {pipeline_mode = #tpu.pipeline_mode<synchronous>, transform_indices = @transform_9, window_bounds = array<i64: 1, 32>}, {pipeline_mode = #tpu.pipeline_mode<synchronous>, transform_indices = @transform_10, window_bounds = array<i64: 32, 16>}, {pipeline_mode = #tpu.pipeline_mode<synchronous>, transform_indices = @transform_11, window_bounds = array<i64: 1, 16>}, {pipeline_mode = #tpu.pipeline_mode<synchronous>, transform_indices = @transform_12, window_bounds = array<i64: 1, 16>}, {pipeline_mode = #tpu.pipeline_mode<synchronous>, transform_indices = @transform_13, window_bounds = array<i64: 1, 1>}, {pipeline_mode = #tpu.pipeline_mode<synchronous>, transform_indices = @transform_14, window_bounds = array<i64: 32, 32>}, {pipeline_mode = #tpu.pipeline_mode<synchronous>, transform_indices = @transform_15, window_bounds = array<i64: 1, 32>}, {transform_indices = @transform_16, window_bounds = array<i64: 1, 1, 32>}]} {
    %c0 = arith.constant 0 : index
    %c0_0 = arith.constant 0 : index
    %c0_1 = arith.constant 0 : index
    %0 = vector.load %arg1[%c0, %c0_0, %c0_1] : memref<1x8x32xf32, #tpu.memory_space<vmem>>, vector<1x8x32xf32>
    %1 = vector.shape_cast %0 : vector<1x8x32xf32> to vector<8x32xf32>
    %c0_2 = arith.constant 0 : index
    %c0_3 = arith.constant 0 : index
    %c0_4 = arith.constant 0 : index
    %2 = vector.load %arg2[%c0_2, %c0_3, %c0_4] : memref<1x8x32xf32, #tpu.memory_space<vmem>>, vector<1x8x32xf32>
    %3 = vector.shape_cast %2 : vector<1x8x32xf32> to vector<8x32xf32>
    %c0_5 = arith.constant 0 : index
    %c0_6 = arith.constant 0 : index
    %c0_7 = arith.constant 0 : index
    %4 = vector.load %arg3[%c0_5, %c0_6, %c0_7] : memref<1x1x8xf32, #tpu.memory_space<vmem>>, vector<1x1x8xf32>
    %5 = vector.shape_cast %4 : vector<1x1x8xf32> to vector<1x8xf32>
    %c0_8 = arith.constant 0 : index
    %c0_9 = arith.constant 0 : index
    %c0_10 = arith.constant 0 : index
    %6 = vector.load %arg5[%c0_8, %c0_9, %c0_10] : memref<3x32x32xf32, #tpu.memory_space<vmem>>, vector<1x32x32xf32>
    %7 = vector.shape_cast %6 : vector<1x32x32xf32> to vector<32x32xf32>
    %cst = arith.constant dense<0.000000e+00> : vector<8x32xf32>
    %8 = tpu.matmul %1, %7, %cst {dimension_numbers = #tpu.dot_dimension_numbers<[1], [0], [0], [1], [0, 0, 1, 1], [], []>} : vector<8x32xf32>, vector<32x32xf32>, vector<8x32xf32> -> vector<8x32xf32>
    %c0_11 = arith.constant 0 : index
    %c0_12 = arith.constant 0 : index
    %c0_13 = arith.constant 0 : index
    %9 = vector.load %arg6[%c0_11, %c0_12, %c0_13] : memref<3x1x32xf32, #tpu.memory_space<vmem>>, vector<1x1x32xf32>
    %10 = vector.shape_cast %9 : vector<1x1x32xf32> to vector<1x32xf32>
    %11 = vector.broadcast %10 : vector<1x32xf32> to vector<8x32xf32>
    %12 = arith.addf %8, %11 : vector<8x32xf32>
    %c1 = arith.constant 1 : index
    %c0_14 = arith.constant 0 : index
    %c0_15 = arith.constant 0 : index
    %13 = vector.load %arg5[%c1, %c0_14, %c0_15] : memref<3x32x32xf32, #tpu.memory_space<vmem>>, vector<1x32x32xf32>
    %14 = vector.shape_cast %13 : vector<1x32x32xf32> to vector<32x32xf32>
    %cst_16 = arith.constant dense<0.000000e+00> : vector<8x32xf32>
    %15 = tpu.matmul %3, %14, %cst_16 {dimension_numbers = #tpu.dot_dimension_numbers<[1], [0], [0], [1], [0, 0, 1, 1], [], []>} : vector<8x32xf32>, vector<32x32xf32>, vector<8x32xf32> -> vector<8x32xf32>
    %c1_17 = arith.constant 1 : index
    %c0_18 = arith.constant 0 : index
    %c0_19 = arith.constant 0 : index
    %16 = vector.load %arg6[%c1_17, %c0_18, %c0_19] : memref<3x1x32xf32, #tpu.memory_space<vmem>>, vector<1x1x32xf32>
    %17 = vector.shape_cast %16 : vector<1x1x32xf32> to vector<1x32xf32>
    %18 = vector.broadcast %17 : vector<1x32xf32> to vector<8x32xf32>
    %19 = arith.addf %15, %18 : vector<8x32xf32>
    %c2 = arith.constant 2 : index
    %c0_20 = arith.constant 0 : index
    %c0_21 = arith.constant 0 : index
    %20 = vector.load %arg5[%c2, %c0_20, %c0_21] : memref<3x32x32xf32, #tpu.memory_space<vmem>>, vector<1x32x32xf32>
    %21 = vector.shape_cast %20 : vector<1x32x32xf32> to vector<32x32xf32>
    %cst_22 = arith.constant dense<0.000000e+00> : vector<8x32xf32>
    %22 = tpu.matmul %3, %21, %cst_22 {dimension_numbers = #tpu.dot_dimension_numbers<[1], [0], [0], [1], [0, 0, 1, 1], [], []>} : vector<8x32xf32>, vector<32x32xf32>, vector<8x32xf32> -> vector<8x32xf32>
    %c2_23 = arith.constant 2 : index
    %c0_24 = arith.constant 0 : index
    %c0_25 = arith.constant 0 : index
    %23 = vector.load %arg6[%c2_23, %c0_24, %c0_25] : memref<3x1x32xf32, #tpu.memory_space<vmem>>, vector<1x1x32xf32>
    %24 = vector.shape_cast %23 : vector<1x1x32xf32> to vector<1x32xf32>
    %25 = vector.broadcast %24 : vector<1x32xf32> to vector<8x32xf32>
    %26 = arith.addf %22, %25 : vector<8x32xf32>
    %cst_26 = arith.constant dense<0.000000e+00> : vector<8x8xf32>
    %27 = tpu.matmul %12, %19, %cst_26 {dimension_numbers = #tpu.dot_dimension_numbers<[1], [1], [0], [0], [0, 0, 1, 0], [], []>} : vector<8x32xf32>, vector<8x32xf32>, vector<8x8xf32> -> vector<8x8xf32>
    %cst_27 = arith.constant 0.176776692 : f32
    %28 = vector.broadcast %cst_27 : f32 to vector<8x8xf32>
    %29 = arith.mulf %27, %28 : vector<8x8xf32>
    %cst_28 = arith.constant -1.000000e+09 : f32
    %30 = vector.broadcast %cst_28 : f32 to vector<1x8xf32>
    %31 = arith.mulf %5, %30 : vector<1x8xf32>
    %32 = vector.broadcast %31 : vector<1x8xf32> to vector<8x8xf32>
    %33 = arith.addf %29, %32 : vector<8x8xf32>
    %cst_29 = arith.constant dense<0xFF800000> : vector<8xf32>
    %34 = vector.multi_reduction <maximumf>, %33, %cst_29 [1] : vector<8x8xf32> to vector<8xf32>
    %35 = vector.shape_cast %34 : vector<8xf32> to vector<8x1xf32>
    %36 = vector.broadcast %35 : vector<8x1xf32> to vector<8x8xf32>
    %37 = arith.subf %33, %36 : vector<8x8xf32>
    %38 = math.exp %37 : vector<8x8xf32>
    %cst_30 = arith.constant dense<0.000000e+00> : vector<8xf32>
    %39 = vector.multi_reduction <add>, %38, %cst_30 [1] : vector<8x8xf32> to vector<8xf32>
    %40 = vector.shape_cast %39 : vector<8xf32> to vector<8x1xf32>
    %41 = tpu.reciprocal %40 {approx = true} : vector<8x1xf32> -> vector<8x1xf32>
    %42 = vector.broadcast %41 : vector<8x1xf32> to vector<8x8xf32>
    %43 = arith.mulf %38, %42 : vector<8x8xf32>
    %cst_31 = arith.constant dense<0.000000e+00> : vector<8x32xf32>
    %44 = tpu.matmul %43, %26, %cst_31 {dimension_numbers = #tpu.dot_dimension_numbers<[1], [0], [0], [1], [0, 0, 1, 1], [], []>} : vector<8x8xf32>, vector<8x32xf32>, vector<8x32xf32> -> vector<8x32xf32>
    %c0_32 = arith.constant 0 : index
    %c0_33 = arith.constant 0 : index
    %45 = vector.load %arg7[%c0_32, %c0_33] : memref<32x32xf32, #tpu.memory_space<vmem>>, vector<32x32xf32>
    %cst_34 = arith.constant dense<0.000000e+00> : vector<8x32xf32>
    %46 = tpu.matmul %44, %45, %cst_34 {dimension_numbers = #tpu.dot_dimension_numbers<[1], [0], [0], [1], [0, 0, 1, 1], [], []>} : vector<8x32xf32>, vector<32x32xf32>, vector<8x32xf32> -> vector<8x32xf32>
    %c0_35 = arith.constant 0 : index
    %c0_36 = arith.constant 0 : index
    %47 = vector.load %arg8[%c0_35, %c0_36] : memref<1x32xf32, #tpu.memory_space<vmem>>, vector<1x32xf32>
    %48 = vector.broadcast %47 : vector<1x32xf32> to vector<8x32xf32>
    %49 = arith.addf %46, %48 : vector<8x32xf32>
    %50 = arith.addf %1, %49 : vector<8x32xf32>
    %cst_37 = arith.constant dense<0.000000e+00> : vector<8xf32>
    %51 = vector.multi_reduction <add>, %50, %cst_37 [1] : vector<8x32xf32> to vector<8xf32>
    %52 = vector.shape_cast %51 : vector<8xf32> to vector<8x1xf32>
    %cst_38 = arith.constant 3.200000e+01 : f32
    %53 = vector.broadcast %cst_38 : f32 to vector<8x1xf32>
    %54 = arith.divf %52, %53 : vector<8x1xf32>
    %55 = vector.broadcast %54 : vector<8x1xf32> to vector<8x32xf32>
    %56 = arith.subf %50, %55 : vector<8x32xf32>
    %57 = arith.mulf %56, %56 : vector<8x32xf32>
    %cst_39 = arith.constant dense<0.000000e+00> : vector<8xf32>
    %58 = vector.multi_reduction <add>, %57, %cst_39 [1] : vector<8x32xf32> to vector<8xf32>
    %59 = vector.shape_cast %58 : vector<8xf32> to vector<8x1xf32>
    %cst_40 = arith.constant 3.200000e+01 : f32
    %60 = vector.broadcast %cst_40 : f32 to vector<8x1xf32>
    %61 = arith.divf %59, %60 : vector<8x1xf32>
    %62 = vector.broadcast %54 : vector<8x1xf32> to vector<8x32xf32>
    %63 = arith.subf %50, %62 : vector<8x32xf32>
    %cst_41 = arith.constant 9.99999997E-7 : f32
    %64 = vector.broadcast %cst_41 : f32 to vector<8x1xf32>
    %65 = arith.addf %61, %64 : vector<8x1xf32>
    %66 = math.rsqrt %65 : vector<8x1xf32>
    %67 = vector.broadcast %66 : vector<8x1xf32> to vector<8x32xf32>
    %68 = arith.mulf %63, %67 : vector<8x32xf32>
    %c0_42 = arith.constant 0 : index
    %c0_43 = arith.constant 0 : index
    %69 = vector.load %arg9[%c0_42, %c0_43] : memref<1x32xf32, #tpu.memory_space<vmem>>, vector<1x32xf32>
    %70 = vector.broadcast %69 : vector<1x32xf32> to vector<8x32xf32>
    %71 = arith.mulf %68, %70 : vector<8x32xf32>
    %c0_44 = arith.constant 0 : index
    %c0_45 = arith.constant 0 : index
    %72 = vector.load %arg10[%c0_44, %c0_45] : memref<1x32xf32, #tpu.memory_space<vmem>>, vector<1x32xf32>
    %73 = vector.broadcast %72 : vector<1x32xf32> to vector<8x32xf32>
    %74 = arith.addf %71, %73 : vector<8x32xf32>
    %c0_46 = arith.constant 0 : index
    %c0_47 = arith.constant 0 : index
    %c0_48 = arith.constant 0 : index
    %75 = vector.load %arg4[%c0_46, %c0_47, %c0_48] : memref<1x1x8xf32, #tpu.memory_space<vmem>>, vector<1x1x8xf32>
    %76 = vector.shape_cast %75 : vector<1x1x8xf32> to vector<1x8xf32>
    %c0_49 = arith.constant 0 : index
    %c0_50 = arith.constant 0 : index
    %77 = vector.load %arg11[%c0_49, %c0_50] : memref<32x16xf32, #tpu.memory_space<vmem>>, vector<32x16xf32>
    %cst_51 = arith.constant dense<0.000000e+00> : vector<8x16xf32>
    %78 = tpu.matmul %74, %77, %cst_51 {dimension_numbers = #tpu.dot_dimension_numbers<[1], [0], [0], [1], [0, 0, 1, 1], [], []>} : vector<8x32xf32>, vector<32x16xf32>, vector<8x16xf32> -> vector<8x16xf32>
    %c0_52 = arith.constant 0 : index
    %c0_53 = arith.constant 0 : index
    %79 = vector.load %arg12[%c0_52, %c0_53] : memref<1x16xf32, #tpu.memory_space<vmem>>, vector<1x16xf32>
    %80 = vector.broadcast %79 : vector<1x16xf32> to vector<8x16xf32>
    %81 = arith.addf %78, %80 : vector<8x16xf32>
    %cst_54 = arith.constant 0.000000e+00 : f32
    %82 = vector.broadcast %cst_54 : f32 to vector<8x16xf32>
    %83 = arith.maximumf %81, %82 : vector<8x16xf32>
    %c0_55 = arith.constant 0 : index
    %c0_56 = arith.constant 0 : index
    %84 = vector.load %arg13[%c0_55, %c0_56] : memref<1x16xf32, #tpu.memory_space<vmem>>, vector<1x16xf32>
    %cst_57 = arith.constant dense<0.000000e+00> : vector<1x8xf32>
    %85 = tpu.matmul %84, %83, %cst_57 {dimension_numbers = #tpu.dot_dimension_numbers<[1], [1], [0], [0], [0, 0, 1, 0], [], []>} : vector<1x16xf32>, vector<8x16xf32>, vector<1x8xf32> -> vector<1x8xf32>
    %c0_58 = arith.constant 0 : index
    %c0_59 = arith.constant 0 : index
    %86 = vector.load %arg14[%c0_58, %c0_59] : memref<1x1xf32, #tpu.memory_space<vmem>>, vector<1x1xf32>
    %87 = vector.broadcast %86 : vector<1x1xf32> to vector<1x8xf32>
    %88 = arith.addf %85, %87 : vector<1x8xf32>
    %cst_60 = arith.constant -1.000000e+09 : f32
    %89 = vector.broadcast %cst_60 : f32 to vector<1x8xf32>
    %90 = arith.mulf %76, %89 : vector<1x8xf32>
    %91 = arith.addf %88, %90 : vector<1x8xf32>
    %cst_61 = arith.constant dense<0xFF800000> : vector<1xf32>
    %92 = vector.multi_reduction <maximumf>, %91, %cst_61 [1] : vector<1x8xf32> to vector<1xf32>
    %93 = vector.shape_cast %92 : vector<1xf32> to vector<1x1xf32>
    %94 = vector.broadcast %93 : vector<1x1xf32> to vector<1x8xf32>
    %95 = arith.subf %91, %94 : vector<1x8xf32>
    %96 = math.exp %95 : vector<1x8xf32>
    %cst_62 = arith.constant dense<0.000000e+00> : vector<1xf32>
    %97 = vector.multi_reduction <add>, %96, %cst_62 [1] : vector<1x8xf32> to vector<1xf32>
    %98 = vector.shape_cast %97 : vector<1xf32> to vector<1x1xf32>
    %99 = tpu.reciprocal %98 {approx = true} : vector<1x1xf32> -> vector<1x1xf32>
    %100 = vector.broadcast %99 : vector<1x1xf32> to vector<1x8xf32>
    %101 = arith.mulf %96, %100 : vector<1x8xf32>
    %cst_63 = arith.constant dense<0.000000e+00> : vector<1x32xf32>
    %102 = tpu.matmul %101, %74, %cst_63 {dimension_numbers = #tpu.dot_dimension_numbers<[1], [0], [0], [1], [0, 0, 1, 1], [], []>} : vector<1x8xf32>, vector<8x32xf32>, vector<1x32xf32> -> vector<1x32xf32>
    %c0_64 = arith.constant 0 : index
    %c0_65 = arith.constant 0 : index
    %103 = vector.load %arg15[%c0_64, %c0_65] : memref<32x32xf32, #tpu.memory_space<vmem>>, vector<32x32xf32>
    %cst_66 = arith.constant dense<0.000000e+00> : vector<1x32xf32>
    %104 = tpu.matmul %102, %103, %cst_66 {dimension_numbers = #tpu.dot_dimension_numbers<[1], [0], [0], [1], [0, 0, 1, 1], [], []>} : vector<1x32xf32>, vector<32x32xf32>, vector<1x32xf32> -> vector<1x32xf32>
    %c0_67 = arith.constant 0 : index
    %c0_68 = arith.constant 0 : index
    %105 = vector.load %arg16[%c0_67, %c0_68] : memref<1x32xf32, #tpu.memory_space<vmem>>, vector<1x32xf32>
    %106 = arith.addf %104, %105 : vector<1x32xf32>
    %c0_69 = arith.constant 0 : index
    %c0_70 = arith.constant 0 : index
    %c0_71 = arith.constant 0 : index
    %107 = vector.load %arg17[%c0_69, %c0_70, %c0_71] : memref<1x1x32xf32, #tpu.memory_space<vmem>>, vector<1x1x32xf32>
    %108 = vector.shape_cast %107 : vector<1x1x32xf32> to vector<1x32xf32>
    %109 = vector.shape_cast %106 : vector<1x32xf32> to vector<1x1x32xf32>
    tpu.vector_store %arg17[%c0_69, %c0_70, %c0_71], %109 {strides = array<i32>} : memref<1x1x32xf32, #tpu.memory_space<vmem>>, vector<1x1x32xf32>,
    return
  }
  func.func @transform_0(%arg0: i32) -> (i32, i32, i32) {
    %c0_i32 = arith.constant 0 : i32
    %c0_i32_0 = arith.constant 0 : i32
    %c0_i32_1 = arith.constant 0 : i32
    return %arg0, %c0_i32, %c0_i32_0 : i32, i32, i32
  }
  func.func @transform_1(%arg0: i32) -> (i32, i32, i32) {
    %c0_i32 = arith.constant 0 : i32
    %c0_i32_0 = arith.constant 0 : i32
    %c0_i32_1 = arith.constant 0 : i32
    return %arg0, %c0_i32, %c0_i32_0 : i32, i32, i32
  }
  func.func @transform_2(%arg0: i32) -> (i32, i32, i32) {
    %c0_i32 = arith.constant 0 : i32
    %c0_i32_0 = arith.constant 0 : i32
    %c0_i32_1 = arith.constant 0 : i32
    return %arg0, %c0_i32, %c0_i32_0 : i32, i32, i32
  }
  func.func @transform_3(%arg0: i32) -> (i32, i32, i32) {
    %c0_i32 = arith.constant 0 : i32
    %c0_i32_0 = arith.constant 0 : i32
    %c0_i32_1 = arith.constant 0 : i32
    return %arg0, %c0_i32, %c0_i32_0 : i32, i32, i32
  }
  func.func @transform_4(%arg0: i32) -> (i32, i32, i32) {
    %c0_i32 = arith.constant 0 : i32
    %c0_i32_0 = arith.constant 0 : i32
    %c0_i32_1 = arith.constant 0 : i32
    %c0_i32_2 = arith.constant 0 : i32
    return %c0_i32, %c0_i32_0, %c0_i32_1 : i32, i32, i32
  }
  func.func @transform_5(%arg0: i32) -> (i32, i32, i32) {
    %c0_i32 = arith.constant 0 : i32
    %c0_i32_0 = arith.constant 0 : i32
    %c0_i32_1 = arith.constant 0 : i32
    %c0_i32_2 = arith.constant 0 : i32
    return %c0_i32, %c0_i32_0, %c0_i32_1 : i32, i32, i32
  }
  func.func @transform_6(%arg0: i32) -> (i32, i32) {
    %c0_i32 = arith.constant 0 : i32
    %c0_i32_0 = arith.constant 0 : i32
    %c0_i32_1 = arith.constant 0 : i32
    return %c0_i32, %c0_i32_0 : i32, i32
  }
  func.func @transform_7(%arg0: i32) -> (i32, i32) {
    %c0_i32 = arith.constant 0 : i32
    %c0_i32_0 = arith.constant 0 : i32
    %c0_i32_1 = arith.constant 0 : i32
    return %c0_i32, %c0_i32_0 : i32, i32
  }
  func.func @transform_8(%arg0: i32) -> (i32, i32) {
    %c0_i32 = arith.constant 0 : i32
    %c0_i32_0 = arith.constant 0 : i32
    %c0_i32_1 = arith.constant 0 : i32
    return %c0_i32, %c0_i32_0 : i32, i32
  }
  func.func @transform_9(%arg0: i32) -> (i32, i32) {
    %c0_i32 = arith.constant 0 : i32
    %c0_i32_0 = arith.constant 0 : i32
    %c0_i32_1 = arith.constant 0 : i32
    return %c0_i32, %c0_i32_0 : i32, i32
  }
  func.func @transform_10(%arg0: i32) -> (i32, i32) {
    %c0_i32 = arith.constant 0 : i32
    %c0_i32_0 = arith.constant 0 : i32
    %c0_i32_1 = arith.constant 0 : i32
    return %c0_i32, %c0_i32_0 : i32, i32
  }
  func.func @transform_11(%arg0: i32) -> (i32, i32) {
    %c0_i32 = arith.constant 0 : i32
    %c0_i32_0 = arith.constant 0 : i32
    %c0_i32_1 = arith.constant 0 : i32
    return %c0_i32, %c0_i32_0 : i32, i32
  }
  func.func @transform_12(%arg0: i32) -> (i32, i32) {
    %c0_i32 = arith.constant 0 : i32
    %c0_i32_0 = arith.constant 0 : i32
    %c0_i32_1 = arith.constant 0 : i32
    return %c0_i32, %c0_i32_0 : i32, i32
  }
  func.func @transform_13(%arg0: i32) -> (i32, i32) {
    %c0_i32 = arith.constant 0 : i32
    %c0_i32_0 = arith.constant 0 : i32
    %c0_i32_1 = arith.constant 0 : i32
    return %c0_i32, %c0_i32_0 : i32, i32
  }
  func.func @transform_14(%arg0: i32) -> (i32, i32) {
    %c0_i32 = arith.constant 0 : i32
    %c0_i32_0 = arith.constant 0 : i32
    %c0_i32_1 = arith.constant 0 : i32
    return %c0_i32, %c0_i32_0 : i32, i32
  }
  func.func @transform_15(%arg0: i32) -> (i32, i32) {
    %c0_i32 = arith.constant 0 : i32
    %c0_i32_0 = arith.constant 0 : i32
    %c0_i32_1 = arith.constant 0 : i32
    return %c0_i32, %c0_i32_0 : i32, i32
  }
  func.func @transform_16(%arg0: i32) -> (i32, i32, i32) {
    %c0_i32 = arith.constant 0 : i32
    %c0_i32_0 = arith.constant 0 : i32
    %c0_i32_1 = arith.constant 0 : i32
    return %arg0, %c0_i32, %c0_i32_0 : i32, i32, i32
  }
}

module attributes {stable_mosaic.version = 11 : i64} {
  func.func @_fusion_cls_kernel(%arg0: i32, %arg1: memref<8x96xf32, #tpu.memory_space<vmem>>, %arg2: memref<1x96xf32, #tpu.memory_space<vmem>>, %arg3: memref<1x96xf32, #tpu.memory_space<vmem>>, %arg4: memref<96x1xf32, #tpu.memory_space<vmem>>, %arg5: memref<1x1xf32, #tpu.memory_space<vmem>>, %arg6: memref<8x1xf32, #tpu.memory_space<vmem>>) attributes {dimension_semantics = [#tpu.dimension_semantics<arbitrary>], iteration_bounds = array<i64: 1>, scalar_prefetch = 0 : i64, scratch_operands = 0 : i64, tpu.core_type = #tpu.core_type<tc>, window_params = [{pipeline_mode = #tpu.pipeline_mode<synchronous>, transform_indices = @transform_0, window_bounds = array<i64: 8, 96>}, {pipeline_mode = #tpu.pipeline_mode<synchronous>, transform_indices = @transform_1, window_bounds = array<i64: 1, 96>}, {pipeline_mode = #tpu.pipeline_mode<synchronous>, transform_indices = @transform_2, window_bounds = array<i64: 1, 96>}, {pipeline_mode = #tpu.pipeline_mode<synchronous>, transform_indices = @transform_3, window_bounds = array<i64: 96, 1>}, {pipeline_mode = #tpu.pipeline_mode<synchronous>, transform_indices = @transform_4, window_bounds = array<i64: 1, 1>}, {pipeline_mode = #tpu.pipeline_mode<synchronous>, transform_indices = @transform_5, window_bounds = array<i64: 8, 1>}]} {
    %c0 = arith.constant 0 : index
    %c0_0 = arith.constant 0 : index
    %0 = vector.load %arg1[%c0, %c0_0] : memref<8x96xf32, #tpu.memory_space<vmem>>, vector<8x96xf32>
    %cst = arith.constant dense<0.000000e+00> : vector<8xf32>
    %1 = vector.multi_reduction <add>, %0, %cst [1] : vector<8x96xf32> to vector<8xf32>
    %2 = vector.shape_cast %1 : vector<8xf32> to vector<8x1xf32>
    %cst_1 = arith.constant 9.600000e+01 : f32
    %3 = vector.broadcast %cst_1 : f32 to vector<8x1xf32>
    %4 = arith.divf %2, %3 : vector<8x1xf32>
    %5 = vector.broadcast %4 : vector<8x1xf32> to vector<8x96xf32>
    %6 = arith.subf %0, %5 : vector<8x96xf32>
    %7 = arith.mulf %6, %6 : vector<8x96xf32>
    %cst_2 = arith.constant dense<0.000000e+00> : vector<8xf32>
    %8 = vector.multi_reduction <add>, %7, %cst_2 [1] : vector<8x96xf32> to vector<8xf32>
    %9 = vector.shape_cast %8 : vector<8xf32> to vector<8x1xf32>
    %cst_3 = arith.constant 9.600000e+01 : f32
    %10 = vector.broadcast %cst_3 : f32 to vector<8x1xf32>
    %11 = arith.divf %9, %10 : vector<8x1xf32>
    %12 = vector.broadcast %4 : vector<8x1xf32> to vector<8x96xf32>
    %13 = arith.subf %0, %12 : vector<8x96xf32>
    %cst_4 = arith.constant 9.99999997E-7 : f32
    %14 = vector.broadcast %cst_4 : f32 to vector<8x1xf32>
    %15 = arith.addf %11, %14 : vector<8x1xf32>
    %16 = math.rsqrt %15 : vector<8x1xf32>
    %17 = vector.broadcast %16 : vector<8x1xf32> to vector<8x96xf32>
    %18 = arith.mulf %13, %17 : vector<8x96xf32>
    %c0_5 = arith.constant 0 : index
    %c0_6 = arith.constant 0 : index
    %19 = vector.load %arg2[%c0_5, %c0_6] : memref<1x96xf32, #tpu.memory_space<vmem>>, vector<1x96xf32>
    %20 = vector.broadcast %19 : vector<1x96xf32> to vector<8x96xf32>
    %21 = arith.mulf %18, %20 : vector<8x96xf32>
    %c0_7 = arith.constant 0 : index
    %c0_8 = arith.constant 0 : index
    %22 = vector.load %arg3[%c0_7, %c0_8] : memref<1x96xf32, #tpu.memory_space<vmem>>, vector<1x96xf32>
    %23 = vector.broadcast %22 : vector<1x96xf32> to vector<8x96xf32>
    %24 = arith.addf %21, %23 : vector<8x96xf32>
    %c0_9 = arith.constant 0 : index
    %c0_10 = arith.constant 0 : index
    %25 = vector.load %arg4[%c0_9, %c0_10] : memref<96x1xf32, #tpu.memory_space<vmem>>, vector<96x1xf32>
    %cst_11 = arith.constant dense<0.000000e+00> : vector<8x1xf32>
    %26 = tpu.matmul %24, %25, %cst_11 {dimension_numbers = #tpu.dot_dimension_numbers<[1], [0], [0], [1], [0, 0, 1, 1], [], []>} : vector<8x96xf32>, vector<96x1xf32>, vector<8x1xf32> -> vector<8x1xf32>
    %c0_12 = arith.constant 0 : index
    %c0_13 = arith.constant 0 : index
    %27 = vector.load %arg5[%c0_12, %c0_13] : memref<1x1xf32, #tpu.memory_space<vmem>>, vector<1x1xf32>
    %28 = vector.broadcast %27 : vector<1x1xf32> to vector<8x1xf32>
    %29 = arith.addf %26, %28 : vector<8x1xf32>
    %c0_14 = arith.constant 0 : index
    %c0_15 = arith.constant 0 : index
    %30 = vector.load %arg6[%c0_14, %c0_15] : memref<8x1xf32, #tpu.memory_space<vmem>>, vector<8x1xf32>
    tpu.vector_store %arg6[%c0_14, %c0_15], %29 {strides = array<i32>} : memref<8x1xf32, #tpu.memory_space<vmem>>, vector<8x1xf32>,
    return
  }
  func.func @transform_0(%arg0: i32) -> (i32, i32) {
    %c0_i32 = arith.constant 0 : i32
    %c0_i32_0 = arith.constant 0 : i32
    %c0_i32_1 = arith.constant 0 : i32
    return %c0_i32, %c0_i32_0 : i32, i32
  }
  func.func @transform_1(%arg0: i32) -> (i32, i32) {
    %c0_i32 = arith.constant 0 : i32
    %c0_i32_0 = arith.constant 0 : i32
    %c0_i32_1 = arith.constant 0 : i32
    return %c0_i32, %c0_i32_0 : i32, i32
  }
  func.func @transform_2(%arg0: i32) -> (i32, i32) {
    %c0_i32 = arith.constant 0 : i32
    %c0_i32_0 = arith.constant 0 : i32
    %c0_i32_1 = arith.constant 0 : i32
    return %c0_i32, %c0_i32_0 : i32, i32
  }
  func.func @transform_3(%arg0: i32) -> (i32, i32) {
    %c0_i32 = arith.constant 0 : i32
    %c0_i32_0 = arith.constant 0 : i32
    %c0_i32_1 = arith.constant 0 : i32
    return %c0_i32, %c0_i32_0 : i32, i32
  }
  func.func @transform_4(%arg0: i32) -> (i32, i32) {
    %c0_i32 = arith.constant 0 : i32
    %c0_i32_0 = arith.constant 0 : i32
    %c0_i32_1 = arith.constant 0 : i32
    return %c0_i32, %c0_i32_0 : i32, i32
  }
  func.func @transform_5(%arg0: i32) -> (i32, i32) {
    %c0_i32 = arith.constant 0 : i32
    %c0_i32_0 = arith.constant 0 : i32
    %c0_i32_1 = arith.constant 0 : i32
    return %c0_i32, %c0_i32_0 : i32, i32
  }
}

</mosaic_0001>

<llo_original>
// kernel: _lambda_.7
$region0: #{_lambda_.7}
  #allocation0 [shape = 'u32[]', space=smem, size = 0x4, offset = 0x4, fixed_abs, tag = 'smem constant byte address 0x4 - core index']
  #allocation1 [shape = 'u32[144,128]{1,0:T(1,128)}', space=vmem, size = 0x12000, scoped, tag = 'internal scratch']
  %s0 = inlined_call_operand.vmem [shape: f32[2,8,32], index: 0, kind: input, shape index: {}]
  %s1 = inlined_call_operand.vmem [shape: f32[2,1,8], index: 1, kind: input, shape index: {}]
  %s2 = inlined_call_operand.vmem [shape: f32[3,32,32], index: 2, kind: input, shape index: {}]
  %s3 = inlined_call_operand.vmem [shape: f32[3,1,32], index: 3, kind: input, shape index: {}]
  %s4 = inlined_call_operand.vmem [shape: f32[32,32], index: 4, kind: input, shape index: {}]
  %s5 = inlined_call_operand.vmem [shape: f32[1,32], index: 5, kind: input, shape index: {}]
  %s6 = inlined_call_operand.vmem [shape: f32[1,32], index: 6, kind: input, shape index: {}]
  %s7 = inlined_call_operand.vmem [shape: f32[1,32], index: 7, kind: input, shape index: {}]
  %s8 = inlined_call_operand.vmem [shape: f32[2,8,32], index: 8, kind: output, shape index: {}]
  %s9 = sld [smem:[#allocation0]]
  $region65: #{_lambda_.7} parent=0
    _
  %s11 = ssub.s32 1, %s9
  %s12 = scalar_select 0, %s11, %s9
  loop: start=0, step=1, limit=4
  $region2: #{_lambda_.7} parent=0 // loop_pre_header
    _
  $region3: #{_lambda_.7} parent=0 // loop_header
    %s14 = sphi 0, %s18
    %p15 = scmp.ge.s32.totalorder %s14, 4
    %s24 = sphi 0, %s26
    %s27 = sphi 0, %s24
    %s28 = sphi 0, %s27
    %s44 = sphi 0, %s28
    %s50 = sphi 0, %s52
    %s53 = sphi 0, %s50
    %s54 = sphi 0, %s53
    %s70 = sphi 0, %s54
    %s74 = sphi 0, %s74
    %s76 = sphi 0, %s74
    %s77 = sphi 0, %s76
    %s91 = sphi 0, %s77
    %s95 = sphi 0, %s95
    %s97 = sphi 0, %s95
    %s98 = sphi 0, %s97
    %s112 = sphi 0, %s98
    %s116 = sphi 0, %s116
    %s118 = sphi 0, %s116
    %s119 = sphi 0, %s118
    %s133 = sphi 0, %s119
    %s137 = sphi 0, %s137
    %s139 = sphi 0, %s137
    %s140 = sphi 0, %s139
    %s154 = sphi 0, %s140
    %s158 = sphi 0, %s158
    %s160 = sphi 0, %s158
    %s161 = sphi 0, %s160
    %s175 = sphi 0, %s161
    %s179 = sphi 0, %s179
    %s181 = sphi 0, %s179
    %s182 = sphi 0, %s181
    %s196 = sphi 0, %s182
    %s202 = sphi 0, %s204
    %s205 = sphi 0, %s202
    %s206 = sphi 0, %s205
    %s222 = sphi 0, %s206
  $region4: #{_lambda_.7} parent=0 // loop_header_branch
    %17 = sbr.rel (%p15) target = $region8
  $region5: #{_lambda_.7} parent=0 // loop_body
    %s19 = ssub.s32 %s14, 1
    %s20 = ssub.s32 %s14, 2
    %s21 = sadd.s32 %s14, 1
    %s22 = ssub.s32 %s14, %s21
    %p23 = scmp.eq.s32.totalorder %s22, 0
    %s25 = sadd.s32 %s24, 1
    %s26 = scalar_select %p23, %s24, %s25
    %p29 = pneg %p23
    %p30 = scmp.eq.s32.totalorder %s14, 1
    %p31 = por %p29, %p30
    %p32 = scmp.ne.s32.totalorder %s24, %s27
    %p33 = scmp.eq.s32.totalorder %s14, 0
    %p34 = por %p32, %p33
    %p35 = scmp.ne.s32.totalorder %s24, %s27
    %p36 = scmp.eq.s32.totalorder %s19, 1
    %p37 = por %p35, %p36
    %p38 = scmp.ne.s32.totalorder %s27, %s28
    %p39 = scmp.eq.s32.totalorder %s19, 0
    %p40 = por %p38, %p39
    %p41 = scmp.ne.s32.totalorder %s27, %s28
    %p42 = scmp.eq.s32.totalorder %s20, 1
    %p43 = por %p41, %p42
    %p45 = scmp.ne.s32.totalorder %s28, %s44
    %p46 = scmp.eq.s32.totalorder %s20, 0
    %p47 = por %p45, %p46
    %s48 = ssub.s32 %s14, %s21
    %p49 = scmp.eq.s32.totalorder %s48, 0
    %s51 = sadd.s32 %s50, 1
    %s52 = scalar_select %p49, %s50, %s51
    %p55 = pneg %p49
    %p56 = scmp.eq.s32.totalorder %s14, 1
    %p57 = por %p55, %p56
    %p58 = scmp.ne.s32.totalorder %s50, %s53
    %p59 = scmp.eq.s32.totalorder %s14, 0
    %p60 = por %p58, %p59
    %p61 = scmp.ne.s32.totalorder %s50, %s53
    %p62 = scmp.eq.s32.totalorder %s19, 1
    %p63 = por %p61, %p62
    %p64 = scmp.ne.s32.totalorder %s53, %s54
    %p65 = scmp.eq.s32.totalorder %s19, 0
    %p66 = por %p64, %p65
    %p67 = scmp.ne.s32.totalorder %s53, %s54
    %p68 = scmp.eq.s32.totalorder %s20, 1
    %p69 = por %p67, %p68
    %p71 = scmp.ne.s32.totalorder %s54, %s70
    %p72 = scmp.eq.s32.totalorder %s20, 0
    %p73 = por %p71, %p72
    %s75 = sadd.s32 %s74, 1
    %p78 = scmp.eq.s32.totalorder %s14, 1
    %p79 = scmp.ne.s32.totalorder %s74, %s76
    %p80 = scmp.eq.s32.totalorder %s14, 0
    %p81 = por %p79, %p80
    %p82 = scmp.ne.s32.totalorder %s74, %s76
    %p83 = scmp.eq.s32.totalorder %s19, 1
    %p84 = por %p82, %p83
    %p85 = scmp.ne.s32.totalorder %s76, %s77
    %p86 = scmp.eq.s32.totalorder %s19, 0
    %p87 = por %p85, %p86
    %p88 = scmp.ne.s32.totalorder %s76, %s77
    %p89 = scmp.eq.s32.totalorder %s20, 1
    %p90 = por %p88, %p89
    %p92 = scmp.ne.s32.totalorder %s77, %s91
    %p93 = scmp.eq.s32.totalorder %s20, 0
    %p94 = por %p92, %p93
    %s96 = sadd.s32 %s95, 1
    %p99 = scmp.eq.s32.totalorder %s14, 1
    %p100 = scmp.ne.s32.totalorder %s95, %s97
    %p101 = scmp.eq.s32.totalorder %s14, 0
    %p102 = por %p100, %p101
    %p103 = scmp.ne.s32.totalorder %s95, %s97
    %p104 = scmp.eq.s32.totalorder %s19, 1
    %p105 = por %p103, %p104
    %p106 = scmp.ne.s32.totalorder %s97, %s98
    %p107 = scmp.eq.s32.totalorder %s19, 0
    %p108 = por %p106, %p107
    %p109 = scmp.ne.s32.totalorder %s97, %s98
    %p110 = scmp.eq.s32.totalorder %s20, 1
    %p111 = por %p109, %p110
    %p113 = scmp.ne.s32.totalorder %s98, %s112
    %p114 = scmp.eq.s32.totalorder %s20, 0
    %p115 = por %p113, %p114
    %s117 = sadd.s32 %s116, 1
    %p120 = scmp.eq.s32.totalorder %s14, 1
    %p121 = scmp.ne.s32.totalorder %s116, %s118
    %p122 = scmp.eq.s32.totalorder %s14, 0
    %p123 = por %p121, %p122
    %p124 = scmp.ne.s32.totalorder %s116, %s118
    %p125 = scmp.eq.s32.totalorder %s19, 1
    %p126 = por %p124, %p125
    %p127 = scmp.ne.s32.totalorder %s118, %s119
    %p128 = scmp.eq.s32.totalorder %s19, 0
    %p129 = por %p127, %p128
    %p130 = scmp.ne.s32.totalorder %s118, %s119
    %p131 = scmp.eq.s32.totalorder %s20, 1
    %p132 = por %p130, %p131
    %p134 = scmp.ne.s32.totalorder %s119, %s133
    %p135 = scmp.eq.s32.totalorder %s20, 0
    %p136 = por %p134, %p135
    %s138 = sadd.s32 %s137, 1
    %p141 = scmp.eq.s32.totalorder %s14, 1
    %p142 = scmp.ne.s32.totalorder %s137, %s139
    %p143 = scmp.eq.s32.totalorder %s14, 0
    %p144 = por %p142, %p143
    %p145 = scmp.ne.s32.totalorder %s137, %s139
    %p146 = scmp.eq.s32.totalorder %s19, 1
    %p147 = por %p145, %p146
    %p148 = scmp.ne.s32.totalorder %s139, %s140
    %p149 = scmp.eq.s32.totalorder %s19, 0
    %p150 = por %p148, %p149
    %p151 = scmp.ne.s32.totalorder %s139, %s140
    %p152 = scmp.eq.s32.totalorder %s20, 1
    %p153 = por %p151, %p152
    %p155 = scmp.ne.s32.totalorder %s140, %s154
    %p156 = scmp.eq.s32.totalorder %s20, 0
    %p157 = por %p155, %p156
    %s159 = sadd.s32 %s158, 1
    %p162 = scmp.eq.s32.totalorder %s14, 1
    %p163 = scmp.ne.s32.totalorder %s158, %s160
    %p164 = scmp.eq.s32.totalorder %s14, 0
    %p165 = por %p163, %p164
    %p166 = scmp.ne.s32.totalorder %s158, %s160
    %p167 = scmp.eq.s32.totalorder %s19, 1
    %p168 = por %p166, %p167
    %p169 = scmp.ne.s32.totalorder %s160, %s161
    %p170 = scmp.eq.s32.totalorder %s19, 0
    %p171 = por %p169, %p170
    %p172 = scmp.ne.s32.totalorder %s160, %s161
    %p173 = scmp.eq.s32.totalorder %s20, 1
    %p174 = por %p172, %p173
    %p176 = scmp.ne.s32.totalorder %s161, %s175
    %p177 = scmp.eq.s32.totalorder %s20, 0
    %p178 = por %p176, %p177
    %s180 = sadd.s32 %s179, 1
    %p183 = scmp.eq.s32.totalorder %s14, 1
    %p184 = scmp.ne.s32.totalorder %s179, %s181
    %p185 = scmp.eq.s32.totalorder %s14, 0
    %p186 = por %p184, %p185
    %p187 = scmp.ne.s32.totalorder %s179, %s181
    %p188 = scmp.eq.s32.totalorder %s19, 1
    %p189 = por %p187, %p188
    %p190 = scmp.ne.s32.totalorder %s181, %s182
    %p191 = scmp.eq.s32.totalorder %s19, 0
    %p192 = por %p190, %p191
    %p193 = scmp.ne.s32.totalorder %s181, %s182
    %p194 = scmp.eq.s32.totalorder %s20, 1
    %p195 = por %p193, %p194
    %p197 = scmp.ne.s32.totalorder %s182, %s196
    %p198 = scmp.eq.s32.totalorder %s20, 0
    %p199 = por %p197, %p198
    %s200 = ssub.s32 %s14, %s21
    %p201 = scmp.eq.s32.totalorder %s200, 0
    %s203 = sadd.s32 %s202, 1
    %s204 = scalar_select %p201, %s202, %s203
    %p207 = pneg %p201
    %p208 = scmp.eq.s32.totalorder %s14, 1
    %p209 = por %p207, %p208
    %p210 = scmp.ne.s32.totalorder %s202, %s205
    %p211 = scmp.eq.s32.totalorder %s14, 0
    %p212 = por %p210, %p211
    %p213 = scmp.ne.s32.totalorder %s202, %s205
    %p214 = scmp.eq.s32.totalorder %s19, 1
    %p215 = por %p213, %p214
    %p216 = scmp.ne.s32.totalorder %s205, %s206
    %p217 = scmp.eq.s32.totalorder %s19, 0
    %p218 = por %p216, %p217
    %p219 = scmp.ne.s32.totalorder %s205, %s206
    %p220 = scmp.eq.s32.totalorder %s20, 1
    %p221 = por %p219, %p220
    %p223 = scmp.ne.s32.totalorder %s206, %s222
    %p224 = scmp.eq.s32.totalorder %s20, 0
    %p225 = por %p223, %p224
    %p226 = scmp.le.s32.totalorder 1, %s14
    %p227 = scmp.lt.s32.totalorder %s14, 3
    %p228 = pnand %p226, %p227
    %p229 = pneg %p228
    // Predicated region
    $region9: #{_lambda_.7} parent=5 // pred_check
      _
    $region10: #{_lambda_.7} parent=5 // pred_check_branch
      %231 = sbr.rel (%p228) target = $region12
    $region11: #{_lambda_.7} parent=5 // pred_region
      %s232 = ssub.s32 %s14, 1
      // Predicated region
      $region13: #{_lambda_.7} parent=11 // pred_check
        %p233 = pneg %p87
      $region14: #{_lambda_.7} parent=11 // pred_check_branch
        %235 = sbr.rel (%p233) target = $region16
      $region15: #{_lambda_.7} parent=11 // pred_region
        _
      $region16: #{_lambda_.7} parent=11 // pred_fallthru
        _
      // Predicated region
      $region17: #{_lambda_.7} parent=11 // pred_check
        %p236 = pneg %p108
      $region18: #{_lambda_.7} parent=11 // pred_check_branch
        %238 = sbr.rel (%p236) target = $region20
      $region19: #{_lambda_.7} parent=11 // pred_region
        _
      $region20: #{_lambda_.7} parent=11 // pred_fallthru
        _
      // Predicated region
      $region21: #{_lambda_.7} parent=11 // pred_check
        %p239 = pneg %p129
      $region22: #{_lambda_.7} parent=11 // pred_check_branch
        %241 = sbr.rel (%p239) target = $region24
      $region23: #{_lambda_.7} parent=11 // pred_region
        _
      $region24: #{_lambda_.7} parent=11 // pred_fallthru
        _
      // Predicated region
      $region25: #{_lambda_.7} parent=11 // pred_check
        %p242 = pneg %p150
      $region26: #{_lambda_.7} parent=11 // pred_check_branch
        %244 = sbr.rel (%p242) target = $region28
      $region27: #{_lambda_.7} parent=11 // pred_region
        _
      $region28: #{_lambda_.7} parent=11 // pred_fallthru
        _
      // Predicated region
      $region29: #{_lambda_.7} parent=11 // pred_check
        %p245 = pneg %p171
      $region30: #{_lambda_.7} parent=11 // pred_check_branch
        %247 = sbr.rel (%p245) target = $region32
      $region31: #{_lambda_.7} parent=11 // pred_region
        _
      $region32: #{_lambda_.7} parent=11 // pred_fallthru
        _
      // Predicated region
      $region33: #{_lambda_.7} parent=11 // pred_check
        %p248 = pneg %p192
      $region34: #{_lambda_.7} parent=11 // pred_check_branch
        %250 = sbr.rel (%p248) target = $region36
      $region35: #{_lambda_.7} parent=11 // pred_region
        _
      $region36: #{_lambda_.7} parent=11 // pred_fallthru
        _
    $region12: #{_lambda_.7} parent=5 // pred_fallthru
      _
    %p251 = scmp.lt.s32.totalorder %s14, 2
    // Predicated region
    $region37: #{_lambda_.7} parent=5 // pred_check
      %p252 = pneg %p251
    $region38: #{_lambda_.7} parent=5 // pred_check_branch
      %254 = sbr.rel (%p252) target = $region40
    $region39: #{_lambda_.7} parent=5 // pred_region
      // Predicated region
      $region41: #{_lambda_.7} parent=39 // pred_check
        %p255 = pneg %p34
      $region42: #{_lambda_.7} parent=39 // pred_check_branch
        %257 = sbr.rel (%p255) target = $region44
      $region43: #{_lambda_.7} parent=39 // pred_region
        %p258 = scmp.lt.s32.totalorder %s14, 1
        %s259 = scalar_select %p258, %s14, 1
        %s260 = smul.addr %s259, 8
        %s261 = scalar_lea.vmem %s0, %s260
      $region44: #{_lambda_.7} parent=39 // pred_fallthru
        _
      // Predicated region
      $region45: #{_lambda_.7} parent=39 // pred_check
        %p262 = pneg %p60
      $region46: #{_lambda_.7} parent=39 // pred_check_branch
        %264 = sbr.rel (%p262) target = $region48
      $region47: #{_lambda_.7} parent=39 // pred_region
        %p265 = scmp.lt.s32.totalorder %s14, 1
        %s266 = scalar_select %p265, %s14, 1
        %s267 = scalar_lea.vmem %s1, %s266
      $region48: #{_lambda_.7} parent=39 // pred_fallthru
        _
    $region40: #{_lambda_.7} parent=5 // pred_fallthru
      _
    %p268 = scmp.le.s32.totalorder 1, %s14
    %p269 = scmp.lt.s32.totalorder %s14, 3
    %p270 = pnand %p268, %p269
    %p271 = pneg %p270
    // Predicated region
    $region49: #{_lambda_.7} parent=5 // pred_check
      _
    $region50: #{_lambda_.7} parent=5 // pred_check_branch
      %273 = sbr.rel (%p270) target = $region52
    $region51: #{_lambda_.7} parent=5 // pred_region
      %s274 = ssub.s32 %s14, 1
      %p275 = scmp.lt.s32.totalorder %s19, 1
      %s276 = scalar_select %p275, %s19, 1
      %s277 = smul.addr %s276, 8
      %s278 = scalar_lea.vmem %s0, %s277
      %p279 = pneg %p40
      %p280 = pneg %p37
      %p281 = scmp.lt.s32.totalorder %s19, 1
      %s282 = scalar_select %p281, %s19, 1
      %s283 = scalar_lea.vmem %s1, %s282
      %p284 = pneg %p66
      %p285 = pneg %p63
      %p286 = pneg %p87
      %p287 = pneg %p84
      %p288 = pneg %p108
      %p289 = pneg %p105
      %p290 = pneg %p129
      %p291 = pneg %p126
      %p292 = pneg %p150
      %p293 = pneg %p147
      %p294 = pneg %p171
      %p295 = pneg %p168
      %p296 = pneg %p192
      %p297 = pneg %p189
      %p298 = pneg %p218
      %p299 = pneg %p215
      %p300 = scmp.lt.s32.totalorder %s19, 1
      %s301 = scalar_select %p300, %s19, 1
      %s302 = smul.addr %s301, 8
      %s303 = scalar_lea.vmem %s8, %s302
      %p304 = scmp.lt.s32.totalorder %s19, 1
      %s305 = scalar_select %p304, %s19, 1
      %s306 = smul.addr %s305, 8
      %s307 = scalar_lea.vmem %s0, %s306
      %p308 = scmp.lt.s32.totalorder %s19, 1
      %s309 = scalar_select %p308, %s19, 1
      %s310 = scalar_lea.vmem %s1, %s309
      %p311 = scmp.lt.s32.totalorder %s19, 1
      %s312 = scalar_select %p311, %s19, 1
      %s313 = smul.addr %s312, 8
      %s314 = scalar_lea.vmem %s8, %s313
      %v315 = vld [vmem:[%s307] sm:$0xff]
      %v316 = vld [vmem:[%s310] sm:$0x1]
      %v317 = vld [vmem:[%s2] sm:$0xff]
      %v318 = vld [vmem:[%s2 + $0x8] sm:$0xff]
      %v319 = vld [vmem:[%s2 + $0x10] sm:$0xff]
      %v320 = vld [vmem:[%s2 + $0x18] sm:$0xff]
      %v321 = vld [vmem:[%s3] sm:$0x1]
      %v323 = vlaneseq
      %v324 = vshrl.u32 %v323, 7
      %v325 = vsub.s32 0, %v324
      %v326 = vrot.slane %v321, %v325
      %vm328 = vcmask 261120
      %v330 = vsel %vm328, %v315, 0
      %332 = vmatprep.subr.mxu0 0.0
      %333 = vmatpush1.msra.mxu0 0.0
      %334 = vmatprep.subr.mxu0 0.0
      %335 = vmatpush1.msra.mxu0 0.0
      %336 = vmatprep.subr.mxu0 0.0
      %337 = vmatpush1.msra.mxu0 0.0
      %338 = vmatprep.subr.mxu0 0.0
      %339 = vmatpush1.msra.mxu0 0.0
      %340 = vmatprep.subr.mxu0 0.0
      %341 = vmatpush1.msra.mxu0 0.0
      %342 = vmatprep.subr.mxu0 0.0
      %343 = vmatpush1.msra.mxu0 0.0
      %344 = vmatprep.subr.mxu0 0.0
      %345 = vmatpush1.msra.mxu0 0.0
      %346 = vmatprep.subr.mxu0 0.0
      %347 = vmatpush1.msra.mxu0 0.0
      %348 = vmatprep.subr.mxu0 0.0
      %349 = vmatpush1.msra.mxu0 0.0
      %350 = vmatprep.subr.mxu0 0.0
      %351 = vmatpush1.msra.mxu0 0.0
      %352 = vmatprep.subr.mxu0 0.0
      %353 = vmatpush1.msra.mxu0 0.0
      %354 = vmatprep.subr.mxu0 0.0
      %355 = vmatpush1.msra.mxu0 0.0
      %356 = vmatprep.subr.mxu0 0.0
      %357 = vmatpush1.msra.mxu0 %v320
      %358 = vmatprep.subr.mxu0 0.0
      %359 = vmatpush1.msra.mxu0 %v319
      %360 = vmatprep.subr.mxu0 0.0
      %361 = vmatpush1.msra.mxu0 %v318
      %362 = vmatprep.subr.mxu0 0.0
      %363 = vmatpush1.msra.mxu0 %v317
      %364 = vmatprep.subr.mxu0 0.0
      %365 = vmatpush2.msra.mxu0 0.0
      %366 = vmatprep.subr.mxu0 0.0
      %367 = vmatpush2.msra.mxu0 0.0
      %368 = vmatprep.subr.mxu0 0.0
      %369 = vmatpush2.msra.mxu0 0.0
      %370 = vmatprep.subr.mxu0 0.0
      %371 = vmatpush2.msra.mxu0 0.0
      %372 = vmatprep.subr.mxu0 0.0
      %373 = vmatpush2.msra.mxu0 0.0
      %374 = vmatprep.subr.mxu0 0.0
      %375 = vmatpush2.msra.mxu0 0.0
      %376 = vmatprep.subr.mxu0 0.0
      %377 = vmatpush2.msra.mxu0 0.0
      %378 = vmatprep.subr.mxu0 0.0
      %379 = vmatpush2.msra.mxu0 0.0
      %380 = vmatprep.subr.mxu0 0.0
      %381 = vmatpush2.msra.mxu0 0.0
      %382 = vmatprep.subr.mxu0 0.0
      %383 = vmatpush2.msra.mxu0 0.0
      %384 = vmatprep.subr.mxu0 0.0
      %385 = vmatpush2.msra.mxu0 0.0
      %386 = vmatprep.subr.mxu0 0.0
      %387 = vmatpush2.msra.mxu0 0.0
      %388 = vmatprep.subr.mxu0 0.0
      %389 = vmatpush2.msra.mxu0 0.0
      %390 = vmatprep.subr.mxu0 0.0
      %391 = vmatpush2.msra.mxu0 0.0
      %392 = vmatprep.subr.mxu0 0.0
      %393 = vmatpush2.msra.mxu0 0.0
      %394 = vmatprep.subr.mxu0 0.0
      %395 = vmatpush2.msra.mxu0 0.0
      %396 = vmatprep.mubr.f32.mxu0 0.0
      %397 = vmatmul.mubr.f32.gmra.mxu0 %v330
      %v398 = vpop.f32.mrf.mxu0
      %v399 = vadd.f32 %v326, %v398
      %v400 = vpop.f32.mrf.mxu0
      %401 = vdwg.mxu0
      %s402 = scalar_lea.vmem %s2, 32
      %v403 = vld [vmem:[%s402] sm:$0xff]
      %v404 = vld [vmem:[%s402 + $0x8] sm:$0xff]
      %v405 = vld [vmem:[%s402 + $0x10] sm:$0xff]
      %v406 = vld [vmem:[%s402 + $0x18] sm:$0xff]
      %s407 = scalar_lea.vmem %s3, 1
      %v408 = vld [vmem:[%s407] sm:$0x1]
      %v410 = vlaneseq
      %v411 = vshrl.u32 %v410, 7
      %v412 = vsub.s32 0, %v411
      %v413 = vrot.slane %v408, %v412
      %415 = vmatprep.subr.mxu0 0.0
      %416 = vmatpush1.msra.mxu0 0.0
      %417 = vmatprep.subr.mxu0 0.0
      %418 = vmatpush1.msra.mxu0 0.0
      %419 = vmatprep.subr.mxu0 0.0
      %420 = vmatpush1.msra.mxu0 0.0
      %421 = vmatprep.subr.mxu0 0.0
      %422 = vmatpush1.msra.mxu0 0.0
      %423 = vmatprep.subr.mxu0 0.0
      %424 = vmatpush1.msra.mxu0 0.0
      %425 = vmatprep.subr.mxu0 0.0
      %426 = vmatpush1.msra.mxu0 0.0
      %427 = vmatprep.subr.mxu0 0.0
      %428 = vmatpush1.msra.mxu0 0.0
      %429 = vmatprep.subr.mxu0 0.0
      %430 = vmatpush1.msra.mxu0 0.0
      %431 = vmatprep.subr.mxu0 0.0
      %432 = vmatpush1.msra.mxu0 0.0
      %433 = vmatprep.subr.mxu0 0.0
      %434 = vmatpush1.msra.mxu0 0.0
      %435 = vmatprep.subr.mxu0 0.0
      %436 = vmatpush1.msra.mxu0 0.0
      %437 = vmatprep.subr.mxu0 0.0
      %438 = vmatpush1.msra.mxu0 0.0
      %439 = vmatprep.subr.mxu0 0.0
      %440 = vmatpush1.msra.mxu0 %v406
      %441 = vmatprep.subr.mxu0 0.0
      %442 = vmatpush1.msra.mxu0 %v405
      %443 = vmatprep.subr.mxu0 0.0
      %444 = vmatpush1.msra.mxu0 %v404
      %445 = vmatprep.subr.mxu0 0.0
      %446 = vmatpush1.msra.mxu0 %v403
      %447 = vmatprep.subr.mxu0 0.0
      %448 = vmatpush2.msra.mxu0 0.0
      %449 = vmatprep.subr.mxu0 0.0
      %450 = vmatpush2.msra.mxu0 0.0
      %451 = vmatprep.subr.mxu0 0.0
      %452 = vmatpush2.msra.mxu0 0.0
      %453 = vmatprep.subr.mxu0 0.0
      %454 = vmatpush2.msra.mxu0 0.0
      %455 = vmatprep.subr.mxu0 0.0
      %456 = vmatpush2.msra.mxu0 0.0
      %457 = vmatprep.subr.mxu0 0.0
      %458 = vmatpush2.msra.mxu0 0.0
      %459 = vmatprep.subr.mxu0 0.0
      %460 = vmatpush2.msra.mxu0 0.0
      %461 = vmatprep.subr.mxu0 0.0
      %462 = vmatpush2.msra.mxu0 0.0
      %463 = vmatprep.subr.mxu0 0.0
      %464 = vmatpush2.msra.mxu0 0.0
      %465 = vmatprep.subr.mxu0 0.0
      %466 = vmatpush2.msra.mxu0 0.0
      %467 = vmatprep.subr.mxu0 0.0
      %468 = vmatpush2.msra.mxu0 0.0
      %469 = vmatprep.subr.mxu0 0.0
      %470 = vmatpush2.msra.mxu0 0.0
      %471 = vmatprep.subr.mxu0 0.0
      %472 = vmatpush2.msra.mxu0 0.0
      %473 = vmatprep.subr.mxu0 0.0
      %474 = vmatpush2.msra.mxu0 0.0
      %475 = vmatprep.subr.mxu0 0.0
      %476 = vmatpush2.msra.mxu0 0.0
      %477 = vmatprep.subr.mxu0 0.0
      %478 = vmatpush2.msra.mxu0 0.0
      %479 = vmatprep.mubr.f32.mxu0 0.0
      %480 = vmatmul.mubr.f32.gmra.mxu0 %v330
      %v481 = vpop.f32.mrf.mxu0
      %v482 = vadd.f32 %v413, %v481
      %v483 = vpop.f32.mrf.mxu0
      %484 = vdwg.mxu0
      %s485 = scalar_lea.vmem %s2, 64
      %v486 = vld [vmem:[%s485] sm:$0xff]
      %v487 = vld [vmem:[%s485 + $0x8] sm:$0xff]
      %v488 = vld [vmem:[%s485 + $0x10] sm:$0xff]
      %v489 = vld [vmem:[%s485 + $0x18] sm:$0xff]
      %s490 = scalar_lea.vmem %s3, 2
      %v491 = vld [vmem:[%s490] sm:$0x1]
      %v493 = vlaneseq
      %v494 = vshrl.u32 %v493, 7
      %v495 = vsub.s32 0, %v494
      %v496 = vrot.slane %v491, %v495
      %498 = vmatprep.subr.mxu0 0.0
      %499 = vmatpush1.msra.mxu0 0.0
      %500 = vmatprep.subr.mxu0 0.0
      %501 = vmatpush1.msra.mxu0 0.0
      %502 = vmatprep.subr.mxu0 0.0
      %503 = vmatpush1.msra.mxu0 0.0
      %504 = vmatprep.subr.mxu0 0.0
      %505 = vmatpush1.msra.mxu0 0.0
      %506 = vmatprep.subr.mxu0 0.0
      %507 = vmatpush1.msra.mxu0 0.0
      %508 = vmatprep.subr.mxu0 0.0
      %509 = vmatpush1.msra.mxu0 0.0
      %510 = vmatprep.subr.mxu0 0.0
      %511 = vmatpush1.msra.mxu0 0.0
      %512 = vmatprep.subr.mxu0 0.0
      %513 = vmatpush1.msra.mxu0 0.0
      %514 = vmatprep.subr.mxu0 0.0
      %515 = vmatpush1.msra.mxu0 0.0
      %516 = vmatprep.subr.mxu0 0.0
      %517 = vmatpush1.msra.mxu0 0.0
      %518 = vmatprep.subr.mxu0 0.0
      %519 = vmatpush1.msra.mxu0 0.0
      %520 = vmatprep.subr.mxu0 0.0
      %521 = vmatpush1.msra.mxu0 0.0
      %522 = vmatprep.subr.mxu0 0.0
      %523 = vmatpush1.msra.mxu0 %v489
      %524 = vmatprep.subr.mxu0 0.0
      %525 = vmatpush1.msra.mxu0 %v488
      %526 = vmatprep.subr.mxu0 0.0
      %527 = vmatpush1.msra.mxu0 %v487
      %528 = vmatprep.subr.mxu0 0.0
      %529 = vmatpush1.msra.mxu0 %v486
      %530 = vmatprep.subr.mxu0 0.0
      %531 = vmatpush2.msra.mxu0 0.0
      %532 = vmatprep.subr.mxu0 0.0
      %533 = vmatpush2.msra.mxu0 0.0
      %534 = vmatprep.subr.mxu0 0.0
      %535 = vmatpush2.msra.mxu0 0.0
      %536 = vmatprep.subr.mxu0 0.0
      %537 = vmatpush2.msra.mxu0 0.0
      %538 = vmatprep.subr.mxu0 0.0
      %539 = vmatpush2.msra.mxu0 0.0
      %540 = vmatprep.subr.mxu0 0.0
      %541 = vmatpush2.msra.mxu0 0.0
      %542 = vmatprep.subr.mxu0 0.0
      %543 = vmatpush2.msra.mxu0 0.0
      %544 = vmatprep.subr.mxu0 0.0
      %545 = vmatpush2.msra.mxu0 0.0
      %546 = vmatprep.subr.mxu0 0.0
      %547 = vmatpush2.msra.mxu0 0.0
      %548 = vmatprep.subr.mxu0 0.0
      %549 = vmatpush2.msra.mxu0 0.0
      %550 = vmatprep.subr.mxu0 0.0
      %551 = vmatpush2.msra.mxu0 0.0
      %552 = vmatprep.subr.mxu0 0.0
      %553 = vmatpush2.msra.mxu0 0.0
      %554 = vmatprep.subr.mxu0 0.0
      %555 = vmatpush2.msra.mxu0 0.0
      %556 = vmatprep.subr.mxu0 0.0
      %557 = vmatpush2.msra.mxu0 0.0
      %558 = vmatprep.subr.mxu0 0.0
      %559 = vmatpush2.msra.mxu0 0.0
      %560 = vmatprep.subr.mxu0 0.0
      %561 = vmatpush2.msra.mxu0 0.0
      %562 = vmatprep.mubr.f32.mxu0 0.0
      %563 = vmatmul.mubr.f32.gmra.mxu0 %v330
      %v564 = vpop.f32.mrf.mxu0
      %v565 = vadd.f32 %v496, %v564
      %v566 = vpop.f32.mrf.mxu0
      %567 = vdwg.mxu0
      %v569 = vsel %vm328, %v399, 0
      %v572 = vsel %vm328, %v482, 0
      %574 = vmatprep.subr.mxu0 0.0
      %575 = vmatpush1.xpose.msra.mxu0 0.0
      %576 = vmatprep.subr.mxu0 0.0
      %577 = vmatpush1.xpose.msra.mxu0 0.0
      %578 = vmatprep.subr.mxu0 0.0
      %579 = vmatpush1.xpose.msra.mxu0 0.0
      %580 = vmatprep.subr.mxu0 0.0
      %581 = vmatpush1.xpose.msra.mxu0 0.0
      %582 = vmatprep.subr.mxu0 0.0
      %583 = vmatpush1.xpose.msra.mxu0 0.0
      %584 = vmatprep.subr.mxu0 0.0
      %585 = vmatpush1.xpose.msra.mxu0 0.0
      %586 = vmatprep.subr.mxu0 0.0
      %587 = vmatpush1.xpose.msra.mxu0 0.0
      %588 = vmatprep.subr.mxu0 0.0
      %589 = vmatpush1.xpose.msra.mxu0 0.0
      %590 = vmatprep.subr.mxu0 0.0
      %591 = vmatpush1.xpose.msra.mxu0 0.0
      %592 = vmatprep.subr.mxu0 0.0
      %593 = vmatpush1.xpose.msra.mxu0 0.0
      %594 = vmatprep.subr.mxu0 0.0
      %595 = vmatpush1.xpose.msra.mxu0 0.0
      %596 = vmatprep.subr.mxu0 0.0
      %597 = vmatpush1.xpose.msra.mxu0 0.0
      %598 = vmatprep.subr.mxu0 0.0
      %599 = vmatpush1.xpose.msra.mxu0 0.0
      %600 = vmatprep.subr.mxu0 0.0
      %601 = vmatpush1.xpose.msra.mxu0 0.0
      %602 = vmatprep.subr.mxu0 0.0
      %603 = vmatpush1.xpose.msra.mxu0 0.0
      %604 = vmatprep.subr.mxu0 0.0
      %605 = vmatpush1.xpose.msra.mxu0 %v572
      %606 = vmatprep.subr.mxu0 0.0
      %607 = vmatpush2.xpose.msra.mxu0 0.0
      %608 = vmatprep.subr.mxu0 0.0
      %609 = vmatpush2.xpose.msra.mxu0 0.0
      %610 = vmatprep.subr.mxu0 0.0
      %611 = vmatpush2.xpose.msra.mxu0 0.0
      %612 = vmatprep.subr.mxu0 0.0
      %613 = vmatpush2.xpose.msra.mxu0 0.0
      %614 = vmatprep.subr.mxu0 0.0
      %615 = vmatpush2.xpose.msra.mxu0 0.0
      %616 = vmatprep.subr.mxu0 0.0
      %617 = vmatpush2.xpose.msra.mxu0 0.0
      %618 = vmatprep.subr.mxu0 0.0
      %619 = vmatpush2.xpose.msra.mxu0 0.0
      %620 = vmatprep.subr.mxu0 0.0
      %621 = vmatpush2.xpose.msra.mxu0 0.0
      %622 = vmatprep.subr.mxu0 0.0
      %623 = vmatpush2.xpose.msra.mxu0 0.0
      %624 = vmatprep.subr.mxu0 0.0
      %625 = vmatpush2.xpose.msra.mxu0 0.0
      %626 = vmatprep.subr.mxu0 0.0
      %627 = vmatpush2.xpose.msra.mxu0 0.0
      %628 = vmatprep.subr.mxu0 0.0
      %629 = vmatpush2.xpose.msra.mxu0 0.0
      %630 = vmatprep.subr.mxu0 0.0
      %631 = vmatpush2.xpose.msra.mxu0 0.0
      %632 = vmatprep.subr.mxu0 0.0
      %633 = vmatpush2.xpose.msra.mxu0 0.0
      %634 = vmatprep.subr.mxu0 0.0
      %635 = vmatpush2.xpose.msra.mxu0 0.0
      %636 = vmatprep.subr.mxu0 0.0
      %637 = vmatpush2.xpose.msra.mxu0 0.0
      %638 = vmatprep.mubr.f32.mxu0 0.0
      %639 = vmatmul.mubr.f32.gmra.mxu0 %v569
      %v640 = vpop.f32.mrf.mxu0
      %v641 = vadd.f32 0.0, %v640
      %v642 = vpop.f32.mrf.mxu0
      %643 = vdwg.mxu0
      %v644 = vmul.f32 %v641, 0.17677669
      %v645 = vmul.f32 %v316, -1e+09
      %v647 = vlaneseq
      %v648 = vshrl.u32 %v647, 7
      %v649 = vsub.s32 0, %v648
      %v650 = vrot.slane %v645, %v649
      %v652 = vadd.f32 %v644, %v650
      %vm653 = vcmask 64512
      %v654 = vsel %vm653, %v652, -inf
      %655 = vmax.xlane.f32.xlu0 %v654
      %v656 = vpop.xlane.xlu0 %655
      %v657 = vsub.f32 %v652, %v656
      %v658 = vmul.f32 %v657, 1.442695
      %v659 = vpow.pop %v658
      %v660 = vsel %vm653, %v659, 0.0
      %661 = vadd.xlane.f32.xlu0 %v660
      %v662 = vpop.xlane.xlu0 %661
      %v663 = vrcp.pop %v662
      %v664 = vmul.f32 %v659, %v663
      %v666 = vsel %vm653, %v664, 0
      %668 = vmatprep.subr.mxu0 0.0
      %669 = vmatpush1.msra.mxu0 0.0
      %670 = vmatprep.subr.mxu0 0.0
      %671 = vmatpush1.msra.mxu0 0.0
      %672 = vmatprep.subr.mxu0 0.0
      %673 = vmatpush1.msra.mxu0 0.0
      %674 = vmatprep.subr.mxu0 0.0
      %675 = vmatpush1.msra.mxu0 0.0
      %676 = vmatprep.subr.mxu0 0.0
      %677 = vmatpush1.msra.mxu0 0.0
      %678 = vmatprep.subr.mxu0 0.0
      %679 = vmatpush1.msra.mxu0 0.0
      %680 = vmatprep.subr.mxu0 0.0
      %681 = vmatpush1.msra.mxu0 0.0
      %682 = vmatprep.subr.mxu0 0.0
      %683 = vmatpush1.msra.mxu0 0.0
      %684 = vmatprep.subr.mxu0 0.0
      %685 = vmatpush1.msra.mxu0 0.0
      %686 = vmatprep.subr.mxu0 0.0
      %687 = vmatpush1.msra.mxu0 0.0
      %688 = vmatprep.subr.mxu0 0.0
      %689 = vmatpush1.msra.mxu0 0.0
      %690 = vmatprep.subr.mxu0 0.0
      %691 = vmatpush1.msra.mxu0 0.0
      %692 = vmatprep.subr.mxu0 0.0
      %693 = vmatpush1.msra.mxu0 0.0
      %694 = vmatprep.subr.mxu0 0.0
      %695 = vmatpush1.msra.mxu0 0.0
      %696 = vmatprep.subr.mxu0 0.0
      %697 = vmatpush1.msra.mxu0 0.0
      %698 = vmatprep.subr.mxu0 0.0
      %699 = vmatpush1.msra.mxu0 %v565
      %700 = vmatprep.subr.mxu0 0.0
      %701 = vmatpush2.msra.mxu0 0.0
      %702 = vmatprep.subr.mxu0 0.0
      %703 = vmatpush2.msra.mxu0 0.0
      %704 = vmatprep.subr.mxu0 0.0
      %705 = vmatpush2.msra.mxu0 0.0
      %706 = vmatprep.subr.mxu0 0.0
      %707 = vmatpush2.msra.mxu0 0.0
      %708 = vmatprep.subr.mxu0 0.0
      %709 = vmatpush2.msra.mxu0 0.0
      %710 = vmatprep.subr.mxu0 0.0
      %711 = vmatpush2.msra.mxu0 0.0
      %712 = vmatprep.subr.mxu0 0.0
      %713 = vmatpush2.msra.mxu0 0.0
      %714 = vmatprep.subr.mxu0 0.0
      %715 = vmatpush2.msra.mxu0 0.0
      %716 = vmatprep.subr.mxu0 0.0
      %717 = vmatpush2.msra.mxu0 0.0
      %718 = vmatprep.subr.mxu0 0.0
      %719 = vmatpush2.msra.mxu0 0.0
      %720 = vmatprep.subr.mxu0 0.0
      %721 = vmatpush2.msra.mxu0 0.0
      %722 = vmatprep.subr.mxu0 0.0
      %723 = vmatpush2.msra.mxu0 0.0
      %724 = vmatprep.subr.mxu0 0.0
      %725 = vmatpush2.msra.mxu0 0.0
      %726 = vmatprep.subr.mxu0 0.0
      %727 = vmatpush2.msra.mxu0 0.0
      %728 = vmatprep.subr.mxu0 0.0
      %729 = vmatpush2.msra.mxu0 0.0
      %730 = vmatprep.subr.mxu0 0.0
      %731 = vmatpush2.msra.mxu0 0.0
      %732 = vmatprep.mubr.f32.mxu0 0.0
      %733 = vmatmul.mubr.f32.gmra.mxu0 %v666
      %v734 = vpop.f32.mrf.mxu0
      %v735 = vadd.f32 0.0, %v734
      %v736 = vpop.f32.mrf.mxu0
      %737 = vdwg.mxu0
      %v738 = vld [vmem:[%s4] sm:$0xff]
      %v739 = vld [vmem:[%s4 + $0x8] sm:$0xff]
      %v740 = vld [vmem:[%s4 + $0x10] sm:$0xff]
      %v741 = vld [vmem:[%s4 + $0x18] sm:$0xff]
      %v742 = vld [vmem:[%s5] sm:$0x1]
      %v744 = vlaneseq
      %v745 = vshrl.u32 %v744, 7
      %v746 = vsub.s32 0, %v745
      %v747 = vrot.slane %v742, %v746
      %v750 = vsel %vm328, %v735, 0
      %752 = vmatprep.subr.mxu0 0.0
      %753 = vmatpush1.msra.mxu0 0.0
      %754 = vmatprep.subr.mxu0 0.0
      %755 = vmatpush1.msra.mxu0 0.0
      %756 = vmatprep.subr.mxu0 0.0
      %757 = vmatpush1.msra.mxu0 0.0
      %758 = vmatprep.subr.mxu0 0.0
      %759 = vmatpush1.msra.mxu0 0.0
      %760 = vmatprep.subr.mxu0 0.0
      %761 = vmatpush1.msra.mxu0 0.0
      %762 = vmatprep.subr.mxu0 0.0
      %763 = vmatpush1.msra.mxu0 0.0
      %764 = vmatprep.subr.mxu0 0.0
      %765 = vmatpush1.msra.mxu0 0.0
      %766 = vmatprep.subr.mxu0 0.0
      %767 = vmatpush1.msra.mxu0 0.0
      %768 = vmatprep.subr.mxu0 0.0
      %769 = vmatpush1.msra.mxu0 0.0
      %770 = vmatprep.subr.mxu0 0.0
      %771 = vmatpush1.msra.mxu0 0.0
      %772 = vmatprep.subr.mxu0 0.0
      %773 = vmatpush1.msra.mxu0 0.0
      %774 = vmatprep.subr.mxu0 0.0
      %775 = vmatpush1.msra.mxu0 0.0
      %776 = vmatprep.subr.mxu0 0.0
      %777 = vmatpush1.msra.mxu0 %v741
      %778 = vmatprep.subr.mxu0 0.0
      %779 = vmatpush1.msra.mxu0 %v740
      %780 = vmatprep.subr.mxu0 0.0
      %781 = vmatpush1.msra.mxu0 %v739
      %782 = vmatprep.subr.mxu0 0.0
      %783 = vmatpush1.msra.mxu0 %v738
      %784 = vmatprep.subr.mxu0 0.0
      %785 = vmatpush2.msra.mxu0 0.0
      %786 = vmatprep.subr.mxu0 0.0
      %787 = vmatpush2.msra.mxu0 0.0
      %788 = vmatprep.subr.mxu0 0.0
      %789 = vmatpush2.msra.mxu0 0.0
      %790 = vmatprep.subr.mxu0 0.0
      %791 = vmatpush2.msra.mxu0 0.0
      %792 = vmatprep.subr.mxu0 0.0
      %793 = vmatpush2.msra.mxu0 0.0
      %794 = vmatprep.subr.mxu0 0.0
      %795 = vmatpush2.msra.mxu0 0.0
      %796 = vmatprep.subr.mxu0 0.0
      %797 = vmatpush2.msra.mxu0 0.0
      %798 = vmatprep.subr.mxu0 0.0
      %799 = vmatpush2.msra.mxu0 0.0
      %800 = vmatprep.subr.mxu0 0.0
      %801 = vmatpush2.msra.mxu0 0.0
      %802 = vmatprep.subr.mxu0 0.0
      %803 = vmatpush2.msra.mxu0 0.0
      %804 = vmatprep.subr.mxu0 0.0
      %805 = vmatpush2.msra.mxu0 0.0
      %806 = vmatprep.subr.mxu0 0.0
      %807 = vmatpush2.msra.mxu0 0.0
      %808 = vmatprep.subr.mxu0 0.0
      %809 = vmatpush2.msra.mxu0 0.0
      %810 = vmatprep.subr.mxu0 0.0
      %811 = vmatpush2.msra.mxu0 0.0
      %812 = vmatprep.subr.mxu0 0.0
      %813 = vmatpush2.msra.mxu0 0.0
      %814 = vmatprep.subr.mxu0 0.0
      %815 = vmatpush2.msra.mxu0 0.0
      %816 = vmatprep.mubr.f32.mxu0 0.0
      %817 = vmatmul.mubr.f32.gmra.mxu0 %v750
      %v818 = vpop.f32.mrf.mxu0
      %v819 = vadd.f32 %v747, %v818
      %v820 = vpop.f32.mrf.mxu0
      %821 = vdwg.mxu0
      %v822 = vadd.f32 %v315, %v819
      %v823 = vsel %vm328, %v822, 0.0
      %824 = vadd.xlane.f32.xlu0 %v823
      %v825 = vpop.xlane.xlu0 %824
      %v826 = vrcp.pop 32.0
      %v827 = vmul.f32 %v825, %v826
      %v828 = vsub.f32 %v822, %v827
      %v829 = vmul.f32 %v828, %v828
      %v830 = vsel %vm328, %v829, 0.0
      %831 = vadd.xlane.f32.xlu0 %v830
      %v832 = vpop.xlane.xlu0 %831
      %v833 = vmul.f32 %v832, %v826
      %v834 = vadd.f32 %v833, 1e-06
      %v835 = vrsqrt.pop %v834
      %v836 = vmul.f32 %v828, %v835
      %v837 = vld [vmem:[%s6] sm:$0x1]
      %v839 = vlaneseq
      %v840 = vshrl.u32 %v839, 7
      %v841 = vsub.s32 0, %v840
      %v842 = vrot.slane %v837, %v841
      %v844 = vmul.f32 %v836, %v842
      %v845 = vld [vmem:[%s7] sm:$0x1]
      %v847 = vlaneseq
      %v848 = vshrl.u32 %v847, 7
      %v849 = vsub.s32 0, %v848
      %v850 = vrot.slane %v845, %v849
      %v852 = vadd.f32 %v844, %v850
      %853 = vst.msk [vmem:[%s314] sm:$0xff] %vm328, %v852
      %p854 = scmp.lt.s32.totalorder %s19, 1
      %s855 = scalar_select %p854, %s19, 1
      %s856 = smul.addr %s855, 8
      %s857 = scalar_lea.vmem %s8, %s856
      // Predicated region
      $region53: #{_lambda_.7} parent=51 // pred_check
        %p858 = pneg %p215
      $region54: #{_lambda_.7} parent=51 // pred_check_branch
        %860 = sbr.rel (%p858) target = $region56
      $region55: #{_lambda_.7} parent=51 // pred_region
        _
      $region56: #{_lambda_.7} parent=51 // pred_fallthru
        _
    $region52: #{_lambda_.7} parent=5 // pred_fallthru
      _
    %p861 = scmp.le.s32.totalorder 2, %s14
    // Predicated region
    $region57: #{_lambda_.7} parent=5 // pred_check
      %p862 = pneg %p861
    $region58: #{_lambda_.7} parent=5 // pred_check_branch
      %864 = sbr.rel (%p862) target = $region60
    $region59: #{_lambda_.7} parent=5 // pred_region
      %s865 = ssub.s32 %s14, 2
      // Predicated region
      $region61: #{_lambda_.7} parent=59 // pred_check
        %p866 = pneg %p221
      $region62: #{_lambda_.7} parent=59 // pred_check_branch
        %868 = sbr.rel (%p866) target = $region64
      $region63: #{_lambda_.7} parent=59 // pred_region
        %p869 = scmp.lt.s32.totalorder %s20, 1
        %s870 = scalar_select %p869, %s20, 1
        %s871 = smul.addr %s870, 8
        %s872 = scalar_lea.vmem %s8, %s871
      $region64: #{_lambda_.7} parent=59 // pred_fallthru
        _
    $region60: #{_lambda_.7} parent=5 // pred_fallthru
      _
  $region6: #{_lambda_.7} parent=0 // loop_footer
    %s18 = sadd.s32 1, %s14
  $region7: #{_lambda_.7} parent=0 // loop_footer_branch
    %13 = sbr.rel target = $region3
  $region8: #{_lambda_.7} parent=0 // loop_exit
    _

// kernel: _lambda_.5
$region0: #{_lambda_.5}
  #allocation0 [shape = 'u32[]', space=smem, size = 0x4, offset = 0x4, fixed_abs, tag = 'smem constant byte address 0x4 - core index']
  #allocation1 [shape = 'u32[144,128]{1,0:T(1,128)}', space=vmem, size = 0x12000, scoped, tag = 'internal scratch']
  %s0 = inlined_call_operand.vmem [shape: f32[2,8,32], index: 0, kind: input, shape index: {}]
  %s1 = inlined_call_operand.vmem [shape: f32[2,8,8], index: 1, kind: input, shape index: {}]
  %s2 = inlined_call_operand.vmem [shape: f32[2,32,16], index: 2, kind: input, shape index: {}]
  %s3 = inlined_call_operand.vmem [shape: f32[2,16,1], index: 3, kind: input, shape index: {}]
  %s4 = inlined_call_operand.vmem [shape: f32[2,16,1], index: 4, kind: input, shape index: {}]
  %s5 = inlined_call_operand.vmem [shape: f32[2,16,32], index: 5, kind: input, shape index: {}]
  %s6 = inlined_call_operand.vmem [shape: f32[32,1], index: 6, kind: input, shape index: {}]
  %s7 = inlined_call_operand.vmem [shape: f32[32,1], index: 7, kind: input, shape index: {}]
  %s8 = inlined_call_operand.vmem [shape: f32[2,8,32], index: 8, kind: output, shape index: {}]
  %s9 = sld [smem:[#allocation0]]
  $region65: #{_lambda_.5} parent=0
    _
  %s11 = ssub.s32 1, %s9
  %s12 = scalar_select 0, %s11, %s9
  loop: start=0, step=1, limit=4
  $region2: #{_lambda_.5} parent=0 // loop_pre_header
    _
  $region3: #{_lambda_.5} parent=0 // loop_header
    %s14 = sphi 0, %s18
    %p15 = scmp.ge.s32.totalorder %s14, 4
    %s24 = sphi 0, %s26
    %s27 = sphi 0, %s24
    %s28 = sphi 0, %s27
    %s44 = sphi 0, %s28
    %s50 = sphi 0, %s52
    %s53 = sphi 0, %s50
    %s54 = sphi 0, %s53
    %s70 = sphi 0, %s54
    %s74 = sphi 0, %s74
    %s76 = sphi 0, %s74
    %s77 = sphi 0, %s76
    %s91 = sphi 0, %s77
    %s95 = sphi 0, %s95
    %s97 = sphi 0, %s95
    %s98 = sphi 0, %s97
    %s112 = sphi 0, %s98
    %s116 = sphi 0, %s116
    %s118 = sphi 0, %s116
    %s119 = sphi 0, %s118
    %s133 = sphi 0, %s119
    %s137 = sphi 0, %s137
    %s139 = sphi 0, %s137
    %s140 = sphi 0, %s139
    %s154 = sphi 0, %s140
    %s158 = sphi 0, %s158
    %s160 = sphi 0, %s158
    %s161 = sphi 0, %s160
    %s175 = sphi 0, %s161
    %s179 = sphi 0, %s179
    %s181 = sphi 0, %s179
    %s182 = sphi 0, %s181
    %s196 = sphi 0, %s182
    %s202 = sphi 0, %s204
    %s205 = sphi 0, %s202
    %s206 = sphi 0, %s205
    %s222 = sphi 0, %s206
  $region4: #{_lambda_.5} parent=0 // loop_header_branch
    %17 = sbr.rel (%p15) target = $region8
  $region5: #{_lambda_.5} parent=0 // loop_body
    %s19 = ssub.s32 %s14, 1
    %s20 = ssub.s32 %s14, 2
    %s21 = sadd.s32 %s14, 1
    %s22 = ssub.s32 %s14, %s21
    %p23 = scmp.eq.s32.totalorder %s22, 0
    %s25 = sadd.s32 %s24, 1
    %s26 = scalar_select %p23, %s24, %s25
    %p29 = pneg %p23
    %p30 = scmp.eq.s32.totalorder %s14, 1
    %p31 = por %p29, %p30
    %p32 = scmp.ne.s32.totalorder %s24, %s27
    %p33 = scmp.eq.s32.totalorder %s14, 0
    %p34 = por %p32, %p33
    %p35 = scmp.ne.s32.totalorder %s24, %s27
    %p36 = scmp.eq.s32.totalorder %s19, 1
    %p37 = por %p35, %p36
    %p38 = scmp.ne.s32.totalorder %s27, %s28
    %p39 = scmp.eq.s32.totalorder %s19, 0
    %p40 = por %p38, %p39
    %p41 = scmp.ne.s32.totalorder %s27, %s28
    %p42 = scmp.eq.s32.totalorder %s20, 1
    %p43 = por %p41, %p42
    %p45 = scmp.ne.s32.totalorder %s28, %s44
    %p46 = scmp.eq.s32.totalorder %s20, 0
    %p47 = por %p45, %p46
    %s48 = ssub.s32 %s14, %s21
    %p49 = scmp.eq.s32.totalorder %s48, 0
    %s51 = sadd.s32 %s50, 1
    %s52 = scalar_select %p49, %s50, %s51
    %p55 = pneg %p49
    %p56 = scmp.eq.s32.totalorder %s14, 1
    %p57 = por %p55, %p56
    %p58 = scmp.ne.s32.totalorder %s50, %s53
    %p59 = scmp.eq.s32.totalorder %s14, 0
    %p60 = por %p58, %p59
    %p61 = scmp.ne.s32.totalorder %s50, %s53
    %p62 = scmp.eq.s32.totalorder %s19, 1
    %p63 = por %p61, %p62
    %p64 = scmp.ne.s32.totalorder %s53, %s54
    %p65 = scmp.eq.s32.totalorder %s19, 0
    %p66 = por %p64, %p65
    %p67 = scmp.ne.s32.totalorder %s53, %s54
    %p68 = scmp.eq.s32.totalorder %s20, 1
    %p69 = por %p67, %p68
    %p71 = scmp.ne.s32.totalorder %s54, %s70
    %p72 = scmp.eq.s32.totalorder %s20, 0
    %p73 = por %p71, %p72
    %s75 = sadd.s32 %s74, 1
    %p78 = scmp.eq.s32.totalorder %s14, 1
    %p79 = scmp.ne.s32.totalorder %s74, %s76
    %p80 = scmp.eq.s32.totalorder %s14, 0
    %p81 = por %p79, %p80
    %p82 = scmp.ne.s32.totalorder %s74, %s76
    %p83 = scmp.eq.s32.totalorder %s19, 1
    %p84 = por %p82, %p83
    %p85 = scmp.ne.s32.totalorder %s76, %s77
    %p86 = scmp.eq.s32.totalorder %s19, 0
    %p87 = por %p85, %p86
    %p88 = scmp.ne.s32.totalorder %s76, %s77
    %p89 = scmp.eq.s32.totalorder %s20, 1
    %p90 = por %p88, %p89
    %p92 = scmp.ne.s32.totalorder %s77, %s91
    %p93 = scmp.eq.s32.totalorder %s20, 0
    %p94 = por %p92, %p93
    %s96 = sadd.s32 %s95, 1
    %p99 = scmp.eq.s32.totalorder %s14, 1
    %p100 = scmp.ne.s32.totalorder %s95, %s97
    %p101 = scmp.eq.s32.totalorder %s14, 0
    %p102 = por %p100, %p101
    %p103 = scmp.ne.s32.totalorder %s95, %s97
    %p104 = scmp.eq.s32.totalorder %s19, 1
    %p105 = por %p103, %p104
    %p106 = scmp.ne.s32.totalorder %s97, %s98
    %p107 = scmp.eq.s32.totalorder %s19, 0
    %p108 = por %p106, %p107
    %p109 = scmp.ne.s32.totalorder %s97, %s98
    %p110 = scmp.eq.s32.totalorder %s20, 1
    %p111 = por %p109, %p110
    %p113 = scmp.ne.s32.totalorder %s98, %s112
    %p114 = scmp.eq.s32.totalorder %s20, 0
    %p115 = por %p113, %p114
    %s117 = sadd.s32 %s116, 1
    %p120 = scmp.eq.s32.totalorder %s14, 1
    %p121 = scmp.ne.s32.totalorder %s116, %s118
    %p122 = scmp.eq.s32.totalorder %s14, 0
    %p123 = por %p121, %p122
    %p124 = scmp.ne.s32.totalorder %s116, %s118
    %p125 = scmp.eq.s32.totalorder %s19, 1
    %p126 = por %p124, %p125
    %p127 = scmp.ne.s32.totalorder %s118, %s119
    %p128 = scmp.eq.s32.totalorder %s19, 0
    %p129 = por %p127, %p128
    %p130 = scmp.ne.s32.totalorder %s118, %s119
    %p131 = scmp.eq.s32.totalorder %s20, 1
    %p132 = por %p130, %p131
    %p134 = scmp.ne.s32.totalorder %s119, %s133
    %p135 = scmp.eq.s32.totalorder %s20, 0
    %p136 = por %p134, %p135
    %s138 = sadd.s32 %s137, 1
    %p141 = scmp.eq.s32.totalorder %s14, 1
    %p142 = scmp.ne.s32.totalorder %s137, %s139
    %p143 = scmp.eq.s32.totalorder %s14, 0
    %p144 = por %p142, %p143
    %p145 = scmp.ne.s32.totalorder %s137, %s139
    %p146 = scmp.eq.s32.totalorder %s19, 1
    %p147 = por %p145, %p146
    %p148 = scmp.ne.s32.totalorder %s139, %s140
    %p149 = scmp.eq.s32.totalorder %s19, 0
    %p150 = por %p148, %p149
    %p151 = scmp.ne.s32.totalorder %s139, %s140
    %p152 = scmp.eq.s32.totalorder %s20, 1
    %p153 = por %p151, %p152
    %p155 = scmp.ne.s32.totalorder %s140, %s154
    %p156 = scmp.eq.s32.totalorder %s20, 0
    %p157 = por %p155, %p156
    %s159 = sadd.s32 %s158, 1
    %p162 = scmp.eq.s32.totalorder %s14, 1
    %p163 = scmp.ne.s32.totalorder %s158, %s160
    %p164 = scmp.eq.s32.totalorder %s14, 0
    %p165 = por %p163, %p164
    %p166 = scmp.ne.s32.totalorder %s158, %s160
    %p167 = scmp.eq.s32.totalorder %s19, 1
    %p168 = por %p166, %p167
    %p169 = scmp.ne.s32.totalorder %s160, %s161
    %p170 = scmp.eq.s32.totalorder %s19, 0
    %p171 = por %p169, %p170
    %p172 = scmp.ne.s32.totalorder %s160, %s161
    %p173 = scmp.eq.s32.totalorder %s20, 1
    %p174 = por %p172, %p173
    %p176 = scmp.ne.s32.totalorder %s161, %s175
    %p177 = scmp.eq.s32.totalorder %s20, 0
    %p178 = por %p176, %p177
    %s180 = sadd.s32 %s179, 1
    %p183 = scmp.eq.s32.totalorder %s14, 1
    %p184 = scmp.ne.s32.totalorder %s179, %s181
    %p185 = scmp.eq.s32.totalorder %s14, 0
    %p186 = por %p184, %p185
    %p187 = scmp.ne.s32.totalorder %s179, %s181
    %p188 = scmp.eq.s32.totalorder %s19, 1
    %p189 = por %p187, %p188
    %p190 = scmp.ne.s32.totalorder %s181, %s182
    %p191 = scmp.eq.s32.totalorder %s19, 0
    %p192 = por %p190, %p191
    %p193 = scmp.ne.s32.totalorder %s181, %s182
    %p194 = scmp.eq.s32.totalorder %s20, 1
    %p195 = por %p193, %p194
    %p197 = scmp.ne.s32.totalorder %s182, %s196
    %p198 = scmp.eq.s32.totalorder %s20, 0
    %p199 = por %p197, %p198
    %s200 = ssub.s32 %s14, %s21
    %p201 = scmp.eq.s32.totalorder %s200, 0
    %s203 = sadd.s32 %s202, 1
    %s204 = scalar_select %p201, %s202, %s203
    %p207 = pneg %p201
    %p208 = scmp.eq.s32.totalorder %s14, 1
    %p209 = por %p207, %p208
    %p210 = scmp.ne.s32.totalorder %s202, %s205
    %p211 = scmp.eq.s32.totalorder %s14, 0
    %p212 = por %p210, %p211
    %p213 = scmp.ne.s32.totalorder %s202, %s205
    %p214 = scmp.eq.s32.totalorder %s19, 1
    %p215 = por %p213, %p214
    %p216 = scmp.ne.s32.totalorder %s205, %s206
    %p217 = scmp.eq.s32.totalorder %s19, 0
    %p218 = por %p216, %p217
    %p219 = scmp.ne.s32.totalorder %s205, %s206
    %p220 = scmp.eq.s32.totalorder %s20, 1
    %p221 = por %p219, %p220
    %p223 = scmp.ne.s32.totalorder %s206, %s222
    %p224 = scmp.eq.s32.totalorder %s20, 0
    %p225 = por %p223, %p224
    %p226 = scmp.le.s32.totalorder 1, %s14
    %p227 = scmp.lt.s32.totalorder %s14, 3
    %p228 = pnand %p226, %p227
    %p229 = pneg %p228
    // Predicated region
    $region9: #{_lambda_.5} parent=5 // pred_check
      _
    $region10: #{_lambda_.5} parent=5 // pred_check_branch
      %231 = sbr.rel (%p228) target = $region12
    $region11: #{_lambda_.5} parent=5 // pred_region
      %s232 = ssub.s32 %s14, 1
      // Predicated region
      $region13: #{_lambda_.5} parent=11 // pred_check
        %p233 = pneg %p87
      $region14: #{_lambda_.5} parent=11 // pred_check_branch
        %235 = sbr.rel (%p233) target = $region16
      $region15: #{_lambda_.5} parent=11 // pred_region
        _
      $region16: #{_lambda_.5} parent=11 // pred_fallthru
        _
      // Predicated region
      $region17: #{_lambda_.5} parent=11 // pred_check
        %p236 = pneg %p108
      $region18: #{_lambda_.5} parent=11 // pred_check_branch
        %238 = sbr.rel (%p236) target = $region20
      $region19: #{_lambda_.5} parent=11 // pred_region
        _
      $region20: #{_lambda_.5} parent=11 // pred_fallthru
        _
      // Predicated region
      $region21: #{_lambda_.5} parent=11 // pred_check
        %p239 = pneg %p129
      $region22: #{_lambda_.5} parent=11 // pred_check_branch
        %241 = sbr.rel (%p239) target = $region24
      $region23: #{_lambda_.5} parent=11 // pred_region
        _
      $region24: #{_lambda_.5} parent=11 // pred_fallthru
        _
      // Predicated region
      $region25: #{_lambda_.5} parent=11 // pred_check
        %p242 = pneg %p150
      $region26: #{_lambda_.5} parent=11 // pred_check_branch
        %244 = sbr.rel (%p242) target = $region28
      $region27: #{_lambda_.5} parent=11 // pred_region
        _
      $region28: #{_lambda_.5} parent=11 // pred_fallthru
        _
      // Predicated region
      $region29: #{_lambda_.5} parent=11 // pred_check
        %p245 = pneg %p171
      $region30: #{_lambda_.5} parent=11 // pred_check_branch
        %247 = sbr.rel (%p245) target = $region32
      $region31: #{_lambda_.5} parent=11 // pred_region
        _
      $region32: #{_lambda_.5} parent=11 // pred_fallthru
        _
      // Predicated region
      $region33: #{_lambda_.5} parent=11 // pred_check
        %p248 = pneg %p192
      $region34: #{_lambda_.5} parent=11 // pred_check_branch
        %250 = sbr.rel (%p248) target = $region36
      $region35: #{_lambda_.5} parent=11 // pred_region
        _
      $region36: #{_lambda_.5} parent=11 // pred_fallthru
        _
    $region12: #{_lambda_.5} parent=5 // pred_fallthru
      _
    %p251 = scmp.lt.s32.totalorder %s14, 2
    // Predicated region
    $region37: #{_lambda_.5} parent=5 // pred_check
      %p252 = pneg %p251
    $region38: #{_lambda_.5} parent=5 // pred_check_branch
      %254 = sbr.rel (%p252) target = $region40
    $region39: #{_lambda_.5} parent=5 // pred_region
      // Predicated region
      $region41: #{_lambda_.5} parent=39 // pred_check
        %p255 = pneg %p34
      $region42: #{_lambda_.5} parent=39 // pred_check_branch
        %257 = sbr.rel (%p255) target = $region44
      $region43: #{_lambda_.5} parent=39 // pred_region
        %p258 = scmp.lt.s32.totalorder %s14, 1
        %s259 = scalar_select %p258, %s14, 1
        %s260 = smul.addr %s259, 8
        %s261 = scalar_lea.vmem %s0, %s260
      $region44: #{_lambda_.5} parent=39 // pred_fallthru
        _
      // Predicated region
      $region45: #{_lambda_.5} parent=39 // pred_check
        %p262 = pneg %p60
      $region46: #{_lambda_.5} parent=39 // pred_check_branch
        %264 = sbr.rel (%p262) target = $region48
      $region47: #{_lambda_.5} parent=39 // pred_region
        %p265 = scmp.lt.s32.totalorder %s14, 1
        %s266 = scalar_select %p265, %s14, 1
        %s267 = smul.addr %s266, 8
        %s268 = scalar_lea.vmem %s1, %s267
      $region48: #{_lambda_.5} parent=39 // pred_fallthru
        _
    $region40: #{_lambda_.5} parent=5 // pred_fallthru
      _
    %p269 = scmp.le.s32.totalorder 1, %s14
    %p270 = scmp.lt.s32.totalorder %s14, 3
    %p271 = pnand %p269, %p270
    %p272 = pneg %p271
    // Predicated region
    $region49: #{_lambda_.5} parent=5 // pred_check
      _
    $region50: #{_lambda_.5} parent=5 // pred_check_branch
      %274 = sbr.rel (%p271) target = $region52
    $region51: #{_lambda_.5} parent=5 // pred_region
      %s275 = ssub.s32 %s14, 1
      %p276 = scmp.lt.s32.totalorder %s19, 1
      %s277 = scalar_select %p276, %s19, 1
      %s278 = smul.addr %s277, 8
      %s279 = scalar_lea.vmem %s0, %s278
      %p280 = pneg %p40
      %p281 = pneg %p37
      %p282 = scmp.lt.s32.totalorder %s19, 1
      %s283 = scalar_select %p282, %s19, 1
      %s284 = smul.addr %s283, 8
      %s285 = scalar_lea.vmem %s1, %s284
      %p286 = pneg %p66
      %p287 = pneg %p63
      %p288 = pneg %p87
      %p289 = pneg %p84
      %p290 = pneg %p108
      %p291 = pneg %p105
      %p292 = pneg %p129
      %p293 = pneg %p126
      %p294 = pneg %p150
      %p295 = pneg %p147
      %p296 = pneg %p171
      %p297 = pneg %p168
      %p298 = pneg %p192
      %p299 = pneg %p189
      %p300 = pneg %p218
      %p301 = pneg %p215
      %p302 = scmp.lt.s32.totalorder %s19, 1
      %s303 = scalar_select %p302, %s19, 1
      %s304 = smul.addr %s303, 8
      %s305 = scalar_lea.vmem %s8, %s304
      %p306 = scmp.lt.s32.totalorder %s19, 1
      %s307 = scalar_select %p306, %s19, 1
      %s308 = smul.addr %s307, 8
      %s309 = scalar_lea.vmem %s0, %s308
      %p310 = scmp.lt.s32.totalorder %s19, 1
      %s311 = scalar_select %p310, %s19, 1
      %s312 = smul.addr %s311, 8
      %s313 = scalar_lea.vmem %s1, %s312
      %p314 = scmp.lt.s32.totalorder %s19, 1
      %s315 = scalar_select %p314, %s19, 1
      %s316 = smul.addr %s315, 8
      %s317 = scalar_lea.vmem %s8, %s316
      %v318 = vld [vmem:[%s309] sm:$0xff]
      %v319 = vld [vmem:[%s313] sm:$0xff]
      %v320 = vld [vmem:[%s2] sm:$0xff]
      %v321 = vld [vmem:[%s2 + $0x8] sm:$0xff]
      %v322 = vld [vmem:[%s2 + $0x10] sm:$0xff]
      %v323 = vld [vmem:[%s2 + $0x18] sm:$0xff]
      %vm324 = vcmask 261120
      %v326 = vsel %vm324, %v318, 0
      %328 = vmatprep.subr.mxu0 0.0
      %329 = vmatpush1.msra.mxu0 0.0
      %330 = vmatprep.subr.mxu0 0.0
      %331 = vmatpush1.msra.mxu0 0.0
      %332 = vmatprep.subr.mxu0 0.0
      %333 = vmatpush1.msra.mxu0 0.0
      %334 = vmatprep.subr.mxu0 0.0
      %335 = vmatpush1.msra.mxu0 0.0
      %336 = vmatprep.subr.mxu0 0.0
      %337 = vmatpush1.msra.mxu0 0.0
      %338 = vmatprep.subr.mxu0 0.0
      %339 = vmatpush1.msra.mxu0 0.0
      %340 = vmatprep.subr.mxu0 0.0
      %341 = vmatpush1.msra.mxu0 0.0
      %342 = vmatprep.subr.mxu0 0.0
      %343 = vmatpush1.msra.mxu0 0.0
      %344 = vmatprep.subr.mxu0 0.0
      %345 = vmatpush1.msra.mxu0 0.0
      %346 = vmatprep.subr.mxu0 0.0
      %347 = vmatpush1.msra.mxu0 0.0
      %348 = vmatprep.subr.mxu0 0.0
      %349 = vmatpush1.msra.mxu0 0.0
      %350 = vmatprep.subr.mxu0 0.0
      %351 = vmatpush1.msra.mxu0 0.0
      %352 = vmatprep.subr.mxu0 0.0
      %353 = vmatpush1.msra.mxu0 %v323
      %354 = vmatprep.subr.mxu0 0.0
      %355 = vmatpush1.msra.mxu0 %v322
      %356 = vmatprep.subr.mxu0 0.0
      %357 = vmatpush1.msra.mxu0 %v321
      %358 = vmatprep.subr.mxu0 0.0
      %359 = vmatpush1.msra.mxu0 %v320
      %360 = vmatprep.subr.mxu0 0.0
      %361 = vmatpush2.msra.mxu0 0.0
      %362 = vmatprep.subr.mxu0 0.0
      %363 = vmatpush2.msra.mxu0 0.0
      %364 = vmatprep.subr.mxu0 0.0
      %365 = vmatpush2.msra.mxu0 0.0
      %366 = vmatprep.subr.mxu0 0.0
      %367 = vmatpush2.msra.mxu0 0.0
      %368 = vmatprep.subr.mxu0 0.0
      %369 = vmatpush2.msra.mxu0 0.0
      %370 = vmatprep.subr.mxu0 0.0
      %371 = vmatpush2.msra.mxu0 0.0
      %372 = vmatprep.subr.mxu0 0.0
      %373 = vmatpush2.msra.mxu0 0.0
      %374 = vmatprep.subr.mxu0 0.0
      %375 = vmatpush2.msra.mxu0 0.0
      %376 = vmatprep.subr.mxu0 0.0
      %377 = vmatpush2.msra.mxu0 0.0
      %378 = vmatprep.subr.mxu0 0.0
      %379 = vmatpush2.msra.mxu0 0.0
      %380 = vmatprep.subr.mxu0 0.0
      %381 = vmatpush2.msra.mxu0 0.0
      %382 = vmatprep.subr.mxu0 0.0
      %383 = vmatpush2.msra.mxu0 0.0
      %384 = vmatprep.subr.mxu0 0.0
      %385 = vmatpush2.msra.mxu0 0.0
      %386 = vmatprep.subr.mxu0 0.0
      %387 = vmatpush2.msra.mxu0 0.0
      %388 = vmatprep.subr.mxu0 0.0
      %389 = vmatpush2.msra.mxu0 0.0
      %390 = vmatprep.subr.mxu0 0.0
      %391 = vmatpush2.msra.mxu0 0.0
      %392 = vmatprep.mubr.f32.mxu0 0.0
      %393 = vmatmul.mubr.f32.gmra.mxu0 %v326
      %v394 = vpop.f32.mrf.mxu0
      %v395 = vadd.f32 0.0, %v394
      %v396 = vpop.f32.mrf.mxu0
      %397 = vdwg.mxu0
      %v398 = vld [vmem:[%s3] sm:$0xff]
      %v399 = vld [vmem:[%s3 + $0x8] sm:$0xff]
      %v400 = vld [vmem:[%s4] sm:$0xff]
      %v401 = vld [vmem:[%s4 + $0x8] sm:$0xff]
      %vm402 = vcmask 130048
      %v404 = vsel %vm402, %v395, 0
      %406 = vmatprep.subr.mxu0 0.0
      %407 = vmatpush1.msra.mxu0 0.0
      %408 = vmatprep.subr.mxu0 0.0
      %409 = vmatpush1.msra.mxu0 0.0
      %410 = vmatprep.subr.mxu0 0.0
      %411 = vmatpush1.msra.mxu0 0.0
      %412 = vmatprep.subr.mxu0 0.0
      %413 = vmatpush1.msra.mxu0 0.0
      %414 = vmatprep.subr.mxu0 0.0
      %415 = vmatpush1.msra.mxu0 0.0
      %416 = vmatprep.subr.mxu0 0.0
      %417 = vmatpush1.msra.mxu0 0.0
      %418 = vmatprep.subr.mxu0 0.0
      %419 = vmatpush1.msra.mxu0 0.0
      %420 = vmatprep.subr.mxu0 0.0
      %421 = vmatpush1.msra.mxu0 0.0
      %422 = vmatprep.subr.mxu0 0.0
      %423 = vmatpush1.msra.mxu0 0.0
      %424 = vmatprep.subr.mxu0 0.0
      %425 = vmatpush1.msra.mxu0 0.0
      %426 = vmatprep.subr.mxu0 0.0
      %427 = vmatpush1.msra.mxu0 0.0
      %428 = vmatprep.subr.mxu0 0.0
      %429 = vmatpush1.msra.mxu0 0.0
      %430 = vmatprep.subr.mxu0 0.0
      %431 = vmatpush1.msra.mxu0 0.0
      %432 = vmatprep.subr.mxu0 0.0
      %433 = vmatpush1.msra.mxu0 0.0
      %434 = vmatprep.subr.mxu0 0.0
      %435 = vmatpush1.msra.mxu0 %v399
      %436 = vmatprep.subr.mxu0 0.0
      %437 = vmatpush1.msra.mxu0 %v398
      %438 = vmatprep.subr.mxu0 0.0
      %439 = vmatpush2.msra.mxu0 0.0
      %440 = vmatprep.subr.mxu0 0.0
      %441 = vmatpush2.msra.mxu0 0.0
      %442 = vmatprep.subr.mxu0 0.0
      %443 = vmatpush2.msra.mxu0 0.0
      %444 = vmatprep.subr.mxu0 0.0
      %445 = vmatpush2.msra.mxu0 0.0
      %446 = vmatprep.subr.mxu0 0.0
      %447 = vmatpush2.msra.mxu0 0.0
      %448 = vmatprep.subr.mxu0 0.0
      %449 = vmatpush2.msra.mxu0 0.0
      %450 = vmatprep.subr.mxu0 0.0
      %451 = vmatpush2.msra.mxu0 0.0
      %452 = vmatprep.subr.mxu0 0.0
      %453 = vmatpush2.msra.mxu0 0.0
      %454 = vmatprep.subr.mxu0 0.0
      %455 = vmatpush2.msra.mxu0 0.0
      %456 = vmatprep.subr.mxu0 0.0
      %457 = vmatpush2.msra.mxu0 0.0
      %458 = vmatprep.subr.mxu0 0.0
      %459 = vmatpush2.msra.mxu0 0.0
      %460 = vmatprep.subr.mxu0 0.0
      %461 = vmatpush2.msra.mxu0 0.0
      %462 = vmatprep.subr.mxu0 0.0
      %463 = vmatpush2.msra.mxu0 0.0
      %464 = vmatprep.subr.mxu0 0.0
      %465 = vmatpush2.msra.mxu0 0.0
      %466 = vmatprep.subr.mxu0 0.0
      %467 = vmatpush2.msra.mxu0 0.0
      %468 = vmatprep.subr.mxu0 0.0
      %469 = vmatpush2.msra.mxu0 0.0
      %470 = vmatprep.mubr.f32.mxu0 0.0
      %471 = vmatmul.mubr.f32.gmra.mxu0 %v404
      %v472 = vpop.f32.mrf.mxu0
      %v473 = vadd.f32 0.0, %v472
      %v474 = vpop.f32.mrf.mxu0
      %475 = vdwg.mxu0
      %476 = vxpose.xlu0.b32.start [1/16] %v400, 128
      %477 = vxpose.xlu0.b32.cont [2/16] %v401, 128
      %478 = vxpose.xlu0.b32.cont [3/16] 0.0, 128
      %479 = vxpose.xlu0.b32.cont [4/16] 0.0, 128
      %480 = vxpose.xlu0.b32.cont [5/16] 0.0, 128
      %481 = vxpose.xlu0.b32.cont [6/16] 0.0, 128
      %482 = vxpose.xlu0.b32.cont [7/16] 0.0, 128
      %483 = vxpose.xlu0.b32.cont [8/16] 0.0, 128
      %484 = vxpose.xlu0.b32.cont [9/16] 0.0, 128
      %485 = vxpose.xlu0.b32.cont [10/16] 0.0, 128
      %486 = vxpose.xlu0.b32.cont [11/16] 0.0, 128
      %487 = vxpose.xlu0.b32.cont [12/16] 0.0, 128
      %488 = vxpose.xlu0.b32.cont [13/16] 0.0, 128
      %489 = vxpose.xlu0.b32.cont [14/16] 0.0, 128
      %490 = vxpose.xlu0.b32.cont [15/16] 0.0, 128
      %491 = vxpose.xlu0.b32.end [16/16] 0.0, 128
      %v492 = vpop.trf.xlu0
      %v493 = vpop.trf.xlu0
      %v494 = vpop.trf.xlu0
      %v495 = vpop.trf.xlu0
      %v496 = vpop.trf.xlu0
      %v497 = vpop.trf.xlu0
      %v498 = vpop.trf.xlu0
      %v499 = vpop.trf.xlu0
      %v500 = vpop.trf.xlu0
      %v501 = vpop.trf.xlu0
      %v502 = vpop.trf.xlu0
      %v503 = vpop.trf.xlu0
      %v504 = vpop.trf.xlu0
      %v505 = vpop.trf.xlu0
      %v506 = vpop.trf.xlu0
      %v507 = vpop.trf.xlu0
      %v509 = vsel %vm402, %v492, 0
      %511 = vmatprep.subr.mxu0 0.0
      %512 = vmatpush1.xpose.msra.mxu0 0.0
      %513 = vmatprep.subr.mxu0 0.0
      %514 = vmatpush1.xpose.msra.mxu0 0.0
      %515 = vmatprep.subr.mxu0 0.0
      %516 = vmatpush1.xpose.msra.mxu0 0.0
      %517 = vmatprep.subr.mxu0 0.0
      %518 = vmatpush1.xpose.msra.mxu0 0.0
      %519 = vmatprep.subr.mxu0 0.0
      %520 = vmatpush1.xpose.msra.mxu0 0.0
      %521 = vmatprep.subr.mxu0 0.0
      %522 = vmatpush1.xpose.msra.mxu0 0.0
      %523 = vmatprep.subr.mxu0 0.0
      %524 = vmatpush1.xpose.msra.mxu0 0.0
      %525 = vmatprep.subr.mxu0 0.0
      %526 = vmatpush1.xpose.msra.mxu0 0.0
      %527 = vmatprep.subr.mxu0 0.0
      %528 = vmatpush1.xpose.msra.mxu0 0.0
      %529 = vmatprep.subr.mxu0 0.0
      %530 = vmatpush1.xpose.msra.mxu0 0.0
      %531 = vmatprep.subr.mxu0 0.0
      %532 = vmatpush1.xpose.msra.mxu0 0.0
      %533 = vmatprep.subr.mxu0 0.0
      %534 = vmatpush1.xpose.msra.mxu0 0.0
      %535 = vmatprep.subr.mxu0 0.0
      %536 = vmatpush1.xpose.msra.mxu0 0.0
      %537 = vmatprep.subr.mxu0 0.0
      %538 = vmatpush1.xpose.msra.mxu0 0.0
      %539 = vmatprep.subr.mxu0 0.0
      %540 = vmatpush1.xpose.msra.mxu0 0.0
      %541 = vmatprep.subr.mxu0 0.0
      %542 = vmatpush1.xpose.msra.mxu0 %v404
      %543 = vmatprep.subr.mxu0 0.0
      %544 = vmatpush2.xpose.msra.mxu0 0.0
      %545 = vmatprep.subr.mxu0 0.0
      %546 = vmatpush2.xpose.msra.mxu0 0.0
      %547 = vmatprep.subr.mxu0 0.0
      %548 = vmatpush2.xpose.msra.mxu0 0.0
      %549 = vmatprep.subr.mxu0 0.0
      %550 = vmatpush2.xpose.msra.mxu0 0.0
      %551 = vmatprep.subr.mxu0 0.0
      %552 = vmatpush2.xpose.msra.mxu0 0.0
      %553 = vmatprep.subr.mxu0 0.0
      %554 = vmatpush2.xpose.msra.mxu0 0.0
      %555 = vmatprep.subr.mxu0 0.0
      %556 = vmatpush2.xpose.msra.mxu0 0.0
      %557 = vmatprep.subr.mxu0 0.0
      %558 = vmatpush2.xpose.msra.mxu0 0.0
      %559 = vmatprep.subr.mxu0 0.0
      %560 = vmatpush2.xpose.msra.mxu0 0.0
      %561 = vmatprep.subr.mxu0 0.0
      %562 = vmatpush2.xpose.msra.mxu0 0.0
      %563 = vmatprep.subr.mxu0 0.0
      %564 = vmatpush2.xpose.msra.mxu0 0.0
      %565 = vmatprep.subr.mxu0 0.0
      %566 = vmatpush2.xpose.msra.mxu0 0.0
      %567 = vmatprep.subr.mxu0 0.0
      %568 = vmatpush2.xpose.msra.mxu0 0.0
      %569 = vmatprep.subr.mxu0 0.0
      %570 = vmatpush2.xpose.msra.mxu0 0.0
      %571 = vmatprep.subr.mxu0 0.0
      %572 = vmatpush2.xpose.msra.mxu0 0.0
      %573 = vmatprep.subr.mxu0 0.0
      %574 = vmatpush2.xpose.msra.mxu0 0.0
      %575 = vmatprep.mubr.f32.mxu0 0.0
      %576 = vmatmul.mubr.f32.gmra.mxu0 %v509
      %v577 = vpop.f32.mrf.mxu0
      %v578 = vadd.f32 0.0, %v577
      %v579 = vpop.f32.mrf.mxu0
      %580 = vdwg.mxu0
      %582 = vset.pattern.permute.xlu0 0
      %583 = vperm.xlu0 %582, %v473
      %v584 = vpop.permute.xlu0 %583
      %v586 = vlaneseq
      %v587 = vshrl.u32 %v586, 7
      %v588 = vsub.s32 0, %v587
      %v589 = vrot.slane %v578, %v588
      %v590 = vadd.f32 %v584, %v589
      %vm591 = vcmp.gt.f32.partialorder %v590, 0.0
      %v592 = vmul.f32 %v590, 0.2
      %v593 = vsel %vm591, %v590, %v592
      %vm594 = vcmp.gt.f32.partialorder %v319, 0.0
      %v595 = vsel %vm594, %v593, -9e+15
      %vm596 = vcmask 64512
      %v597 = vsel %vm596, %v595, -inf
      %598 = vmax.xlane.f32.xlu0 %v597
      %v599 = vpop.xlane.xlu0 %598
      %v600 = vsub.f32 %v595, %v599
      %v601 = vmul.f32 %v600, 1.442695
      %v602 = vpow.pop %v601
      %v603 = vsel %vm596, %v602, 0.0
      %604 = vadd.xlane.f32.xlu0 %v603
      %v605 = vpop.xlane.xlu0 %604
      %v606 = vrcp.pop %v605
      %v607 = vmul.f32 %v602, %v606
      %v609 = vsel %vm596, %v607, 0
      %611 = vmatprep.subr.mxu0 0.0
      %612 = vmatpush1.msra.mxu0 0.0
      %613 = vmatprep.subr.mxu0 0.0
      %614 = vmatpush1.msra.mxu0 0.0
      %615 = vmatprep.subr.mxu0 0.0
      %616 = vmatpush1.msra.mxu0 0.0
      %617 = vmatprep.subr.mxu0 0.0
      %618 = vmatpush1.msra.mxu0 0.0
      %619 = vmatprep.subr.mxu0 0.0
      %620 = vmatpush1.msra.mxu0 0.0
      %621 = vmatprep.subr.mxu0 0.0
      %622 = vmatpush1.msra.mxu0 0.0
      %623 = vmatprep.subr.mxu0 0.0
      %624 = vmatpush1.msra.mxu0 0.0
      %625 = vmatprep.subr.mxu0 0.0
      %626 = vmatpush1.msra.mxu0 0.0
      %627 = vmatprep.subr.mxu0 0.0
      %628 = vmatpush1.msra.mxu0 0.0
      %629 = vmatprep.subr.mxu0 0.0
      %630 = vmatpush1.msra.mxu0 0.0
      %631 = vmatprep.subr.mxu0 0.0
      %632 = vmatpush1.msra.mxu0 0.0
      %633 = vmatprep.subr.mxu0 0.0
      %634 = vmatpush1.msra.mxu0 0.0
      %635 = vmatprep.subr.mxu0 0.0
      %636 = vmatpush1.msra.mxu0 0.0
      %637 = vmatprep.subr.mxu0 0.0
      %638 = vmatpush1.msra.mxu0 0.0
      %639 = vmatprep.subr.mxu0 0.0
      %640 = vmatpush1.msra.mxu0 0.0
      %641 = vmatprep.subr.mxu0 0.0
      %642 = vmatpush1.msra.mxu0 %v395
      %643 = vmatprep.subr.mxu0 0.0
      %644 = vmatpush2.msra.mxu0 0.0
      %645 = vmatprep.subr.mxu0 0.0
      %646 = vmatpush2.msra.mxu0 0.0
      %647 = vmatprep.subr.mxu0 0.0
      %648 = vmatpush2.msra.mxu0 0.0
      %649 = vmatprep.subr.mxu0 0.0
      %650 = vmatpush2.msra.mxu0 0.0
      %651 = vmatprep.subr.mxu0 0.0
      %652 = vmatpush2.msra.mxu0 0.0
      %653 = vmatprep.subr.mxu0 0.0
      %654 = vmatpush2.msra.mxu0 0.0
      %655 = vmatprep.subr.mxu0 0.0
      %656 = vmatpush2.msra.mxu0 0.0
      %657 = vmatprep.subr.mxu0 0.0
      %658 = vmatpush2.msra.mxu0 0.0
      %659 = vmatprep.subr.mxu0 0.0
      %660 = vmatpush2.msra.mxu0 0.0
      %661 = vmatprep.subr.mxu0 0.0
      %662 = vmatpush2.msra.mxu0 0.0
      %663 = vmatprep.subr.mxu0 0.0
      %664 = vmatpush2.msra.mxu0 0.0
      %665 = vmatprep.subr.mxu0 0.0
      %666 = vmatpush2.msra.mxu0 0.0
      %667 = vmatprep.subr.mxu0 0.0
      %668 = vmatpush2.msra.mxu0 0.0
      %669 = vmatprep.subr.mxu0 0.0
      %670 = vmatpush2.msra.mxu0 0.0
      %671 = vmatprep.subr.mxu0 0.0
      %672 = vmatpush2.msra.mxu0 0.0
      %673 = vmatprep.subr.mxu0 0.0
      %674 = vmatpush2.msra.mxu0 0.0
      %675 = vmatprep.mubr.f32.mxu0 0.0
      %676 = vmatmul.mubr.f32.gmra.mxu0 %v609
      %v677 = vpop.f32.mrf.mxu0
      %v678 = vadd.f32 0.0, %v677
      %v679 = vpop.f32.mrf.mxu0
      %680 = vdwg.mxu0
      %vm681 = vcmp.gt.f32.partialorder %v678, 0.0
      %v682 = vmin.f32 %v678, 0.0
      %v683 = vmul.f32 %v682, 1.442695
      %v684 = vpow.pop %v683
      %v685 = vsub.f32 %v684, 1.0
      %v686 = vsel %vm681, %v678, %v685
      %v687 = vld [vmem:[%s5] sm:$0xff]
      %v688 = vld [vmem:[%s5 + $0x8] sm:$0xff]
      %s689 = scalar_lea.vmem %s2, 32
      %v690 = vld [vmem:[%s689] sm:$0xff]
      %v691 = vld [vmem:[%s689 + $0x8] sm:$0xff]
      %v692 = vld [vmem:[%s689 + $0x10] sm:$0xff]
      %v693 = vld [vmem:[%s689 + $0x18] sm:$0xff]
      %694 = vmatprep.subr.mxu0 0.0
      %695 = vmatpush1.msra.mxu0 0.0
      %696 = vmatprep.subr.mxu0 0.0
      %697 = vmatpush1.msra.mxu0 0.0
      %698 = vmatprep.subr.mxu0 0.0
      %699 = vmatpush1.msra.mxu0 0.0
      %700 = vmatprep.subr.mxu0 0.0
      %701 = vmatpush1.msra.mxu0 0.0
      %702 = vmatprep.subr.mxu0 0.0
      %703 = vmatpush1.msra.mxu0 0.0
      %704 = vmatprep.subr.mxu0 0.0
      %705 = vmatpush1.msra.mxu0 0.0
      %706 = vmatprep.subr.mxu0 0.0
      %707 = vmatpush1.msra.mxu0 0.0
      %708 = vmatprep.subr.mxu0 0.0
      %709 = vmatpush1.msra.mxu0 0.0
      %710 = vmatprep.subr.mxu0 0.0
      %711 = vmatpush1.msra.mxu0 0.0
      %712 = vmatprep.subr.mxu0 0.0
      %713 = vmatpush1.msra.mxu0 0.0
      %714 = vmatprep.subr.mxu0 0.0
      %715 = vmatpush1.msra.mxu0 0.0
      %716 = vmatprep.subr.mxu0 0.0
      %717 = vmatpush1.msra.mxu0 0.0
      %718 = vmatprep.subr.mxu0 0.0
      %719 = vmatpush1.msra.mxu0 %v693
      %720 = vmatprep.subr.mxu0 0.0
      %721 = vmatpush1.msra.mxu0 %v692
      %722 = vmatprep.subr.mxu0 0.0
      %723 = vmatpush1.msra.mxu0 %v691
      %724 = vmatprep.subr.mxu0 0.0
      %725 = vmatpush1.msra.mxu0 %v690
      %726 = vmatprep.subr.mxu0 0.0
      %727 = vmatpush2.msra.mxu0 0.0
      %728 = vmatprep.subr.mxu0 0.0
      %729 = vmatpush2.msra.mxu0 0.0
      %730 = vmatprep.subr.mxu0 0.0
      %731 = vmatpush2.msra.mxu0 0.0
      %732 = vmatprep.subr.mxu0 0.0
      %733 = vmatpush2.msra.mxu0 0.0
      %734 = vmatprep.subr.mxu0 0.0
      %735 = vmatpush2.msra.mxu0 0.0
      %736 = vmatprep.subr.mxu0 0.0
      %737 = vmatpush2.msra.mxu0 0.0
      %738 = vmatprep.subr.mxu0 0.0
      %739 = vmatpush2.msra.mxu0 0.0
      %740 = vmatprep.subr.mxu0 0.0
      %741 = vmatpush2.msra.mxu0 0.0
      %742 = vmatprep.subr.mxu0 0.0
      %743 = vmatpush2.msra.mxu0 0.0
      %744 = vmatprep.subr.mxu0 0.0
      %745 = vmatpush2.msra.mxu0 0.0
      %746 = vmatprep.subr.mxu0 0.0
      %747 = vmatpush2.msra.mxu0 0.0
      %748 = vmatprep.subr.mxu0 0.0
      %749 = vmatpush2.msra.mxu0 0.0
      %750 = vmatprep.subr.mxu0 0.0
      %751 = vmatpush2.msra.mxu0 0.0
      %752 = vmatprep.subr.mxu0 0.0
      %753 = vmatpush2.msra.mxu0 0.0
      %754 = vmatprep.subr.mxu0 0.0
      %755 = vmatpush2.msra.mxu0 0.0
      %756 = vmatprep.subr.mxu0 0.0
      %757 = vmatpush2.msra.mxu0 0.0
      %758 = vmatprep.mubr.f32.mxu0 0.0
      %759 = vmatmul.mubr.f32.gmra.mxu0 %v326
      %v760 = vpop.f32.mrf.mxu0
      %v761 = vadd.f32 0.0, %v760
      %v762 = vpop.f32.mrf.mxu0
      %763 = vdwg.mxu0
      %s764 = scalar_lea.vmem %s3, 16
      %v765 = vld [vmem:[%s764] sm:$0xff]
      %v766 = vld [vmem:[%s764 + $0x8] sm:$0xff]
      %s767 = scalar_lea.vmem %s4, 16
      %v768 = vld [vmem:[%s767] sm:$0xff]
      %v769 = vld [vmem:[%s767 + $0x8] sm:$0xff]
      %v771 = vsel %vm402, %v761, 0
      %773 = vmatprep.subr.mxu0 0.0
      %774 = vmatpush1.msra.mxu0 0.0
      %775 = vmatprep.subr.mxu0 0.0
      %776 = vmatpush1.msra.mxu0 0.0
      %777 = vmatprep.subr.mxu0 0.0
      %778 = vmatpush1.msra.mxu0 0.0
      %779 = vmatprep.subr.mxu0 0.0
      %780 = vmatpush1.msra.mxu0 0.0
      %781 = vmatprep.subr.mxu0 0.0
      %782 = vmatpush1.msra.mxu0 0.0
      %783 = vmatprep.subr.mxu0 0.0
      %784 = vmatpush1.msra.mxu0 0.0
      %785 = vmatprep.subr.mxu0 0.0
      %786 = vmatpush1.msra.mxu0 0.0
      %787 = vmatprep.subr.mxu0 0.0
      %788 = vmatpush1.msra.mxu0 0.0
      %789 = vmatprep.subr.mxu0 0.0
      %790 = vmatpush1.msra.mxu0 0.0
      %791 = vmatprep.subr.mxu0 0.0
      %792 = vmatpush1.msra.mxu0 0.0
      %793 = vmatprep.subr.mxu0 0.0
      %794 = vmatpush1.msra.mxu0 0.0
      %795 = vmatprep.subr.mxu0 0.0
      %796 = vmatpush1.msra.mxu0 0.0
      %797 = vmatprep.subr.mxu0 0.0
      %798 = vmatpush1.msra.mxu0 0.0
      %799 = vmatprep.subr.mxu0 0.0
      %800 = vmatpush1.msra.mxu0 0.0
      %801 = vmatprep.subr.mxu0 0.0
      %802 = vmatpush1.msra.mxu0 %v766
      %803 = vmatprep.subr.mxu0 0.0
      %804 = vmatpush1.msra.mxu0 %v765
      %805 = vmatprep.subr.mxu0 0.0
      %806 = vmatpush2.msra.mxu0 0.0
      %807 = vmatprep.subr.mxu0 0.0
      %808 = vmatpush2.msra.mxu0 0.0
      %809 = vmatprep.subr.mxu0 0.0
      %810 = vmatpush2.msra.mxu0 0.0
      %811 = vmatprep.subr.mxu0 0.0
      %812 = vmatpush2.msra.mxu0 0.0
      %813 = vmatprep.subr.mxu0 0.0
      %814 = vmatpush2.msra.mxu0 0.0
      %815 = vmatprep.subr.mxu0 0.0
      %816 = vmatpush2.msra.mxu0 0.0
      %817 = vmatprep.subr.mxu0 0.0
      %818 = vmatpush2.msra.mxu0 0.0
      %819 = vmatprep.subr.mxu0 0.0
      %820 = vmatpush2.msra.mxu0 0.0
      %821 = vmatprep.subr.mxu0 0.0
      %822 = vmatpush2.msra.mxu0 0.0
      %823 = vmatprep.subr.mxu0 0.0
      %824 = vmatpush2.msra.mxu0 0.0
      %825 = vmatprep.subr.mxu0 0.0
      %826 = vmatpush2.msra.mxu0 0.0
      %827 = vmatprep.subr.mxu0 0.0
      %828 = vmatpush2.msra.mxu0 0.0
      %829 = vmatprep.subr.mxu0 0.0
      %830 = vmatpush2.msra.mxu0 0.0
      %831 = vmatprep.subr.mxu0 0.0
      %832 = vmatpush2.msra.mxu0 0.0
      %833 = vmatprep.subr.mxu0 0.0
      %834 = vmatpush2.msra.mxu0 0.0
      %835 = vmatprep.subr.mxu0 0.0
      %836 = vmatpush2.msra.mxu0 0.0
      %837 = vmatprep.mubr.f32.mxu0 0.0
      %838 = vmatmul.mubr.f32.gmra.mxu0 %v771
      %v839 = vpop.f32.mrf.mxu0
      %v840 = vadd.f32 0.0, %v839
      %v841 = vpop.f32.mrf.mxu0
      %842 = vdwg.mxu0
      %843 = vxpose.xlu0.b32.start [1/16] %v768, 128
      %844 = vxpose.xlu0.b32.cont [2/16] %v769, 128
      %845 = vxpose.xlu0.b32.cont [3/16] 0.0, 128
      %846 = vxpose.xlu0.b32.cont [4/16] 0.0, 128
      %847 = vxpose.xlu0.b32.cont [5/16] 0.0, 128
      %848 = vxpose.xlu0.b32.cont [6/16] 0.0, 128
      %849 = vxpose.xlu0.b32.cont [7/16] 0.0, 128
      %850 = vxpose.xlu0.b32.cont [8/16] 0.0, 128
      %851 = vxpose.xlu0.b32.cont [9/16] 0.0, 128
      %852 = vxpose.xlu0.b32.cont [10/16] 0.0, 128
      %853 = vxpose.xlu0.b32.cont [11/16] 0.0, 128
      %854 = vxpose.xlu0.b32.cont [12/16] 0.0, 128
      %855 = vxpose.xlu0.b32.cont [13/16] 0.0, 128
      %856 = vxpose.xlu0.b32.cont [14/16] 0.0, 128
      %857 = vxpose.xlu0.b32.cont [15/16] 0.0, 128
      %858 = vxpose.xlu0.b32.end [16/16] 0.0, 128
      %v859 = vpop.trf.xlu0
      %v860 = vpop.trf.xlu0
      %v861 = vpop.trf.xlu0
      %v862 = vpop.trf.xlu0
      %v863 = vpop.trf.xlu0
      %v864 = vpop.trf.xlu0
      %v865 = vpop.trf.xlu0
      %v866 = vpop.trf.xlu0
      %v867 = vpop.trf.xlu0
      %v868 = vpop.trf.xlu0
      %v869 = vpop.trf.xlu0
      %v870 = vpop.trf.xlu0
      %v871 = vpop.trf.xlu0
      %v872 = vpop.trf.xlu0
      %v873 = vpop.trf.xlu0
      %v874 = vpop.trf.xlu0
      %v876 = vsel %vm402, %v859, 0
      %878 = vmatprep.subr.mxu0 0.0
      %879 = vmatpush1.xpose.msra.mxu0 0.0
      %880 = vmatprep.subr.mxu0 0.0
      %881 = vmatpush1.xpose.msra.mxu0 0.0
      %882 = vmatprep.subr.mxu0 0.0
      %883 = vmatpush1.xpose.msra.mxu0 0.0
      %884 = vmatprep.subr.mxu0 0.0
      %885 = vmatpush1.xpose.msra.mxu0 0.0
      %886 = vmatprep.subr.mxu0 0.0
      %887 = vmatpush1.xpose.msra.mxu0 0.0
      %888 = vmatprep.subr.mxu0 0.0
      %889 = vmatpush1.xpose.msra.mxu0 0.0
      %890 = vmatprep.subr.mxu0 0.0
      %891 = vmatpush1.xpose.msra.mxu0 0.0
      %892 = vmatprep.subr.mxu0 0.0
      %893 = vmatpush1.xpose.msra.mxu0 0.0
      %894 = vmatprep.subr.mxu0 0.0
      %895 = vmatpush1.xpose.msra.mxu0 0.0
      %896 = vmatprep.subr.mxu0 0.0
      %897 = vmatpush1.xpose.msra.mxu0 0.0
      %898 = vmatprep.subr.mxu0 0.0
      %899 = vmatpush1.xpose.msra.mxu0 0.0
      %900 = vmatprep.subr.mxu0 0.0
      %901 = vmatpush1.xpose.msra.mxu0 0.0
      %902 = vmatprep.subr.mxu0 0.0
      %903 = vmatpush1.xpose.msra.mxu0 0.0
      %904 = vmatprep.subr.mxu0 0.0
      %905 = vmatpush1.xpose.msra.mxu0 0.0
      %906 = vmatprep.subr.mxu0 0.0
      %907 = vmatpush1.xpose.msra.mxu0 0.0
      %908 = vmatprep.subr.mxu0 0.0
      %909 = vmatpush1.xpose.msra.mxu0 %v771
      %910 = vmatprep.subr.mxu0 0.0
      %911 = vmatpush2.xpose.msra.mxu0 0.0
      %912 = vmatprep.subr.mxu0 0.0
      %913 = vmatpush2.xpose.msra.mxu0 0.0
      %914 = vmatprep.subr.mxu0 0.0
      %915 = vmatpush2.xpose.msra.mxu0 0.0
      %916 = vmatprep.subr.mxu0 0.0
      %917 = vmatpush2.xpose.msra.mxu0 0.0
      %918 = vmatprep.subr.mxu0 0.0
      %919 = vmatpush2.xpose.msra.mxu0 0.0
      %920 = vmatprep.subr.mxu0 0.0
      %921 = vmatpush2.xpose.msra.mxu0 0.0
      %922 = vmatprep.subr.mxu0 0.0
      %923 = vmatpush2.xpose.msra.mxu0 0.0
      %924 = vmatprep.subr.mxu0 0.0
      %925 = vmatpush2.xpose.msra.mxu0 0.0
      %926 = vmatprep.subr.mxu0 0.0
      %927 = vmatpush2.xpose.msra.mxu0 0.0
      %928 = vmatprep.subr.mxu0 0.0
      %929 = vmatpush2.xpose.msra.mxu0 0.0
      %930 = vmatprep.subr.mxu0 0.0
      %931 = vmatpush2.xpose.msra.mxu0 0.0
      %932 = vmatprep.subr.mxu0 0.0
      %933 = vmatpush2.xpose.msra.mxu0 0.0
      %934 = vmatprep.subr.mxu0 0.0
      %935 = vmatpush2.xpose.msra.mxu0 0.0
      %936 = vmatprep.subr.mxu0 0.0
      %937 = vmatpush2.xpose.msra.mxu0 0.0
      %938 = vmatprep.subr.mxu0 0.0
      %939 = vmatpush2.xpose.msra.mxu0 0.0
      %940 = vmatprep.subr.mxu0 0.0
      %941 = vmatpush2.xpose.msra.mxu0 0.0
      %942 = vmatprep.mubr.f32.mxu0 0.0
      %943 = vmatmul.mubr.f32.gmra.mxu0 %v876
      %v944 = vpop.f32.mrf.mxu0
      %v945 = vadd.f32 0.0, %v944
      %v946 = vpop.f32.mrf.mxu0
      %947 = vdwg.mxu0
      %949 = vset.pattern.permute.xlu0 0
      %950 = vperm.xlu0 %949, %v840
      %v951 = vpop.permute.xlu0 %950
      %v953 = vlaneseq
      %v954 = vshrl.u32 %v953, 7
      %v955 = vsub.s32 0, %v954
      %v956 = vrot.slane %v945, %v955
      %v957 = vadd.f32 %v951, %v956
      %vm958 = vcmp.gt.f32.partialorder %v957, 0.0
      %v959 = vmul.f32 %v957, 0.2
      %v960 = vsel %vm958, %v957, %v959
      %v961 = vsel %vm594, %v960, -9e+15
      %v962 = vsel %vm596, %v961, -inf
      %963 = vmax.xlane.f32.xlu0 %v962
      %v964 = vpop.xlane.xlu0 %963
      %v965 = vsub.f32 %v961, %v964
      %v966 = vmul.f32 %v965, 1.442695
      %v967 = vpow.pop %v966
      %v968 = vsel %vm596, %v967, 0.0
      %969 = vadd.xlane.f32.xlu0 %v968
      %v970 = vpop.xlane.xlu0 %969
      %v971 = vrcp.pop %v970
      %v972 = vmul.f32 %v967, %v971
      %v974 = vsel %vm596, %v972, 0
      %976 = vmatprep.subr.mxu0 0.0
      %977 = vmatpush1.msra.mxu0 0.0
      %978 = vmatprep.subr.mxu0 0.0
      %979 = vmatpush1.msra.mxu0 0.0
      %980 = vmatprep.subr.mxu0 0.0
      %981 = vmatpush1.msra.mxu0 0.0
      %982 = vmatprep.subr.mxu0 0.0
      %983 = vmatpush1.msra.mxu0 0.0
      %984 = vmatprep.subr.mxu0 0.0
      %985 = vmatpush1.msra.mxu0 0.0
      %986 = vmatprep.subr.mxu0 0.0
      %987 = vmatpush1.msra.mxu0 0.0
      %988 = vmatprep.subr.mxu0 0.0
      %989 = vmatpush1.msra.mxu0 0.0
      %990 = vmatprep.subr.mxu0 0.0
      %991 = vmatpush1.msra.mxu0 0.0
      %992 = vmatprep.subr.mxu0 0.0
      %993 = vmatpush1.msra.mxu0 0.0
      %994 = vmatprep.subr.mxu0 0.0
      %995 = vmatpush1.msra.mxu0 0.0
      %996 = vmatprep.subr.mxu0 0.0
      %997 = vmatpush1.msra.mxu0 0.0
      %998 = vmatprep.subr.mxu0 0.0
      %999 = vmatpush1.msra.mxu0 0.0
      %1000 = vmatprep.subr.mxu0 0.0
      %1001 = vmatpush1.msra.mxu0 0.0
      %1002 = vmatprep.subr.mxu0 0.0
      %1003 = vmatpush1.msra.mxu0 0.0
      %1004 = vmatprep.subr.mxu0 0.0
      %1005 = vmatpush1.msra.mxu0 0.0
      %1006 = vmatprep.subr.mxu0 0.0
      %1007 = vmatpush1.msra.mxu0 %v761
      %1008 = vmatprep.subr.mxu0 0.0
      %1009 = vmatpush2.msra.mxu0 0.0
      %1010 = vmatprep.subr.mxu0 0.0
      %1011 = vmatpush2.msra.mxu0 0.0
      %1012 = vmatprep.subr.mxu0 0.0
      %1013 = vmatpush2.msra.mxu0 0.0
      %1014 = vmatprep.subr.mxu0 0.0
      %1015 = vmatpush2.msra.mxu0 0.0
      %1016 = vmatprep.subr.mxu0 0.0
      %1017 = vmatpush2.msra.mxu0 0.0
      %1018 = vmatprep.subr.mxu0 0.0
      %1019 = vmatpush2.msra.mxu0 0.0
      %1020 = vmatprep.subr.mxu0 0.0
      %1021 = vmatpush2.msra.mxu0 0.0
      %1022 = vmatprep.subr.mxu0 0.0
      %1023 = vmatpush2.msra.mxu0 0.0
      %1024 = vmatprep.subr.mxu0 0.0
      %1025 = vmatpush2.msra.mxu0 0.0
      %1026 = vmatprep.subr.mxu0 0.0
      %1027 = vmatpush2.msra.mxu0 0.0
      %1028 = vmatprep.subr.mxu0 0.0
      %1029 = vmatpush2.msra.mxu0 0.0
      %1030 = vmatprep.subr.mxu0 0.0
      %1031 = vmatpush2.msra.mxu0 0.0
      %1032 = vmatprep.subr.mxu0 0.0
      %1033 = vmatpush2.msra.mxu0 0.0
      %1034 = vmatprep.subr.mxu0 0.0
      %1035 = vmatpush2.msra.mxu0 0.0
      %1036 = vmatprep.subr.mxu0 0.0
      %1037 = vmatpush2.msra.mxu0 0.0
      %1038 = vmatprep.subr.mxu0 0.0
      %1039 = vmatpush2.msra.mxu0 0.0
      %1040 = vmatprep.mubr.f32.mxu0 0.0
      %1041 = vmatmul.mubr.f32.gmra.mxu0 %v974
      %v1042 = vpop.f32.mrf.mxu0
      %v1043 = vadd.f32 0.0, %v1042
      %v1044 = vpop.f32.mrf.mxu0
      %1045 = vdwg.mxu0
      %vm1046 = vcmp.gt.f32.partialorder %v1043, 0.0
      %v1047 = vmin.f32 %v1043, 0.0
      %v1048 = vmul.f32 %v1047, 1.442695
      %v1049 = vpow.pop %v1048
      %v1050 = vsub.f32 %v1049, 1.0
      %v1051 = vsel %vm1046, %v1043, %v1050
      %s1052 = scalar_lea.vmem %s5, 16
      %v1053 = vld [vmem:[%s1052] sm:$0xff]
      %v1054 = vld [vmem:[%s1052 + $0x8] sm:$0xff]
      %v1056 = vsel %vm402, %v1051, 0
      %1058 = vmatprep.subr.mxu0 0.0
      %1059 = vmatpush1.msra.mxu0 0.0
      %1060 = vmatprep.subr.mxu0 0.0
      %1061 = vmatpush1.msra.mxu0 0.0
      %1062 = vmatprep.subr.mxu0 0.0
      %1063 = vmatpush1.msra.mxu0 0.0
      %1064 = vmatprep.subr.mxu0 0.0
      %1065 = vmatpush1.msra.mxu0 0.0
      %1066 = vmatprep.subr.mxu0 0.0
      %1067 = vmatpush1.msra.mxu0 0.0
      %1068 = vmatprep.subr.mxu0 0.0
      %1069 = vmatpush1.msra.mxu0 0.0
      %1070 = vmatprep.subr.mxu0 0.0
      %1071 = vmatpush1.msra.mxu0 0.0
      %1072 = vmatprep.subr.mxu0 0.0
      %1073 = vmatpush1.msra.mxu0 0.0
      %1074 = vmatprep.subr.mxu0 0.0
      %1075 = vmatpush1.msra.mxu0 0.0
      %1076 = vmatprep.subr.mxu0 0.0
      %1077 = vmatpush1.msra.mxu0 0.0
      %1078 = vmatprep.subr.mxu0 0.0
      %1079 = vmatpush1.msra.mxu0 0.0
      %1080 = vmatprep.subr.mxu0 0.0
      %1081 = vmatpush1.msra.mxu0 0.0
      %1082 = vmatprep.subr.mxu0 0.0
      %1083 = vmatpush1.msra.mxu0 0.0
      %1084 = vmatprep.subr.mxu0 0.0
      %1085 = vmatpush1.msra.mxu0 0.0
      %1086 = vmatprep.subr.mxu0 0.0
      %1087 = vmatpush1.msra.mxu0 %v1054
      %1088 = vmatprep.subr.mxu0 0.0
      %1089 = vmatpush1.msra.mxu0 %v1053
      %1090 = vmatprep.subr.mxu0 0.0
      %1091 = vmatpush2.msra.mxu0 0.0
      %1092 = vmatprep.subr.mxu0 0.0
      %1093 = vmatpush2.msra.mxu0 0.0
      %1094 = vmatprep.subr.mxu0 0.0
      %1095 = vmatpush2.msra.mxu0 0.0
      %1096 = vmatprep.subr.mxu0 0.0
      %1097 = vmatpush2.msra.mxu0 0.0
      %1098 = vmatprep.subr.mxu0 0.0
      %1099 = vmatpush2.msra.mxu0 0.0
      %1100 = vmatprep.subr.mxu0 0.0
      %1101 = vmatpush2.msra.mxu0 0.0
      %1102 = vmatprep.subr.mxu0 0.0
      %1103 = vmatpush2.msra.mxu0 0.0
      %1104 = vmatprep.subr.mxu0 0.0
      %1105 = vmatpush2.msra.mxu0 0.0
      %1106 = vmatprep.subr.mxu0 0.0
      %1107 = vmatpush2.msra.mxu0 0.0
      %1108 = vmatprep.subr.mxu0 0.0
      %1109 = vmatpush2.msra.mxu0 0.0
      %1110 = vmatprep.subr.mxu0 0.0
      %1111 = vmatpush2.msra.mxu0 0.0
      %1112 = vmatprep.subr.mxu0 0.0
      %1113 = vmatpush2.msra.mxu0 0.0
      %1114 = vmatprep.subr.mxu0 0.0
      %1115 = vmatpush2.msra.mxu0 0.0
      %1116 = vmatprep.subr.mxu0 0.0
      %1117 = vmatpush2.msra.mxu0 0.0
      %1118 = vmatprep.subr.mxu0 0.0
      %1119 = vmatpush2.msra.mxu0 0.0
      %1120 = vmatprep.subr.mxu0 0.0
      %1121 = vmatpush2.msra.mxu0 0.0
      %1122 = vmatprep.mubr.f32.mxu0 0.0
      %1123 = vmatmul.mubr.f32.gmra.mxu0 %v1056
      %v1124 = vpop.f32.mrf.mxu0
      %v1125 = vadd.f32 0.0, %v1124
      %v1126 = vpop.f32.mrf.mxu0
      %1127 = vdwg.mxu0
      %v1129 = vsel %vm402, %v686, 0
      %1131 = vmatprep.subr.mxu0 0.0
      %1132 = vmatpush1.msra.mxu0 0.0
      %1133 = vmatprep.subr.mxu0 0.0
      %1134 = vmatpush1.msra.mxu0 0.0
      %1135 = vmatprep.subr.mxu0 0.0
      %1136 = vmatpush1.msra.mxu0 0.0
      %1137 = vmatprep.subr.mxu0 0.0
      %1138 = vmatpush1.msra.mxu0 0.0
      %1139 = vmatprep.subr.mxu0 0.0
      %1140 = vmatpush1.msra.mxu0 0.0
      %1141 = vmatprep.subr.mxu0 0.0
      %1142 = vmatpush1.msra.mxu0 0.0
      %1143 = vmatprep.subr.mxu0 0.0
      %1144 = vmatpush1.msra.mxu0 0.0
      %1145 = vmatprep.subr.mxu0 0.0
      %1146 = vmatpush1.msra.mxu0 0.0
      %1147 = vmatprep.subr.mxu0 0.0
      %1148 = vmatpush1.msra.mxu0 0.0
      %1149 = vmatprep.subr.mxu0 0.0
      %1150 = vmatpush1.msra.mxu0 0.0
      %1151 = vmatprep.subr.mxu0 0.0
      %1152 = vmatpush1.msra.mxu0 0.0
      %1153 = vmatprep.subr.mxu0 0.0
      %1154 = vmatpush1.msra.mxu0 0.0
      %1155 = vmatprep.subr.mxu0 0.0
      %1156 = vmatpush1.msra.mxu0 0.0
      %1157 = vmatprep.subr.mxu0 0.0
      %1158 = vmatpush1.msra.mxu0 0.0
      %1159 = vmatprep.subr.mxu0 0.0
      %1160 = vmatpush1.msra.mxu0 %v688
      %1161 = vmatprep.subr.mxu0 0.0
      %1162 = vmatpush1.msra.mxu0 %v687
      %1163 = vmatprep.subr.mxu0 0.0
      %1164 = vmatpush2.msra.mxu0 0.0
      %1165 = vmatprep.subr.mxu0 0.0
      %1166 = vmatpush2.msra.mxu0 0.0
      %1167 = vmatprep.subr.mxu0 0.0
      %1168 = vmatpush2.msra.mxu0 0.0
      %1169 = vmatprep.subr.mxu0 0.0
      %1170 = vmatpush2.msra.mxu0 0.0
      %1171 = vmatprep.subr.mxu0 0.0
      %1172 = vmatpush2.msra.mxu0 0.0
      %1173 = vmatprep.subr.mxu0 0.0
      %1174 = vmatpush2.msra.mxu0 0.0
      %1175 = vmatprep.subr.mxu0 0.0
      %1176 = vmatpush2.msra.mxu0 0.0
      %1177 = vmatprep.subr.mxu0 0.0
      %1178 = vmatpush2.msra.mxu0 0.0
      %1179 = vmatprep.subr.mxu0 0.0
      %1180 = vmatpush2.msra.mxu0 0.0
      %1181 = vmatprep.subr.mxu0 0.0
      %1182 = vmatpush2.msra.mxu0 0.0
      %1183 = vmatprep.subr.mxu0 0.0
      %1184 = vmatpush2.msra.mxu0 0.0
      %1185 = vmatprep.subr.mxu0 0.0
      %1186 = vmatpush2.msra.mxu0 0.0
      %1187 = vmatprep.subr.mxu0 0.0
      %1188 = vmatpush2.msra.mxu0 0.0
      %1189 = vmatprep.subr.mxu0 0.0
      %1190 = vmatpush2.msra.mxu0 0.0
      %1191 = vmatprep.subr.mxu0 0.0
      %1192 = vmatpush2.msra.mxu0 0.0
      %1193 = vmatprep.subr.mxu0 0.0
      %1194 = vmatpush2.msra.mxu0 0.0
      %1195 = vmatprep.mubr.f32.mxu0 0.0
      %1196 = vmatmul.mubr.f32.gmra.mxu0 %v1129
      %v1197 = vpop.f32.mrf.mxu0
      %v1198 = vadd.f32 %v1125, %v1197
      %v1199 = vpop.f32.mrf.mxu0
      %1200 = vdwg.mxu0
      %v1201 = vld [vmem:[%s6] sm:$0xff]
      %v1202 = vld [vmem:[%s6 + $0x8] sm:$0xff]
      %v1203 = vld [vmem:[%s6 + $0x10] sm:$0xff]
      %v1204 = vld [vmem:[%s6 + $0x18] sm:$0xff]
      %v1205 = vld [vmem:[%s7] sm:$0xff]
      %v1206 = vld [vmem:[%s7 + $0x8] sm:$0xff]
      %v1207 = vld [vmem:[%s7 + $0x10] sm:$0xff]
      %v1208 = vld [vmem:[%s7 + $0x18] sm:$0xff]
      %v1210 = vsel %vm324, %v1198, 0
      %1212 = vmatprep.subr.mxu0 0.0
      %1213 = vmatpush1.msra.mxu0 0.0
      %1214 = vmatprep.subr.mxu0 0.0
      %1215 = vmatpush1.msra.mxu0 0.0
      %1216 = vmatprep.subr.mxu0 0.0
      %1217 = vmatpush1.msra.mxu0 0.0
      %1218 = vmatprep.subr.mxu0 0.0
      %1219 = vmatpush1.msra.mxu0 0.0
      %1220 = vmatprep.subr.mxu0 0.0
      %1221 = vmatpush1.msra.mxu0 0.0
      %1222 = vmatprep.subr.mxu0 0.0
      %1223 = vmatpush1.msra.mxu0 0.0
      %1224 = vmatprep.subr.mxu0 0.0
      %1225 = vmatpush1.msra.mxu0 0.0
      %1226 = vmatprep.subr.mxu0 0.0
      %1227 = vmatpush1.msra.mxu0 0.0
      %1228 = vmatprep.subr.mxu0 0.0
      %1229 = vmatpush1.msra.mxu0 0.0
      %1230 = vmatprep.subr.mxu0 0.0
      %1231 = vmatpush1.msra.mxu0 0.0
      %1232 = vmatprep.subr.mxu0 0.0
      %1233 = vmatpush1.msra.mxu0 0.0
      %1234 = vmatprep.subr.mxu0 0.0
      %1235 = vmatpush1.msra.mxu0 0.0
      %1236 = vmatprep.subr.mxu0 0.0
      %1237 = vmatpush1.msra.mxu0 %v1204
      %1238 = vmatprep.subr.mxu0 0.0
      %1239 = vmatpush1.msra.mxu0 %v1203
      %1240 = vmatprep.subr.mxu0 0.0
      %1241 = vmatpush1.msra.mxu0 %v1202
      %1242 = vmatprep.subr.mxu0 0.0
      %1243 = vmatpush1.msra.mxu0 %v1201
      %1244 = vmatprep.subr.mxu0 0.0
      %1245 = vmatpush2.msra.mxu0 0.0
      %1246 = vmatprep.subr.mxu0 0.0
      %1247 = vmatpush2.msra.mxu0 0.0
      %1248 = vmatprep.subr.mxu0 0.0
      %1249 = vmatpush2.msra.mxu0 0.0
      %1250 = vmatprep.subr.mxu0 0.0
      %1251 = vmatpush2.msra.mxu0 0.0
      %1252 = vmatprep.subr.mxu0 0.0
      %1253 = vmatpush2.msra.mxu0 0.0
      %1254 = vmatprep.subr.mxu0 0.0
      %1255 = vmatpush2.msra.mxu0 0.0
      %1256 = vmatprep.subr.mxu0 0.0
      %1257 = vmatpush2.msra.mxu0 0.0
      %1258 = vmatprep.subr.mxu0 0.0
      %1259 = vmatpush2.msra.mxu0 0.0
      %1260 = vmatprep.subr.mxu0 0.0
      %1261 = vmatpush2.msra.mxu0 0.0
      %1262 = vmatprep.subr.mxu0 0.0
      %1263 = vmatpush2.msra.mxu0 0.0
      %1264 = vmatprep.subr.mxu0 0.0
      %1265 = vmatpush2.msra.mxu0 0.0
      %1266 = vmatprep.subr.mxu0 0.0
      %1267 = vmatpush2.msra.mxu0 0.0
      %1268 = vmatprep.subr.mxu0 0.0
      %1269 = vmatpush2.msra.mxu0 0.0
      %1270 = vmatprep.subr.mxu0 0.0
      %1271 = vmatpush2.msra.mxu0 0.0
      %1272 = vmatprep.subr.mxu0 0.0
      %1273 = vmatpush2.msra.mxu0 0.0
      %1274 = vmatprep.subr.mxu0 0.0
      %1275 = vmatpush2.msra.mxu0 0.0
      %1276 = vmatprep.mubr.f32.mxu0 0.0
      %1277 = vmatmul.mubr.f32.gmra.mxu0 %v1210
      %v1278 = vpop.f32.mrf.mxu0
      %v1279 = vadd.f32 0.0, %v1278
      %v1280 = vpop.f32.mrf.mxu0
      %1281 = vdwg.mxu0
      %1282 = vxpose.xlu0.b32.start [1/16] %v1205, 128
      %1283 = vxpose.xlu0.b32.cont [2/16] %v1206, 128
      %1284 = vxpose.xlu0.b32.cont [3/16] %v1207, 128
      %1285 = vxpose.xlu0.b32.cont [4/16] %v1208, 128
      %1286 = vxpose.xlu0.b32.cont [5/16] 0.0, 128
      %1287 = vxpose.xlu0.b32.cont [6/16] 0.0, 128
      %1288 = vxpose.xlu0.b32.cont [7/16] 0.0, 128
      %1289 = vxpose.xlu0.b32.cont [8/16] 0.0, 128
      %1290 = vxpose.xlu0.b32.cont [9/16] 0.0, 128
      %1291 = vxpose.xlu0.b32.cont [10/16] 0.0, 128
      %1292 = vxpose.xlu0.b32.cont [11/16] 0.0, 128
      %1293 = vxpose.xlu0.b32.cont [12/16] 0.0, 128
      %1294 = vxpose.xlu0.b32.cont [13/16] 0.0, 128
      %1295 = vxpose.xlu0.b32.cont [14/16] 0.0, 128
      %1296 = vxpose.xlu0.b32.cont [15/16] 0.0, 128
      %1297 = vxpose.xlu0.b32.end [16/16] 0.0, 128
      %v1298 = vpop.trf.xlu0
      %v1299 = vpop.trf.xlu0
      %v1300 = vpop.trf.xlu0
      %v1301 = vpop.trf.xlu0
      %v1302 = vpop.trf.xlu0
      %v1303 = vpop.trf.xlu0
      %v1304 = vpop.trf.xlu0
      %v1305 = vpop.trf.xlu0
      %v1306 = vpop.trf.xlu0
      %v1307 = vpop.trf.xlu0
      %v1308 = vpop.trf.xlu0
      %v1309 = vpop.trf.xlu0
      %v1310 = vpop.trf.xlu0
      %v1311 = vpop.trf.xlu0
      %v1312 = vpop.trf.xlu0
      %v1313 = vpop.trf.xlu0
      %v1315 = vsel %vm324, %v1298, 0
      %1317 = vmatprep.subr.mxu0 0.0
      %1318 = vmatpush1.xpose.msra.mxu0 0.0
      %1319 = vmatprep.subr.mxu0 0.0
      %1320 = vmatpush1.xpose.msra.mxu0 0.0
      %1321 = vmatprep.subr.mxu0 0.0
      %1322 = vmatpush1.xpose.msra.mxu0 0.0
      %1323 = vmatprep.subr.mxu0 0.0
      %1324 = vmatpush1.xpose.msra.mxu0 0.0
      %1325 = vmatprep.subr.mxu0 0.0
      %1326 = vmatpush1.xpose.msra.mxu0 0.0
      %1327 = vmatprep.subr.mxu0 0.0
      %1328 = vmatpush1.xpose.msra.mxu0 0.0
      %1329 = vmatprep.subr.mxu0 0.0
      %1330 = vmatpush1.xpose.msra.mxu0 0.0
      %1331 = vmatprep.subr.mxu0 0.0
      %1332 = vmatpush1.xpose.msra.mxu0 0.0
      %1333 = vmatprep.subr.mxu0 0.0
      %1334 = vmatpush1.xpose.msra.mxu0 0.0
      %1335 = vmatprep.subr.mxu0 0.0
      %1336 = vmatpush1.xpose.msra.mxu0 0.0
      %1337 = vmatprep.subr.mxu0 0.0
      %1338 = vmatpush1.xpose.msra.mxu0 0.0
      %1339 = vmatprep.subr.mxu0 0.0
      %1340 = vmatpush1.xpose.msra.mxu0 0.0
      %1341 = vmatprep.subr.mxu0 0.0
      %1342 = vmatpush1.xpose.msra.mxu0 0.0
      %1343 = vmatprep.subr.mxu0 0.0
      %1344 = vmatpush1.xpose.msra.mxu0 0.0
      %1345 = vmatprep.subr.mxu0 0.0
      %1346 = vmatpush1.xpose.msra.mxu0 0.0
      %1347 = vmatprep.subr.mxu0 0.0
      %1348 = vmatpush1.xpose.msra.mxu0 %v1210
      %1349 = vmatprep.subr.mxu0 0.0
      %1350 = vmatpush2.xpose.msra.mxu0 0.0
      %1351 = vmatprep.subr.mxu0 0.0
      %1352 = vmatpush2.xpose.msra.mxu0 0.0
      %1353 = vmatprep.subr.mxu0 0.0
      %1354 = vmatpush2.xpose.msra.mxu0 0.0
      %1355 = vmatprep.subr.mxu0 0.0
      %1356 = vmatpush2.xpose.msra.mxu0 0.0
      %1357 = vmatprep.subr.mxu0 0.0
      %1358 = vmatpush2.xpose.msra.mxu0 0.0
      %1359 = vmatprep.subr.mxu0 0.0
      %1360 = vmatpush2.xpose.msra.mxu0 0.0
      %1361 = vmatprep.subr.mxu0 0.0
      %1362 = vmatpush2.xpose.msra.mxu0 0.0
      %1363 = vmatprep.subr.mxu0 0.0
      %1364 = vmatpush2.xpose.msra.mxu0 0.0
      %1365 = vmatprep.subr.mxu0 0.0
      %1366 = vmatpush2.xpose.msra.mxu0 0.0
      %1367 = vmatprep.subr.mxu0 0.0
      %1368 = vmatpush2.xpose.msra.mxu0 0.0
      %1369 = vmatprep.subr.mxu0 0.0
      %1370 = vmatpush2.xpose.msra.mxu0 0.0
      %1371 = vmatprep.subr.mxu0 0.0
      %1372 = vmatpush2.xpose.msra.mxu0 0.0
      %1373 = vmatprep.subr.mxu0 0.0
      %1374 = vmatpush2.xpose.msra.mxu0 0.0
      %1375 = vmatprep.subr.mxu0 0.0
      %1376 = vmatpush2.xpose.msra.mxu0 0.0
      %1377 = vmatprep.subr.mxu0 0.0
      %1378 = vmatpush2.xpose.msra.mxu0 0.0
      %1379 = vmatprep.subr.mxu0 0.0
      %1380 = vmatpush2.xpose.msra.mxu0 0.0
      %1381 = vmatprep.mubr.f32.mxu0 0.0
      %1382 = vmatmul.mubr.f32.gmra.mxu0 %v1315
      %v1383 = vpop.f32.mrf.mxu0
      %v1384 = vadd.f32 0.0, %v1383
      %v1385 = vpop.f32.mrf.mxu0
      %1386 = vdwg.mxu0
      %1388 = vset.pattern.permute.xlu0 0
      %1389 = vperm.xlu0 %1388, %v1279
      %v1390 = vpop.permute.xlu0 %1389
      %v1392 = vlaneseq
      %v1393 = vshrl.u32 %v1392, 7
      %v1394 = vsub.s32 0, %v1393
      %v1395 = vrot.slane %v1384, %v1394
      %v1396 = vadd.f32 %v1390, %v1395
      %vm1397 = vcmp.gt.f32.partialorder %v1396, 0.0
      %v1398 = vmul.f32 %v1396, 0.2
      %v1399 = vsel %vm1397, %v1396, %v1398
      %v1400 = vsel %vm594, %v1399, -9e+15
      %v1401 = vsel %vm596, %v1400, -inf
      %1402 = vmax.xlane.f32.xlu0 %v1401
      %v1403 = vpop.xlane.xlu0 %1402
      %v1404 = vsub.f32 %v1400, %v1403
      %v1405 = vmul.f32 %v1404, 1.442695
      %v1406 = vpow.pop %v1405
      %v1407 = vsel %vm596, %v1406, 0.0
      %1408 = vadd.xlane.f32.xlu0 %v1407
      %v1409 = vpop.xlane.xlu0 %1408
      %v1410 = vrcp.pop %v1409
      %v1411 = vmul.f32 %v1406, %v1410
      %v1413 = vsel %vm596, %v1411, 0
      %1415 = vmatprep.subr.mxu0 0.0
      %1416 = vmatpush1.msra.mxu0 0.0
      %1417 = vmatprep.subr.mxu0 0.0
      %1418 = vmatpush1.msra.mxu0 0.0
      %1419 = vmatprep.subr.mxu0 0.0
      %1420 = vmatpush1.msra.mxu0 0.0
      %1421 = vmatprep.subr.mxu0 0.0
      %1422 = vmatpush1.msra.mxu0 0.0
      %1423 = vmatprep.subr.mxu0 0.0
      %1424 = vmatpush1.msra.mxu0 0.0
      %1425 = vmatprep.subr.mxu0 0.0
      %1426 = vmatpush1.msra.mxu0 0.0
      %1427 = vmatprep.subr.mxu0 0.0
      %1428 = vmatpush1.msra.mxu0 0.0
      %1429 = vmatprep.subr.mxu0 0.0
      %1430 = vmatpush1.msra.mxu0 0.0
      %1431 = vmatprep.subr.mxu0 0.0
      %1432 = vmatpush1.msra.mxu0 0.0
      %1433 = vmatprep.subr.mxu0 0.0
      %1434 = vmatpush1.msra.mxu0 0.0
      %1435 = vmatprep.subr.mxu0 0.0
      %1436 = vmatpush1.msra.mxu0 0.0
      %1437 = vmatprep.subr.mxu0 0.0
      %1438 = vmatpush1.msra.mxu0 0.0
      %1439 = vmatprep.subr.mxu0 0.0
      %1440 = vmatpush1.msra.mxu0 0.0
      %1441 = vmatprep.subr.mxu0 0.0
      %1442 = vmatpush1.msra.mxu0 0.0
      %1443 = vmatprep.subr.mxu0 0.0
      %1444 = vmatpush1.msra.mxu0 0.0
      %1445 = vmatprep.subr.mxu0 0.0
      %1446 = vmatpush1.msra.mxu0 %v1198
      %1447 = vmatprep.subr.mxu0 0.0
      %1448 = vmatpush2.msra.mxu0 0.0
      %1449 = vmatprep.subr.mxu0 0.0
      %1450 = vmatpush2.msra.mxu0 0.0
      %1451 = vmatprep.subr.mxu0 0.0
      %1452 = vmatpush2.msra.mxu0 0.0
      %1453 = vmatprep.subr.mxu0 0.0
      %1454 = vmatpush2.msra.mxu0 0.0
      %1455 = vmatprep.subr.mxu0 0.0
      %1456 = vmatpush2.msra.mxu0 0.0
      %1457 = vmatprep.subr.mxu0 0.0
      %1458 = vmatpush2.msra.mxu0 0.0
      %1459 = vmatprep.subr.mxu0 0.0
      %1460 = vmatpush2.msra.mxu0 0.0
      %1461 = vmatprep.subr.mxu0 0.0
      %1462 = vmatpush2.msra.mxu0 0.0
      %1463 = vmatprep.subr.mxu0 0.0
      %1464 = vmatpush2.msra.mxu0 0.0
      %1465 = vmatprep.subr.mxu0 0.0
      %1466 = vmatpush2.msra.mxu0 0.0
      %1467 = vmatprep.subr.mxu0 0.0
      %1468 = vmatpush2.msra.mxu0 0.0
      %1469 = vmatprep.subr.mxu0 0.0
      %1470 = vmatpush2.msra.mxu0 0.0
      %1471 = vmatprep.subr.mxu0 0.0
      %1472 = vmatpush2.msra.mxu0 0.0
      %1473 = vmatprep.subr.mxu0 0.0
      %1474 = vmatpush2.msra.mxu0 0.0
      %1475 = vmatprep.subr.mxu0 0.0
      %1476 = vmatpush2.msra.mxu0 0.0
      %1477 = vmatprep.subr.mxu0 0.0
      %1478 = vmatpush2.msra.mxu0 0.0
      %1479 = vmatprep.mubr.f32.mxu0 0.0
      %1480 = vmatmul.mubr.f32.gmra.mxu0 %v1413
      %v1481 = vpop.f32.mrf.mxu0
      %v1482 = vadd.f32 0.0, %v1481
      %v1483 = vpop.f32.mrf.mxu0
      %1484 = vdwg.mxu0
      %vm1485 = vcmp.gt.f32.partialorder %v1482, 0.0
      %v1486 = vmin.f32 %v1482, 0.0
      %v1487 = vmul.f32 %v1486, 1.442695
      %v1488 = vpow.pop %v1487
      %v1489 = vsub.f32 %v1488, 1.0
      %v1490 = vsel %vm1485, %v1482, %v1489
      %v1491 = vand.u32 2147483647, %v318
      %v1492 = vsel %vm324, %v1491, 0.0
      %1493 = vadd.xlane.f32.xlu0 %v1492
      %v1494 = vpop.xlane.xlu0 %1493
      %vm1495 = vcmp.eq.f32.partialorder %v1494, 0.0
      %v1496 = vsel %vm1495, 1, 0
      %vm1497 = vcmp.eq.s32.totalorder %v1496, 1
      %v1498 = vsel %vm1497, 0.0, %v1490
      %1499 = vst.msk [vmem:[%s317] sm:$0xff] %vm324, %v1498
      %p1500 = scmp.lt.s32.totalorder %s19, 1
      %s1501 = scalar_select %p1500, %s19, 1
      %s1502 = smul.addr %s1501, 8
      %s1503 = scalar_lea.vmem %s8, %s1502
      // Predicated region
      $region53: #{_lambda_.5} parent=51 // pred_check
        %p1504 = pneg %p215
      $region54: #{_lambda_.5} parent=51 // pred_check_branch
        %1506 = sbr.rel (%p1504) target = $region56
      $region55: #{_lambda_.5} parent=51 // pred_region
        _
      $region56: #{_lambda_.5} parent=51 // pred_fallthru
        _
    $region52: #{_lambda_.5} parent=5 // pred_fallthru
      _
    %p1507 = scmp.le.s32.totalorder 2, %s14
    // Predicated region
    $region57: #{_lambda_.5} parent=5 // pred_check
      %p1508 = pneg %p1507
    $region58: #{_lambda_.5} parent=5 // pred_check_branch
      %1510 = sbr.rel (%p1508) target = $region60
    $region59: #{_lambda_.5} parent=5 // pred_region
      %s1511 = ssub.s32 %s14, 2
      // Predicated region
      $region61: #{_lambda_.5} parent=59 // pred_check
        %p1512 = pneg %p221
      $region62: #{_lambda_.5} parent=59 // pred_check_branch
        %1514 = sbr.rel (%p1512) target = $region64
      $region63: #{_lambda_.5} parent=59 // pred_region
        %p1515 = scmp.lt.s32.totalorder %s20, 1
        %s1516 = scalar_select %p1515, %s20, 1
        %s1517 = smul.addr %s1516, 8
        %s1518 = scalar_lea.vmem %s8, %s1517
      $region64: #{_lambda_.5} parent=59 // pred_fallthru
        _
    $region60: #{_lambda_.5} parent=5 // pred_fallthru
      _
  $region6: #{_lambda_.5} parent=0 // loop_footer
    %s18 = sadd.s32 1, %s14
  $region7: #{_lambda_.5} parent=0 // loop_footer_branch
    %13 = sbr.rel target = $region3
  $region8: #{_lambda_.5} parent=0 // loop_exit
    _

// kernel: _lambda_.6
$region0: #{_lambda_.6}
  #allocation0 [shape = 'u32[]', space=smem, size = 0x4, offset = 0x4, fixed_abs, tag = 'smem constant byte address 0x4 - core index']
  #allocation1 [shape = 'u32[144,128]{1,0:T(1,128)}', space=vmem, size = 0x12000, scoped, tag = 'internal scratch']
  #allocation2 [shape = 'f32[1,1]{1,0:T(1,128)S(1)}', space=vmem, size = 0x200, scoped, tag = 'scoped memory for _lambda_.6']
  %s0 = inlined_call_operand.vmem [shape: f32[2,8,32], index: 0, kind: input, shape index: {}]
  %s1 = inlined_call_operand.vmem [shape: f32[2,1,8], index: 1, kind: input, shape index: {}]
  %s2 = inlined_call_operand.vmem [shape: f32[3,32,32], index: 2, kind: input, shape index: {}]
  %s3 = inlined_call_operand.vmem [shape: f32[3,1,32], index: 3, kind: input, shape index: {}]
  %s4 = inlined_call_operand.hbm [shape: f32[32,32], index: 4, kind: input, shape index: {}]
  %s5 = inlined_call_operand.vmem [shape: f32[1,32], index: 5, kind: input, shape index: {}]
  %s6 = inlined_call_operand.vmem [shape: f32[1,32], index: 6, kind: input, shape index: {}]
  %s7 = inlined_call_operand.vmem [shape: f32[1,32], index: 7, kind: input, shape index: {}]
  %s8 = inlined_call_operand.vmem [shape: f32[32,16], index: 8, kind: input, shape index: {}]
  %s9 = inlined_call_operand.vmem [shape: f32[1,16], index: 9, kind: input, shape index: {}]
  %s10 = inlined_call_operand.vmem [shape: f32[1,16], index: 10, kind: input, shape index: {}]
  %s11 = inlined_call_operand.<no memory space> [shape: f32[1,1], index: 11, kind: input, shape index: {}]
  %s12 = inlined_call_operand.hbm [shape: f32[32,32], index: 12, kind: input, shape index: {}]
  %s13 = inlined_call_operand.vmem [shape: f32[1,32], index: 13, kind: input, shape index: {}]
  %s14 = inlined_call_operand.vmem [shape: f32[2,8,32], index: 14, kind: output, shape index: {0}]
  %s15 = inlined_call_operand.vmem [shape: f32[2,1,32], index: 15, kind: output, shape index: {1}]
  %16 = xla_tuple %s14, %s15
  %s17 = sld [smem:[#allocation0]]
  $region105: #{_lambda_.6} parent=0
    _
  %s19 = ssub.s32 1, %s17
  %s20 = scalar_select 0, %s19, %s17
  %v21 = vstv %s11
  %22 = vst [vmem:[#allocation2] sm:$0x1] %v21
  $region1: #{_lambda_.6} parent=0
    #allocation3 [shape = 'u8[16384]{0}', space=vmem, size = 0x4000, scoped, tag = 'input window, operand 4, single buffered']
    #allocation4 [shape = 's32[2]{0}', space=sflag, size = 0x8, scoped, tag = 'scoped memory for _lambda_.6']
    #allocation5 [shape = 'u8[16384]{0}', space=vmem, size = 0x4000, scoped, tag = 'input window, operand 12, single buffered']
    #allocation6 [shape = 's32[1]{0}', space=sflag, size = 0x4, scoped, tag = 'scoped memory for _lambda_.6']
    %23 = vsyncpa [#allocation4], 0
    %24 = vsyncpa [#allocation6], 0
    loop: start=0, step=1, limit=4
    $region2: #{_lambda_.6} parent=1 // loop_pre_header
      _
    $region3: #{_lambda_.6} parent=1 // loop_header
      %s26 = sphi 0, %s30
      %p27 = scmp.ge.s32.totalorder %s26, 4
      %s36 = sphi 0, %s38
      %s39 = sphi 0, %s36
      %s40 = sphi 0, %s39
      %s56 = sphi 0, %s40
      %s62 = sphi 0, %s64
      %s65 = sphi 0, %s62
      %s66 = sphi 0, %s65
      %s82 = sphi 0, %s66
      %s86 = sphi 0, %s86
      %s88 = sphi 0, %s86
      %s89 = sphi 0, %s88
      %s103 = sphi 0, %s89
      %s107 = sphi 0, %s107
      %s109 = sphi 0, %s107
      %s110 = sphi 0, %s109
      %s124 = sphi 0, %s110
      %s128 = sphi 0, %s128
      %s130 = sphi 0, %s128
      %s131 = sphi 0, %s130
      %s145 = sphi 0, %s131
      %s149 = sphi 0, %s149
      %s151 = sphi 0, %s149
      %s152 = sphi 0, %s151
      %s166 = sphi 0, %s152
      %s170 = sphi 0, %s170
      %s172 = sphi 0, %s170
      %s173 = sphi 0, %s172
      %s187 = sphi 0, %s173
      %s191 = sphi 0, %s191
      %s193 = sphi 0, %s191
      %s194 = sphi 0, %s193
      %s208 = sphi 0, %s194
      %s212 = sphi 0, %s212
      %s214 = sphi 0, %s212
      %s215 = sphi 0, %s214
      %s229 = sphi 0, %s215
      %s233 = sphi 0, %s233
      %s235 = sphi 0, %s233
      %s236 = sphi 0, %s235
      %s250 = sphi 0, %s236
      %s254 = sphi 0, %s254
      %s256 = sphi 0, %s254
      %s257 = sphi 0, %s256
      %s271 = sphi 0, %s257
      %s275 = sphi 0, %s275
      %s277 = sphi 0, %s275
      %s278 = sphi 0, %s277
      %s292 = sphi 0, %s278
      %s296 = sphi 0, %s296
      %s298 = sphi 0, %s296
      %s299 = sphi 0, %s298
      %s313 = sphi 0, %s299
      %s317 = sphi 0, %s317
      %s319 = sphi 0, %s317
      %s320 = sphi 0, %s319
      %s334 = sphi 0, %s320
      %s340 = sphi 0, %s342
      %s343 = sphi 0, %s340
      %s344 = sphi 0, %s343
      %s360 = sphi 0, %s344
      %s366 = sphi 0, %s368
      %s369 = sphi 0, %s366
      %s370 = sphi 0, %s369
      %s386 = sphi 0, %s370
    $region4: #{_lambda_.6} parent=1 // loop_header_branch
      %29 = sbr.rel (%p27) target = $region8
    $region5: #{_lambda_.6} parent=1 // loop_body
      %s31 = ssub.s32 %s26, 1
      %s32 = ssub.s32 %s26, 2
      %s33 = sadd.s32 %s26, 1
      %s34 = ssub.s32 %s26, %s33
      %p35 = scmp.eq.s32.totalorder %s34, 0
      %s37 = sadd.s32 %s36, 1
      %s38 = scalar_select %p35, %s36, %s37
      %p41 = pneg %p35
      %p42 = scmp.eq.s32.totalorder %s26, 1
      %p43 = por %p41, %p42
      %p44 = scmp.ne.s32.totalorder %s36, %s39
      %p45 = scmp.eq.s32.totalorder %s26, 0
      %p46 = por %p44, %p45
      %p47 = scmp.ne.s32.totalorder %s36, %s39
      %p48 = scmp.eq.s32.totalorder %s31, 1
      %p49 = por %p47, %p48
      %p50 = scmp.ne.s32.totalorder %s39, %s40
      %p51 = scmp.eq.s32.totalorder %s31, 0
      %p52 = por %p50, %p51
      %p53 = scmp.ne.s32.totalorder %s39, %s40
      %p54 = scmp.eq.s32.totalorder %s32, 1
      %p55 = por %p53, %p54
      %p57 = scmp.ne.s32.totalorder %s40, %s56
      %p58 = scmp.eq.s32.totalorder %s32, 0
      %p59 = por %p57, %p58
      %s60 = ssub.s32 %s26, %s33
      %p61 = scmp.eq.s32.totalorder %s60, 0
      %s63 = sadd.s32 %s62, 1
      %s64 = scalar_select %p61, %s62, %s63
      %p67 = pneg %p61
      %p68 = scmp.eq.s32.totalorder %s26, 1
      %p69 = por %p67, %p68
      %p70 = scmp.ne.s32.totalorder %s62, %s65
      %p71 = scmp.eq.s32.totalorder %s26, 0
      %p72 = por %p70, %p71
      %p73 = scmp.ne.s32.totalorder %s62, %s65
      %p74 = scmp.eq.s32.totalorder %s31, 1
      %p75 = por %p73, %p74
      %p76 = scmp.ne.s32.totalorder %s65, %s66
      %p77 = scmp.eq.s32.totalorder %s31, 0
      %p78 = por %p76, %p77
      %p79 = scmp.ne.s32.totalorder %s65, %s66
      %p80 = scmp.eq.s32.totalorder %s32, 1
      %p81 = por %p79, %p80
      %p83 = scmp.ne.s32.totalorder %s66, %s82
      %p84 = scmp.eq.s32.totalorder %s32, 0
      %p85 = por %p83, %p84
      %s87 = sadd.s32 %s86, 1
      %p90 = scmp.eq.s32.totalorder %s26, 1
      %p91 = scmp.ne.s32.totalorder %s86, %s88
      %p92 = scmp.eq.s32.totalorder %s26, 0
      %p93 = por %p91, %p92
      %p94 = scmp.ne.s32.totalorder %s86, %s88
      %p95 = scmp.eq.s32.totalorder %s31, 1
      %p96 = por %p94, %p95
      %p97 = scmp.ne.s32.totalorder %s88, %s89
      %p98 = scmp.eq.s32.totalorder %s31, 0
      %p99 = por %p97, %p98
      %p100 = scmp.ne.s32.totalorder %s88, %s89
      %p101 = scmp.eq.s32.totalorder %s32, 1
      %p102 = por %p100, %p101
      %p104 = scmp.ne.s32.totalorder %s89, %s103
      %p105 = scmp.eq.s32.totalorder %s32, 0
      %p106 = por %p104, %p105
      %s108 = sadd.s32 %s107, 1
      %p111 = scmp.eq.s32.totalorder %s26, 1
      %p112 = scmp.ne.s32.totalorder %s107, %s109
      %p113 = scmp.eq.s32.totalorder %s26, 0
      %p114 = por %p112, %p113
      %p115 = scmp.ne.s32.totalorder %s107, %s109
      %p116 = scmp.eq.s32.totalorder %s31, 1
      %p117 = por %p115, %p116
      %p118 = scmp.ne.s32.totalorder %s109, %s110
      %p119 = scmp.eq.s32.totalorder %s31, 0
      %p120 = por %p118, %p119
      %p121 = scmp.ne.s32.totalorder %s109, %s110
      %p122 = scmp.eq.s32.totalorder %s32, 1
      %p123 = por %p121, %p122
      %p125 = scmp.ne.s32.totalorder %s110, %s124
      %p126 = scmp.eq.s32.totalorder %s32, 0
      %p127 = por %p125, %p126
      %s129 = sadd.s32 %s128, 1
      %p132 = scmp.eq.s32.totalorder %s26, 1
      %p133 = scmp.ne.s32.totalorder %s128, %s130
      %p134 = scmp.eq.s32.totalorder %s26, 0
      %p135 = por %p133, %p134
      %p136 = scmp.ne.s32.totalorder %s128, %s130
      %p137 = scmp.eq.s32.totalorder %s31, 1
      %p138 = por %p136, %p137
      %p139 = scmp.ne.s32.totalorder %s130, %s131
      %p140 = scmp.eq.s32.totalorder %s31, 0
      %p141 = por %p139, %p140
      %p142 = scmp.ne.s32.totalorder %s130, %s131
      %p143 = scmp.eq.s32.totalorder %s32, 1
      %p144 = por %p142, %p143
      %p146 = scmp.ne.s32.totalorder %s131, %s145
      %p147 = scmp.eq.s32.totalorder %s32, 0
      %p148 = por %p146, %p147
      %s150 = sadd.s32 %s149, 1
      %p153 = scmp.eq.s32.totalorder %s26, 1
      %p154 = scmp.ne.s32.totalorder %s149, %s151
      %p155 = scmp.eq.s32.totalorder %s26, 0
      %p156 = por %p154, %p155
      %p157 = scmp.ne.s32.totalorder %s149, %s151
      %p158 = scmp.eq.s32.totalorder %s31, 1
      %p159 = por %p157, %p158
      %p160 = scmp.ne.s32.totalorder %s151, %s152
      %p161 = scmp.eq.s32.totalorder %s31, 0
      %p162 = por %p160, %p161
      %p163 = scmp.ne.s32.totalorder %s151, %s152
      %p164 = scmp.eq.s32.totalorder %s32, 1
      %p165 = por %p163, %p164
      %p167 = scmp.ne.s32.totalorder %s152, %s166
      %p168 = scmp.eq.s32.totalorder %s32, 0
      %p169 = por %p167, %p168
      %s171 = sadd.s32 %s170, 1
      %p174 = scmp.eq.s32.totalorder %s26, 1
      %p175 = scmp.ne.s32.totalorder %s170, %s172
      %p176 = scmp.eq.s32.totalorder %s26, 0
      %p177 = por %p175, %p176
      %p178 = scmp.ne.s32.totalorder %s170, %s172
      %p179 = scmp.eq.s32.totalorder %s31, 1
      %p180 = por %p178, %p179
      %p181 = scmp.ne.s32.totalorder %s172, %s173
      %p182 = scmp.eq.s32.totalorder %s31, 0
      %p183 = por %p181, %p182
      %p184 = scmp.ne.s32.totalorder %s172, %s173
      %p185 = scmp.eq.s32.totalorder %s32, 1
      %p186 = por %p184, %p185
      %p188 = scmp.ne.s32.totalorder %s173, %s187
      %p189 = scmp.eq.s32.totalorder %s32, 0
      %p190 = por %p188, %p189
      %s192 = sadd.s32 %s191, 1
      %p195 = scmp.eq.s32.totalorder %s26, 1
      %p196 = scmp.ne.s32.totalorder %s191, %s193
      %p197 = scmp.eq.s32.totalorder %s26, 0
      %p198 = por %p196, %p197
      %p199 = scmp.ne.s32.totalorder %s191, %s193
      %p200 = scmp.eq.s32.totalorder %s31, 1
      %p201 = por %p199, %p200
      %p202 = scmp.ne.s32.totalorder %s193, %s194
      %p203 = scmp.eq.s32.totalorder %s31, 0
      %p204 = por %p202, %p203
      %p205 = scmp.ne.s32.totalorder %s193, %s194
      %p206 = scmp.eq.s32.totalorder %s32, 1
      %p207 = por %p205, %p206
      %p209 = scmp.ne.s32.totalorder %s194, %s208
      %p210 = scmp.eq.s32.totalorder %s32, 0
      %p211 = por %p209, %p210
      %s213 = sadd.s32 %s212, 1
      %p216 = scmp.eq.s32.totalorder %s26, 1
      %p217 = scmp.ne.s32.totalorder %s212, %s214
      %p218 = scmp.eq.s32.totalorder %s26, 0
      %p219 = por %p217, %p218
      %p220 = scmp.ne.s32.totalorder %s212, %s214
      %p221 = scmp.eq.s32.totalorder %s31, 1
      %p222 = por %p220, %p221
      %p223 = scmp.ne.s32.totalorder %s214, %s215
      %p224 = scmp.eq.s32.totalorder %s31, 0
      %p225 = por %p223, %p224
      %p226 = scmp.ne.s32.totalorder %s214, %s215
      %p227 = scmp.eq.s32.totalorder %s32, 1
      %p228 = por %p226, %p227
      %p230 = scmp.ne.s32.totalorder %s215, %s229
      %p231 = scmp.eq.s32.totalorder %s32, 0
      %p232 = por %p230, %p231
      %s234 = sadd.s32 %s233, 1
      %p237 = scmp.eq.s32.totalorder %s26, 1
      %p238 = scmp.ne.s32.totalorder %s233, %s235
      %p239 = scmp.eq.s32.totalorder %s26, 0
      %p240 = por %p238, %p239
      %p241 = scmp.ne.s32.totalorder %s233, %s235
      %p242 = scmp.eq.s32.totalorder %s31, 1
      %p243 = por %p241, %p242
      %p244 = scmp.ne.s32.totalorder %s235, %s236
      %p245 = scmp.eq.s32.totalorder %s31, 0
      %p246 = por %p244, %p245
      %p247 = scmp.ne.s32.totalorder %s235, %s236
      %p248 = scmp.eq.s32.totalorder %s32, 1
      %p249 = por %p247, %p248
      %p251 = scmp.ne.s32.totalorder %s236, %s250
      %p252 = scmp.eq.s32.totalorder %s32, 0
      %p253 = por %p251, %p252
      %s255 = sadd.s32 %s254, 1
      %p258 = scmp.eq.s32.totalorder %s26, 1
      %p259 = scmp.ne.s32.totalorder %s254, %s256
      %p260 = scmp.eq.s32.totalorder %s26, 0
      %p261 = por %p259, %p260
      %p262 = scmp.ne.s32.totalorder %s254, %s256
      %p263 = scmp.eq.s32.totalorder %s31, 1
      %p264 = por %p262, %p263
      %p265 = scmp.ne.s32.totalorder %s256, %s257
      %p266 = scmp.eq.s32.totalorder %s31, 0
      %p267 = por %p265, %p266
      %p268 = scmp.ne.s32.totalorder %s256, %s257
      %p269 = scmp.eq.s32.totalorder %s32, 1
      %p270 = por %p268, %p269
      %p272 = scmp.ne.s32.totalorder %s257, %s271
      %p273 = scmp.eq.s32.totalorder %s32, 0
      %p274 = por %p272, %p273
      %s276 = sadd.s32 %s275, 1
      %p279 = scmp.eq.s32.totalorder %s26, 1
      %p280 = scmp.ne.s32.totalorder %s275, %s277
      %p281 = scmp.eq.s32.totalorder %s26, 0
      %p282 = por %p280, %p281
      %p283 = scmp.ne.s32.totalorder %s275, %s277
      %p284 = scmp.eq.s32.totalorder %s31, 1
      %p285 = por %p283, %p284
      %p286 = scmp.ne.s32.totalorder %s277, %s278
      %p287 = scmp.eq.s32.totalorder %s31, 0
      %p288 = por %p286, %p287
      %p289 = scmp.ne.s32.totalorder %s277, %s278
      %p290 = scmp.eq.s32.totalorder %s32, 1
      %p291 = por %p289, %p290
      %p293 = scmp.ne.s32.totalorder %s278, %s292
      %p294 = scmp.eq.s32.totalorder %s32, 0
      %p295 = por %p293, %p294
      %s297 = sadd.s32 %s296, 1
      %p300 = scmp.eq.s32.totalorder %s26, 1
      %p301 = scmp.ne.s32.totalorder %s296, %s298
      %p302 = scmp.eq.s32.totalorder %s26, 0
      %p303 = por %p301, %p302
      %p304 = scmp.ne.s32.totalorder %s296, %s298
      %p305 = scmp.eq.s32.totalorder %s31, 1
      %p306 = por %p304, %p305
      %p307 = scmp.ne.s32.totalorder %s298, %s299
      %p308 = scmp.eq.s32.totalorder %s31, 0
      %p309 = por %p307, %p308
      %p310 = scmp.ne.s32.totalorder %s298, %s299
      %p311 = scmp.eq.s32.totalorder %s32, 1
      %p312 = por %p310, %p311
      %p314 = scmp.ne.s32.totalorder %s299, %s313
      %p315 = scmp.eq.s32.totalorder %s32, 0
      %p316 = por %p314, %p315
      %s318 = sadd.s32 %s317, 1
      %p321 = scmp.eq.s32.totalorder %s26, 1
      %p322 = scmp.ne.s32.totalorder %s317, %s319
      %p323 = scmp.eq.s32.totalorder %s26, 0
      %p324 = por %p322, %p323
      %p325 = scmp.ne.s32.totalorder %s317, %s319
      %p326 = scmp.eq.s32.totalorder %s31, 1
      %p327 = por %p325, %p326
      %p328 = scmp.ne.s32.totalorder %s319, %s320
      %p329 = scmp.eq.s32.totalorder %s31, 0
      %p330 = por %p328, %p329
      %p331 = scmp.ne.s32.totalorder %s319, %s320
      %p332 = scmp.eq.s32.totalorder %s32, 1
      %p333 = por %p331, %p332
      %p335 = scmp.ne.s32.totalorder %s320, %s334
      %p336 = scmp.eq.s32.totalorder %s32, 0
      %p337 = por %p335, %p336
      %s338 = ssub.s32 %s26, %s33
      %p339 = scmp.eq.s32.totalorder %s338, 0
      %s341 = sadd.s32 %s340, 1
      %s342 = scalar_select %p339, %s340, %s341
      %p345 = pneg %p339
      %p346 = scmp.eq.s32.totalorder %s26, 1
      %p347 = por %p345, %p346
      %p348 = scmp.ne.s32.totalorder %s340, %s343
      %p349 = scmp.eq.s32.totalorder %s26, 0
      %p350 = por %p348, %p349
      %p351 = scmp.ne.s32.totalorder %s340, %s343
      %p352 = scmp.eq.s32.totalorder %s31, 1
      %p353 = por %p351, %p352
      %p354 = scmp.ne.s32.totalorder %s343, %s344
      %p355 = scmp.eq.s32.totalorder %s31, 0
      %p356 = por %p354, %p355
      %p357 = scmp.ne.s32.totalorder %s343, %s344
      %p358 = scmp.eq.s32.totalorder %s32, 1
      %p359 = por %p357, %p358
      %p361 = scmp.ne.s32.totalorder %s344, %s360
      %p362 = scmp.eq.s32.totalorder %s32, 0
      %p363 = por %p361, %p362
      %s364 = ssub.s32 %s26, %s33
      %p365 = scmp.eq.s32.totalorder %s364, 0
      %s367 = sadd.s32 %s366, 1
      %s368 = scalar_select %p365, %s366, %s367
      %p371 = pneg %p365
      %p372 = scmp.eq.s32.totalorder %s26, 1
      %p373 = por %p371, %p372
      %p374 = scmp.ne.s32.totalorder %s366, %s369
      %p375 = scmp.eq.s32.totalorder %s26, 0
      %p376 = por %p374, %p375
      %p377 = scmp.ne.s32.totalorder %s366, %s369
      %p378 = scmp.eq.s32.totalorder %s31, 1
      %p379 = por %p377, %p378
      %p380 = scmp.ne.s32.totalorder %s369, %s370
      %p381 = scmp.eq.s32.totalorder %s31, 0
      %p382 = por %p380, %p381
      %p383 = scmp.ne.s32.totalorder %s369, %s370
      %p384 = scmp.eq.s32.totalorder %s32, 1
      %p385 = por %p383, %p384
      %p387 = scmp.ne.s32.totalorder %s370, %s386
      %p388 = scmp.eq.s32.totalorder %s32, 0
      %p389 = por %p387, %p388
      %p390 = scmp.le.s32.totalorder 1, %s26
      %p391 = scmp.lt.s32.totalorder %s26, 3
      %p392 = pnand %p390, %p391
      %p393 = pneg %p392
      // Predicated region
      $region9: #{_lambda_.6} parent=5 // pred_check
        _
      $region10: #{_lambda_.6} parent=5 // pred_check_branch
        %395 = sbr.rel (%p392) target = $region12
      $region11: #{_lambda_.6} parent=5 // pred_region
        %s396 = ssub.s32 %s26, 1
        // Predicated region
        $region13: #{_lambda_.6} parent=11 // pred_check
          %p397 = pneg %p99
        $region14: #{_lambda_.6} parent=11 // pred_check_branch
          %399 = sbr.rel (%p397) target = $region16
        $region15: #{_lambda_.6} parent=11 // pred_region
          _
        $region16: #{_lambda_.6} parent=11 // pred_fallthru
          _
        // Predicated region
        $region17: #{_lambda_.6} parent=11 // pred_check
          %p400 = pneg %p120
        $region18: #{_lambda_.6} parent=11 // pred_check_branch
          %402 = sbr.rel (%p400) target = $region20
        $region19: #{_lambda_.6} parent=11 // pred_region
          _
        $region20: #{_lambda_.6} parent=11 // pred_fallthru
          _
        // Predicated region
        $region21: #{_lambda_.6} parent=11 // pred_check
          %p403 = pneg %p141
        $region22: #{_lambda_.6} parent=11 // pred_check_branch
          %405 = sbr.rel (%p403) target = $region24
        $region23: #{_lambda_.6} parent=11 // pred_region
          %s407 = ssub.s32 512, 512
          %408 = vsyncadd [#allocation4], %s407
          %s409 = sshll.u32 [#allocation3], 4
          %s410 = int_to_ptr.vmem [resolvable:$true] %s409
          %415 = dma.hbm_to_vmem [thread:$0]  %s4, 512, %s410, [#allocation4], 128, 128, 8
        $region24: #{_lambda_.6} parent=11 // pred_fallthru
          _
        // Predicated region
        $region25: #{_lambda_.6} parent=11 // pred_check
          %p416 = pneg %p162
        $region26: #{_lambda_.6} parent=11 // pred_check_branch
          %418 = sbr.rel (%p416) target = $region28
        $region27: #{_lambda_.6} parent=11 // pred_region
          _
        $region28: #{_lambda_.6} parent=11 // pred_fallthru
          _
        // Predicated region
        $region29: #{_lambda_.6} parent=11 // pred_check
          %p419 = pneg %p183
        $region30: #{_lambda_.6} parent=11 // pred_check_branch
          %421 = sbr.rel (%p419) target = $region32
        $region31: #{_lambda_.6} parent=11 // pred_region
          _
        $region32: #{_lambda_.6} parent=11 // pred_fallthru
          _
        // Predicated region
        $region33: #{_lambda_.6} parent=11 // pred_check
          %p422 = pneg %p204
        $region34: #{_lambda_.6} parent=11 // pred_check_branch
          %424 = sbr.rel (%p422) target = $region36
        $region35: #{_lambda_.6} parent=11 // pred_region
          _
        $region36: #{_lambda_.6} parent=11 // pred_fallthru
          _
        // Predicated region
        $region37: #{_lambda_.6} parent=11 // pred_check
          %p425 = pneg %p225
        $region38: #{_lambda_.6} parent=11 // pred_check_branch
          %427 = sbr.rel (%p425) target = $region40
        $region39: #{_lambda_.6} parent=11 // pred_region
          _
        $region40: #{_lambda_.6} parent=11 // pred_fallthru
          _
        // Predicated region
        $region41: #{_lambda_.6} parent=11 // pred_check
          %p428 = pneg %p246
        $region42: #{_lambda_.6} parent=11 // pred_check_branch
          %430 = sbr.rel (%p428) target = $region44
        $region43: #{_lambda_.6} parent=11 // pred_region
          _
        $region44: #{_lambda_.6} parent=11 // pred_fallthru
          _
        // Predicated region
        $region45: #{_lambda_.6} parent=11 // pred_check
          %p431 = pneg %p267
        $region46: #{_lambda_.6} parent=11 // pred_check_branch
          %433 = sbr.rel (%p431) target = $region48
        $region47: #{_lambda_.6} parent=11 // pred_region
          _
        $region48: #{_lambda_.6} parent=11 // pred_fallthru
          _
        // Predicated region
        $region49: #{_lambda_.6} parent=11 // pred_check
          %p434 = pneg %p288
        $region50: #{_lambda_.6} parent=11 // pred_check_branch
          %436 = sbr.rel (%p434) target = $region52
        $region51: #{_lambda_.6} parent=11 // pred_region
          _
        $region52: #{_lambda_.6} parent=11 // pred_fallthru
          _
        // Predicated region
        $region53: #{_lambda_.6} parent=11 // pred_check
          %p437 = pneg %p309
        $region54: #{_lambda_.6} parent=11 // pred_check_branch
          %439 = sbr.rel (%p437) target = $region56
        $region55: #{_lambda_.6} parent=11 // pred_region
          %s441 = ssub.s32 512, 512
          %442 = vsyncadd [#allocation6], %s441
          %s443 = sshll.u32 [#allocation5], 4
          %s444 = int_to_ptr.vmem [resolvable:$true] %s443
          %449 = dma.hbm_to_vmem [thread:$0]  %s12, 512, %s444, [#allocation6], 128, 128, 8
        $region56: #{_lambda_.6} parent=11 // pred_fallthru
          _
        // Predicated region
        $region57: #{_lambda_.6} parent=11 // pred_check
          %p450 = pneg %p330
        $region58: #{_lambda_.6} parent=11 // pred_check_branch
          %452 = sbr.rel (%p450) target = $region60
        $region59: #{_lambda_.6} parent=11 // pred_region
          _
        $region60: #{_lambda_.6} parent=11 // pred_fallthru
          _
      $region12: #{_lambda_.6} parent=5 // pred_fallthru
        _
      %p453 = scmp.lt.s32.totalorder %s26, 2
      // Predicated region
      $region61: #{_lambda_.6} parent=5 // pred_check
        %p454 = pneg %p453
      $region62: #{_lambda_.6} parent=5 // pred_check_branch
        %456 = sbr.rel (%p454) target = $region64
      $region63: #{_lambda_.6} parent=5 // pred_region
        // Predicated region
        $region65: #{_lambda_.6} parent=63 // pred_check
          %p457 = pneg %p46
        $region66: #{_lambda_.6} parent=63 // pred_check_branch
          %459 = sbr.rel (%p457) target = $region68
        $region67: #{_lambda_.6} parent=63 // pred_region
          %p460 = scmp.lt.s32.totalorder %s26, 1
          %s461 = scalar_select %p460, %s26, 1
          %s462 = smul.addr %s461, 8
          %s463 = scalar_lea.vmem %s0, %s462
        $region68: #{_lambda_.6} parent=63 // pred_fallthru
          _
        // Predicated region
        $region69: #{_lambda_.6} parent=63 // pred_check
          %p464 = pneg %p72
        $region70: #{_lambda_.6} parent=63 // pred_check_branch
          %466 = sbr.rel (%p464) target = $region72
        $region71: #{_lambda_.6} parent=63 // pred_region
          %p467 = scmp.lt.s32.totalorder %s26, 1
          %s468 = scalar_select %p467, %s26, 1
          %s469 = scalar_lea.vmem %s1, %s468
        $region72: #{_lambda_.6} parent=63 // pred_fallthru
          _
      $region64: #{_lambda_.6} parent=5 // pred_fallthru
        _
      %p470 = scmp.le.s32.totalorder 1, %s26
      %p471 = scmp.lt.s32.totalorder %s26, 3
      %p472 = pnand %p470, %p471
      %p473 = pneg %p472
      // Predicated region
      $region73: #{_lambda_.6} parent=5 // pred_check
        _
      $region74: #{_lambda_.6} parent=5 // pred_check_branch
        %475 = sbr.rel (%p472) target = $region76
      $region75: #{_lambda_.6} parent=5 // pred_region
        %s476 = ssub.s32 %s26, 1
        // Predicated region
        $region77: #{_lambda_.6} parent=75 // pred_check
          %p477 = pneg %p141
        $region78: #{_lambda_.6} parent=75 // pred_check_branch
          %479 = sbr.rel (%p477) target = $region80
        $region79: #{_lambda_.6} parent=75 // pred_region
          %480 = dma.done [#allocation4], 512
        $region80: #{_lambda_.6} parent=75 // pred_fallthru
          _
        // Predicated region
        $region81: #{_lambda_.6} parent=75 // pred_check
          %p481 = pneg %p309
        $region82: #{_lambda_.6} parent=75 // pred_check_branch
          %483 = sbr.rel (%p481) target = $region84
        $region83: #{_lambda_.6} parent=75 // pred_region
          %484 = dma.done [#allocation6], 512
        $region84: #{_lambda_.6} parent=75 // pred_fallthru
          _
        %p485 = scmp.lt.s32.totalorder %s31, 1
        %s486 = scalar_select %p485, %s31, 1
        %s487 = smul.addr %s486, 8
        %s488 = scalar_lea.vmem %s0, %s487
        %p489 = pneg %p52
        %p490 = pneg %p49
        %p491 = scmp.lt.s32.totalorder %s31, 1
        %s492 = scalar_select %p491, %s31, 1
        %s493 = scalar_lea.vmem %s1, %s492
        %p494 = pneg %p78
        %p495 = pneg %p75
        %p496 = pneg %p99
        %p497 = pneg %p96
        %p498 = pneg %p120
        %p499 = pneg %p117
        %p500 = pneg %p141
        %p501 = pneg %p138
        %p502 = pneg %p162
        %p503 = pneg %p159
        %p504 = pneg %p183
        %p505 = pneg %p180
        %p506 = pneg %p204
        %p507 = pneg %p201
        %p508 = pneg %p225
        %p509 = pneg %p222
        %p510 = pneg %p246
        %p511 = pneg %p243
        %p512 = pneg %p267
        %p513 = pneg %p264
        %p514 = pneg %p288
        %p515 = pneg %p285
        %p516 = pneg %p309
        %p517 = pneg %p306
        %p518 = pneg %p330
        %p519 = pneg %p327
        %p520 = pneg %p356
        %p521 = pneg %p353
        %p522 = scmp.lt.s32.totalorder %s31, 1
        %s523 = scalar_select %p522, %s31, 1
        %s524 = smul.addr %s523, 8
        %s525 = scalar_lea.vmem %s14, %s524
        %p526 = pneg %p382
        %p527 = pneg %p379
        %p528 = scmp.lt.s32.totalorder %s31, 1
        %s529 = scalar_select %p528, %s31, 1
        %s530 = scalar_lea.vmem %s15, %s529
        %p531 = scmp.lt.s32.totalorder %s31, 1
        %s532 = scalar_select %p531, %s31, 1
        %s533 = smul.addr %s532, 8
        %s534 = scalar_lea.vmem %s0, %s533
        %p535 = scmp.lt.s32.totalorder %s31, 1
        %s536 = scalar_select %p535, %s31, 1
        %s537 = scalar_lea.vmem %s1, %s536
        %p538 = scmp.lt.s32.totalorder %s31, 1
        %s539 = scalar_select %p538, %s31, 1
        %s540 = smul.addr %s539, 8
        %s541 = scalar_lea.vmem %s14, %s540
        %p542 = scmp.lt.s32.totalorder %s31, 1
        %s543 = scalar_select %p542, %s31, 1
        %s544 = scalar_lea.vmem %s15, %s543
        %v545 = vld [vmem:[%s534] sm:$0xff]
        %v546 = vld [vmem:[%s537] sm:$0x1]
        %v547 = vld [vmem:[%s2] sm:$0xff]
        %v548 = vld [vmem:[%s2 + $0x8] sm:$0xff]
        %v549 = vld [vmem:[%s2 + $0x10] sm:$0xff]
        %v550 = vld [vmem:[%s2 + $0x18] sm:$0xff]
        %v551 = vld [vmem:[%s3] sm:$0x1]
        %v553 = vlaneseq
        %v554 = vshrl.u32 %v553, 7
        %v555 = vsub.s32 0, %v554
        %v556 = vrot.slane %v551, %v555
        %vm558 = vcmask 261120
        %v560 = vsel %vm558, %v545, 0
        %562 = vmatprep.subr.mxu0 0.0
        %563 = vmatpush1.msra.mxu0 0.0
        %564 = vmatprep.subr.mxu0 0.0
        %565 = vmatpush1.msra.mxu0 0.0
        %566 = vmatprep.subr.mxu0 0.0
        %567 = vmatpush1.msra.mxu0 0.0
        %568 = vmatprep.subr.mxu0 0.0
        %569 = vmatpush1.msra.mxu0 0.0
        %570 = vmatprep.subr.mxu0 0.0
        %571 = vmatpush1.msra.mxu0 0.0
        %572 = vmatprep.subr.mxu0 0.0
        %573 = vmatpush1.msra.mxu0 0.0
        %574 = vmatprep.subr.mxu0 0.0
        %575 = vmatpush1.msra.mxu0 0.0
        %576 = vmatprep.subr.mxu0 0.0
        %577 = vmatpush1.msra.mxu0 0.0
        %578 = vmatprep.subr.mxu0 0.0
        %579 = vmatpush1.msra.mxu0 0.0
        %580 = vmatprep.subr.mxu0 0.0
        %581 = vmatpush1.msra.mxu0 0.0
        %582 = vmatprep.subr.mxu0 0.0
        %583 = vmatpush1.msra.mxu0 0.0
        %584 = vmatprep.subr.mxu0 0.0
        %585 = vmatpush1.msra.mxu0 0.0
        %586 = vmatprep.subr.mxu0 0.0
        %587 = vmatpush1.msra.mxu0 %v550
        %588 = vmatprep.subr.mxu0 0.0
        %589 = vmatpush1.msra.mxu0 %v549
        %590 = vmatprep.subr.mxu0 0.0
        %591 = vmatpush1.msra.mxu0 %v548
        %592 = vmatprep.subr.mxu0 0.0
        %593 = vmatpush1.msra.mxu0 %v547
        %594 = vmatprep.subr.mxu0 0.0
        %595 = vmatpush2.msra.mxu0 0.0
        %596 = vmatprep.subr.mxu0 0.0
        %597 = vmatpush2.msra.mxu0 0.0
        %598 = vmatprep.subr.mxu0 0.0
        %599 = vmatpush2.msra.mxu0 0.0
        %600 = vmatprep.subr.mxu0 0.0
        %601 = vmatpush2.msra.mxu0 0.0
        %602 = vmatprep.subr.mxu0 0.0
        %603 = vmatpush2.msra.mxu0 0.0
        %604 = vmatprep.subr.mxu0 0.0
        %605 = vmatpush2.msra.mxu0 0.0
        %606 = vmatprep.subr.mxu0 0.0
        %607 = vmatpush2.msra.mxu0 0.0
        %608 = vmatprep.subr.mxu0 0.0
        %609 = vmatpush2.msra.mxu0 0.0
        %610 = vmatprep.subr.mxu0 0.0
        %611 = vmatpush2.msra.mxu0 0.0
        %612 = vmatprep.subr.mxu0 0.0
        %613 = vmatpush2.msra.mxu0 0.0
        %614 = vmatprep.subr.mxu0 0.0
        %615 = vmatpush2.msra.mxu0 0.0
        %616 = vmatprep.subr.mxu0 0.0
        %617 = vmatpush2.msra.mxu0 0.0
        %618 = vmatprep.subr.mxu0 0.0
        %619 = vmatpush2.msra.mxu0 0.0
        %620 = vmatprep.subr.mxu0 0.0
        %621 = vmatpush2.msra.mxu0 0.0
        %622 = vmatprep.subr.mxu0 0.0
        %623 = vmatpush2.msra.mxu0 0.0
        %624 = vmatprep.subr.mxu0 0.0
        %625 = vmatpush2.msra.mxu0 0.0
        %626 = vmatprep.mubr.f32.mxu0 0.0
        %627 = vmatmul.mubr.f32.gmra.mxu0 %v560
        %v628 = vpop.f32.mrf.mxu0
        %v629 = vadd.f32 %v556, %v628
        %v630 = vpop.f32.mrf.mxu0
        %631 = vdwg.mxu0
        %s632 = scalar_lea.vmem %s2, 32
        %v633 = vld [vmem:[%s632] sm:$0xff]
        %v634 = vld [vmem:[%s632 + $0x8] sm:$0xff]
        %v635 = vld [vmem:[%s632 + $0x10] sm:$0xff]
        %v636 = vld [vmem:[%s632 + $0x18] sm:$0xff]
        %s637 = scalar_lea.vmem %s3, 1
        %v638 = vld [vmem:[%s637] sm:$0x1]
        %v640 = vlaneseq
        %v641 = vshrl.u32 %v640, 7
        %v642 = vsub.s32 0, %v641
        %v643 = vrot.slane %v638, %v642
        %645 = vmatprep.subr.mxu0 0.0
        %646 = vmatpush1.msra.mxu0 0.0
        %647 = vmatprep.subr.mxu0 0.0
        %648 = vmatpush1.msra.mxu0 0.0
        %649 = vmatprep.subr.mxu0 0.0
        %650 = vmatpush1.msra.mxu0 0.0
        %651 = vmatprep.subr.mxu0 0.0
        %652 = vmatpush1.msra.mxu0 0.0
        %653 = vmatprep.subr.mxu0 0.0
        %654 = vmatpush1.msra.mxu0 0.0
        %655 = vmatprep.subr.mxu0 0.0
        %656 = vmatpush1.msra.mxu0 0.0
        %657 = vmatprep.subr.mxu0 0.0
        %658 = vmatpush1.msra.mxu0 0.0
        %659 = vmatprep.subr.mxu0 0.0
        %660 = vmatpush1.msra.mxu0 0.0
        %661 = vmatprep.subr.mxu0 0.0
        %662 = vmatpush1.msra.mxu0 0.0
        %663 = vmatprep.subr.mxu0 0.0
        %664 = vmatpush1.msra.mxu0 0.0
        %665 = vmatprep.subr.mxu0 0.0
        %666 = vmatpush1.msra.mxu0 0.0
        %667 = vmatprep.subr.mxu0 0.0
        %668 = vmatpush1.msra.mxu0 0.0
        %669 = vmatprep.subr.mxu0 0.0
        %670 = vmatpush1.msra.mxu0 %v636
        %671 = vmatprep.subr.mxu0 0.0
        %672 = vmatpush1.msra.mxu0 %v635
        %673 = vmatprep.subr.mxu0 0.0
        %674 = vmatpush1.msra.mxu0 %v634
        %675 = vmatprep.subr.mxu0 0.0
        %676 = vmatpush1.msra.mxu0 %v633
        %677 = vmatprep.subr.mxu0 0.0
        %678 = vmatpush2.msra.mxu0 0.0
        %679 = vmatprep.subr.mxu0 0.0
        %680 = vmatpush2.msra.mxu0 0.0
        %681 = vmatprep.subr.mxu0 0.0
        %682 = vmatpush2.msra.mxu0 0.0
        %683 = vmatprep.subr.mxu0 0.0
        %684 = vmatpush2.msra.mxu0 0.0
        %685 = vmatprep.subr.mxu0 0.0
        %686 = vmatpush2.msra.mxu0 0.0
        %687 = vmatprep.subr.mxu0 0.0
        %688 = vmatpush2.msra.mxu0 0.0
        %689 = vmatprep.subr.mxu0 0.0
        %690 = vmatpush2.msra.mxu0 0.0
        %691 = vmatprep.subr.mxu0 0.0
        %692 = vmatpush2.msra.mxu0 0.0
        %693 = vmatprep.subr.mxu0 0.0
        %694 = vmatpush2.msra.mxu0 0.0
        %695 = vmatprep.subr.mxu0 0.0
        %696 = vmatpush2.msra.mxu0 0.0
        %697 = vmatprep.subr.mxu0 0.0
        %698 = vmatpush2.msra.mxu0 0.0
        %699 = vmatprep.subr.mxu0 0.0
        %700 = vmatpush2.msra.mxu0 0.0
        %701 = vmatprep.subr.mxu0 0.0
        %702 = vmatpush2.msra.mxu0 0.0
        %703 = vmatprep.subr.mxu0 0.0
        %704 = vmatpush2.msra.mxu0 0.0
        %705 = vmatprep.subr.mxu0 0.0
        %706 = vmatpush2.msra.mxu0 0.0
        %707 = vmatprep.subr.mxu0 0.0
        %708 = vmatpush2.msra.mxu0 0.0
        %709 = vmatprep.mubr.f32.mxu0 0.0
        %710 = vmatmul.mubr.f32.gmra.mxu0 %v560
        %v711 = vpop.f32.mrf.mxu0
        %v712 = vadd.f32 %v643, %v711
        %v713 = vpop.f32.mrf.mxu0
        %714 = vdwg.mxu0
        %s715 = scalar_lea.vmem %s2, 64
        %v716 = vld [vmem:[%s715] sm:$0xff]
        %v717 = vld [vmem:[%s715 + $0x8] sm:$0xff]
        %v718 = vld [vmem:[%s715 + $0x10] sm:$0xff]
        %v719 = vld [vmem:[%s715 + $0x18] sm:$0xff]
        %s720 = scalar_lea.vmem %s3, 2
        %v721 = vld [vmem:[%s720] sm:$0x1]
        %v723 = vlaneseq
        %v724 = vshrl.u32 %v723, 7
        %v725 = vsub.s32 0, %v724
        %v726 = vrot.slane %v721, %v725
        %728 = vmatprep.subr.mxu0 0.0
        %729 = vmatpush1.msra.mxu0 0.0
        %730 = vmatprep.subr.mxu0 0.0
        %731 = vmatpush1.msra.mxu0 0.0
        %732 = vmatprep.subr.mxu0 0.0
        %733 = vmatpush1.msra.mxu0 0.0
        %734 = vmatprep.subr.mxu0 0.0
        %735 = vmatpush1.msra.mxu0 0.0
        %736 = vmatprep.subr.mxu0 0.0
        %737 = vmatpush1.msra.mxu0 0.0
        %738 = vmatprep.subr.mxu0 0.0
        %739 = vmatpush1.msra.mxu0 0.0
        %740 = vmatprep.subr.mxu0 0.0
        %741 = vmatpush1.msra.mxu0 0.0
        %742 = vmatprep.subr.mxu0 0.0
        %743 = vmatpush1.msra.mxu0 0.0
        %744 = vmatprep.subr.mxu0 0.0
        %745 = vmatpush1.msra.mxu0 0.0
        %746 = vmatprep.subr.mxu0 0.0
        %747 = vmatpush1.msra.mxu0 0.0
        %748 = vmatprep.subr.mxu0 0.0
        %749 = vmatpush1.msra.mxu0 0.0
        %750 = vmatprep.subr.mxu0 0.0
        %751 = vmatpush1.msra.mxu0 0.0
        %752 = vmatprep.subr.mxu0 0.0
        %753 = vmatpush1.msra.mxu0 %v719
        %754 = vmatprep.subr.mxu0 0.0
        %755 = vmatpush1.msra.mxu0 %v718
        %756 = vmatprep.subr.mxu0 0.0
        %757 = vmatpush1.msra.mxu0 %v717
        %758 = vmatprep.subr.mxu0 0.0
        %759 = vmatpush1.msra.mxu0 %v716
        %760 = vmatprep.subr.mxu0 0.0
        %761 = vmatpush2.msra.mxu0 0.0
        %762 = vmatprep.subr.mxu0 0.0
        %763 = vmatpush2.msra.mxu0 0.0
        %764 = vmatprep.subr.mxu0 0.0
        %765 = vmatpush2.msra.mxu0 0.0
        %766 = vmatprep.subr.mxu0 0.0
        %767 = vmatpush2.msra.mxu0 0.0
        %768 = vmatprep.subr.mxu0 0.0
        %769 = vmatpush2.msra.mxu0 0.0
        %770 = vmatprep.subr.mxu0 0.0
        %771 = vmatpush2.msra.mxu0 0.0
        %772 = vmatprep.subr.mxu0 0.0
        %773 = vmatpush2.msra.mxu0 0.0
        %774 = vmatprep.subr.mxu0 0.0
        %775 = vmatpush2.msra.mxu0 0.0
        %776 = vmatprep.subr.mxu0 0.0
        %777 = vmatpush2.msra.mxu0 0.0
        %778 = vmatprep.subr.mxu0 0.0
        %779 = vmatpush2.msra.mxu0 0.0
        %780 = vmatprep.subr.mxu0 0.0
        %781 = vmatpush2.msra.mxu0 0.0
        %782 = vmatprep.subr.mxu0 0.0
        %783 = vmatpush2.msra.mxu0 0.0
        %784 = vmatprep.subr.mxu0 0.0
        %785 = vmatpush2.msra.mxu0 0.0
        %786 = vmatprep.subr.mxu0 0.0
        %787 = vmatpush2.msra.mxu0 0.0
        %788 = vmatprep.subr.mxu0 0.0
        %789 = vmatpush2.msra.mxu0 0.0
        %790 = vmatprep.subr.mxu0 0.0
        %791 = vmatpush2.msra.mxu0 0.0
        %792 = vmatprep.mubr.f32.mxu0 0.0
        %793 = vmatmul.mubr.f32.gmra.mxu0 %v560
        %v794 = vpop.f32.mrf.mxu0
        %v795 = vadd.f32 %v726, %v794
        %v796 = vpop.f32.mrf.mxu0
        %797 = vdwg.mxu0
        %v799 = vsel %vm558, %v629, 0
        %v802 = vsel %vm558, %v712, 0
        %804 = vmatprep.subr.mxu0 0.0
        %805 = vmatpush1.xpose.msra.mxu0 0.0
        %806 = vmatprep.subr.mxu0 0.0
        %807 = vmatpush1.xpose.msra.mxu0 0.0
        %808 = vmatprep.subr.mxu0 0.0
        %809 = vmatpush1.xpose.msra.mxu0 0.0
        %810 = vmatprep.subr.mxu0 0.0
        %811 = vmatpush1.xpose.msra.mxu0 0.0
        %812 = vmatprep.subr.mxu0 0.0
        %813 = vmatpush1.xpose.msra.mxu0 0.0
        %814 = vmatprep.subr.mxu0 0.0
        %815 = vmatpush1.xpose.msra.mxu0 0.0
        %816 = vmatprep.subr.mxu0 0.0
        %817 = vmatpush1.xpose.msra.mxu0 0.0
        %818 = vmatprep.subr.mxu0 0.0
        %819 = vmatpush1.xpose.msra.mxu0 0.0
        %820 = vmatprep.subr.mxu0 0.0
        %821 = vmatpush1.xpose.msra.mxu0 0.0
        %822 = vmatprep.subr.mxu0 0.0
        %823 = vmatpush1.xpose.msra.mxu0 0.0
        %824 = vmatprep.subr.mxu0 0.0
        %825 = vmatpush1.xpose.msra.mxu0 0.0
        %826 = vmatprep.subr.mxu0 0.0
        %827 = vmatpush1.xpose.msra.mxu0 0.0
        %828 = vmatprep.subr.mxu0 0.0
        %829 = vmatpush1.xpose.msra.mxu0 0.0
        %830 = vmatprep.subr.mxu0 0.0
        %831 = vmatpush1.xpose.msra.mxu0 0.0
        %832 = vmatprep.subr.mxu0 0.0
        %833 = vmatpush1.xpose.msra.mxu0 0.0
        %834 = vmatprep.subr.mxu0 0.0
        %835 = vmatpush1.xpose.msra.mxu0 %v802
        %836 = vmatprep.subr.mxu0 0.0
        %837 = vmatpush2.xpose.msra.mxu0 0.0
        %838 = vmatprep.subr.mxu0 0.0
        %839 = vmatpush2.xpose.msra.mxu0 0.0
        %840 = vmatprep.subr.mxu0 0.0
        %841 = vmatpush2.xpose.msra.mxu0 0.0
        %842 = vmatprep.subr.mxu0 0.0
        %843 = vmatpush2.xpose.msra.mxu0 0.0
        %844 = vmatprep.subr.mxu0 0.0
        %845 = vmatpush2.xpose.msra.mxu0 0.0
        %846 = vmatprep.subr.mxu0 0.0
        %847 = vmatpush2.xpose.msra.mxu0 0.0
        %848 = vmatprep.subr.mxu0 0.0
        %849 = vmatpush2.xpose.msra.mxu0 0.0
        %850 = vmatprep.subr.mxu0 0.0
        %851 = vmatpush2.xpose.msra.mxu0 0.0
        %852 = vmatprep.subr.mxu0 0.0
        %853 = vmatpush2.xpose.msra.mxu0 0.0
        %854 = vmatprep.subr.mxu0 0.0
        %855 = vmatpush2.xpose.msra.mxu0 0.0
        %856 = vmatprep.subr.mxu0 0.0
        %857 = vmatpush2.xpose.msra.mxu0 0.0
        %858 = vmatprep.subr.mxu0 0.0
        %859 = vmatpush2.xpose.msra.mxu0 0.0
        %860 = vmatprep.subr.mxu0 0.0
        %861 = vmatpush2.xpose.msra.mxu0 0.0
        %862 = vmatprep.subr.mxu0 0.0
        %863 = vmatpush2.xpose.msra.mxu0 0.0
        %864 = vmatprep.subr.mxu0 0.0
        %865 = vmatpush2.xpose.msra.mxu0 0.0
        %866 = vmatprep.subr.mxu0 0.0
        %867 = vmatpush2.xpose.msra.mxu0 0.0
        %868 = vmatprep.mubr.f32.mxu0 0.0
        %869 = vmatmul.mubr.f32.gmra.mxu0 %v799
        %v870 = vpop.f32.mrf.mxu0
        %v871 = vadd.f32 0.0, %v870
        %v872 = vpop.f32.mrf.mxu0
        %873 = vdwg.mxu0
        %v874 = vmul.f32 %v871, 0.17677669
        %v875 = vmul.f32 %v546, -1e+09
        %v877 = vlaneseq
        %v878 = vshrl.u32 %v877, 7
        %v879 = vsub.s32 0, %v878
        %v880 = vrot.slane %v875, %v879
        %v882 = vadd.f32 %v874, %v880
        %vm883 = vcmask 64512
        %v884 = vsel %vm883, %v882, -inf
        %885 = vmax.xlane.f32.xlu0 %v884
        %v886 = vpop.xlane.xlu0 %885
        %v887 = vsub.f32 %v882, %v886
        %v888 = vmul.f32 %v887, 1.442695
        %v889 = vpow.pop %v888
        %v890 = vsel %vm883, %v889, 0.0
        %891 = vadd.xlane.f32.xlu0 %v890
        %v892 = vpop.xlane.xlu0 %891
        %v893 = vrcp.pop %v892
        %v894 = vmul.f32 %v889, %v893
        %v896 = vsel %vm883, %v894, 0
        %898 = vmatprep.subr.mxu0 0.0
        %899 = vmatpush1.msra.mxu0 0.0
        %900 = vmatprep.subr.mxu0 0.0
        %901 = vmatpush1.msra.mxu0 0.0
        %902 = vmatprep.subr.mxu0 0.0
        %903 = vmatpush1.msra.mxu0 0.0
        %904 = vmatprep.subr.mxu0 0.0
        %905 = vmatpush1.msra.mxu0 0.0
        %906 = vmatprep.subr.mxu0 0.0
        %907 = vmatpush1.msra.mxu0 0.0
        %908 = vmatprep.subr.mxu0 0.0
        %909 = vmatpush1.msra.mxu0 0.0
        %910 = vmatprep.subr.mxu0 0.0
        %911 = vmatpush1.msra.mxu0 0.0
        %912 = vmatprep.subr.mxu0 0.0
        %913 = vmatpush1.msra.mxu0 0.0
        %914 = vmatprep.subr.mxu0 0.0
        %915 = vmatpush1.msra.mxu0 0.0
        %916 = vmatprep.subr.mxu0 0.0
        %917 = vmatpush1.msra.mxu0 0.0
        %918 = vmatprep.subr.mxu0 0.0
        %919 = vmatpush1.msra.mxu0 0.0
        %920 = vmatprep.subr.mxu0 0.0
        %921 = vmatpush1.msra.mxu0 0.0
        %922 = vmatprep.subr.mxu0 0.0
        %923 = vmatpush1.msra.mxu0 0.0
        %924 = vmatprep.subr.mxu0 0.0
        %925 = vmatpush1.msra.mxu0 0.0
        %926 = vmatprep.subr.mxu0 0.0
        %927 = vmatpush1.msra.mxu0 0.0
        %928 = vmatprep.subr.mxu0 0.0
        %929 = vmatpush1.msra.mxu0 %v795
        %930 = vmatprep.subr.mxu0 0.0
        %931 = vmatpush2.msra.mxu0 0.0
        %932 = vmatprep.subr.mxu0 0.0
        %933 = vmatpush2.msra.mxu0 0.0
        %934 = vmatprep.subr.mxu0 0.0
        %935 = vmatpush2.msra.mxu0 0.0
        %936 = vmatprep.subr.mxu0 0.0
        %937 = vmatpush2.msra.mxu0 0.0
        %938 = vmatprep.subr.mxu0 0.0
        %939 = vmatpush2.msra.mxu0 0.0
        %940 = vmatprep.subr.mxu0 0.0
        %941 = vmatpush2.msra.mxu0 0.0
        %942 = vmatprep.subr.mxu0 0.0
        %943 = vmatpush2.msra.mxu0 0.0
        %944 = vmatprep.subr.mxu0 0.0
        %945 = vmatpush2.msra.mxu0 0.0
        %946 = vmatprep.subr.mxu0 0.0
        %947 = vmatpush2.msra.mxu0 0.0
        %948 = vmatprep.subr.mxu0 0.0
        %949 = vmatpush2.msra.mxu0 0.0
        %950 = vmatprep.subr.mxu0 0.0
        %951 = vmatpush2.msra.mxu0 0.0
        %952 = vmatprep.subr.mxu0 0.0
        %953 = vmatpush2.msra.mxu0 0.0
        %954 = vmatprep.subr.mxu0 0.0
        %955 = vmatpush2.msra.mxu0 0.0
        %956 = vmatprep.subr.mxu0 0.0
        %957 = vmatpush2.msra.mxu0 0.0
        %958 = vmatprep.subr.mxu0 0.0
        %959 = vmatpush2.msra.mxu0 0.0
        %960 = vmatprep.subr.mxu0 0.0
        %961 = vmatpush2.msra.mxu0 0.0
        %962 = vmatprep.mubr.f32.mxu0 0.0
        %963 = vmatmul.mubr.f32.gmra.mxu0 %v896
        %v964 = vpop.f32.mrf.mxu0
        %v965 = vadd.f32 0.0, %v964
        %v966 = vpop.f32.mrf.mxu0
        %967 = vdwg.mxu0
        %v968 = vld [vmem:[#allocation3] sm:$0xff]
        %v969 = vld [vmem:[#allocation3 + $0x8] sm:$0xff]
        %v970 = vld [vmem:[#allocation3 + $0x10] sm:$0xff]
        %v971 = vld [vmem:[#allocation3 + $0x18] sm:$0xff]
        %v972 = vld [vmem:[%s5] sm:$0x1]
        %v974 = vlaneseq
        %v975 = vshrl.u32 %v974, 7
        %v976 = vsub.s32 0, %v975
        %v977 = vrot.slane %v972, %v976
        %v980 = vsel %vm558, %v965, 0
        %982 = vmatprep.subr.mxu0 0.0
        %983 = vmatpush1.msra.mxu0 0.0
        %984 = vmatprep.subr.mxu0 0.0
        %985 = vmatpush1.msra.mxu0 0.0
        %986 = vmatprep.subr.mxu0 0.0
        %987 = vmatpush1.msra.mxu0 0.0
        %988 = vmatprep.subr.mxu0 0.0
        %989 = vmatpush1.msra.mxu0 0.0
        %990 = vmatprep.subr.mxu0 0.0
        %991 = vmatpush1.msra.mxu0 0.0
        %992 = vmatprep.subr.mxu0 0.0
        %993 = vmatpush1.msra.mxu0 0.0
        %994 = vmatprep.subr.mxu0 0.0
        %995 = vmatpush1.msra.mxu0 0.0
        %996 = vmatprep.subr.mxu0 0.0
        %997 = vmatpush1.msra.mxu0 0.0
        %998 = vmatprep.subr.mxu0 0.0
        %999 = vmatpush1.msra.mxu0 0.0
        %1000 = vmatprep.subr.mxu0 0.0
        %1001 = vmatpush1.msra.mxu0 0.0
        %1002 = vmatprep.subr.mxu0 0.0
        %1003 = vmatpush1.msra.mxu0 0.0
        %1004 = vmatprep.subr.mxu0 0.0
        %1005 = vmatpush1.msra.mxu0 0.0
        %1006 = vmatprep.subr.mxu0 0.0
        %1007 = vmatpush1.msra.mxu0 %v971
        %1008 = vmatprep.subr.mxu0 0.0
        %1009 = vmatpush1.msra.mxu0 %v970
        %1010 = vmatprep.subr.mxu0 0.0
        %1011 = vmatpush1.msra.mxu0 %v969
        %1012 = vmatprep.subr.mxu0 0.0
        %1013 = vmatpush1.msra.mxu0 %v968
        %1014 = vmatprep.subr.mxu0 0.0
        %1015 = vmatpush2.msra.mxu0 0.0
        %1016 = vmatprep.subr.mxu0 0.0
        %1017 = vmatpush2.msra.mxu0 0.0
        %1018 = vmatprep.subr.mxu0 0.0
        %1019 = vmatpush2.msra.mxu0 0.0
        %1020 = vmatprep.subr.mxu0 0.0
        %1021 = vmatpush2.msra.mxu0 0.0
        %1022 = vmatprep.subr.mxu0 0.0
        %1023 = vmatpush2.msra.mxu0 0.0
        %1024 = vmatprep.subr.mxu0 0.0
        %1025 = vmatpush2.msra.mxu0 0.0
        %1026 = vmatprep.subr.mxu0 0.0
        %1027 = vmatpush2.msra.mxu0 0.0
        %1028 = vmatprep.subr.mxu0 0.0
        %1029 = vmatpush2.msra.mxu0 0.0
        %1030 = vmatprep.subr.mxu0 0.0
        %1031 = vmatpush2.msra.mxu0 0.0
        %1032 = vmatprep.subr.mxu0 0.0
        %1033 = vmatpush2.msra.mxu0 0.0
        %1034 = vmatprep.subr.mxu0 0.0
        %1035 = vmatpush2.msra.mxu0 0.0
        %1036 = vmatprep.subr.mxu0 0.0
        %1037 = vmatpush2.msra.mxu0 0.0
        %1038 = vmatprep.subr.mxu0 0.0
        %1039 = vmatpush2.msra.mxu0 0.0
        %1040 = vmatprep.subr.mxu0 0.0
        %1041 = vmatpush2.msra.mxu0 0.0
        %1042 = vmatprep.subr.mxu0 0.0
        %1043 = vmatpush2.msra.mxu0 0.0
        %1044 = vmatprep.subr.mxu0 0.0
        %1045 = vmatpush2.msra.mxu0 0.0
        %1046 = vmatprep.mubr.f32.mxu0 0.0
        %1047 = vmatmul.mubr.f32.gmra.mxu0 %v980
        %v1048 = vpop.f32.mrf.mxu0
        %v1049 = vadd.f32 %v977, %v1048
        %v1050 = vpop.f32.mrf.mxu0
        %1051 = vdwg.mxu0
        %v1052 = vadd.f32 %v545, %v1049
        %v1053 = vsel %vm558, %v1052, 0.0
        %1054 = vadd.xlane.f32.xlu0 %v1053
        %v1055 = vpop.xlane.xlu0 %1054
        %v1056 = vrcp.pop 32.0
        %v1057 = vmul.f32 %v1055, %v1056
        %v1058 = vsub.f32 %v1052, %v1057
        %v1059 = vmul.f32 %v1058, %v1058
        %v1060 = vsel %vm558, %v1059, 0.0
        %1061 = vadd.xlane.f32.xlu0 %v1060
        %v1062 = vpop.xlane.xlu0 %1061
        %v1063 = vmul.f32 %v1062, %v1056
        %v1064 = vadd.f32 %v1063, 1e-06
        %v1065 = vrsqrt.pop %v1064
        %v1066 = vmul.f32 %v1058, %v1065
        %v1067 = vld [vmem:[%s6] sm:$0x1]
        %v1069 = vlaneseq
        %v1070 = vshrl.u32 %v1069, 7
        %v1071 = vsub.s32 0, %v1070
        %v1072 = vrot.slane %v1067, %v1071
        %v1074 = vmul.f32 %v1066, %v1072
        %v1075 = vld [vmem:[%s7] sm:$0x1]
        %v1077 = vlaneseq
        %v1078 = vshrl.u32 %v1077, 7
        %v1079 = vsub.s32 0, %v1078
        %v1080 = vrot.slane %v1075, %v1079
        %v1082 = vadd.f32 %v1074, %v1080
        %1083 = vst.msk [vmem:[%s541] sm:$0xff] %vm558, %v1082
        %v1084 = vld [vmem:[%s8] sm:$0xff]
        %v1085 = vld [vmem:[%s8 + $0x8] sm:$0xff]
        %v1086 = vld [vmem:[%s8 + $0x10] sm:$0xff]
        %v1087 = vld [vmem:[%s8 + $0x18] sm:$0xff]
        %v1088 = vld [vmem:[%s9] sm:$0x1]
        %v1090 = vlaneseq
        %v1091 = vshrl.u32 %v1090, 7
        %v1092 = vsub.s32 0, %v1091
        %v1093 = vrot.slane %v1088, %v1092
        %v1096 = vsel %vm558, %v1082, 0
        %1098 = vmatprep.subr.mxu0 0.0
        %1099 = vmatpush1.msra.mxu0 0.0
        %1100 = vmatprep.subr.mxu0 0.0
        %1101 = vmatpush1.msra.mxu0 0.0
        %1102 = vmatprep.subr.mxu0 0.0
        %1103 = vmatpush1.msra.mxu0 0.0
        %1104 = vmatprep.subr.mxu0 0.0
        %1105 = vmatpush1.msra.mxu0 0.0
        %1106 = vmatprep.subr.mxu0 0.0
        %1107 = vmatpush1.msra.mxu0 0.0
        %1108 = vmatprep.subr.mxu0 0.0
        %1109 = vmatpush1.msra.mxu0 0.0
        %1110 = vmatprep.subr.mxu0 0.0
        %1111 = vmatpush1.msra.mxu0 0.0
        %1112 = vmatprep.subr.mxu0 0.0
        %1113 = vmatpush1.msra.mxu0 0.0
        %1114 = vmatprep.subr.mxu0 0.0
        %1115 = vmatpush1.msra.mxu0 0.0
        %1116 = vmatprep.subr.mxu0 0.0
        %1117 = vmatpush1.msra.mxu0 0.0
        %1118 = vmatprep.subr.mxu0 0.0
        %1119 = vmatpush1.msra.mxu0 0.0
        %1120 = vmatprep.subr.mxu0 0.0
        %1121 = vmatpush1.msra.mxu0 0.0
        %1122 = vmatprep.subr.mxu0 0.0
        %1123 = vmatpush1.msra.mxu0 %v1087
        %1124 = vmatprep.subr.mxu0 0.0
        %1125 = vmatpush1.msra.mxu0 %v1086
        %1126 = vmatprep.subr.mxu0 0.0
        %1127 = vmatpush1.msra.mxu0 %v1085
        %1128 = vmatprep.subr.mxu0 0.0
        %1129 = vmatpush1.msra.mxu0 %v1084
        %1130 = vmatprep.subr.mxu0 0.0
        %1131 = vmatpush2.msra.mxu0 0.0
        %1132 = vmatprep.subr.mxu0 0.0
        %1133 = vmatpush2.msra.mxu0 0.0
        %1134 = vmatprep.subr.mxu0 0.0
        %1135 = vmatpush2.msra.mxu0 0.0
        %1136 = vmatprep.subr.mxu0 0.0
        %1137 = vmatpush2.msra.mxu0 0.0
        %1138 = vmatprep.subr.mxu0 0.0
        %1139 = vmatpush2.msra.mxu0 0.0
        %1140 = vmatprep.subr.mxu0 0.0
        %1141 = vmatpush2.msra.mxu0 0.0
        %1142 = vmatprep.subr.mxu0 0.0
        %1143 = vmatpush2.msra.mxu0 0.0
        %1144 = vmatprep.subr.mxu0 0.0
        %1145 = vmatpush2.msra.mxu0 0.0
        %1146 = vmatprep.subr.mxu0 0.0
        %1147 = vmatpush2.msra.mxu0 0.0
        %1148 = vmatprep.subr.mxu0 0.0
        %1149 = vmatpush2.msra.mxu0 0.0
        %1150 = vmatprep.subr.mxu0 0.0
        %1151 = vmatpush2.msra.mxu0 0.0
        %1152 = vmatprep.subr.mxu0 0.0
        %1153 = vmatpush2.msra.mxu0 0.0
        %1154 = vmatprep.subr.mxu0 0.0
        %1155 = vmatpush2.msra.mxu0 0.0
        %1156 = vmatprep.subr.mxu0 0.0
        %1157 = vmatpush2.msra.mxu0 0.0
        %1158 = vmatprep.subr.mxu0 0.0
        %1159 = vmatpush2.msra.mxu0 0.0
        %1160 = vmatprep.subr.mxu0 0.0
        %1161 = vmatpush2.msra.mxu0 0.0
        %1162 = vmatprep.mubr.f32.mxu0 0.0
        %1163 = vmatmul.mubr.f32.gmra.mxu0 %v1096
        %v1164 = vpop.f32.mrf.mxu0
        %v1165 = vadd.f32 %v1093, %v1164
        %v1166 = vpop.f32.mrf.mxu0
        %1167 = vdwg.mxu0
        %v1168 = vmax.f32 %v1165, 0.0
        %v1169 = vld [vmem:[%s10] sm:$0x1]
        %v1170 = vld [vmem:[#allocation2] sm:$0x1]
        %1172 = vset.pattern.permute.xlu0 0
        %1173 = vperm.xlu0 %1172, %v1170
        %v1174 = vpop.permute.xlu0 %1173
        %v1176 = vlaneseq
        %v1177 = vshrl.u32 %v1176, 7
        %v1178 = vsub.s32 0, %v1177
        %v1179 = vrot.slane %v1174, %v1178
        %vm1180 = vcmask 130048
        %v1182 = vsel %vm1180, %v1169, 0
        %v1185 = vsel %vm1180, %v1168, 0
        %1187 = vmatprep.subr.mxu0 0.0
        %1188 = vmatpush1.xpose.msra.mxu0 0.0
        %1189 = vmatprep.subr.mxu0 0.0
        %1190 = vmatpush1.xpose.msra.mxu0 0.0
        %1191 = vmatprep.subr.mxu0 0.0
        %1192 = vmatpush1.xpose.msra.mxu0 0.0
        %1193 = vmatprep.subr.mxu0 0.0
        %1194 = vmatpush1.xpose.msra.mxu0 0.0
        %1195 = vmatprep.subr.mxu0 0.0
        %1196 = vmatpush1.xpose.msra.mxu0 0.0
        %1197 = vmatprep.subr.mxu0 0.0
        %1198 = vmatpush1.xpose.msra.mxu0 0.0
        %1199 = vmatprep.subr.mxu0 0.0
        %1200 = vmatpush1.xpose.msra.mxu0 0.0
        %1201 = vmatprep.subr.mxu0 0.0
        %1202 = vmatpush1.xpose.msra.mxu0 0.0
        %1203 = vmatprep.subr.mxu0 0.0
        %1204 = vmatpush1.xpose.msra.mxu0 0.0
        %1205 = vmatprep.subr.mxu0 0.0
        %1206 = vmatpush1.xpose.msra.mxu0 0.0
        %1207 = vmatprep.subr.mxu0 0.0
        %1208 = vmatpush1.xpose.msra.mxu0 0.0
        %1209 = vmatprep.subr.mxu0 0.0
        %1210 = vmatpush1.xpose.msra.mxu0 0.0
        %1211 = vmatprep.subr.mxu0 0.0
        %1212 = vmatpush1.xpose.msra.mxu0 0.0
        %1213 = vmatprep.subr.mxu0 0.0
        %1214 = vmatpush1.xpose.msra.mxu0 0.0
        %1215 = vmatprep.subr.mxu0 0.0
        %1216 = vmatpush1.xpose.msra.mxu0 0.0
        %1217 = vmatprep.subr.mxu0 0.0
        %1218 = vmatpush1.xpose.msra.mxu0 %v1185
        %1219 = vmatprep.subr.mxu0 0.0
        %1220 = vmatpush2.xpose.msra.mxu0 0.0
        %1221 = vmatprep.subr.mxu0 0.0
        %1222 = vmatpush2.xpose.msra.mxu0 0.0
        %1223 = vmatprep.subr.mxu0 0.0
        %1224 = vmatpush2.xpose.msra.mxu0 0.0
        %1225 = vmatprep.subr.mxu0 0.0
        %1226 = vmatpush2.xpose.msra.mxu0 0.0
        %1227 = vmatprep.subr.mxu0 0.0
        %1228 = vmatpush2.xpose.msra.mxu0 0.0
        %1229 = vmatprep.subr.mxu0 0.0
        %1230 = vmatpush2.xpose.msra.mxu0 0.0
        %1231 = vmatprep.subr.mxu0 0.0
        %1232 = vmatpush2.xpose.msra.mxu0 0.0
        %1233 = vmatprep.subr.mxu0 0.0
        %1234 = vmatpush2.xpose.msra.mxu0 0.0
        %1235 = vmatprep.subr.mxu0 0.0
        %1236 = vmatpush2.xpose.msra.mxu0 0.0
        %1237 = vmatprep.subr.mxu0 0.0
        %1238 = vmatpush2.xpose.msra.mxu0 0.0
        %1239 = vmatprep.subr.mxu0 0.0
        %1240 = vmatpush2.xpose.msra.mxu0 0.0
        %1241 = vmatprep.subr.mxu0 0.0
        %1242 = vmatpush2.xpose.msra.mxu0 0.0
        %1243 = vmatprep.subr.mxu0 0.0
        %1244 = vmatpush2.xpose.msra.mxu0 0.0
        %1245 = vmatprep.subr.mxu0 0.0
        %1246 = vmatpush2.xpose.msra.mxu0 0.0
        %1247 = vmatprep.subr.mxu0 0.0
        %1248 = vmatpush2.xpose.msra.mxu0 0.0
        %1249 = vmatprep.subr.mxu0 0.0
        %1250 = vmatpush2.xpose.msra.mxu0 0.0
        %1251 = vmatprep.mubr.f32.mxu0 0.0
        %1252 = vmatmul.mubr.f32.gmra.mxu0 %v1182
        %v1253 = vpop.f32.mrf.mxu0
        %v1254 = vadd.f32 %v1179, %v1253
        %v1255 = vpop.f32.mrf.mxu0
        %1256 = vdwg.mxu0
        %v1257 = vadd.f32 %v1254, %v875
        %vm1258 = vcmask 57344
        %v1259 = vsel %vm1258, %v1257, -inf
        %1260 = vmax.xlane.f32.xlu0 %v1259
        %v1261 = vpop.xlane.xlu0 %1260
        %v1262 = vsub.f32 %v1257, %v1261
        %v1263 = vmul.f32 %v1262, 1.442695
        %v1264 = vpow.pop %v1263
        %v1265 = vsel %vm1258, %v1264, 0.0
        %1266 = vadd.xlane.f32.xlu0 %v1265
        %v1267 = vpop.xlane.xlu0 %1266
        %v1268 = vrcp.pop %v1267
        %v1269 = vmul.f32 %v1264, %v1268
        %v1271 = vsel %vm883, %v1269, 0
        %1273 = vmatprep.subr.mxu0 0.0
        %1274 = vmatpush1.msra.mxu0 0.0
        %1275 = vmatprep.subr.mxu0 0.0
        %1276 = vmatpush1.msra.mxu0 0.0
        %1277 = vmatprep.subr.mxu0 0.0
        %1278 = vmatpush1.msra.mxu0 0.0
        %1279 = vmatprep.subr.mxu0 0.0
        %1280 = vmatpush1.msra.mxu0 0.0
        %1281 = vmatprep.subr.mxu0 0.0
        %1282 = vmatpush1.msra.mxu0 0.0
        %1283 = vmatprep.subr.mxu0 0.0
        %1284 = vmatpush1.msra.mxu0 0.0
        %1285 = vmatprep.subr.mxu0 0.0
        %1286 = vmatpush1.msra.mxu0 0.0
        %1287 = vmatprep.subr.mxu0 0.0
        %1288 = vmatpush1.msra.mxu0 0.0
        %1289 = vmatprep.subr.mxu0 0.0
        %1290 = vmatpush1.msra.mxu0 0.0
        %1291 = vmatprep.subr.mxu0 0.0
        %1292 = vmatpush1.msra.mxu0 0.0
        %1293 = vmatprep.subr.mxu0 0.0
        %1294 = vmatpush1.msra.mxu0 0.0
        %1295 = vmatprep.subr.mxu0 0.0
        %1296 = vmatpush1.msra.mxu0 0.0
        %1297 = vmatprep.subr.mxu0 0.0
        %1298 = vmatpush1.msra.mxu0 0.0
        %1299 = vmatprep.subr.mxu0 0.0
        %1300 = vmatpush1.msra.mxu0 0.0
        %1301 = vmatprep.subr.mxu0 0.0
        %1302 = vmatpush1.msra.mxu0 0.0
        %1303 = vmatprep.subr.mxu0 0.0
        %1304 = vmatpush1.msra.mxu0 %v1082
        %1305 = vmatprep.subr.mxu0 0.0
        %1306 = vmatpush2.msra.mxu0 0.0
        %1307 = vmatprep.subr.mxu0 0.0
        %1308 = vmatpush2.msra.mxu0 0.0
        %1309 = vmatprep.subr.mxu0 0.0
        %1310 = vmatpush2.msra.mxu0 0.0
        %1311 = vmatprep.subr.mxu0 0.0
        %1312 = vmatpush2.msra.mxu0 0.0
        %1313 = vmatprep.subr.mxu0 0.0
        %1314 = vmatpush2.msra.mxu0 0.0
        %1315 = vmatprep.subr.mxu0 0.0
        %1316 = vmatpush2.msra.mxu0 0.0
        %1317 = vmatprep.subr.mxu0 0.0
        %1318 = vmatpush2.msra.mxu0 0.0
        %1319 = vmatprep.subr.mxu0 0.0
        %1320 = vmatpush2.msra.mxu0 0.0
        %1321 = vmatprep.subr.mxu0 0.0
        %1322 = vmatpush2.msra.mxu0 0.0
        %1323 = vmatprep.subr.mxu0 0.0
        %1324 = vmatpush2.msra.mxu0 0.0
        %1325 = vmatprep.subr.mxu0 0.0
        %1326 = vmatpush2.msra.mxu0 0.0
        %1327 = vmatprep.subr.mxu0 0.0
        %1328 = vmatpush2.msra.mxu0 0.0
        %1329 = vmatprep.subr.mxu0 0.0
        %1330 = vmatpush2.msra.mxu0 0.0
        %1331 = vmatprep.subr.mxu0 0.0
        %1332 = vmatpush2.msra.mxu0 0.0
        %1333 = vmatprep.subr.mxu0 0.0
        %1334 = vmatpush2.msra.mxu0 0.0
        %1335 = vmatprep.subr.mxu0 0.0
        %1336 = vmatpush2.msra.mxu0 0.0
        %1337 = vmatprep.mubr.f32.mxu0 0.0
        %1338 = vmatmul.mubr.f32.gmra.mxu0 %v1271
        %v1339 = vpop.f32.mrf.mxu0
        %v1340 = vadd.f32 0.0, %v1339
        %v1341 = vpop.f32.mrf.mxu0
        %1342 = vdwg.mxu0
        %v1343 = vld [vmem:[#allocation5] sm:$0xff]
        %v1344 = vld [vmem:[#allocation5 + $0x8] sm:$0xff]
        %v1345 = vld [vmem:[#allocation5 + $0x10] sm:$0xff]
        %v1346 = vld [vmem:[#allocation5 + $0x18] sm:$0xff]
        %v1347 = vld [vmem:[%s13] sm:$0x1]
        %v1349 = vsel %vm558, %v1340, 0
        %1351 = vmatprep.subr.mxu0 0.0
        %1352 = vmatpush1.msra.mxu0 0.0
        %1353 = vmatprep.subr.mxu0 0.0
        %1354 = vmatpush1.msra.mxu0 0.0
        %1355 = vmatprep.subr.mxu0 0.0
        %1356 = vmatpush1.msra.mxu0 0.0
        %1357 = vmatprep.subr.mxu0 0.0
        %1358 = vmatpush1.msra.mxu0 0.0
        %1359 = vmatprep.subr.mxu0 0.0
        %1360 = vmatpush1.msra.mxu0 0.0
        %1361 = vmatprep.subr.mxu0 0.0
        %1362 = vmatpush1.msra.mxu0 0.0
        %1363 = vmatprep.subr.mxu0 0.0
        %1364 = vmatpush1.msra.mxu0 0.0
        %1365 = vmatprep.subr.mxu0 0.0
        %1366 = vmatpush1.msra.mxu0 0.0
        %1367 = vmatprep.subr.mxu0 0.0
        %1368 = vmatpush1.msra.mxu0 0.0
        %1369 = vmatprep.subr.mxu0 0.0
        %1370 = vmatpush1.msra.mxu0 0.0
        %1371 = vmatprep.subr.mxu0 0.0
        %1372 = vmatpush1.msra.mxu0 0.0
        %1373 = vmatprep.subr.mxu0 0.0
        %1374 = vmatpush1.msra.mxu0 0.0
        %1375 = vmatprep.subr.mxu0 0.0
        %1376 = vmatpush1.msra.mxu0 %v1346
        %1377 = vmatprep.subr.mxu0 0.0
        %1378 = vmatpush1.msra.mxu0 %v1345
        %1379 = vmatprep.subr.mxu0 0.0
        %1380 = vmatpush1.msra.mxu0 %v1344
        %1381 = vmatprep.subr.mxu0 0.0
        %1382 = vmatpush1.msra.mxu0 %v1343
        %1383 = vmatprep.subr.mxu0 0.0
        %1384 = vmatpush2.msra.mxu0 0.0
        %1385 = vmatprep.subr.mxu0 0.0
        %1386 = vmatpush2.msra.mxu0 0.0
        %1387 = vmatprep.subr.mxu0 0.0
        %1388 = vmatpush2.msra.mxu0 0.0
        %1389 = vmatprep.subr.mxu0 0.0
        %1390 = vmatpush2.msra.mxu0 0.0
        %1391 = vmatprep.subr.mxu0 0.0
        %1392 = vmatpush2.msra.mxu0 0.0
        %1393 = vmatprep.subr.mxu0 0.0
        %1394 = vmatpush2.msra.mxu0 0.0
        %1395 = vmatprep.subr.mxu0 0.0
        %1396 = vmatpush2.msra.mxu0 0.0
        %1397 = vmatprep.subr.mxu0 0.0
        %1398 = vmatpush2.msra.mxu0 0.0
        %1399 = vmatprep.subr.mxu0 0.0
        %1400 = vmatpush2.msra.mxu0 0.0
        %1401 = vmatprep.subr.mxu0 0.0
        %1402 = vmatpush2.msra.mxu0 0.0
        %1403 = vmatprep.subr.mxu0 0.0
        %1404 = vmatpush2.msra.mxu0 0.0
        %1405 = vmatprep.subr.mxu0 0.0
        %1406 = vmatpush2.msra.mxu0 0.0
        %1407 = vmatprep.subr.mxu0 0.0
        %1408 = vmatpush2.msra.mxu0 0.0
        %1409 = vmatprep.subr.mxu0 0.0
        %1410 = vmatpush2.msra.mxu0 0.0
        %1411 = vmatprep.subr.mxu0 0.0
        %1412 = vmatpush2.msra.mxu0 0.0
        %1413 = vmatprep.subr.mxu0 0.0
        %1414 = vmatpush2.msra.mxu0 0.0
        %1415 = vmatprep.mubr.f32.mxu0 0.0
        %1416 = vmatmul.mubr.f32.gmra.mxu0 %v1349
        %v1417 = vpop.f32.mrf.mxu0
        %v1418 = vadd.f32 %v1347, %v1417
        %v1419 = vpop.f32.mrf.mxu0
        %1420 = vdwg.mxu0
        %vm1421 = vcmask 253952
        %1422 = vst.msk [vmem:[%s544] sm:$0x1] %vm1421, %v1418
        %p1423 = scmp.lt.s32.totalorder %s31, 1
        %s1424 = scalar_select %p1423, %s31, 1
        %s1425 = smul.addr %s1424, 8
        %s1426 = scalar_lea.vmem %s14, %s1425
        %p1427 = scmp.lt.s32.totalorder %s31, 1
        %s1428 = scalar_select %p1427, %s31, 1
        %s1429 = scalar_lea.vmem %s15, %s1428
        // Predicated region
        $region85: #{_lambda_.6} parent=75 // pred_check
          %p1430 = pneg %p353
        $region86: #{_lambda_.6} parent=75 // pred_check_branch
          %1432 = sbr.rel (%p1430) target = $region88
        $region87: #{_lambda_.6} parent=75 // pred_region
          _
        $region88: #{_lambda_.6} parent=75 // pred_fallthru
          _
        // Predicated region
        $region89: #{_lambda_.6} parent=75 // pred_check
          %p1433 = pneg %p379
        $region90: #{_lambda_.6} parent=75 // pred_check_branch
          %1435 = sbr.rel (%p1433) target = $region92
        $region91: #{_lambda_.6} parent=75 // pred_region
          _
        $region92: #{_lambda_.6} parent=75 // pred_fallthru
          _
      $region76: #{_lambda_.6} parent=5 // pred_fallthru
        _
      %p1436 = scmp.le.s32.totalorder 2, %s26
      // Predicated region
      $region93: #{_lambda_.6} parent=5 // pred_check
        %p1437 = pneg %p1436
      $region94: #{_lambda_.6} parent=5 // pred_check_branch
        %1439 = sbr.rel (%p1437) target = $region96
      $region95: #{_lambda_.6} parent=5 // pred_region
        %s1440 = ssub.s32 %s26, 2
        // Predicated region
        $region97: #{_lambda_.6} parent=95 // pred_check
          %p1441 = pneg %p359
        $region98: #{_lambda_.6} parent=95 // pred_check_branch
          %1443 = sbr.rel (%p1441) target = $region100
        $region99: #{_lambda_.6} parent=95 // pred_region
          %p1444 = scmp.lt.s32.totalorder %s32, 1
          %s1445 = scalar_select %p1444, %s32, 1
          %s1446 = smul.addr %s1445, 8
          %s1447 = scalar_lea.vmem %s14, %s1446
        $region100: #{_lambda_.6} parent=95 // pred_fallthru
          _
        // Predicated region
        $region101: #{_lambda_.6} parent=95 // pred_check
          %p1448 = pneg %p385
        $region102: #{_lambda_.6} parent=95 // pred_check_branch
          %1450 = sbr.rel (%p1448) target = $region104
        $region103: #{_lambda_.6} parent=95 // pred_region
          %p1451 = scmp.lt.s32.totalorder %s32, 1
          %s1452 = scalar_select %p1451, %s32, 1
          %s1453 = scalar_lea.vmem %s15, %s1452
        $region104: #{_lambda_.6} parent=95 // pred_fallthru
          _
      $region96: #{_lambda_.6} parent=5 // pred_fallthru
        _
    $region6: #{_lambda_.6} parent=1 // loop_footer
      %s30 = sadd.s32 1, %s26
    $region7: #{_lambda_.6} parent=1 // loop_footer_branch
      %25 = sbr.rel target = $region3
    $region8: #{_lambda_.6} parent=1 // loop_exit
      _
    %1454 = vsyncpa [#allocation4], 1
    %s1455 = scalar_lea.sflag [#allocation4], 1
    %1456 = vsyncpa %s1455, 1
    %1457 = vsyncpa [#allocation6], 1

// kernel: _lambda_.8
$region0: #{_lambda_.8}
  #allocation0 [shape = 'u32[]', space=smem, size = 0x4, offset = 0x4, fixed_abs, tag = 'smem constant byte address 0x4 - core index']
  #allocation1 [shape = 'u32[144,128]{1,0:T(1,128)}', space=vmem, size = 0x12000, scoped, tag = 'internal scratch']
  #allocation2 [shape = 'f32[1,1]{1,0:T(1,128)S(1)}', space=vmem, size = 0x200, scoped, tag = 'scoped memory for _lambda_.8']
  %s0 = inlined_call_operand.vmem [shape: f32[2,8,32], index: 0, kind: input, shape index: {}]
  %s1 = inlined_call_operand.vmem [shape: f32[2,8,32], index: 1, kind: input, shape index: {}]
  %s2 = inlined_call_operand.vmem [shape: f32[2,1,8], index: 2, kind: input, shape index: {}]
  %s3 = inlined_call_operand.vmem [shape: f32[2,1,8], index: 3, kind: input, shape index: {}]
  %s4 = inlined_call_operand.vmem [shape: f32[3,32,32], index: 4, kind: input, shape index: {}]
  %s5 = inlined_call_operand.vmem [shape: f32[3,1,32], index: 5, kind: input, shape index: {}]
  %s6 = inlined_call_operand.vmem [shape: f32[32,32], index: 6, kind: input, shape index: {}]
  %s7 = inlined_call_operand.vmem [shape: f32[1,32], index: 7, kind: input, shape index: {}]
  %s8 = inlined_call_operand.vmem [shape: f32[1,32], index: 8, kind: input, shape index: {}]
  %s9 = inlined_call_operand.vmem [shape: f32[1,32], index: 9, kind: input, shape index: {}]
  %s10 = inlined_call_operand.vmem [shape: f32[32,16], index: 10, kind: input, shape index: {}]
  %s11 = inlined_call_operand.vmem [shape: f32[1,16], index: 11, kind: input, shape index: {}]
  %s12 = inlined_call_operand.vmem [shape: f32[1,16], index: 12, kind: input, shape index: {}]
  %s13 = inlined_call_operand.<no memory space> [shape: f32[1,1], index: 13, kind: input, shape index: {}]
  %s14 = inlined_call_operand.vmem [shape: f32[32,32], index: 14, kind: input, shape index: {}]
  %s15 = inlined_call_operand.vmem [shape: f32[1,32], index: 15, kind: input, shape index: {}]
  %s16 = inlined_call_operand.vmem [shape: f32[2,1,32], index: 16, kind: output, shape index: {}]
  %s17 = sld [smem:[#allocation0]]
  $region97: #{_lambda_.8} parent=0
    _
  %s19 = ssub.s32 1, %s17
  %s20 = scalar_select 0, %s19, %s17
  %v21 = vstv %s13
  %22 = vst [vmem:[#allocation2] sm:$0x1] %v21
  loop: start=0, step=1, limit=4
  $region2: #{_lambda_.8} parent=0 // loop_pre_header
    _
  $region3: #{_lambda_.8} parent=0 // loop_header
    %s24 = sphi 0, %s28
    %p25 = scmp.ge.s32.totalorder %s24, 4
    %s34 = sphi 0, %s36
    %s37 = sphi 0, %s34
    %s38 = sphi 0, %s37
    %s54 = sphi 0, %s38
    %s60 = sphi 0, %s62
    %s63 = sphi 0, %s60
    %s64 = sphi 0, %s63
    %s80 = sphi 0, %s64
    %s86 = sphi 0, %s88
    %s89 = sphi 0, %s86
    %s90 = sphi 0, %s89
    %s106 = sphi 0, %s90
    %s112 = sphi 0, %s114
    %s115 = sphi 0, %s112
    %s116 = sphi 0, %s115
    %s132 = sphi 0, %s116
    %s136 = sphi 0, %s136
    %s138 = sphi 0, %s136
    %s139 = sphi 0, %s138
    %s153 = sphi 0, %s139
    %s157 = sphi 0, %s157
    %s159 = sphi 0, %s157
    %s160 = sphi 0, %s159
    %s174 = sphi 0, %s160
    %s178 = sphi 0, %s178
    %s180 = sphi 0, %s178
    %s181 = sphi 0, %s180
    %s195 = sphi 0, %s181
    %s199 = sphi 0, %s199
    %s201 = sphi 0, %s199
    %s202 = sphi 0, %s201
    %s216 = sphi 0, %s202
    %s220 = sphi 0, %s220
    %s222 = sphi 0, %s220
    %s223 = sphi 0, %s222
    %s237 = sphi 0, %s223
    %s241 = sphi 0, %s241
    %s243 = sphi 0, %s241
    %s244 = sphi 0, %s243
    %s258 = sphi 0, %s244
    %s262 = sphi 0, %s262
    %s264 = sphi 0, %s262
    %s265 = sphi 0, %s264
    %s279 = sphi 0, %s265
    %s283 = sphi 0, %s283
    %s285 = sphi 0, %s283
    %s286 = sphi 0, %s285
    %s300 = sphi 0, %s286
    %s304 = sphi 0, %s304
    %s306 = sphi 0, %s304
    %s307 = sphi 0, %s306
    %s321 = sphi 0, %s307
    %s325 = sphi 0, %s325
    %s327 = sphi 0, %s325
    %s328 = sphi 0, %s327
    %s342 = sphi 0, %s328
    %s346 = sphi 0, %s346
    %s348 = sphi 0, %s346
    %s349 = sphi 0, %s348
    %s363 = sphi 0, %s349
    %s367 = sphi 0, %s367
    %s369 = sphi 0, %s367
    %s370 = sphi 0, %s369
    %s384 = sphi 0, %s370
    %s390 = sphi 0, %s392
    %s393 = sphi 0, %s390
    %s394 = sphi 0, %s393
    %s410 = sphi 0, %s394
  $region4: #{_lambda_.8} parent=0 // loop_header_branch
    %27 = sbr.rel (%p25) target = $region8
  $region5: #{_lambda_.8} parent=0 // loop_body
    %s29 = ssub.s32 %s24, 1
    %s30 = ssub.s32 %s24, 2
    %s31 = sadd.s32 %s24, 1
    %s32 = ssub.s32 %s24, %s31
    %p33 = scmp.eq.s32.totalorder %s32, 0
    %s35 = sadd.s32 %s34, 1
    %s36 = scalar_select %p33, %s34, %s35
    %p39 = pneg %p33
    %p40 = scmp.eq.s32.totalorder %s24, 1
    %p41 = por %p39, %p40
    %p42 = scmp.ne.s32.totalorder %s34, %s37
    %p43 = scmp.eq.s32.totalorder %s24, 0
    %p44 = por %p42, %p43
    %p45 = scmp.ne.s32.totalorder %s34, %s37
    %p46 = scmp.eq.s32.totalorder %s29, 1
    %p47 = por %p45, %p46
    %p48 = scmp.ne.s32.totalorder %s37, %s38
    %p49 = scmp.eq.s32.totalorder %s29, 0
    %p50 = por %p48, %p49
    %p51 = scmp.ne.s32.totalorder %s37, %s38
    %p52 = scmp.eq.s32.totalorder %s30, 1
    %p53 = por %p51, %p52
    %p55 = scmp.ne.s32.totalorder %s38, %s54
    %p56 = scmp.eq.s32.totalorder %s30, 0
    %p57 = por %p55, %p56
    %s58 = ssub.s32 %s24, %s31
    %p59 = scmp.eq.s32.totalorder %s58, 0
    %s61 = sadd.s32 %s60, 1
    %s62 = scalar_select %p59, %s60, %s61
    %p65 = pneg %p59
    %p66 = scmp.eq.s32.totalorder %s24, 1
    %p67 = por %p65, %p66
    %p68 = scmp.ne.s32.totalorder %s60, %s63
    %p69 = scmp.eq.s32.totalorder %s24, 0
    %p70 = por %p68, %p69
    %p71 = scmp.ne.s32.totalorder %s60, %s63
    %p72 = scmp.eq.s32.totalorder %s29, 1
    %p73 = por %p71, %p72
    %p74 = scmp.ne.s32.totalorder %s63, %s64
    %p75 = scmp.eq.s32.totalorder %s29, 0
    %p76 = por %p74, %p75
    %p77 = scmp.ne.s32.totalorder %s63, %s64
    %p78 = scmp.eq.s32.totalorder %s30, 1
    %p79 = por %p77, %p78
    %p81 = scmp.ne.s32.totalorder %s64, %s80
    %p82 = scmp.eq.s32.totalorder %s30, 0
    %p83 = por %p81, %p82
    %s84 = ssub.s32 %s24, %s31
    %p85 = scmp.eq.s32.totalorder %s84, 0
    %s87 = sadd.s32 %s86, 1
    %s88 = scalar_select %p85, %s86, %s87
    %p91 = pneg %p85
    %p92 = scmp.eq.s32.totalorder %s24, 1
    %p93 = por %p91, %p92
    %p94 = scmp.ne.s32.totalorder %s86, %s89
    %p95 = scmp.eq.s32.totalorder %s24, 0
    %p96 = por %p94, %p95
    %p97 = scmp.ne.s32.totalorder %s86, %s89
    %p98 = scmp.eq.s32.totalorder %s29, 1
    %p99 = por %p97, %p98
    %p100 = scmp.ne.s32.totalorder %s89, %s90
    %p101 = scmp.eq.s32.totalorder %s29, 0
    %p102 = por %p100, %p101
    %p103 = scmp.ne.s32.totalorder %s89, %s90
    %p104 = scmp.eq.s32.totalorder %s30, 1
    %p105 = por %p103, %p104
    %p107 = scmp.ne.s32.totalorder %s90, %s106
    %p108 = scmp.eq.s32.totalorder %s30, 0
    %p109 = por %p107, %p108
    %s110 = ssub.s32 %s24, %s31
    %p111 = scmp.eq.s32.totalorder %s110, 0
    %s113 = sadd.s32 %s112, 1
    %s114 = scalar_select %p111, %s112, %s113
    %p117 = pneg %p111
    %p118 = scmp.eq.s32.totalorder %s24, 1
    %p119 = por %p117, %p118
    %p120 = scmp.ne.s32.totalorder %s112, %s115
    %p121 = scmp.eq.s32.totalorder %s24, 0
    %p122 = por %p120, %p121
    %p123 = scmp.ne.s32.totalorder %s112, %s115
    %p124 = scmp.eq.s32.totalorder %s29, 1
    %p125 = por %p123, %p124
    %p126 = scmp.ne.s32.totalorder %s115, %s116
    %p127 = scmp.eq.s32.totalorder %s29, 0
    %p128 = por %p126, %p127
    %p129 = scmp.ne.s32.totalorder %s115, %s116
    %p130 = scmp.eq.s32.totalorder %s30, 1
    %p131 = por %p129, %p130
    %p133 = scmp.ne.s32.totalorder %s116, %s132
    %p134 = scmp.eq.s32.totalorder %s30, 0
    %p135 = por %p133, %p134
    %s137 = sadd.s32 %s136, 1
    %p140 = scmp.eq.s32.totalorder %s24, 1
    %p141 = scmp.ne.s32.totalorder %s136, %s138
    %p142 = scmp.eq.s32.totalorder %s24, 0
    %p143 = por %p141, %p142
    %p144 = scmp.ne.s32.totalorder %s136, %s138
    %p145 = scmp.eq.s32.totalorder %s29, 1
    %p146 = por %p144, %p145
    %p147 = scmp.ne.s32.totalorder %s138, %s139
    %p148 = scmp.eq.s32.totalorder %s29, 0
    %p149 = por %p147, %p148
    %p150 = scmp.ne.s32.totalorder %s138, %s139
    %p151 = scmp.eq.s32.totalorder %s30, 1
    %p152 = por %p150, %p151
    %p154 = scmp.ne.s32.totalorder %s139, %s153
    %p155 = scmp.eq.s32.totalorder %s30, 0
    %p156 = por %p154, %p155
    %s158 = sadd.s32 %s157, 1
    %p161 = scmp.eq.s32.totalorder %s24, 1
    %p162 = scmp.ne.s32.totalorder %s157, %s159
    %p163 = scmp.eq.s32.totalorder %s24, 0
    %p164 = por %p162, %p163
    %p165 = scmp.ne.s32.totalorder %s157, %s159
    %p166 = scmp.eq.s32.totalorder %s29, 1
    %p167 = por %p165, %p166
    %p168 = scmp.ne.s32.totalorder %s159, %s160
    %p169 = scmp.eq.s32.totalorder %s29, 0
    %p170 = por %p168, %p169
    %p171 = scmp.ne.s32.totalorder %s159, %s160
    %p172 = scmp.eq.s32.totalorder %s30, 1
    %p173 = por %p171, %p172
    %p175 = scmp.ne.s32.totalorder %s160, %s174
    %p176 = scmp.eq.s32.totalorder %s30, 0
    %p177 = por %p175, %p176
    %s179 = sadd.s32 %s178, 1
    %p182 = scmp.eq.s32.totalorder %s24, 1
    %p183 = scmp.ne.s32.totalorder %s178, %s180
    %p184 = scmp.eq.s32.totalorder %s24, 0
    %p185 = por %p183, %p184
    %p186 = scmp.ne.s32.totalorder %s178, %s180
    %p187 = scmp.eq.s32.totalorder %s29, 1
    %p188 = por %p186, %p187
    %p189 = scmp.ne.s32.totalorder %s180, %s181
    %p190 = scmp.eq.s32.totalorder %s29, 0
    %p191 = por %p189, %p190
    %p192 = scmp.ne.s32.totalorder %s180, %s181
    %p193 = scmp.eq.s32.totalorder %s30, 1
    %p194 = por %p192, %p193
    %p196 = scmp.ne.s32.totalorder %s181, %s195
    %p197 = scmp.eq.s32.totalorder %s30, 0
    %p198 = por %p196, %p197
    %s200 = sadd.s32 %s199, 1
    %p203 = scmp.eq.s32.totalorder %s24, 1
    %p204 = scmp.ne.s32.totalorder %s199, %s201
    %p205 = scmp.eq.s32.totalorder %s24, 0
    %p206 = por %p204, %p205
    %p207 = scmp.ne.s32.totalorder %s199, %s201
    %p208 = scmp.eq.s32.totalorder %s29, 1
    %p209 = por %p207, %p208
    %p210 = scmp.ne.s32.totalorder %s201, %s202
    %p211 = scmp.eq.s32.totalorder %s29, 0
    %p212 = por %p210, %p211
    %p213 = scmp.ne.s32.totalorder %s201, %s202
    %p214 = scmp.eq.s32.totalorder %s30, 1
    %p215 = por %p213, %p214
    %p217 = scmp.ne.s32.totalorder %s202, %s216
    %p218 = scmp.eq.s32.totalorder %s30, 0
    %p219 = por %p217, %p218
    %s221 = sadd.s32 %s220, 1
    %p224 = scmp.eq.s32.totalorder %s24, 1
    %p225 = scmp.ne.s32.totalorder %s220, %s222
    %p226 = scmp.eq.s32.totalorder %s24, 0
    %p227 = por %p225, %p226
    %p228 = scmp.ne.s32.totalorder %s220, %s222
    %p229 = scmp.eq.s32.totalorder %s29, 1
    %p230 = por %p228, %p229
    %p231 = scmp.ne.s32.totalorder %s222, %s223
    %p232 = scmp.eq.s32.totalorder %s29, 0
    %p233 = por %p231, %p232
    %p234 = scmp.ne.s32.totalorder %s222, %s223
    %p235 = scmp.eq.s32.totalorder %s30, 1
    %p236 = por %p234, %p235
    %p238 = scmp.ne.s32.totalorder %s223, %s237
    %p239 = scmp.eq.s32.totalorder %s30, 0
    %p240 = por %p238, %p239
    %s242 = sadd.s32 %s241, 1
    %p245 = scmp.eq.s32.totalorder %s24, 1
    %p246 = scmp.ne.s32.totalorder %s241, %s243
    %p247 = scmp.eq.s32.totalorder %s24, 0
    %p248 = por %p246, %p247
    %p249 = scmp.ne.s32.totalorder %s241, %s243
    %p250 = scmp.eq.s32.totalorder %s29, 1
    %p251 = por %p249, %p250
    %p252 = scmp.ne.s32.totalorder %s243, %s244
    %p253 = scmp.eq.s32.totalorder %s29, 0
    %p254 = por %p252, %p253
    %p255 = scmp.ne.s32.totalorder %s243, %s244
    %p256 = scmp.eq.s32.totalorder %s30, 1
    %p257 = por %p255, %p256
    %p259 = scmp.ne.s32.totalorder %s244, %s258
    %p260 = scmp.eq.s32.totalorder %s30, 0
    %p261 = por %p259, %p260
    %s263 = sadd.s32 %s262, 1
    %p266 = scmp.eq.s32.totalorder %s24, 1
    %p267 = scmp.ne.s32.totalorder %s262, %s264
    %p268 = scmp.eq.s32.totalorder %s24, 0
    %p269 = por %p267, %p268
    %p270 = scmp.ne.s32.totalorder %s262, %s264
    %p271 = scmp.eq.s32.totalorder %s29, 1
    %p272 = por %p270, %p271
    %p273 = scmp.ne.s32.totalorder %s264, %s265
    %p274 = scmp.eq.s32.totalorder %s29, 0
    %p275 = por %p273, %p274
    %p276 = scmp.ne.s32.totalorder %s264, %s265
    %p277 = scmp.eq.s32.totalorder %s30, 1
    %p278 = por %p276, %p277
    %p280 = scmp.ne.s32.totalorder %s265, %s279
    %p281 = scmp.eq.s32.totalorder %s30, 0
    %p282 = por %p280, %p281
    %s284 = sadd.s32 %s283, 1
    %p287 = scmp.eq.s32.totalorder %s24, 1
    %p288 = scmp.ne.s32.totalorder %s283, %s285
    %p289 = scmp.eq.s32.totalorder %s24, 0
    %p290 = por %p288, %p289
    %p291 = scmp.ne.s32.totalorder %s283, %s285
    %p292 = scmp.eq.s32.totalorder %s29, 1
    %p293 = por %p291, %p292
    %p294 = scmp.ne.s32.totalorder %s285, %s286
    %p295 = scmp.eq.s32.totalorder %s29, 0
    %p296 = por %p294, %p295
    %p297 = scmp.ne.s32.totalorder %s285, %s286
    %p298 = scmp.eq.s32.totalorder %s30, 1
    %p299 = por %p297, %p298
    %p301 = scmp.ne.s32.totalorder %s286, %s300
    %p302 = scmp.eq.s32.totalorder %s30, 0
    %p303 = por %p301, %p302
    %s305 = sadd.s32 %s304, 1
    %p308 = scmp.eq.s32.totalorder %s24, 1
    %p309 = scmp.ne.s32.totalorder %s304, %s306
    %p310 = scmp.eq.s32.totalorder %s24, 0
    %p311 = por %p309, %p310
    %p312 = scmp.ne.s32.totalorder %s304, %s306
    %p313 = scmp.eq.s32.totalorder %s29, 1
    %p314 = por %p312, %p313
    %p315 = scmp.ne.s32.totalorder %s306, %s307
    %p316 = scmp.eq.s32.totalorder %s29, 0
    %p317 = por %p315, %p316
    %p318 = scmp.ne.s32.totalorder %s306, %s307
    %p319 = scmp.eq.s32.totalorder %s30, 1
    %p320 = por %p318, %p319
    %p322 = scmp.ne.s32.totalorder %s307, %s321
    %p323 = scmp.eq.s32.totalorder %s30, 0
    %p324 = por %p322, %p323
    %s326 = sadd.s32 %s325, 1
    %p329 = scmp.eq.s32.totalorder %s24, 1
    %p330 = scmp.ne.s32.totalorder %s325, %s327
    %p331 = scmp.eq.s32.totalorder %s24, 0
    %p332 = por %p330, %p331
    %p333 = scmp.ne.s32.totalorder %s325, %s327
    %p334 = scmp.eq.s32.totalorder %s29, 1
    %p335 = por %p333, %p334
    %p336 = scmp.ne.s32.totalorder %s327, %s328
    %p337 = scmp.eq.s32.totalorder %s29, 0
    %p338 = por %p336, %p337
    %p339 = scmp.ne.s32.totalorder %s327, %s328
    %p340 = scmp.eq.s32.totalorder %s30, 1
    %p341 = por %p339, %p340
    %p343 = scmp.ne.s32.totalorder %s328, %s342
    %p344 = scmp.eq.s32.totalorder %s30, 0
    %p345 = por %p343, %p344
    %s347 = sadd.s32 %s346, 1
    %p350 = scmp.eq.s32.totalorder %s24, 1
    %p351 = scmp.ne.s32.totalorder %s346, %s348
    %p352 = scmp.eq.s32.totalorder %s24, 0
    %p353 = por %p351, %p352
    %p354 = scmp.ne.s32.totalorder %s346, %s348
    %p355 = scmp.eq.s32.totalorder %s29, 1
    %p356 = por %p354, %p355
    %p357 = scmp.ne.s32.totalorder %s348, %s349
    %p358 = scmp.eq.s32.totalorder %s29, 0
    %p359 = por %p357, %p358
    %p360 = scmp.ne.s32.totalorder %s348, %s349
    %p361 = scmp.eq.s32.totalorder %s30, 1
    %p362 = por %p360, %p361
    %p364 = scmp.ne.s32.totalorder %s349, %s363
    %p365 = scmp.eq.s32.totalorder %s30, 0
    %p366 = por %p364, %p365
    %s368 = sadd.s32 %s367, 1
    %p371 = scmp.eq.s32.totalorder %s24, 1
    %p372 = scmp.ne.s32.totalorder %s367, %s369
    %p373 = scmp.eq.s32.totalorder %s24, 0
    %p374 = por %p372, %p373
    %p375 = scmp.ne.s32.totalorder %s367, %s369
    %p376 = scmp.eq.s32.totalorder %s29, 1
    %p377 = por %p375, %p376
    %p378 = scmp.ne.s32.totalorder %s369, %s370
    %p379 = scmp.eq.s32.totalorder %s29, 0
    %p380 = por %p378, %p379
    %p381 = scmp.ne.s32.totalorder %s369, %s370
    %p382 = scmp.eq.s32.totalorder %s30, 1
    %p383 = por %p381, %p382
    %p385 = scmp.ne.s32.totalorder %s370, %s384
    %p386 = scmp.eq.s32.totalorder %s30, 0
    %p387 = por %p385, %p386
    %s388 = ssub.s32 %s24, %s31
    %p389 = scmp.eq.s32.totalorder %s388, 0
    %s391 = sadd.s32 %s390, 1
    %s392 = scalar_select %p389, %s390, %s391
    %p395 = pneg %p389
    %p396 = scmp.eq.s32.totalorder %s24, 1
    %p397 = por %p395, %p396
    %p398 = scmp.ne.s32.totalorder %s390, %s393
    %p399 = scmp.eq.s32.totalorder %s24, 0
    %p400 = por %p398, %p399
    %p401 = scmp.ne.s32.totalorder %s390, %s393
    %p402 = scmp.eq.s32.totalorder %s29, 1
    %p403 = por %p401, %p402
    %p404 = scmp.ne.s32.totalorder %s393, %s394
    %p405 = scmp.eq.s32.totalorder %s29, 0
    %p406 = por %p404, %p405
    %p407 = scmp.ne.s32.totalorder %s393, %s394
    %p408 = scmp.eq.s32.totalorder %s30, 1
    %p409 = por %p407, %p408
    %p411 = scmp.ne.s32.totalorder %s394, %s410
    %p412 = scmp.eq.s32.totalorder %s30, 0
    %p413 = por %p411, %p412
    %p414 = scmp.le.s32.totalorder 1, %s24
    %p415 = scmp.lt.s32.totalorder %s24, 3
    %p416 = pnand %p414, %p415
    %p417 = pneg %p416
    // Predicated region
    $region9: #{_lambda_.8} parent=5 // pred_check
      _
    $region10: #{_lambda_.8} parent=5 // pred_check_branch
      %419 = sbr.rel (%p416) target = $region12
    $region11: #{_lambda_.8} parent=5 // pred_region
      %s420 = ssub.s32 %s24, 1
      // Predicated region
      $region13: #{_lambda_.8} parent=11 // pred_check
        %p421 = pneg %p149
      $region14: #{_lambda_.8} parent=11 // pred_check_branch
        %423 = sbr.rel (%p421) target = $region16
      $region15: #{_lambda_.8} parent=11 // pred_region
        _
      $region16: #{_lambda_.8} parent=11 // pred_fallthru
        _
      // Predicated region
      $region17: #{_lambda_.8} parent=11 // pred_check
        %p424 = pneg %p170
      $region18: #{_lambda_.8} parent=11 // pred_check_branch
        %426 = sbr.rel (%p424) target = $region20
      $region19: #{_lambda_.8} parent=11 // pred_region
        _
      $region20: #{_lambda_.8} parent=11 // pred_fallthru
        _
      // Predicated region
      $region21: #{_lambda_.8} parent=11 // pred_check
        %p427 = pneg %p191
      $region22: #{_lambda_.8} parent=11 // pred_check_branch
        %429 = sbr.rel (%p427) target = $region24
      $region23: #{_lambda_.8} parent=11 // pred_region
        _
      $region24: #{_lambda_.8} parent=11 // pred_fallthru
        _
      // Predicated region
      $region25: #{_lambda_.8} parent=11 // pred_check
        %p430 = pneg %p212
      $region26: #{_lambda_.8} parent=11 // pred_check_branch
        %432 = sbr.rel (%p430) target = $region28
      $region27: #{_lambda_.8} parent=11 // pred_region
        _
      $region28: #{_lambda_.8} parent=11 // pred_fallthru
        _
      // Predicated region
      $region29: #{_lambda_.8} parent=11 // pred_check
        %p433 = pneg %p233
      $region30: #{_lambda_.8} parent=11 // pred_check_branch
        %435 = sbr.rel (%p433) target = $region32
      $region31: #{_lambda_.8} parent=11 // pred_region
        _
      $region32: #{_lambda_.8} parent=11 // pred_fallthru
        _
      // Predicated region
      $region33: #{_lambda_.8} parent=11 // pred_check
        %p436 = pneg %p254
      $region34: #{_lambda_.8} parent=11 // pred_check_branch
        %438 = sbr.rel (%p436) target = $region36
      $region35: #{_lambda_.8} parent=11 // pred_region
        _
      $region36: #{_lambda_.8} parent=11 // pred_fallthru
        _
      // Predicated region
      $region37: #{_lambda_.8} parent=11 // pred_check
        %p439 = pneg %p275
      $region38: #{_lambda_.8} parent=11 // pred_check_branch
        %441 = sbr.rel (%p439) target = $region40
      $region39: #{_lambda_.8} parent=11 // pred_region
        _
      $region40: #{_lambda_.8} parent=11 // pred_fallthru
        _
      // Predicated region
      $region41: #{_lambda_.8} parent=11 // pred_check
        %p442 = pneg %p296
      $region42: #{_lambda_.8} parent=11 // pred_check_branch
        %444 = sbr.rel (%p442) target = $region44
      $region43: #{_lambda_.8} parent=11 // pred_region
        _
      $region44: #{_lambda_.8} parent=11 // pred_fallthru
        _
      // Predicated region
      $region45: #{_lambda_.8} parent=11 // pred_check
        %p445 = pneg %p317
      $region46: #{_lambda_.8} parent=11 // pred_check_branch
        %447 = sbr.rel (%p445) target = $region48
      $region47: #{_lambda_.8} parent=11 // pred_region
        _
      $region48: #{_lambda_.8} parent=11 // pred_fallthru
        _
      // Predicated region
      $region49: #{_lambda_.8} parent=11 // pred_check
        %p448 = pneg %p338
      $region50: #{_lambda_.8} parent=11 // pred_check_branch
        %450 = sbr.rel (%p448) target = $region52
      $region51: #{_lambda_.8} parent=11 // pred_region
        _
      $region52: #{_lambda_.8} parent=11 // pred_fallthru
        _
      // Predicated region
      $region53: #{_lambda_.8} parent=11 // pred_check
        %p451 = pneg %p359
      $region54: #{_lambda_.8} parent=11 // pred_check_branch
        %453 = sbr.rel (%p451) target = $region56
      $region55: #{_lambda_.8} parent=11 // pred_region
        _
      $region56: #{_lambda_.8} parent=11 // pred_fallthru
        _
      // Predicated region
      $region57: #{_lambda_.8} parent=11 // pred_check
        %p454 = pneg %p380
      $region58: #{_lambda_.8} parent=11 // pred_check_branch
        %456 = sbr.rel (%p454) target = $region60
      $region59: #{_lambda_.8} parent=11 // pred_region
        _
      $region60: #{_lambda_.8} parent=11 // pred_fallthru
        _
    $region12: #{_lambda_.8} parent=5 // pred_fallthru
      _
    %p457 = scmp.lt.s32.totalorder %s24, 2
    // Predicated region
    $region61: #{_lambda_.8} parent=5 // pred_check
      %p458 = pneg %p457
    $region62: #{_lambda_.8} parent=5 // pred_check_branch
      %460 = sbr.rel (%p458) target = $region64
    $region63: #{_lambda_.8} parent=5 // pred_region
      // Predicated region
      $region65: #{_lambda_.8} parent=63 // pred_check
        %p461 = pneg %p44
      $region66: #{_lambda_.8} parent=63 // pred_check_branch
        %463 = sbr.rel (%p461) target = $region68
      $region67: #{_lambda_.8} parent=63 // pred_region
        %p464 = scmp.lt.s32.totalorder %s24, 1
        %s465 = scalar_select %p464, %s24, 1
        %s466 = smul.addr %s465, 8
        %s467 = scalar_lea.vmem %s0, %s466
      $region68: #{_lambda_.8} parent=63 // pred_fallthru
        _
      // Predicated region
      $region69: #{_lambda_.8} parent=63 // pred_check
        %p468 = pneg %p70
      $region70: #{_lambda_.8} parent=63 // pred_check_branch
        %470 = sbr.rel (%p468) target = $region72
      $region71: #{_lambda_.8} parent=63 // pred_region
        %p471 = scmp.lt.s32.totalorder %s24, 1
        %s472 = scalar_select %p471, %s24, 1
        %s473 = smul.addr %s472, 8
        %s474 = scalar_lea.vmem %s1, %s473
      $region72: #{_lambda_.8} parent=63 // pred_fallthru
        _
      // Predicated region
      $region73: #{_lambda_.8} parent=63 // pred_check
        %p475 = pneg %p96
      $region74: #{_lambda_.8} parent=63 // pred_check_branch
        %477 = sbr.rel (%p475) target = $region76
      $region75: #{_lambda_.8} parent=63 // pred_region
        %p478 = scmp.lt.s32.totalorder %s24, 1
        %s479 = scalar_select %p478, %s24, 1
        %s480 = scalar_lea.vmem %s2, %s479
      $region76: #{_lambda_.8} parent=63 // pred_fallthru
        _
      // Predicated region
      $region77: #{_lambda_.8} parent=63 // pred_check
        %p481 = pneg %p122
      $region78: #{_lambda_.8} parent=63 // pred_check_branch
        %483 = sbr.rel (%p481) target = $region80
      $region79: #{_lambda_.8} parent=63 // pred_region
        %p484 = scmp.lt.s32.totalorder %s24, 1
        %s485 = scalar_select %p484, %s24, 1
        %s486 = scalar_lea.vmem %s3, %s485
      $region80: #{_lambda_.8} parent=63 // pred_fallthru
        _
    $region64: #{_lambda_.8} parent=5 // pred_fallthru
      _
    %p487 = scmp.le.s32.totalorder 1, %s24
    %p488 = scmp.lt.s32.totalorder %s24, 3
    %p489 = pnand %p487, %p488
    %p490 = pneg %p489
    // Predicated region
    $region81: #{_lambda_.8} parent=5 // pred_check
      _
    $region82: #{_lambda_.8} parent=5 // pred_check_branch
      %492 = sbr.rel (%p489) target = $region84
    $region83: #{_lambda_.8} parent=5 // pred_region
      %s493 = ssub.s32 %s24, 1
      %p494 = scmp.lt.s32.totalorder %s29, 1
      %s495 = scalar_select %p494, %s29, 1
      %s496 = smul.addr %s495, 8
      %s497 = scalar_lea.vmem %s0, %s496
      %p498 = pneg %p50
      %p499 = pneg %p47
      %p500 = scmp.lt.s32.totalorder %s29, 1
      %s501 = scalar_select %p500, %s29, 1
      %s502 = smul.addr %s501, 8
      %s503 = scalar_lea.vmem %s1, %s502
      %p504 = pneg %p76
      %p505 = pneg %p73
      %p506 = scmp.lt.s32.totalorder %s29, 1
      %s507 = scalar_select %p506, %s29, 1
      %s508 = scalar_lea.vmem %s2, %s507
      %p509 = pneg %p102
      %p510 = pneg %p99
      %p511 = scmp.lt.s32.totalorder %s29, 1
      %s512 = scalar_select %p511, %s29, 1
      %s513 = scalar_lea.vmem %s3, %s512
      %p514 = pneg %p128
      %p515 = pneg %p125
      %p516 = pneg %p149
      %p517 = pneg %p146
      %p518 = pneg %p170
      %p519 = pneg %p167
      %p520 = pneg %p191
      %p521 = pneg %p188
      %p522 = pneg %p212
      %p523 = pneg %p209
      %p524 = pneg %p233
      %p525 = pneg %p230
      %p526 = pneg %p254
      %p527 = pneg %p251
      %p528 = pneg %p275
      %p529 = pneg %p272
      %p530 = pneg %p296
      %p531 = pneg %p293
      %p532 = pneg %p317
      %p533 = pneg %p314
      %p534 = pneg %p338
      %p535 = pneg %p335
      %p536 = pneg %p359
      %p537 = pneg %p356
      %p538 = pneg %p380
      %p539 = pneg %p377
      %p540 = pneg %p406
      %p541 = pneg %p403
      %p542 = scmp.lt.s32.totalorder %s29, 1
      %s543 = scalar_select %p542, %s29, 1
      %s544 = scalar_lea.vmem %s16, %s543
      %p545 = scmp.lt.s32.totalorder %s29, 1
      %s546 = scalar_select %p545, %s29, 1
      %s547 = smul.addr %s546, 8
      %s548 = scalar_lea.vmem %s0, %s547
      %p549 = scmp.lt.s32.totalorder %s29, 1
      %s550 = scalar_select %p549, %s29, 1
      %s551 = smul.addr %s550, 8
      %s552 = scalar_lea.vmem %s1, %s551
      %p553 = scmp.lt.s32.totalorder %s29, 1
      %s554 = scalar_select %p553, %s29, 1
      %s555 = scalar_lea.vmem %s2, %s554
      %p556 = scmp.lt.s32.totalorder %s29, 1
      %s557 = scalar_select %p556, %s29, 1
      %s558 = scalar_lea.vmem %s3, %s557
      %p559 = scmp.lt.s32.totalorder %s29, 1
      %s560 = scalar_select %p559, %s29, 1
      %s561 = scalar_lea.vmem %s16, %s560
      %v562 = vld [vmem:[%s548] sm:$0xff]
      %v563 = vld [vmem:[%s552] sm:$0xff]
      %v564 = vld [vmem:[%s555] sm:$0x1]
      %v565 = vld [vmem:[%s4] sm:$0xff]
      %v566 = vld [vmem:[%s4 + $0x8] sm:$0xff]
      %v567 = vld [vmem:[%s4 + $0x10] sm:$0xff]
      %v568 = vld [vmem:[%s4 + $0x18] sm:$0xff]
      %v569 = vld [vmem:[%s5] sm:$0x1]
      %v571 = vlaneseq
      %v572 = vshrl.u32 %v571, 7
      %v573 = vsub.s32 0, %v572
      %v574 = vrot.slane %v569, %v573
      %vm576 = vcmask 261120
      %v578 = vsel %vm576, %v562, 0
      %580 = vmatprep.subr.mxu0 0.0
      %581 = vmatpush1.msra.mxu0 0.0
      %582 = vmatprep.subr.mxu0 0.0
      %583 = vmatpush1.msra.mxu0 0.0
      %584 = vmatprep.subr.mxu0 0.0
      %585 = vmatpush1.msra.mxu0 0.0
      %586 = vmatprep.subr.mxu0 0.0
      %587 = vmatpush1.msra.mxu0 0.0
      %588 = vmatprep.subr.mxu0 0.0
      %589 = vmatpush1.msra.mxu0 0.0
      %590 = vmatprep.subr.mxu0 0.0
      %591 = vmatpush1.msra.mxu0 0.0
      %592 = vmatprep.subr.mxu0 0.0
      %593 = vmatpush1.msra.mxu0 0.0
      %594 = vmatprep.subr.mxu0 0.0
      %595 = vmatpush1.msra.mxu0 0.0
      %596 = vmatprep.subr.mxu0 0.0
      %597 = vmatpush1.msra.mxu0 0.0
      %598 = vmatprep.subr.mxu0 0.0
      %599 = vmatpush1.msra.mxu0 0.0
      %600 = vmatprep.subr.mxu0 0.0
      %601 = vmatpush1.msra.mxu0 0.0
      %602 = vmatprep.subr.mxu0 0.0
      %603 = vmatpush1.msra.mxu0 0.0
      %604 = vmatprep.subr.mxu0 0.0
      %605 = vmatpush1.msra.mxu0 %v568
      %606 = vmatprep.subr.mxu0 0.0
      %607 = vmatpush1.msra.mxu0 %v567
      %608 = vmatprep.subr.mxu0 0.0
      %609 = vmatpush1.msra.mxu0 %v566
      %610 = vmatprep.subr.mxu0 0.0
      %611 = vmatpush1.msra.mxu0 %v565
      %612 = vmatprep.subr.mxu0 0.0
      %613 = vmatpush2.msra.mxu0 0.0
      %614 = vmatprep.subr.mxu0 0.0
      %615 = vmatpush2.msra.mxu0 0.0
      %616 = vmatprep.subr.mxu0 0.0
      %617 = vmatpush2.msra.mxu0 0.0
      %618 = vmatprep.subr.mxu0 0.0
      %619 = vmatpush2.msra.mxu0 0.0
      %620 = vmatprep.subr.mxu0 0.0
      %621 = vmatpush2.msra.mxu0 0.0
      %622 = vmatprep.subr.mxu0 0.0
      %623 = vmatpush2.msra.mxu0 0.0
      %624 = vmatprep.subr.mxu0 0.0
      %625 = vmatpush2.msra.mxu0 0.0
      %626 = vmatprep.subr.mxu0 0.0
      %627 = vmatpush2.msra.mxu0 0.0
      %628 = vmatprep.subr.mxu0 0.0
      %629 = vmatpush2.msra.mxu0 0.0
      %630 = vmatprep.subr.mxu0 0.0
      %631 = vmatpush2.msra.mxu0 0.0
      %632 = vmatprep.subr.mxu0 0.0
      %633 = vmatpush2.msra.mxu0 0.0
      %634 = vmatprep.subr.mxu0 0.0
      %635 = vmatpush2.msra.mxu0 0.0
      %636 = vmatprep.subr.mxu0 0.0
      %637 = vmatpush2.msra.mxu0 0.0
      %638 = vmatprep.subr.mxu0 0.0
      %639 = vmatpush2.msra.mxu0 0.0
      %640 = vmatprep.subr.mxu0 0.0
      %641 = vmatpush2.msra.mxu0 0.0
      %642 = vmatprep.subr.mxu0 0.0
      %643 = vmatpush2.msra.mxu0 0.0
      %644 = vmatprep.mubr.f32.mxu0 0.0
      %645 = vmatmul.mubr.f32.gmra.mxu0 %v578
      %v646 = vpop.f32.mrf.mxu0
      %v647 = vadd.f32 %v574, %v646
      %v648 = vpop.f32.mrf.mxu0
      %649 = vdwg.mxu0
      %s650 = scalar_lea.vmem %s4, 32
      %v651 = vld [vmem:[%s650] sm:$0xff]
      %v652 = vld [vmem:[%s650 + $0x8] sm:$0xff]
      %v653 = vld [vmem:[%s650 + $0x10] sm:$0xff]
      %v654 = vld [vmem:[%s650 + $0x18] sm:$0xff]
      %s655 = scalar_lea.vmem %s5, 1
      %v656 = vld [vmem:[%s655] sm:$0x1]
      %v658 = vlaneseq
      %v659 = vshrl.u32 %v658, 7
      %v660 = vsub.s32 0, %v659
      %v661 = vrot.slane %v656, %v660
      %v664 = vsel %vm576, %v563, 0
      %666 = vmatprep.subr.mxu0 0.0
      %667 = vmatpush1.msra.mxu0 0.0
      %668 = vmatprep.subr.mxu0 0.0
      %669 = vmatpush1.msra.mxu0 0.0
      %670 = vmatprep.subr.mxu0 0.0
      %671 = vmatpush1.msra.mxu0 0.0
      %672 = vmatprep.subr.mxu0 0.0
      %673 = vmatpush1.msra.mxu0 0.0
      %674 = vmatprep.subr.mxu0 0.0
      %675 = vmatpush1.msra.mxu0 0.0
      %676 = vmatprep.subr.mxu0 0.0
      %677 = vmatpush1.msra.mxu0 0.0
      %678 = vmatprep.subr.mxu0 0.0
      %679 = vmatpush1.msra.mxu0 0.0
      %680 = vmatprep.subr.mxu0 0.0
      %681 = vmatpush1.msra.mxu0 0.0
      %682 = vmatprep.subr.mxu0 0.0
      %683 = vmatpush1.msra.mxu0 0.0
      %684 = vmatprep.subr.mxu0 0.0
      %685 = vmatpush1.msra.mxu0 0.0
      %686 = vmatprep.subr.mxu0 0.0
      %687 = vmatpush1.msra.mxu0 0.0
      %688 = vmatprep.subr.mxu0 0.0
      %689 = vmatpush1.msra.mxu0 0.0
      %690 = vmatprep.subr.mxu0 0.0
      %691 = vmatpush1.msra.mxu0 %v654
      %692 = vmatprep.subr.mxu0 0.0
      %693 = vmatpush1.msra.mxu0 %v653
      %694 = vmatprep.subr.mxu0 0.0
      %695 = vmatpush1.msra.mxu0 %v652
      %696 = vmatprep.subr.mxu0 0.0
      %697 = vmatpush1.msra.mxu0 %v651
      %698 = vmatprep.subr.mxu0 0.0
      %699 = vmatpush2.msra.mxu0 0.0
      %700 = vmatprep.subr.mxu0 0.0
      %701 = vmatpush2.msra.mxu0 0.0
      %702 = vmatprep.subr.mxu0 0.0
      %703 = vmatpush2.msra.mxu0 0.0
      %704 = vmatprep.subr.mxu0 0.0
      %705 = vmatpush2.msra.mxu0 0.0
      %706 = vmatprep.subr.mxu0 0.0
      %707 = vmatpush2.msra.mxu0 0.0
      %708 = vmatprep.subr.mxu0 0.0
      %709 = vmatpush2.msra.mxu0 0.0
      %710 = vmatprep.subr.mxu0 0.0
      %711 = vmatpush2.msra.mxu0 0.0
      %712 = vmatprep.subr.mxu0 0.0
      %713 = vmatpush2.msra.mxu0 0.0
      %714 = vmatprep.subr.mxu0 0.0
      %715 = vmatpush2.msra.mxu0 0.0
      %716 = vmatprep.subr.mxu0 0.0
      %717 = vmatpush2.msra.mxu0 0.0
      %718 = vmatprep.subr.mxu0 0.0
      %719 = vmatpush2.msra.mxu0 0.0
      %720 = vmatprep.subr.mxu0 0.0
      %721 = vmatpush2.msra.mxu0 0.0
      %722 = vmatprep.subr.mxu0 0.0
      %723 = vmatpush2.msra.mxu0 0.0
      %724 = vmatprep.subr.mxu0 0.0
      %725 = vmatpush2.msra.mxu0 0.0
      %726 = vmatprep.subr.mxu0 0.0
      %727 = vmatpush2.msra.mxu0 0.0
      %728 = vmatprep.subr.mxu0 0.0
      %729 = vmatpush2.msra.mxu0 0.0
      %730 = vmatprep.mubr.f32.mxu0 0.0
      %731 = vmatmul.mubr.f32.gmra.mxu0 %v664
      %v732 = vpop.f32.mrf.mxu0
      %v733 = vadd.f32 %v661, %v732
      %v734 = vpop.f32.mrf.mxu0
      %735 = vdwg.mxu0
      %s736 = scalar_lea.vmem %s4, 64
      %v737 = vld [vmem:[%s736] sm:$0xff]
      %v738 = vld [vmem:[%s736 + $0x8] sm:$0xff]
      %v739 = vld [vmem:[%s736 + $0x10] sm:$0xff]
      %v740 = vld [vmem:[%s736 + $0x18] sm:$0xff]
      %s741 = scalar_lea.vmem %s5, 2
      %v742 = vld [vmem:[%s741] sm:$0x1]
      %v744 = vlaneseq
      %v745 = vshrl.u32 %v744, 7
      %v746 = vsub.s32 0, %v745
      %v747 = vrot.slane %v742, %v746
      %749 = vmatprep.subr.mxu0 0.0
      %750 = vmatpush1.msra.mxu0 0.0
      %751 = vmatprep.subr.mxu0 0.0
      %752 = vmatpush1.msra.mxu0 0.0
      %753 = vmatprep.subr.mxu0 0.0
      %754 = vmatpush1.msra.mxu0 0.0
      %755 = vmatprep.subr.mxu0 0.0
      %756 = vmatpush1.msra.mxu0 0.0
      %757 = vmatprep.subr.mxu0 0.0
      %758 = vmatpush1.msra.mxu0 0.0
      %759 = vmatprep.subr.mxu0 0.0
      %760 = vmatpush1.msra.mxu0 0.0
      %761 = vmatprep.subr.mxu0 0.0
      %762 = vmatpush1.msra.mxu0 0.0
      %763 = vmatprep.subr.mxu0 0.0
      %764 = vmatpush1.msra.mxu0 0.0
      %765 = vmatprep.subr.mxu0 0.0
      %766 = vmatpush1.msra.mxu0 0.0
      %767 = vmatprep.subr.mxu0 0.0
      %768 = vmatpush1.msra.mxu0 0.0
      %769 = vmatprep.subr.mxu0 0.0
      %770 = vmatpush1.msra.mxu0 0.0
      %771 = vmatprep.subr.mxu0 0.0
      %772 = vmatpush1.msra.mxu0 0.0
      %773 = vmatprep.subr.mxu0 0.0
      %774 = vmatpush1.msra.mxu0 %v740
      %775 = vmatprep.subr.mxu0 0.0
      %776 = vmatpush1.msra.mxu0 %v739
      %777 = vmatprep.subr.mxu0 0.0
      %778 = vmatpush1.msra.mxu0 %v738
      %779 = vmatprep.subr.mxu0 0.0
      %780 = vmatpush1.msra.mxu0 %v737
      %781 = vmatprep.subr.mxu0 0.0
      %782 = vmatpush2.msra.mxu0 0.0
      %783 = vmatprep.subr.mxu0 0.0
      %784 = vmatpush2.msra.mxu0 0.0
      %785 = vmatprep.subr.mxu0 0.0
      %786 = vmatpush2.msra.mxu0 0.0
      %787 = vmatprep.subr.mxu0 0.0
      %788 = vmatpush2.msra.mxu0 0.0
      %789 = vmatprep.subr.mxu0 0.0
      %790 = vmatpush2.msra.mxu0 0.0
      %791 = vmatprep.subr.mxu0 0.0
      %792 = vmatpush2.msra.mxu0 0.0
      %793 = vmatprep.subr.mxu0 0.0
      %794 = vmatpush2.msra.mxu0 0.0
      %795 = vmatprep.subr.mxu0 0.0
      %796 = vmatpush2.msra.mxu0 0.0
      %797 = vmatprep.subr.mxu0 0.0
      %798 = vmatpush2.msra.mxu0 0.0
      %799 = vmatprep.subr.mxu0 0.0
      %800 = vmatpush2.msra.mxu0 0.0
      %801 = vmatprep.subr.mxu0 0.0
      %802 = vmatpush2.msra.mxu0 0.0
      %803 = vmatprep.subr.mxu0 0.0
      %804 = vmatpush2.msra.mxu0 0.0
      %805 = vmatprep.subr.mxu0 0.0
      %806 = vmatpush2.msra.mxu0 0.0
      %807 = vmatprep.subr.mxu0 0.0
      %808 = vmatpush2.msra.mxu0 0.0
      %809 = vmatprep.subr.mxu0 0.0
      %810 = vmatpush2.msra.mxu0 0.0
      %811 = vmatprep.subr.mxu0 0.0
      %812 = vmatpush2.msra.mxu0 0.0
      %813 = vmatprep.mubr.f32.mxu0 0.0
      %814 = vmatmul.mubr.f32.gmra.mxu0 %v664
      %v815 = vpop.f32.mrf.mxu0
      %v816 = vadd.f32 %v747, %v815
      %v817 = vpop.f32.mrf.mxu0
      %818 = vdwg.mxu0
      %v820 = vsel %vm576, %v647, 0
      %v823 = vsel %vm576, %v733, 0
      %825 = vmatprep.subr.mxu0 0.0
      %826 = vmatpush1.xpose.msra.mxu0 0.0
      %827 = vmatprep.subr.mxu0 0.0
      %828 = vmatpush1.xpose.msra.mxu0 0.0
      %829 = vmatprep.subr.mxu0 0.0
      %830 = vmatpush1.xpose.msra.mxu0 0.0
      %831 = vmatprep.subr.mxu0 0.0
      %832 = vmatpush1.xpose.msra.mxu0 0.0
      %833 = vmatprep.subr.mxu0 0.0
      %834 = vmatpush1.xpose.msra.mxu0 0.0
      %835 = vmatprep.subr.mxu0 0.0
      %836 = vmatpush1.xpose.msra.mxu0 0.0
      %837 = vmatprep.subr.mxu0 0.0
      %838 = vmatpush1.xpose.msra.mxu0 0.0
      %839 = vmatprep.subr.mxu0 0.0
      %840 = vmatpush1.xpose.msra.mxu0 0.0
      %841 = vmatprep.subr.mxu0 0.0
      %842 = vmatpush1.xpose.msra.mxu0 0.0
      %843 = vmatprep.subr.mxu0 0.0
      %844 = vmatpush1.xpose.msra.mxu0 0.0
      %845 = vmatprep.subr.mxu0 0.0
      %846 = vmatpush1.xpose.msra.mxu0 0.0
      %847 = vmatprep.subr.mxu0 0.0
      %848 = vmatpush1.xpose.msra.mxu0 0.0
      %849 = vmatprep.subr.mxu0 0.0
      %850 = vmatpush1.xpose.msra.mxu0 0.0
      %851 = vmatprep.subr.mxu0 0.0
      %852 = vmatpush1.xpose.msra.mxu0 0.0
      %853 = vmatprep.subr.mxu0 0.0
      %854 = vmatpush1.xpose.msra.mxu0 0.0
      %855 = vmatprep.subr.mxu0 0.0
      %856 = vmatpush1.xpose.msra.mxu0 %v823
      %857 = vmatprep.subr.mxu0 0.0
      %858 = vmatpush2.xpose.msra.mxu0 0.0
      %859 = vmatprep.subr.mxu0 0.0
      %860 = vmatpush2.xpose.msra.mxu0 0.0
      %861 = vmatprep.subr.mxu0 0.0
      %862 = vmatpush2.xpose.msra.mxu0 0.0
      %863 = vmatprep.subr.mxu0 0.0
      %864 = vmatpush2.xpose.msra.mxu0 0.0
      %865 = vmatprep.subr.mxu0 0.0
      %866 = vmatpush2.xpose.msra.mxu0 0.0
      %867 = vmatprep.subr.mxu0 0.0
      %868 = vmatpush2.xpose.msra.mxu0 0.0
      %869 = vmatprep.subr.mxu0 0.0
      %870 = vmatpush2.xpose.msra.mxu0 0.0
      %871 = vmatprep.subr.mxu0 0.0
      %872 = vmatpush2.xpose.msra.mxu0 0.0
      %873 = vmatprep.subr.mxu0 0.0
      %874 = vmatpush2.xpose.msra.mxu0 0.0
      %875 = vmatprep.subr.mxu0 0.0
      %876 = vmatpush2.xpose.msra.mxu0 0.0
      %877 = vmatprep.subr.mxu0 0.0
      %878 = vmatpush2.xpose.msra.mxu0 0.0
      %879 = vmatprep.subr.mxu0 0.0
      %880 = vmatpush2.xpose.msra.mxu0 0.0
      %881 = vmatprep.subr.mxu0 0.0
      %882 = vmatpush2.xpose.msra.mxu0 0.0
      %883 = vmatprep.subr.mxu0 0.0
      %884 = vmatpush2.xpose.msra.mxu0 0.0
      %885 = vmatprep.subr.mxu0 0.0
      %886 = vmatpush2.xpose.msra.mxu0 0.0
      %887 = vmatprep.subr.mxu0 0.0
      %888 = vmatpush2.xpose.msra.mxu0 0.0
      %889 = vmatprep.mubr.f32.mxu0 0.0
      %890 = vmatmul.mubr.f32.gmra.mxu0 %v820
      %v891 = vpop.f32.mrf.mxu0
      %v892 = vadd.f32 0.0, %v891
      %v893 = vpop.f32.mrf.mxu0
      %894 = vdwg.mxu0
      %v895 = vmul.f32 %v892, 0.17677669
      %v896 = vmul.f32 %v564, -1e+09
      %v898 = vlaneseq
      %v899 = vshrl.u32 %v898, 7
      %v900 = vsub.s32 0, %v899
      %v901 = vrot.slane %v896, %v900
      %v903 = vadd.f32 %v895, %v901
      %vm904 = vcmask 64512
      %v905 = vsel %vm904, %v903, -inf
      %906 = vmax.xlane.f32.xlu0 %v905
      %v907 = vpop.xlane.xlu0 %906
      %v908 = vsub.f32 %v903, %v907
      %v909 = vmul.f32 %v908, 1.442695
      %v910 = vpow.pop %v909
      %v911 = vsel %vm904, %v910, 0.0
      %912 = vadd.xlane.f32.xlu0 %v911
      %v913 = vpop.xlane.xlu0 %912
      %v914 = vrcp.pop %v913
      %v915 = vmul.f32 %v910, %v914
      %v917 = vsel %vm904, %v915, 0
      %919 = vmatprep.subr.mxu0 0.0
      %920 = vmatpush1.msra.mxu0 0.0
      %921 = vmatprep.subr.mxu0 0.0
      %922 = vmatpush1.msra.mxu0 0.0
      %923 = vmatprep.subr.mxu0 0.0
      %924 = vmatpush1.msra.mxu0 0.0
      %925 = vmatprep.subr.mxu0 0.0
      %926 = vmatpush1.msra.mxu0 0.0
      %927 = vmatprep.subr.mxu0 0.0
      %928 = vmatpush1.msra.mxu0 0.0
      %929 = vmatprep.subr.mxu0 0.0
      %930 = vmatpush1.msra.mxu0 0.0
      %931 = vmatprep.subr.mxu0 0.0
      %932 = vmatpush1.msra.mxu0 0.0
      %933 = vmatprep.subr.mxu0 0.0
      %934 = vmatpush1.msra.mxu0 0.0
      %935 = vmatprep.subr.mxu0 0.0
      %936 = vmatpush1.msra.mxu0 0.0
      %937 = vmatprep.subr.mxu0 0.0
      %938 = vmatpush1.msra.mxu0 0.0
      %939 = vmatprep.subr.mxu0 0.0
      %940 = vmatpush1.msra.mxu0 0.0
      %941 = vmatprep.subr.mxu0 0.0
      %942 = vmatpush1.msra.mxu0 0.0
      %943 = vmatprep.subr.mxu0 0.0
      %944 = vmatpush1.msra.mxu0 0.0
      %945 = vmatprep.subr.mxu0 0.0
      %946 = vmatpush1.msra.mxu0 0.0
      %947 = vmatprep.subr.mxu0 0.0
      %948 = vmatpush1.msra.mxu0 0.0
      %949 = vmatprep.subr.mxu0 0.0
      %950 = vmatpush1.msra.mxu0 %v816
      %951 = vmatprep.subr.mxu0 0.0
      %952 = vmatpush2.msra.mxu0 0.0
      %953 = vmatprep.subr.mxu0 0.0
      %954 = vmatpush2.msra.mxu0 0.0
      %955 = vmatprep.subr.mxu0 0.0
      %956 = vmatpush2.msra.mxu0 0.0
      %957 = vmatprep.subr.mxu0 0.0
      %958 = vmatpush2.msra.mxu0 0.0
      %959 = vmatprep.subr.mxu0 0.0
      %960 = vmatpush2.msra.mxu0 0.0
      %961 = vmatprep.subr.mxu0 0.0
      %962 = vmatpush2.msra.mxu0 0.0
      %963 = vmatprep.subr.mxu0 0.0
      %964 = vmatpush2.msra.mxu0 0.0
      %965 = vmatprep.subr.mxu0 0.0
      %966 = vmatpush2.msra.mxu0 0.0
      %967 = vmatprep.subr.mxu0 0.0
      %968 = vmatpush2.msra.mxu0 0.0
      %969 = vmatprep.subr.mxu0 0.0
      %970 = vmatpush2.msra.mxu0 0.0
      %971 = vmatprep.subr.mxu0 0.0
      %972 = vmatpush2.msra.mxu0 0.0
      %973 = vmatprep.subr.mxu0 0.0
      %974 = vmatpush2.msra.mxu0 0.0
      %975 = vmatprep.subr.mxu0 0.0
      %976 = vmatpush2.msra.mxu0 0.0
      %977 = vmatprep.subr.mxu0 0.0
      %978 = vmatpush2.msra.mxu0 0.0
      %979 = vmatprep.subr.mxu0 0.0
      %980 = vmatpush2.msra.mxu0 0.0
      %981 = vmatprep.subr.mxu0 0.0
      %982 = vmatpush2.msra.mxu0 0.0
      %983 = vmatprep.mubr.f32.mxu0 0.0
      %984 = vmatmul.mubr.f32.gmra.mxu0 %v917
      %v985 = vpop.f32.mrf.mxu0
      %v986 = vadd.f32 0.0, %v985
      %v987 = vpop.f32.mrf.mxu0
      %988 = vdwg.mxu0
      %v989 = vld [vmem:[%s6] sm:$0xff]
      %v990 = vld [vmem:[%s6 + $0x8] sm:$0xff]
      %v991 = vld [vmem:[%s6 + $0x10] sm:$0xff]
      %v992 = vld [vmem:[%s6 + $0x18] sm:$0xff]
      %v993 = vld [vmem:[%s7] sm:$0x1]
      %v995 = vlaneseq
      %v996 = vshrl.u32 %v995, 7
      %v997 = vsub.s32 0, %v996
      %v998 = vrot.slane %v993, %v997
      %v1001 = vsel %vm576, %v986, 0
      %1003 = vmatprep.subr.mxu0 0.0
      %1004 = vmatpush1.msra.mxu0 0.0
      %1005 = vmatprep.subr.mxu0 0.0
      %1006 = vmatpush1.msra.mxu0 0.0
      %1007 = vmatprep.subr.mxu0 0.0
      %1008 = vmatpush1.msra.mxu0 0.0
      %1009 = vmatprep.subr.mxu0 0.0
      %1010 = vmatpush1.msra.mxu0 0.0
      %1011 = vmatprep.subr.mxu0 0.0
      %1012 = vmatpush1.msra.mxu0 0.0
      %1013 = vmatprep.subr.mxu0 0.0
      %1014 = vmatpush1.msra.mxu0 0.0
      %1015 = vmatprep.subr.mxu0 0.0
      %1016 = vmatpush1.msra.mxu0 0.0
      %1017 = vmatprep.subr.mxu0 0.0
      %1018 = vmatpush1.msra.mxu0 0.0
      %1019 = vmatprep.subr.mxu0 0.0
      %1020 = vmatpush1.msra.mxu0 0.0
      %1021 = vmatprep.subr.mxu0 0.0
      %1022 = vmatpush1.msra.mxu0 0.0
      %1023 = vmatprep.subr.mxu0 0.0
      %1024 = vmatpush1.msra.mxu0 0.0
      %1025 = vmatprep.subr.mxu0 0.0
      %1026 = vmatpush1.msra.mxu0 0.0
      %1027 = vmatprep.subr.mxu0 0.0
      %1028 = vmatpush1.msra.mxu0 %v992
      %1029 = vmatprep.subr.mxu0 0.0
      %1030 = vmatpush1.msra.mxu0 %v991
      %1031 = vmatprep.subr.mxu0 0.0
      %1032 = vmatpush1.msra.mxu0 %v990
      %1033 = vmatprep.subr.mxu0 0.0
      %1034 = vmatpush1.msra.mxu0 %v989
      %1035 = vmatprep.subr.mxu0 0.0
      %1036 = vmatpush2.msra.mxu0 0.0
      %1037 = vmatprep.subr.mxu0 0.0
      %1038 = vmatpush2.msra.mxu0 0.0
      %1039 = vmatprep.subr.mxu0 0.0
      %1040 = vmatpush2.msra.mxu0 0.0
      %1041 = vmatprep.subr.mxu0 0.0
      %1042 = vmatpush2.msra.mxu0 0.0
      %1043 = vmatprep.subr.mxu0 0.0
      %1044 = vmatpush2.msra.mxu0 0.0
      %1045 = vmatprep.subr.mxu0 0.0
      %1046 = vmatpush2.msra.mxu0 0.0
      %1047 = vmatprep.subr.mxu0 0.0
      %1048 = vmatpush2.msra.mxu0 0.0
      %1049 = vmatprep.subr.mxu0 0.0
      %1050 = vmatpush2.msra.mxu0 0.0
      %1051 = vmatprep.subr.mxu0 0.0
      %1052 = vmatpush2.msra.mxu0 0.0
      %1053 = vmatprep.subr.mxu0 0.0
      %1054 = vmatpush2.msra.mxu0 0.0
      %1055 = vmatprep.subr.mxu0 0.0
      %1056 = vmatpush2.msra.mxu0 0.0
      %1057 = vmatprep.subr.mxu0 0.0
      %1058 = vmatpush2.msra.mxu0 0.0
      %1059 = vmatprep.subr.mxu0 0.0
      %1060 = vmatpush2.msra.mxu0 0.0
      %1061 = vmatprep.subr.mxu0 0.0
      %1062 = vmatpush2.msra.mxu0 0.0
      %1063 = vmatprep.subr.mxu0 0.0
      %1064 = vmatpush2.msra.mxu0 0.0
      %1065 = vmatprep.subr.mxu0 0.0
      %1066 = vmatpush2.msra.mxu0 0.0
      %1067 = vmatprep.mubr.f32.mxu0 0.0
      %1068 = vmatmul.mubr.f32.gmra.mxu0 %v1001
      %v1069 = vpop.f32.mrf.mxu0
      %v1070 = vadd.f32 %v998, %v1069
      %v1071 = vpop.f32.mrf.mxu0
      %1072 = vdwg.mxu0
      %v1073 = vadd.f32 %v562, %v1070
      %v1074 = vsel %vm576, %v1073, 0.0
      %1075 = vadd.xlane.f32.xlu0 %v1074
      %v1076 = vpop.xlane.xlu0 %1075
      %v1077 = vrcp.pop 32.0
      %v1078 = vmul.f32 %v1076, %v1077
      %v1079 = vsub.f32 %v1073, %v1078
      %v1080 = vmul.f32 %v1079, %v1079
      %v1081 = vsel %vm576, %v1080, 0.0
      %1082 = vadd.xlane.f32.xlu0 %v1081
      %v1083 = vpop.xlane.xlu0 %1082
      %v1084 = vmul.f32 %v1083, %v1077
      %v1085 = vadd.f32 %v1084, 1e-06
      %v1086 = vrsqrt.pop %v1085
      %v1087 = vmul.f32 %v1079, %v1086
      %v1088 = vld [vmem:[%s8] sm:$0x1]
      %v1090 = vlaneseq
      %v1091 = vshrl.u32 %v1090, 7
      %v1092 = vsub.s32 0, %v1091
      %v1093 = vrot.slane %v1088, %v1092
      %v1095 = vmul.f32 %v1087, %v1093
      %v1096 = vld [vmem:[%s9] sm:$0x1]
      %v1098 = vlaneseq
      %v1099 = vshrl.u32 %v1098, 7
      %v1100 = vsub.s32 0, %v1099
      %v1101 = vrot.slane %v1096, %v1100
      %v1103 = vadd.f32 %v1095, %v1101
      %v1104 = vld [vmem:[%s558] sm:$0x1]
      %v1105 = vld [vmem:[%s10] sm:$0xff]
      %v1106 = vld [vmem:[%s10 + $0x8] sm:$0xff]
      %v1107 = vld [vmem:[%s10 + $0x10] sm:$0xff]
      %v1108 = vld [vmem:[%s10 + $0x18] sm:$0xff]
      %v1109 = vld [vmem:[%s11] sm:$0x1]
      %v1111 = vlaneseq
      %v1112 = vshrl.u32 %v1111, 7
      %v1113 = vsub.s32 0, %v1112
      %v1114 = vrot.slane %v1109, %v1113
      %v1117 = vsel %vm576, %v1103, 0
      %1119 = vmatprep.subr.mxu0 0.0
      %1120 = vmatpush1.msra.mxu0 0.0
      %1121 = vmatprep.subr.mxu0 0.0
      %1122 = vmatpush1.msra.mxu0 0.0
      %1123 = vmatprep.subr.mxu0 0.0
      %1124 = vmatpush1.msra.mxu0 0.0
      %1125 = vmatprep.subr.mxu0 0.0
      %1126 = vmatpush1.msra.mxu0 0.0
      %1127 = vmatprep.subr.mxu0 0.0
      %1128 = vmatpush1.msra.mxu0 0.0
      %1129 = vmatprep.subr.mxu0 0.0
      %1130 = vmatpush1.msra.mxu0 0.0
      %1131 = vmatprep.subr.mxu0 0.0
      %1132 = vmatpush1.msra.mxu0 0.0
      %1133 = vmatprep.subr.mxu0 0.0
      %1134 = vmatpush1.msra.mxu0 0.0
      %1135 = vmatprep.subr.mxu0 0.0
      %1136 = vmatpush1.msra.mxu0 0.0
      %1137 = vmatprep.subr.mxu0 0.0
      %1138 = vmatpush1.msra.mxu0 0.0
      %1139 = vmatprep.subr.mxu0 0.0
      %1140 = vmatpush1.msra.mxu0 0.0
      %1141 = vmatprep.subr.mxu0 0.0
      %1142 = vmatpush1.msra.mxu0 0.0
      %1143 = vmatprep.subr.mxu0 0.0
      %1144 = vmatpush1.msra.mxu0 %v1108
      %1145 = vmatprep.subr.mxu0 0.0
      %1146 = vmatpush1.msra.mxu0 %v1107
      %1147 = vmatprep.subr.mxu0 0.0
      %1148 = vmatpush1.msra.mxu0 %v1106
      %1149 = vmatprep.subr.mxu0 0.0
      %1150 = vmatpush1.msra.mxu0 %v1105
      %1151 = vmatprep.subr.mxu0 0.0
      %1152 = vmatpush2.msra.mxu0 0.0
      %1153 = vmatprep.subr.mxu0 0.0
      %1154 = vmatpush2.msra.mxu0 0.0
      %1155 = vmatprep.subr.mxu0 0.0
      %1156 = vmatpush2.msra.mxu0 0.0
      %1157 = vmatprep.subr.mxu0 0.0
      %1158 = vmatpush2.msra.mxu0 0.0
      %1159 = vmatprep.subr.mxu0 0.0
      %1160 = vmatpush2.msra.mxu0 0.0
      %1161 = vmatprep.subr.mxu0 0.0
      %1162 = vmatpush2.msra.mxu0 0.0
      %1163 = vmatprep.subr.mxu0 0.0
      %1164 = vmatpush2.msra.mxu0 0.0
      %1165 = vmatprep.subr.mxu0 0.0
      %1166 = vmatpush2.msra.mxu0 0.0
      %1167 = vmatprep.subr.mxu0 0.0
      %1168 = vmatpush2.msra.mxu0 0.0
      %1169 = vmatprep.subr.mxu0 0.0
      %1170 = vmatpush2.msra.mxu0 0.0
      %1171 = vmatprep.subr.mxu0 0.0
      %1172 = vmatpush2.msra.mxu0 0.0
      %1173 = vmatprep.subr.mxu0 0.0
      %1174 = vmatpush2.msra.mxu0 0.0
      %1175 = vmatprep.subr.mxu0 0.0
      %1176 = vmatpush2.msra.mxu0 0.0
      %1177 = vmatprep.subr.mxu0 0.0
      %1178 = vmatpush2.msra.mxu0 0.0
      %1179 = vmatprep.subr.mxu0 0.0
      %1180 = vmatpush2.msra.mxu0 0.0
      %1181 = vmatprep.subr.mxu0 0.0
      %1182 = vmatpush2.msra.mxu0 0.0
      %1183 = vmatprep.mubr.f32.mxu0 0.0
      %1184 = vmatmul.mubr.f32.gmra.mxu0 %v1117
      %v1185 = vpop.f32.mrf.mxu0
      %v1186 = vadd.f32 %v1114, %v1185
      %v1187 = vpop.f32.mrf.mxu0
      %1188 = vdwg.mxu0
      %v1189 = vmax.f32 %v1186, 0.0
      %v1190 = vld [vmem:[%s12] sm:$0x1]
      %v1191 = vld [vmem:[#allocation2] sm:$0x1]
      %1193 = vset.pattern.permute.xlu0 0
      %1194 = vperm.xlu0 %1193, %v1191
      %v1195 = vpop.permute.xlu0 %1194
      %v1197 = vlaneseq
      %v1198 = vshrl.u32 %v1197, 7
      %v1199 = vsub.s32 0, %v1198
      %v1200 = vrot.slane %v1195, %v1199
      %vm1201 = vcmask 130048
      %v1203 = vsel %vm1201, %v1190, 0
      %v1206 = vsel %vm1201, %v1189, 0
      %1208 = vmatprep.subr.mxu0 0.0
      %1209 = vmatpush1.xpose.msra.mxu0 0.0
      %1210 = vmatprep.subr.mxu0 0.0
      %1211 = vmatpush1.xpose.msra.mxu0 0.0
      %1212 = vmatprep.subr.mxu0 0.0
      %1213 = vmatpush1.xpose.msra.mxu0 0.0
      %1214 = vmatprep.subr.mxu0 0.0
      %1215 = vmatpush1.xpose.msra.mxu0 0.0
      %1216 = vmatprep.subr.mxu0 0.0
      %1217 = vmatpush1.xpose.msra.mxu0 0.0
      %1218 = vmatprep.subr.mxu0 0.0
      %1219 = vmatpush1.xpose.msra.mxu0 0.0
      %1220 = vmatprep.subr.mxu0 0.0
      %1221 = vmatpush1.xpose.msra.mxu0 0.0
      %1222 = vmatprep.subr.mxu0 0.0
      %1223 = vmatpush1.xpose.msra.mxu0 0.0
      %1224 = vmatprep.subr.mxu0 0.0
      %1225 = vmatpush1.xpose.msra.mxu0 0.0
      %1226 = vmatprep.subr.mxu0 0.0
      %1227 = vmatpush1.xpose.msra.mxu0 0.0
      %1228 = vmatprep.subr.mxu0 0.0
      %1229 = vmatpush1.xpose.msra.mxu0 0.0
      %1230 = vmatprep.subr.mxu0 0.0
      %1231 = vmatpush1.xpose.msra.mxu0 0.0
      %1232 = vmatprep.subr.mxu0 0.0
      %1233 = vmatpush1.xpose.msra.mxu0 0.0
      %1234 = vmatprep.subr.mxu0 0.0
      %1235 = vmatpush1.xpose.msra.mxu0 0.0
      %1236 = vmatprep.subr.mxu0 0.0
      %1237 = vmatpush1.xpose.msra.mxu0 0.0
      %1238 = vmatprep.subr.mxu0 0.0
      %1239 = vmatpush1.xpose.msra.mxu0 %v1206
      %1240 = vmatprep.subr.mxu0 0.0
      %1241 = vmatpush2.xpose.msra.mxu0 0.0
      %1242 = vmatprep.subr.mxu0 0.0
      %1243 = vmatpush2.xpose.msra.mxu0 0.0
      %1244 = vmatprep.subr.mxu0 0.0
      %1245 = vmatpush2.xpose.msra.mxu0 0.0
      %1246 = vmatprep.subr.mxu0 0.0
      %1247 = vmatpush2.xpose.msra.mxu0 0.0
      %1248 = vmatprep.subr.mxu0 0.0
      %1249 = vmatpush2.xpose.msra.mxu0 0.0
      %1250 = vmatprep.subr.mxu0 0.0
      %1251 = vmatpush2.xpose.msra.mxu0 0.0
      %1252 = vmatprep.subr.mxu0 0.0
      %1253 = vmatpush2.xpose.msra.mxu0 0.0
      %1254 = vmatprep.subr.mxu0 0.0
      %1255 = vmatpush2.xpose.msra.mxu0 0.0
      %1256 = vmatprep.subr.mxu0 0.0
      %1257 = vmatpush2.xpose.msra.mxu0 0.0
      %1258 = vmatprep.subr.mxu0 0.0
      %1259 = vmatpush2.xpose.msra.mxu0 0.0
      %1260 = vmatprep.subr.mxu0 0.0
      %1261 = vmatpush2.xpose.msra.mxu0 0.0
      %1262 = vmatprep.subr.mxu0 0.0
      %1263 = vmatpush2.xpose.msra.mxu0 0.0
      %1264 = vmatprep.subr.mxu0 0.0
      %1265 = vmatpush2.xpose.msra.mxu0 0.0
      %1266 = vmatprep.subr.mxu0 0.0
      %1267 = vmatpush2.xpose.msra.mxu0 0.0
      %1268 = vmatprep.subr.mxu0 0.0
      %1269 = vmatpush2.xpose.msra.mxu0 0.0
      %1270 = vmatprep.subr.mxu0 0.0
      %1271 = vmatpush2.xpose.msra.mxu0 0.0
      %1272 = vmatprep.mubr.f32.mxu0 0.0
      %1273 = vmatmul.mubr.f32.gmra.mxu0 %v1203
      %v1274 = vpop.f32.mrf.mxu0
      %v1275 = vadd.f32 %v1200, %v1274
      %v1276 = vpop.f32.mrf.mxu0
      %1277 = vdwg.mxu0
      %v1278 = vmul.f32 %v1104, -1e+09
      %v1279 = vadd.f32 %v1275, %v1278
      %vm1280 = vcmask 57344
      %v1281 = vsel %vm1280, %v1279, -inf
      %1282 = vmax.xlane.f32.xlu0 %v1281
      %v1283 = vpop.xlane.xlu0 %1282
      %v1284 = vsub.f32 %v1279, %v1283
      %v1285 = vmul.f32 %v1284, 1.442695
      %v1286 = vpow.pop %v1285
      %v1287 = vsel %vm1280, %v1286, 0.0
      %1288 = vadd.xlane.f32.xlu0 %v1287
      %v1289 = vpop.xlane.xlu0 %1288
      %v1290 = vrcp.pop %v1289
      %v1291 = vmul.f32 %v1286, %v1290
      %v1293 = vsel %vm904, %v1291, 0
      %1295 = vmatprep.subr.mxu0 0.0
      %1296 = vmatpush1.msra.mxu0 0.0
      %1297 = vmatprep.subr.mxu0 0.0
      %1298 = vmatpush1.msra.mxu0 0.0
      %1299 = vmatprep.subr.mxu0 0.0
      %1300 = vmatpush1.msra.mxu0 0.0
      %1301 = vmatprep.subr.mxu0 0.0
      %1302 = vmatpush1.msra.mxu0 0.0
      %1303 = vmatprep.subr.mxu0 0.0
      %1304 = vmatpush1.msra.mxu0 0.0
      %1305 = vmatprep.subr.mxu0 0.0
      %1306 = vmatpush1.msra.mxu0 0.0
      %1307 = vmatprep.subr.mxu0 0.0
      %1308 = vmatpush1.msra.mxu0 0.0
      %1309 = vmatprep.subr.mxu0 0.0
      %1310 = vmatpush1.msra.mxu0 0.0
      %1311 = vmatprep.subr.mxu0 0.0
      %1312 = vmatpush1.msra.mxu0 0.0
      %1313 = vmatprep.subr.mxu0 0.0
      %1314 = vmatpush1.msra.mxu0 0.0
      %1315 = vmatprep.subr.mxu0 0.0
      %1316 = vmatpush1.msra.mxu0 0.0
      %1317 = vmatprep.subr.mxu0 0.0
      %1318 = vmatpush1.msra.mxu0 0.0
      %1319 = vmatprep.subr.mxu0 0.0
      %1320 = vmatpush1.msra.mxu0 0.0
      %1321 = vmatprep.subr.mxu0 0.0
      %1322 = vmatpush1.msra.mxu0 0.0
      %1323 = vmatprep.subr.mxu0 0.0
      %1324 = vmatpush1.msra.mxu0 0.0
      %1325 = vmatprep.subr.mxu0 0.0
      %1326 = vmatpush1.msra.mxu0 %v1103
      %1327 = vmatprep.subr.mxu0 0.0
      %1328 = vmatpush2.msra.mxu0 0.0
      %1329 = vmatprep.subr.mxu0 0.0
      %1330 = vmatpush2.msra.mxu0 0.0
      %1331 = vmatprep.subr.mxu0 0.0
      %1332 = vmatpush2.msra.mxu0 0.0
      %1333 = vmatprep.subr.mxu0 0.0
      %1334 = vmatpush2.msra.mxu0 0.0
      %1335 = vmatprep.subr.mxu0 0.0
      %1336 = vmatpush2.msra.mxu0 0.0
      %1337 = vmatprep.subr.mxu0 0.0
      %1338 = vmatpush2.msra.mxu0 0.0
      %1339 = vmatprep.subr.mxu0 0.0
      %1340 = vmatpush2.msra.mxu0 0.0
      %1341 = vmatprep.subr.mxu0 0.0
      %1342 = vmatpush2.msra.mxu0 0.0
      %1343 = vmatprep.subr.mxu0 0.0
      %1344 = vmatpush2.msra.mxu0 0.0
      %1345 = vmatprep.subr.mxu0 0.0
      %1346 = vmatpush2.msra.mxu0 0.0
      %1347 = vmatprep.subr.mxu0 0.0
      %1348 = vmatpush2.msra.mxu0 0.0
      %1349 = vmatprep.subr.mxu0 0.0
      %1350 = vmatpush2.msra.mxu0 0.0
      %1351 = vmatprep.subr.mxu0 0.0
      %1352 = vmatpush2.msra.mxu0 0.0
      %1353 = vmatprep.subr.mxu0 0.0
      %1354 = vmatpush2.msra.mxu0 0.0
      %1355 = vmatprep.subr.mxu0 0.0
      %1356 = vmatpush2.msra.mxu0 0.0
      %1357 = vmatprep.subr.mxu0 0.0
      %1358 = vmatpush2.msra.mxu0 0.0
      %1359 = vmatprep.mubr.f32.mxu0 0.0
      %1360 = vmatmul.mubr.f32.gmra.mxu0 %v1293
      %v1361 = vpop.f32.mrf.mxu0
      %v1362 = vadd.f32 0.0, %v1361
      %v1363 = vpop.f32.mrf.mxu0
      %1364 = vdwg.mxu0
      %v1365 = vld [vmem:[%s14] sm:$0xff]
      %v1366 = vld [vmem:[%s14 + $0x8] sm:$0xff]
      %v1367 = vld [vmem:[%s14 + $0x10] sm:$0xff]
      %v1368 = vld [vmem:[%s14 + $0x18] sm:$0xff]
      %v1369 = vld [vmem:[%s15] sm:$0x1]
      %v1371 = vsel %vm576, %v1362, 0
      %1373 = vmatprep.subr.mxu0 0.0
      %1374 = vmatpush1.msra.mxu0 0.0
      %1375 = vmatprep.subr.mxu0 0.0
      %1376 = vmatpush1.msra.mxu0 0.0
      %1377 = vmatprep.subr.mxu0 0.0
      %1378 = vmatpush1.msra.mxu0 0.0
      %1379 = vmatprep.subr.mxu0 0.0
      %1380 = vmatpush1.msra.mxu0 0.0
      %1381 = vmatprep.subr.mxu0 0.0
      %1382 = vmatpush1.msra.mxu0 0.0
      %1383 = vmatprep.subr.mxu0 0.0
      %1384 = vmatpush1.msra.mxu0 0.0
      %1385 = vmatprep.subr.mxu0 0.0
      %1386 = vmatpush1.msra.mxu0 0.0
      %1387 = vmatprep.subr.mxu0 0.0
      %1388 = vmatpush1.msra.mxu0 0.0
      %1389 = vmatprep.subr.mxu0 0.0
      %1390 = vmatpush1.msra.mxu0 0.0
      %1391 = vmatprep.subr.mxu0 0.0
      %1392 = vmatpush1.msra.mxu0 0.0
      %1393 = vmatprep.subr.mxu0 0.0
      %1394 = vmatpush1.msra.mxu0 0.0
      %1395 = vmatprep.subr.mxu0 0.0
      %1396 = vmatpush1.msra.mxu0 0.0
      %1397 = vmatprep.subr.mxu0 0.0
      %1398 = vmatpush1.msra.mxu0 %v1368
      %1399 = vmatprep.subr.mxu0 0.0
      %1400 = vmatpush1.msra.mxu0 %v1367
      %1401 = vmatprep.subr.mxu0 0.0
      %1402 = vmatpush1.msra.mxu0 %v1366
      %1403 = vmatprep.subr.mxu0 0.0
      %1404 = vmatpush1.msra.mxu0 %v1365
      %1405 = vmatprep.subr.mxu0 0.0
      %1406 = vmatpush2.msra.mxu0 0.0
      %1407 = vmatprep.subr.mxu0 0.0
      %1408 = vmatpush2.msra.mxu0 0.0
      %1409 = vmatprep.subr.mxu0 0.0
      %1410 = vmatpush2.msra.mxu0 0.0
      %1411 = vmatprep.subr.mxu0 0.0
      %1412 = vmatpush2.msra.mxu0 0.0
      %1413 = vmatprep.subr.mxu0 0.0
      %1414 = vmatpush2.msra.mxu0 0.0
      %1415 = vmatprep.subr.mxu0 0.0
      %1416 = vmatpush2.msra.mxu0 0.0
      %1417 = vmatprep.subr.mxu0 0.0
      %1418 = vmatpush2.msra.mxu0 0.0
      %1419 = vmatprep.subr.mxu0 0.0
      %1420 = vmatpush2.msra.mxu0 0.0
      %1421 = vmatprep.subr.mxu0 0.0
      %1422 = vmatpush2.msra.mxu0 0.0
      %1423 = vmatprep.subr.mxu0 0.0
      %1424 = vmatpush2.msra.mxu0 0.0
      %1425 = vmatprep.subr.mxu0 0.0
      %1426 = vmatpush2.msra.mxu0 0.0
      %1427 = vmatprep.subr.mxu0 0.0
      %1428 = vmatpush2.msra.mxu0 0.0
      %1429 = vmatprep.subr.mxu0 0.0
      %1430 = vmatpush2.msra.mxu0 0.0
      %1431 = vmatprep.subr.mxu0 0.0
      %1432 = vmatpush2.msra.mxu0 0.0
      %1433 = vmatprep.subr.mxu0 0.0
      %1434 = vmatpush2.msra.mxu0 0.0
      %1435 = vmatprep.subr.mxu0 0.0
      %1436 = vmatpush2.msra.mxu0 0.0
      %1437 = vmatprep.mubr.f32.mxu0 0.0
      %1438 = vmatmul.mubr.f32.gmra.mxu0 %v1371
      %v1439 = vpop.f32.mrf.mxu0
      %v1440 = vadd.f32 %v1369, %v1439
      %v1441 = vpop.f32.mrf.mxu0
      %1442 = vdwg.mxu0
      %vm1443 = vcmask 253952
      %1444 = vst.msk [vmem:[%s561] sm:$0x1] %vm1443, %v1440
      %p1445 = scmp.lt.s32.totalorder %s29, 1
      %s1446 = scalar_select %p1445, %s29, 1
      %s1447 = scalar_lea.vmem %s16, %s1446
      // Predicated region
      $region85: #{_lambda_.8} parent=83 // pred_check
        %p1448 = pneg %p403
      $region86: #{_lambda_.8} parent=83 // pred_check_branch
        %1450 = sbr.rel (%p1448) target = $region88
      $region87: #{_lambda_.8} parent=83 // pred_region
        _
      $region88: #{_lambda_.8} parent=83 // pred_fallthru
        _
    $region84: #{_lambda_.8} parent=5 // pred_fallthru
      _
    %p1451 = scmp.le.s32.totalorder 2, %s24
    // Predicated region
    $region89: #{_lambda_.8} parent=5 // pred_check
      %p1452 = pneg %p1451
    $region90: #{_lambda_.8} parent=5 // pred_check_branch
      %1454 = sbr.rel (%p1452) target = $region92
    $region91: #{_lambda_.8} parent=5 // pred_region
      %s1455 = ssub.s32 %s24, 2
      // Predicated region
      $region93: #{_lambda_.8} parent=91 // pred_check
        %p1456 = pneg %p409
      $region94: #{_lambda_.8} parent=91 // pred_check_branch
        %1458 = sbr.rel (%p1456) target = $region96
      $region95: #{_lambda_.8} parent=91 // pred_region
        %p1459 = scmp.lt.s32.totalorder %s30, 1
        %s1460 = scalar_select %p1459, %s30, 1
        %s1461 = scalar_lea.vmem %s16, %s1460
      $region96: #{_lambda_.8} parent=91 // pred_fallthru
        _
    $region92: #{_lambda_.8} parent=5 // pred_fallthru
      _
  $region6: #{_lambda_.8} parent=0 // loop_footer
    %s28 = sadd.s32 1, %s24
  $region7: #{_lambda_.8} parent=0 // loop_footer_branch
    %23 = sbr.rel target = $region3
  $region8: #{_lambda_.8} parent=0 // loop_exit
    _

// kernel: _lambda_.9
$region0: #{_lambda_.9}
  #allocation0 [shape = 'u32[]', space=smem, size = 0x4, offset = 0x4, fixed_abs, tag = 'smem constant byte address 0x4 - core index']
  #allocation1 [shape = 'u32[144,128]{1,0:T(1,128)}', space=vmem, size = 0x12000, scoped, tag = 'internal scratch']
  #allocation2 [shape = 'f32[1,1]{1,0:T(1,128)S(1)}', space=vmem, size = 0x200, scoped, tag = 'scoped memory for _lambda_.9']
  %s0 = inlined_call_operand.vmem [shape: f32[8,96], index: 0, kind: input, shape index: {}]
  %s1 = inlined_call_operand.vmem [shape: f32[1,96], index: 1, kind: input, shape index: {}]
  %s2 = inlined_call_operand.vmem [shape: f32[1,96], index: 2, kind: input, shape index: {}]
  %s3 = inlined_call_operand.vmem [shape: f32[96,1], index: 3, kind: input, shape index: {}]
  %s4 = inlined_call_operand.<no memory space> [shape: f32[1,1], index: 4, kind: input, shape index: {}]
  %s5 = inlined_call_operand.vmem [shape: f32[8,1], index: 5, kind: output, shape index: {}]
  %s6 = sld [smem:[#allocation0]]
  $region30: #{_lambda_.9} parent=0
    _
  %s8 = ssub.s32 1, %s6
  %s9 = scalar_select 0, %s8, %s6
  %v10 = vstv %s4
  %11 = vst [vmem:[#allocation2] sm:$0x1] %v10
  // Predicated region
  $region2: #{_lambda_.9} parent=0 // pred_check
    _
  $region3: #{_lambda_.9} parent=0 // pred_check_branch
    %13 = sbr.rel (0) target = $region5
  $region4: #{_lambda_.9} parent=0 // pred_region
    _
  $region5: #{_lambda_.9} parent=0 // pred_fallthru
    _
  // Predicated region
  $region6: #{_lambda_.9} parent=0 // pred_check
    _
  $region7: #{_lambda_.9} parent=0 // pred_check_branch
    %15 = sbr.rel (0) target = $region9
  $region8: #{_lambda_.9} parent=0 // pred_region
    _
  $region9: #{_lambda_.9} parent=0 // pred_fallthru
    _
  // Predicated region
  $region10: #{_lambda_.9} parent=0 // pred_check
    _
  $region11: #{_lambda_.9} parent=0 // pred_check_branch
    %17 = sbr.rel (0) target = $region13
  $region12: #{_lambda_.9} parent=0 // pred_region
    _
  $region13: #{_lambda_.9} parent=0 // pred_fallthru
    _
  // Predicated region
  $region14: #{_lambda_.9} parent=0 // pred_check
    _
  $region15: #{_lambda_.9} parent=0 // pred_check_branch
    %19 = sbr.rel (0) target = $region17
  $region16: #{_lambda_.9} parent=0 // pred_region
    _
  $region17: #{_lambda_.9} parent=0 // pred_fallthru
    _
  // Predicated region
  $region18: #{_lambda_.9} parent=0 // pred_check
    _
  $region19: #{_lambda_.9} parent=0 // pred_check_branch
    %21 = sbr.rel (0) target = $region21
  $region20: #{_lambda_.9} parent=0 // pred_region
    _
  $region21: #{_lambda_.9} parent=0 // pred_fallthru
    _
  %v22 = vld [vmem:[%s0] sm:$0xff]
  %vm23 = vcmask 785408
  %v24 = vsel %vm23, %v22, 0.0
  %25 = vadd.xlane.f32.xlu0 %v24
  %v26 = vpop.xlane.xlu0 %25
  %v27 = vrcp.pop 96.0
  %v28 = vmul.f32 %v26, %v27
  %v29 = vsub.f32 %v22, %v28
  %v30 = vmul.f32 %v29, %v29
  %v31 = vsel %vm23, %v30, 0.0
  %32 = vadd.xlane.f32.xlu0 %v31
  %v33 = vpop.xlane.xlu0 %32
  %v34 = vmul.f32 %v33, %v27
  %v35 = vadd.f32 %v34, 1e-06
  %v36 = vrsqrt.pop %v35
  %v37 = vmul.f32 %v29, %v36
  %v38 = vld [vmem:[%s1] sm:$0x1]
  %v40 = vlaneseq
  %v41 = vshrl.u32 %v40, 7
  %v42 = vsub.s32 0, %v41
  %v43 = vrot.slane %v38, %v42
  %v45 = vmul.f32 %v37, %v43
  %v46 = vld [vmem:[%s2] sm:$0x1]
  %v48 = vlaneseq
  %v49 = vshrl.u32 %v48, 7
  %v50 = vsub.s32 0, %v49
  %v51 = vrot.slane %v46, %v50
  %v53 = vadd.f32 %v45, %v51
  %v54 = vld [vmem:[%s3] sm:$0xff]
  %v55 = vld [vmem:[%s3 + $0x8] sm:$0xff]
  %v56 = vld [vmem:[%s3 + $0x10] sm:$0xff]
  %v57 = vld [vmem:[%s3 + $0x18] sm:$0xff]
  %v58 = vld [vmem:[%s3 + $0x20] sm:$0xff]
  %v59 = vld [vmem:[%s3 + $0x28] sm:$0xff]
  %v60 = vld [vmem:[%s3 + $0x30] sm:$0xff]
  %v61 = vld [vmem:[%s3 + $0x38] sm:$0xff]
  %v62 = vld [vmem:[%s3 + $0x40] sm:$0xff]
  %v63 = vld [vmem:[%s3 + $0x48] sm:$0xff]
  %v64 = vld [vmem:[%s3 + $0x50] sm:$0xff]
  %v65 = vld [vmem:[%s3 + $0x58] sm:$0xff]
  %v66 = vld [vmem:[#allocation2] sm:$0x1]
  %v68 = vlaneseq
  %v69 = vshrl.u32 %v68, 7
  %v70 = vsub.s32 0, %v69
  %v71 = vrot.slane %v66, %v70
  %v74 = vsel %vm23, %v53, 0
  %76 = vmatprep.subr.mxu0 0.0
  %77 = vmatpush1.msra.mxu0 0.0
  %78 = vmatprep.subr.mxu0 0.0
  %79 = vmatpush1.msra.mxu0 0.0
  %80 = vmatprep.subr.mxu0 0.0
  %81 = vmatpush1.msra.mxu0 0.0
  %82 = vmatprep.subr.mxu0 0.0
  %83 = vmatpush1.msra.mxu0 0.0
  %84 = vmatprep.subr.mxu0 0.0
  %85 = vmatpush1.msra.mxu0 %v65
  %86 = vmatprep.subr.mxu0 0.0
  %87 = vmatpush1.msra.mxu0 %v64
  %88 = vmatprep.subr.mxu0 0.0
  %89 = vmatpush1.msra.mxu0 %v63
  %90 = vmatprep.subr.mxu0 0.0
  %91 = vmatpush1.msra.mxu0 %v62
  %92 = vmatprep.subr.mxu0 0.0
  %93 = vmatpush1.msra.mxu0 %v61
  %94 = vmatprep.subr.mxu0 0.0
  %95 = vmatpush1.msra.mxu0 %v60
  %96 = vmatprep.subr.mxu0 0.0
  %97 = vmatpush1.msra.mxu0 %v59
  %98 = vmatprep.subr.mxu0 0.0
  %99 = vmatpush1.msra.mxu0 %v58
  %100 = vmatprep.subr.mxu0 0.0
  %101 = vmatpush1.msra.mxu0 %v57
  %102 = vmatprep.subr.mxu0 0.0
  %103 = vmatpush1.msra.mxu0 %v56
  %104 = vmatprep.subr.mxu0 0.0
  %105 = vmatpush1.msra.mxu0 %v55
  %106 = vmatprep.subr.mxu0 0.0
  %107 = vmatpush1.msra.mxu0 %v54
  %108 = vmatprep.subr.mxu0 0.0
  %109 = vmatpush2.msra.mxu0 0.0
  %110 = vmatprep.subr.mxu0 0.0
  %111 = vmatpush2.msra.mxu0 0.0
  %112 = vmatprep.subr.mxu0 0.0
  %113 = vmatpush2.msra.mxu0 0.0
  %114 = vmatprep.subr.mxu0 0.0
  %115 = vmatpush2.msra.mxu0 0.0
  %116 = vmatprep.subr.mxu0 0.0
  %117 = vmatpush2.msra.mxu0 0.0
  %118 = vmatprep.subr.mxu0 0.0
  %119 = vmatpush2.msra.mxu0 0.0
  %120 = vmatprep.subr.mxu0 0.0
  %121 = vmatpush2.msra.mxu0 0.0
  %122 = vmatprep.subr.mxu0 0.0
  %123 = vmatpush2.msra.mxu0 0.0
  %124 = vmatprep.subr.mxu0 0.0
  %125 = vmatpush2.msra.mxu0 0.0
  %126 = vmatprep.subr.mxu0 0.0
  %127 = vmatpush2.msra.mxu0 0.0
  %128 = vmatprep.subr.mxu0 0.0
  %129 = vmatpush2.msra.mxu0 0.0
  %130 = vmatprep.subr.mxu0 0.0
  %131 = vmatpush2.msra.mxu0 0.0
  %132 = vmatprep.subr.mxu0 0.0
  %133 = vmatpush2.msra.mxu0 0.0
  %134 = vmatprep.subr.mxu0 0.0
  %135 = vmatpush2.msra.mxu0 0.0
  %136 = vmatprep.subr.mxu0 0.0
  %137 = vmatpush2.msra.mxu0 0.0
  %138 = vmatprep.subr.mxu0 0.0
  %139 = vmatpush2.msra.mxu0 0.0
  %140 = vmatprep.mubr.f32.mxu0 0.0
  %141 = vmatmul.mubr.f32.gmra.mxu0 %v74
  %v142 = vpop.f32.mrf.mxu0
  %v143 = vadd.f32 %v71, %v142
  %v144 = vpop.f32.mrf.mxu0
  %145 = vdwg.mxu0
  %vm146 = vcmask 7168
  %147 = vst.msk [vmem:[%s5] sm:$0xff] %vm146, %v143
  // Predicated region
  $region22: #{_lambda_.9} parent=0 // pred_check
    _
  $region23: #{_lambda_.9} parent=0 // pred_check_branch
    %149 = sbr.rel (0) target = $region25
  $region24: #{_lambda_.9} parent=0 // pred_region
    _
  $region25: #{_lambda_.9} parent=0 // pred_fallthru
    _
  // Predicated region
  $region26: #{_lambda_.9} parent=0 // pred_check
    _
  $region27: #{_lambda_.9} parent=0 // pred_check_branch
    %151 = sbr.rel (0) target = $region29
  $region28: #{_lambda_.9} parent=0 // pred_region
    _
  $region29: #{_lambda_.9} parent=0 // pred_fallthru
    _

</llo_original>
